<compile_context>
chip_gen: v7x
topology: tpu7x:2x2x1
jax: 0.10.0
libtpu: 0.0.40
codegen_flags: <defaults>
</compile_context>

<pallas_src>
import jax
import jax.numpy as jnp
from jax.experimental import pallas as pl
from jax.experimental.pallas import tpu as pltpu

# ----------------------------- hyper-parameters ------------------------------
B = 2                  # batch size
S = 4                  # sequence_length
N = B * S              # 8 images per forward
CNN_HIDDEN = 4         # cnn_hidden_size -> conv out channels = 2 * CNN_HIDDEN
C_OUT = 2 * CNN_HIDDEN            # 8
CNN_FEAT = 64          # CustomCNN fc output dim (hard-coded 64 in the module)
RNN_HID = 32           # rnn_hidden_size
NUM_CLASSES = 26
IMG = 28
PAD = IMG + 2                      # 30 (padded image side)
POOL = 14
PACKW = C_OUT * PAD                # 240 lanes: all 8 channel stripes
CONVW = PACKW - 2                  # 238 valid lanes after 3x3 tap slicing
LANE = 128                         # pooled features padded to a full lane tile
FLATP = POOL * LANE                # 1792 padded flattened feature dim
RPI = 32                           # padded-row block per image (30 live, 8-aligned)


# --------------------------- the single fused kernel --------------------------
def convlstm_kernel(x_ref, rpad_ref, tile_ref, w_ref, b_ref, selr_ref, selc_ref,
                    selfc_ref, wfc_ref, bfc_ref, wfi_ref, bfi_ref, tsel_ref,
                    wih_ref, whh_ref, bl_ref, wo_ref, bo_ref, osel_ref,
                    o_ref, p_ref, flat_ref, hs_ref):
    f32 = jnp.float32

    # ---- conv3x3(pad=1) + ReLU + maxpool(2,2); channels packed along lanes ---
    # Zero-padding + channel-stripe replication folded into two batched one-hot
    # matmuls:  xt_all[k*32 + r, 30c + m] = padded image k value at (r, m).
    xr = jnp.dot(rpad_ref[...], x_ref[...], preferred_element_type=f32)   # (256, 28)
    xt_all = jnp.dot(xr, tile_ref[...], preferred_element_type=f32)       # (256, 240)

    brow = b_ref[:, :CONVW]                                    # (1, 238)
    wrows = [w_ref[t:t + 1, :CONVW] for t in range(9)]         # 9 x (1, 238)
    for k in range(N):
        xt = xt_all[k * RPI:(k + 1) * RPI]         # (32, 240), rows 0..29 valid
        acc = None
        for di in range(3):
            for dj in range(3):
                tap = xt[di:di + IMG, dj:dj + CONVW] * wrows[3 * di + dj]
                acc = tap if acc is None else acc + tap        # VPU madd, all ch.
        conv = jnp.maximum(acc + brow, 0.0)                                # (28, 238)
        # 2x2 / stride-2 max pool: pairwise max + one-hot selection matmuls
        rmax = jnp.maximum(conv[0:IMG - 1, :], conv[1:IMG, :])             # (27, 238)
        prow = jnp.dot(selr_ref[...], rmax, preferred_element_type=f32)    # (16, 238)
        cmax = jnp.maximum(prow[:, 0:CONVW - 1], prow[:, 1:CONVW])         # (16, 237)
        # pooled[h, c*14+w]; lanes 112..127 and rows 14,15 are zero (padding)
        p_ref[k * 16:(k + 1) * 16, :] = jnp.dot(
            cmax, selc_ref[...], preferred_element_type=f32)               # (16, 128)

    # ---- flatten to lane-dense (N, 1792): flat[n, h*128 + c*14 + w] ----------
    pooled_all = p_ref[...]                                                # (128, 128)
    for h in range(POOL):
        flat_ref[:, h * LANE:(h + 1) * LANE] = jnp.dot(
            selfc_ref[h * N:(h + 1) * N, :], pooled_all,
            preferred_element_type=f32)                                    # (8, 128)
    flat = flat_ref[...]                                                   # (8, 1792)

    # ---- CustomCNN.fc + ReLU, LSTM.fc_in -------------------------------------
    feat = jnp.maximum(jnp.dot(flat, wfc_ref[...], preferred_element_type=f32)
                       + bfc_ref[...], 0.0)                                # (8, 64)
    rnn_in = (jnp.dot(feat, wfi_ref[...], preferred_element_type=f32)
              + bfi_ref[...])                                              # (8, 32)
    # batch-first rows (b*S+t) -> time-major rows (t*B+b) via one-hot matmul
    xs_tm = jnp.dot(tsel_ref[...], rnn_in, preferred_element_type=f32)     # (8, 32)
    # hoisted LSTM input projection + bias for all timesteps at once
    gx_all = (jnp.dot(xs_tm, wih_ref[...], preferred_element_type=f32)
              + bl_ref[...])                                               # (8, 128)

    # ---- LSTM recurrence (gate order i, f, g, o; h0 = c0 = 0) ----------------
    whh = whh_ref[...]
    H = RNN_HID
    h_t = jnp.zeros((B, H), f32)
    c_t = jnp.zeros((B, H), f32)
    for t in range(S):                     # tiny static trip count -> unrolled
        g = gx_all[t * B:(t + 1) * B, :] + jnp.dot(
            h_t, whh, preferred_element_type=f32)                          # (B, 4H)
        sig = 0.5 * (jnp.tanh(0.5 * g) + 1.0)   # exact sigmoid, full 4H width
        tnh = jnp.tanh(g)
        c_t = sig[:, H:2 * H] * c_t + sig[:, 0:H] * tnh[:, 2 * H:3 * H]
        h_t = sig[:, 3 * H:4 * H] * jnp.tanh(c_t)
        hs_ref[t * B:(t + 1) * B, :] = h_t

    # ---- LSTM.fc_out hoisted out of the loop: one matmul, one store ----------
    logits_tm = jnp.dot(hs_ref[...], wo_ref[...],
                        preferred_element_type=f32)                        # (8, 26)
    # reorder time-major rows (t*B+b) back to batch-first rows (b*S+t)
    o_ref[...] = (jnp.dot(osel_ref[...], logits_tm,
                          preferred_element_type=f32) + bo_ref[...])


# ------------------------------- full forward --------------------------------
def conv_lstm_forward(images, params):
    # images: (B, S, 1, 28, 28) float32
    bsz, seq = images.shape[0], images.shape[1]
    assert bsz * seq == N
    x_all = images.reshape(bsz * seq * IMG, IMG)        # free row-major reshape
    out = pl.pallas_call(
        convlstm_kernel,
        out_shape=jax.ShapeDtypeStruct((bsz * seq, NUM_CLASSES), jnp.float32),
        scratch_shapes=[
            pltpu.VMEM((N * 16, LANE), jnp.float32),    # pooled features
            pltpu.VMEM((N, FLATP), jnp.float32),        # lane-dense flat feats
            pltpu.VMEM((S * B, RNN_HID), jnp.float32),  # stacked h_t (time-major)
        ],
    )(x_all, params["rpad"], params["tile28"], params["conv_w_rows"],
      params["conv_b_row"], params["selr"], params["selc"], params["sel_fc"],
      params["fc_w_perm"], params["fc_b"], params["fcin_w_t"], params["fcin_b"],
      params["time_sel"], params["wih_t"], params["whh_t"], params["lstm_b"],
      params["fcout_w_t"], params["fcout_b"], params["out_sel"])
    return out.reshape(bsz, seq, NUM_CLASSES)           # rows are (b, t) order


# ------------------------------ parameter setup -------------------------------
def init_params(key):
    ks = jax.random.split(key, 12)

    def u(k, shape, fan_in):
        bound = 1.0 / jnp.sqrt(jnp.float32(fan_in))
        return jax.random.uniform(k, shape, jnp.float32, -bound, bound)

    p = {}
    # conv1: Conv2d(1, C_OUT, 3, padding=1) -- torch layout (C_OUT, 1, 3, 3)
    conv_w = u(ks[0], (C_OUT, 1, 3, 3), 9)
    conv_b = u(ks[1], (C_OUT,), 9)
    # channel-packed forms: stripe c occupies lanes [30c, 30c+29]
    p["conv_w_rows"] = jnp.repeat(conv_w.reshape(C_OUT, 9).T, PAD, axis=1)  # (9,240)
    p["conv_b_row"] = jnp.repeat(conv_b, PAD)[None, :]                       # (1,240)

    # row pad/replicate matrix: rpad[k*32 + i + 1, k*28 + i] = 1  (zero pad rows)
    rows = jnp.arange(N * RPI)
    k_img, r_in = rows // RPI, rows % RPI
    src_row = k_img * IMG + (r_in - 1)
    valid = (r_in >= 1) & (r_in <= IMG)
    p["rpad"] = (valid[:, None]
                 & (src_row[:, None] == jnp.arange(N * IMG)[None, :])
                 ).astype(jnp.float32)                                       # (256,224)

    # stripe tiling with left/right padding: tile28[j, 30c + j + 1] = 1
    cols240 = jnp.arange(PACKW)
    p["tile28"] = ((jnp.arange(IMG)[:, None] + 1) == (cols240 % PAD)[None, :]
                   ).astype(jnp.float32)                                     # (28,240)

    # pooling selection matrices (exact 2x2 / stride-2 max pool)
    p["selr"] = (jnp.arange(2 * POOL - 1)[None, :] == 2 * jnp.arange(16)[:, None]
                 ).astype(jnp.float32)                                       # (16,27)
    lanes = jnp.arange(LANE)
    c_id, w_id = lanes // POOL, lanes % POOL
    src_col = PAD * c_id + 2 * w_id
    live = lanes < C_OUT * POOL
    p["selc"] = (live[None, :]
                 & (jnp.arange(CONVW - 1)[:, None] == src_col[None, :])
                 ).astype(jnp.float32)                                       # (237,128)

    # row-select for the flatten: sel_fc[h*8 + n, n*16 + h] = 1
    rr = jnp.arange(POOL * N)
    h_id, n_id = rr // N, rr % N
    p["sel_fc"] = ((n_id * 16 + h_id)[:, None] == jnp.arange(N * 16)[None, :]
                   ).astype(jnp.float32)                                     # (112,128)

    # fc: Linear(1568, 64).  Torch flattens conv output as (c, h, w); our flat
    # layout is h-major 128-lane blocks with column c*14 + w -> permute + pad.
    flat_t = C_OUT * POOL * POOL                     # 1568
    fc_w_t = u(ks[2], (flat_t, CNN_FEAT), flat_t)    # rows in torch (c,h,w) order
    w4 = fc_w_t.reshape(C_OUT, POOL, POOL, CNN_FEAT).transpose(1, 0, 2, 3)
    w4 = w4.reshape(POOL, C_OUT * POOL, CNN_FEAT)
    w4 = jnp.pad(w4, ((0, 0), (0, LANE - C_OUT * POOL), (0, 0)))
    p["fc_w_perm"] = w4.reshape(FLATP, CNN_FEAT)                             # (1792,64)
    p["fc_b"] = u(ks[3], (1, CNN_FEAT), flat_t)

    # lstm.fc_in: Linear(64, RNN_HID)
    p["fcin_w_t"] = u(ks[4], (CNN_FEAT, RNN_HID), CNN_FEAT)
    p["fcin_b"] = u(ks[5], (1, RNN_HID), CNN_FEAT)
    # nn.LSTM(RNN_HID, RNN_HID, 1): gate order i,f,g,o; bias = b_ih + b_hh
    p["wih_t"] = u(ks[6], (RNN_HID, 4 * RNN_HID), RNN_HID)
    p["whh_t"] = u(ks[7], (RNN_HID, 4 * RNN_HID), RNN_HID)
    p["lstm_b"] = (u(ks[8], (1, 4 * RNN_HID), RNN_HID)
                   + u(ks[9], (1, 4 * RNN_HID), RNN_HID))
    # lstm.fc_out: Linear(RNN_HID, NUM_CLASSES)
    p["fcout_w_t"] = u(ks[10], (RNN_HID, NUM_CLASSES), RNN_HID)
    p["fcout_b"] = u(ks[11], (1, NUM_CLASSES), RNN_HID)

    # batch-first -> time-major reorder (row t*B+b <- b*S+t) and its inverse
    rows_tb = jnp.arange(S * B)
    src_bf = (rows_tb % B) * S + rows_tb // B
    p["time_sel"] = (src_bf[:, None] == jnp.arange(N)[None, :]
                     ).astype(jnp.float32)                                   # (8,8)
    rows_bt = jnp.arange(B * S)
    src_tm = (rows_bt % S) * B + rows_bt // S
    p["out_sel"] = (src_tm[:, None] == jnp.arange(S * B)[None, :]
                    ).astype(jnp.float32)                                    # (8,8)
    return p


if __name__ == "__main__":
    key = jax.random.PRNGKey(0)
    k_img, k_par = jax.random.split(key)
    params = init_params(k_par)
    # images: [Batch, Sequence_length, Channel=1, 28, 28]
    images = jax.random.normal(k_img, (B, S, 1, IMG, IMG), dtype=jnp.float32)

    out = jax.jit(conv_lstm_forward)(images, params)
    out = jax.block_until_ready(out)
    assert out.shape == (B, S, NUM_CLASSES), out.shape
    print("KERNEL_OK")
</pallas_src>

<mosaic_0001>
module attributes {stable_mosaic.version = 11 : i64} {
  func.func @convlstm_kernel(%arg0: memref<224x28xf32, #tpu.memory_space<vmem>>, %arg1: memref<256x224xf32, #tpu.memory_space<vmem>>, %arg2: memref<28x240xf32, #tpu.memory_space<vmem>>, %arg3: memref<9x240xf32, #tpu.memory_space<vmem>>, %arg4: memref<1x240xf32, #tpu.memory_space<vmem>>, %arg5: memref<16x27xf32, #tpu.memory_space<vmem>>, %arg6: memref<237x128xf32, #tpu.memory_space<vmem>>, %arg7: memref<112x128xf32, #tpu.memory_space<vmem>>, %arg8: memref<1792x64xf32, #tpu.memory_space<vmem>>, %arg9: memref<1x64xf32, #tpu.memory_space<vmem>>, %arg10: memref<64x32xf32, #tpu.memory_space<vmem>>, %arg11: memref<1x32xf32, #tpu.memory_space<vmem>>, %arg12: memref<8x8xf32, #tpu.memory_space<vmem>>, %arg13: memref<32x128xf32, #tpu.memory_space<vmem>>, %arg14: memref<32x128xf32, #tpu.memory_space<vmem>>, %arg15: memref<1x128xf32, #tpu.memory_space<vmem>>, %arg16: memref<32x26xf32, #tpu.memory_space<vmem>>, %arg17: memref<1x26xf32, #tpu.memory_space<vmem>>, %arg18: memref<8x8xf32, #tpu.memory_space<vmem>>, %arg19: memref<8x26xf32, #tpu.memory_space<vmem>>, %arg20: memref<128x128xf32, #tpu.memory_space<vmem>>, %arg21: memref<8x1792xf32, #tpu.memory_space<vmem>>, %arg22: memref<8x32xf32, #tpu.memory_space<vmem>>) attributes {dimension_semantics = [], scalar_prefetch = 0 : i64, scratch_operands = 3 : i64, tpu.core_type = #tpu.core_type<tc>} {
    %c0 = arith.constant 0 : index
    %c0_0 = arith.constant 0 : index
    %0 = vector.load %arg1[%c0, %c0_0] : memref<256x224xf32, #tpu.memory_space<vmem>>, vector<256x224xf32>
    %c0_1 = arith.constant 0 : index
    %c0_2 = arith.constant 0 : index
    %1 = vector.load %arg0[%c0_1, %c0_2] : memref<224x28xf32, #tpu.memory_space<vmem>>, vector<224x28xf32>
    %cst = arith.constant dense<0.000000e+00> : vector<256x28xf32>
    %2 = tpu.matmul %0, %1, %cst {dimension_numbers = #tpu.dot_dimension_numbers<[1], [0], [0], [1], [0, 0, 1, 1], [], []>} : vector<256x224xf32>, vector<224x28xf32>, vector<256x28xf32> -> vector<256x28xf32>
    %c0_3 = arith.constant 0 : index
    %c0_4 = arith.constant 0 : index
    %3 = vector.load %arg2[%c0_3, %c0_4] : memref<28x240xf32, #tpu.memory_space<vmem>>, vector<28x240xf32>
    %cst_5 = arith.constant dense<0.000000e+00> : vector<256x240xf32>
    %4 = tpu.matmul %2, %3, %cst_5 {dimension_numbers = #tpu.dot_dimension_numbers<[1], [0], [0], [1], [0, 0, 1, 1], [], []>} : vector<256x28xf32>, vector<28x240xf32>, vector<256x240xf32> -> vector<256x240xf32>
    %c0_6 = arith.constant 0 : index
    %c0_7 = arith.constant 0 : index
    %5 = vector.load %arg4[%c0_6, %c0_7] : memref<1x240xf32, #tpu.memory_space<vmem>>, vector<1x238xf32>
    %c0_8 = arith.constant 0 : index
    %c0_9 = arith.constant 0 : index
    %6 = vector.load %arg3[%c0_8, %c0_9] : memref<9x240xf32, #tpu.memory_space<vmem>>, vector<1x238xf32>
    %c1 = arith.constant 1 : index
    %c0_10 = arith.constant 0 : index
    %7 = vector.load %arg3[%c1, %c0_10] : memref<9x240xf32, #tpu.memory_space<vmem>>, vector<1x238xf32>
    %c2 = arith.constant 2 : index
    %c0_11 = arith.constant 0 : index
    %8 = vector.load %arg3[%c2, %c0_11] : memref<9x240xf32, #tpu.memory_space<vmem>>, vector<1x238xf32>
    %c3 = arith.constant 3 : index
    %c0_12 = arith.constant 0 : index
    %9 = vector.load %arg3[%c3, %c0_12] : memref<9x240xf32, #tpu.memory_space<vmem>>, vector<1x238xf32>
    %c4 = arith.constant 4 : index
    %c0_13 = arith.constant 0 : index
    %10 = vector.load %arg3[%c4, %c0_13] : memref<9x240xf32, #tpu.memory_space<vmem>>, vector<1x238xf32>
    %c5 = arith.constant 5 : index
    %c0_14 = arith.constant 0 : index
    %11 = vector.load %arg3[%c5, %c0_14] : memref<9x240xf32, #tpu.memory_space<vmem>>, vector<1x238xf32>
    %c6 = arith.constant 6 : index
    %c0_15 = arith.constant 0 : index
    %12 = vector.load %arg3[%c6, %c0_15] : memref<9x240xf32, #tpu.memory_space<vmem>>, vector<1x238xf32>
    %c7 = arith.constant 7 : index
    %c0_16 = arith.constant 0 : index
    %13 = vector.load %arg3[%c7, %c0_16] : memref<9x240xf32, #tpu.memory_space<vmem>>, vector<1x238xf32>
    %c8 = arith.constant 8 : index
    %c0_17 = arith.constant 0 : index
    %14 = vector.load %arg3[%c8, %c0_17] : memref<9x240xf32, #tpu.memory_space<vmem>>, vector<1x238xf32>
    %15 = vector.extract_strided_slice %4 {offsets = [0, 0], sizes = [32, 240], strides = [1, 1]} : vector<256x240xf32> to vector<32x240xf32>
    %16 = vector.extract_strided_slice %15 {offsets = [0, 0], sizes = [28, 238], strides = [1, 1]} : vector<32x240xf32> to vector<28x238xf32>
    %17 = vector.broadcast %6 : vector<1x238xf32> to vector<28x238xf32>
    %18 = arith.mulf %16, %17 : vector<28x238xf32>
    %19 = vector.extract_strided_slice %15 {offsets = [0, 1], sizes = [28, 238], strides = [1, 1]} : vector<32x240xf32> to vector<28x238xf32>
    %20 = vector.broadcast %7 : vector<1x238xf32> to vector<28x238xf32>
    %21 = arith.mulf %19, %20 : vector<28x238xf32>
    %22 = arith.addf %18, %21 : vector<28x238xf32>
    %23 = vector.extract_strided_slice %15 {offsets = [0, 2], sizes = [28, 238], strides = [1, 1]} : vector<32x240xf32> to vector<28x238xf32>
    %24 = vector.broadcast %8 : vector<1x238xf32> to vector<28x238xf32>
    %25 = arith.mulf %23, %24 : vector<28x238xf32>
    %26 = arith.addf %22, %25 : vector<28x238xf32>
    %27 = vector.extract_strided_slice %15 {offsets = [1, 0], sizes = [28, 238], strides = [1, 1]} : vector<32x240xf32> to vector<28x238xf32>
    %28 = vector.broadcast %9 : vector<1x238xf32> to vector<28x238xf32>
    %29 = arith.mulf %27, %28 : vector<28x238xf32>
    %30 = arith.addf %26, %29 : vector<28x238xf32>
    %31 = vector.extract_strided_slice %15 {offsets = [1, 1], sizes = [28, 238], strides = [1, 1]} : vector<32x240xf32> to vector<28x238xf32>
    %32 = vector.broadcast %10 : vector<1x238xf32> to vector<28x238xf32>
    %33 = arith.mulf %31, %32 : vector<28x238xf32>
    %34 = arith.addf %30, %33 : vector<28x238xf32>
    %35 = vector.extract_strided_slice %15 {offsets = [1, 2], sizes = [28, 238], strides = [1, 1]} : vector<32x240xf32> to vector<28x238xf32>
    %36 = vector.broadcast %11 : vector<1x238xf32> to vector<28x238xf32>
    %37 = arith.mulf %35, %36 : vector<28x238xf32>
    %38 = arith.addf %34, %37 : vector<28x238xf32>
    %39 = vector.extract_strided_slice %15 {offsets = [2, 0], sizes = [28, 238], strides = [1, 1]} : vector<32x240xf32> to vector<28x238xf32>
    %40 = vector.broadcast %12 : vector<1x238xf32> to vector<28x238xf32>
    %41 = arith.mulf %39, %40 : vector<28x238xf32>
    %42 = arith.addf %38, %41 : vector<28x238xf32>
    %43 = vector.extract_strided_slice %15 {offsets = [2, 1], sizes = [28, 238], strides = [1, 1]} : vector<32x240xf32> to vector<28x238xf32>
    %44 = vector.broadcast %13 : vector<1x238xf32> to vector<28x238xf32>
    %45 = arith.mulf %43, %44 : vector<28x238xf32>
    %46 = arith.addf %42, %45 : vector<28x238xf32>
    %47 = vector.extract_strided_slice %15 {offsets = [2, 2], sizes = [28, 238], strides = [1, 1]} : vector<32x240xf32> to vector<28x238xf32>
    %48 = vector.broadcast %14 : vector<1x238xf32> to vector<28x238xf32>
    %49 = arith.mulf %47, %48 : vector<28x238xf32>
    %50 = arith.addf %46, %49 : vector<28x238xf32>
    %51 = vector.broadcast %5 : vector<1x238xf32> to vector<28x238xf32>
    %52 = arith.addf %50, %51 : vector<28x238xf32>
    %cst_18 = arith.constant 0.000000e+00 : f32
    %53 = vector.broadcast %cst_18 : f32 to vector<28x238xf32>
    %54 = arith.maximumf %52, %53 : vector<28x238xf32>
    %55 = vector.extract_strided_slice %54 {offsets = [0, 0], sizes = [27, 238], strides = [1, 1]} : vector<28x238xf32> to vector<27x238xf32>
    %56 = vector.extract_strided_slice %54 {offsets = [1, 0], sizes = [27, 238], strides = [1, 1]} : vector<28x238xf32> to vector<27x238xf32>
    %57 = arith.maximumf %55, %56 : vector<27x238xf32>
    %c0_19 = arith.constant 0 : index
    %c0_20 = arith.constant 0 : index
    %58 = vector.load %arg5[%c0_19, %c0_20] : memref<16x27xf32, #tpu.memory_space<vmem>>, vector<16x27xf32>
    %cst_21 = arith.constant dense<0.000000e+00> : vector<16x238xf32>
    %59 = tpu.matmul %58, %57, %cst_21 {dimension_numbers = #tpu.dot_dimension_numbers<[1], [0], [0], [1], [0, 0, 1, 1], [], []>} : vector<16x27xf32>, vector<27x238xf32>, vector<16x238xf32> -> vector<16x238xf32>
    %60 = vector.extract_strided_slice %59 {offsets = [0, 0], sizes = [16, 237], strides = [1, 1]} : vector<16x238xf32> to vector<16x237xf32>
    %61 = vector.extract_strided_slice %59 {offsets = [0, 1], sizes = [16, 237], strides = [1, 1]} : vector<16x238xf32> to vector<16x237xf32>
    %62 = arith.maximumf %60, %61 : vector<16x237xf32>
    %c0_22 = arith.constant 0 : index
    %c0_23 = arith.constant 0 : index
    %63 = vector.load %arg6[%c0_22, %c0_23] : memref<237x128xf32, #tpu.memory_space<vmem>>, vector<237x128xf32>
    %cst_24 = arith.constant dense<0.000000e+00> : vector<16x128xf32>
    %64 = tpu.matmul %62, %63, %cst_24 {dimension_numbers = #tpu.dot_dimension_numbers<[1], [0], [0], [1], [0, 0, 1, 1], [], []>} : vector<16x237xf32>, vector<237x128xf32>, vector<16x128xf32> -> vector<16x128xf32>
    %c0_25 = arith.constant 0 : index
    %c0_26 = arith.constant 0 : index
    %65 = vector.load %arg20[%c0_25, %c0_26] : memref<128x128xf32, #tpu.memory_space<vmem>>, vector<16x128xf32>
    tpu.vector_store %arg20[%c0_25, %c0_26], %64 {strides = array<i32>} : memref<128x128xf32, #tpu.memory_space<vmem>>, vector<16x128xf32>,
    %66 = vector.extract_strided_slice %4 {offsets = [32, 0], sizes = [32, 240], strides = [1, 1]} : vector<256x240xf32> to vector<32x240xf32>
    %67 = vector.extract_strided_slice %66 {offsets = [0, 0], sizes = [28, 238], strides = [1, 1]} : vector<32x240xf32> to vector<28x238xf32>
    %68 = vector.broadcast %6 : vector<1x238xf32> to vector<28x238xf32>
    %69 = arith.mulf %67, %68 : vector<28x238xf32>
    %70 = vector.extract_strided_slice %66 {offsets = [0, 1], sizes = [28, 238], strides = [1, 1]} : vector<32x240xf32> to vector<28x238xf32>
    %71 = vector.broadcast %7 : vector<1x238xf32> to vector<28x238xf32>
    %72 = arith.mulf %70, %71 : vector<28x238xf32>
    %73 = arith.addf %69, %72 : vector<28x238xf32>
    %74 = vector.extract_strided_slice %66 {offsets = [0, 2], sizes = [28, 238], strides = [1, 1]} : vector<32x240xf32> to vector<28x238xf32>
    %75 = vector.broadcast %8 : vector<1x238xf32> to vector<28x238xf32>
    %76 = arith.mulf %74, %75 : vector<28x238xf32>
    %77 = arith.addf %73, %76 : vector<28x238xf32>
    %78 = vector.extract_strided_slice %66 {offsets = [1, 0], sizes = [28, 238], strides = [1, 1]} : vector<32x240xf32> to vector<28x238xf32>
    %79 = vector.broadcast %9 : vector<1x238xf32> to vector<28x238xf32>
    %80 = arith.mulf %78, %79 : vector<28x238xf32>
    %81 = arith.addf %77, %80 : vector<28x238xf32>
    %82 = vector.extract_strided_slice %66 {offsets = [1, 1], sizes = [28, 238], strides = [1, 1]} : vector<32x240xf32> to vector<28x238xf32>
    %83 = vector.broadcast %10 : vector<1x238xf32> to vector<28x238xf32>
    %84 = arith.mulf %82, %83 : vector<28x238xf32>
    %85 = arith.addf %81, %84 : vector<28x238xf32>
    %86 = vector.extract_strided_slice %66 {offsets = [1, 2], sizes = [28, 238], strides = [1, 1]} : vector<32x240xf32> to vector<28x238xf32>
    %87 = vector.broadcast %11 : vector<1x238xf32> to vector<28x238xf32>
    %88 = arith.mulf %86, %87 : vector<28x238xf32>
    %89 = arith.addf %85, %88 : vector<28x238xf32>
    %90 = vector.extract_strided_slice %66 {offsets = [2, 0], sizes = [28, 238], strides = [1, 1]} : vector<32x240xf32> to vector<28x238xf32>
    %91 = vector.broadcast %12 : vector<1x238xf32> to vector<28x238xf32>
    %92 = arith.mulf %90, %91 : vector<28x238xf32>
    %93 = arith.addf %89, %92 : vector<28x238xf32>
    %94 = vector.extract_strided_slice %66 {offsets = [2, 1], sizes = [28, 238], strides = [1, 1]} : vector<32x240xf32> to vector<28x238xf32>
    %95 = vector.broadcast %13 : vector<1x238xf32> to vector<28x238xf32>
    %96 = arith.mulf %94, %95 : vector<28x238xf32>
    %97 = arith.addf %93, %96 : vector<28x238xf32>
    %98 = vector.extract_strided_slice %66 {offsets = [2, 2], sizes = [28, 238], strides = [1, 1]} : vector<32x240xf32> to vector<28x238xf32>
    %99 = vector.broadcast %14 : vector<1x238xf32> to vector<28x238xf32>
    %100 = arith.mulf %98, %99 : vector<28x238xf32>
    %101 = arith.addf %97, %100 : vector<28x238xf32>
    %102 = vector.broadcast %5 : vector<1x238xf32> to vector<28x238xf32>
    %103 = arith.addf %101, %102 : vector<28x238xf32>
    %cst_27 = arith.constant 0.000000e+00 : f32
    %104 = vector.broadcast %cst_27 : f32 to vector<28x238xf32>
    %105 = arith.maximumf %103, %104 : vector<28x238xf32>
    %106 = vector.extract_strided_slice %105 {offsets = [0, 0], sizes = [27, 238], strides = [1, 1]} : vector<28x238xf32> to vector<27x238xf32>
    %107 = vector.extract_strided_slice %105 {offsets = [1, 0], sizes = [27, 238], strides = [1, 1]} : vector<28x238xf32> to vector<27x238xf32>
    %108 = arith.maximumf %106, %107 : vector<27x238xf32>
    %c0_28 = arith.constant 0 : index
    %c0_29 = arith.constant 0 : index
    %109 = vector.load %arg5[%c0_28, %c0_29] : memref<16x27xf32, #tpu.memory_space<vmem>>, vector<16x27xf32>
    %cst_30 = arith.constant dense<0.000000e+00> : vector<16x238xf32>
    %110 = tpu.matmul %109, %108, %cst_30 {dimension_numbers = #tpu.dot_dimension_numbers<[1], [0], [0], [1], [0, 0, 1, 1], [], []>} : vector<16x27xf32>, vector<27x238xf32>, vector<16x238xf32> -> vector<16x238xf32>
    %111 = vector.extract_strided_slice %110 {offsets = [0, 0], sizes = [16, 237], strides = [1, 1]} : vector<16x238xf32> to vector<16x237xf32>
    %112 = vector.extract_strided_slice %110 {offsets = [0, 1], sizes = [16, 237], strides = [1, 1]} : vector<16x238xf32> to vector<16x237xf32>
    %113 = arith.maximumf %111, %112 : vector<16x237xf32>
    %c0_31 = arith.constant 0 : index
    %c0_32 = arith.constant 0 : index
    %114 = vector.load %arg6[%c0_31, %c0_32] : memref<237x128xf32, #tpu.memory_space<vmem>>, vector<237x128xf32>
    %cst_33 = arith.constant dense<0.000000e+00> : vector<16x128xf32>
    %115 = tpu.matmul %113, %114, %cst_33 {dimension_numbers = #tpu.dot_dimension_numbers<[1], [0], [0], [1], [0, 0, 1, 1], [], []>} : vector<16x237xf32>, vector<237x128xf32>, vector<16x128xf32> -> vector<16x128xf32>
    %c16 = arith.constant 16 : index
    %c0_34 = arith.constant 0 : index
    %116 = vector.load %arg20[%c16, %c0_34] : memref<128x128xf32, #tpu.memory_space<vmem>>, vector<16x128xf32>
    tpu.vector_store %arg20[%c16, %c0_34], %115 {strides = array<i32>} : memref<128x128xf32, #tpu.memory_space<vmem>>, vector<16x128xf32>,
    %117 = vector.extract_strided_slice %4 {offsets = [64, 0], sizes = [32, 240], strides = [1, 1]} : vector<256x240xf32> to vector<32x240xf32>
    %118 = vector.extract_strided_slice %117 {offsets = [0, 0], sizes = [28, 238], strides = [1, 1]} : vector<32x240xf32> to vector<28x238xf32>
    %119 = vector.broadcast %6 : vector<1x238xf32> to vector<28x238xf32>
    %120 = arith.mulf %118, %119 : vector<28x238xf32>
    %121 = vector.extract_strided_slice %117 {offsets = [0, 1], sizes = [28, 238], strides = [1, 1]} : vector<32x240xf32> to vector<28x238xf32>
    %122 = vector.broadcast %7 : vector<1x238xf32> to vector<28x238xf32>
    %123 = arith.mulf %121, %122 : vector<28x238xf32>
    %124 = arith.addf %120, %123 : vector<28x238xf32>
    %125 = vector.extract_strided_slice %117 {offsets = [0, 2], sizes = [28, 238], strides = [1, 1]} : vector<32x240xf32> to vector<28x238xf32>
    %126 = vector.broadcast %8 : vector<1x238xf32> to vector<28x238xf32>
    %127 = arith.mulf %125, %126 : vector<28x238xf32>
    %128 = arith.addf %124, %127 : vector<28x238xf32>
    %129 = vector.extract_strided_slice %117 {offsets = [1, 0], sizes = [28, 238], strides = [1, 1]} : vector<32x240xf32> to vector<28x238xf32>
    %130 = vector.broadcast %9 : vector<1x238xf32> to vector<28x238xf32>
    %131 = arith.mulf %129, %130 : vector<28x238xf32>
    %132 = arith.addf %128, %131 : vector<28x238xf32>
    %133 = vector.extract_strided_slice %117 {offsets = [1, 1], sizes = [28, 238], strides = [1, 1]} : vector<32x240xf32> to vector<28x238xf32>
    %134 = vector.broadcast %10 : vector<1x238xf32> to vector<28x238xf32>
    %135 = arith.mulf %133, %134 : vector<28x238xf32>
    %136 = arith.addf %132, %135 : vector<28x238xf32>
    %137 = vector.extract_strided_slice %117 {offsets = [1, 2], sizes = [28, 238], strides = [1, 1]} : vector<32x240xf32> to vector<28x238xf32>
    %138 = vector.broadcast %11 : vector<1x238xf32> to vector<28x238xf32>
    %139 = arith.mulf %137, %138 : vector<28x238xf32>
    %140 = arith.addf %136, %139 : vector<28x238xf32>
    %141 = vector.extract_strided_slice %117 {offsets = [2, 0], sizes = [28, 238], strides = [1, 1]} : vector<32x240xf32> to vector<28x238xf32>
    %142 = vector.broadcast %12 : vector<1x238xf32> to vector<28x238xf32>
    %143 = arith.mulf %141, %142 : vector<28x238xf32>
    %144 = arith.addf %140, %143 : vector<28x238xf32>
    %145 = vector.extract_strided_slice %117 {offsets = [2, 1], sizes = [28, 238], strides = [1, 1]} : vector<32x240xf32> to vector<28x238xf32>
    %146 = vector.broadcast %13 : vector<1x238xf32> to vector<28x238xf32>
    %147 = arith.mulf %145, %146 : vector<28x238xf32>
    %148 = arith.addf %144, %147 : vector<28x238xf32>
    %149 = vector.extract_strided_slice %117 {offsets = [2, 2], sizes = [28, 238], strides = [1, 1]} : vector<32x240xf32> to vector<28x238xf32>
    %150 = vector.broadcast %14 : vector<1x238xf32> to vector<28x238xf32>
    %151 = arith.mulf %149, %150 : vector<28x238xf32>
    %152 = arith.addf %148, %151 : vector<28x238xf32>
    %153 = vector.broadcast %5 : vector<1x238xf32> to vector<28x238xf32>
    %154 = arith.addf %152, %153 : vector<28x238xf32>
    %cst_35 = arith.constant 0.000000e+00 : f32
    %155 = vector.broadcast %cst_35 : f32 to vector<28x238xf32>
    %156 = arith.maximumf %154, %155 : vector<28x238xf32>
    %157 = vector.extract_strided_slice %156 {offsets = [0, 0], sizes = [27, 238], strides = [1, 1]} : vector<28x238xf32> to vector<27x238xf32>
    %158 = vector.extract_strided_slice %156 {offsets = [1, 0], sizes = [27, 238], strides = [1, 1]} : vector<28x238xf32> to vector<27x238xf32>
    %159 = arith.maximumf %157, %158 : vector<27x238xf32>
    %c0_36 = arith.constant 0 : index
    %c0_37 = arith.constant 0 : index
    %160 = vector.load %arg5[%c0_36, %c0_37] : memref<16x27xf32, #tpu.memory_space<vmem>>, vector<16x27xf32>
    %cst_38 = arith.constant dense<0.000000e+00> : vector<16x238xf32>
    %161 = tpu.matmul %160, %159, %cst_38 {dimension_numbers = #tpu.dot_dimension_numbers<[1], [0], [0], [1], [0, 0, 1, 1], [], []>} : vector<16x27xf32>, vector<27x238xf32>, vector<16x238xf32> -> vector<16x238xf32>
    %162 = vector.extract_strided_slice %161 {offsets = [0, 0], sizes = [16, 237], strides = [1, 1]} : vector<16x238xf32> to vector<16x237xf32>
    %163 = vector.extract_strided_slice %161 {offsets = [0, 1], sizes = [16, 237], strides = [1, 1]} : vector<16x238xf32> to vector<16x237xf32>
    %164 = arith.maximumf %162, %163 : vector<16x237xf32>
    %c0_39 = arith.constant 0 : index
    %c0_40 = arith.constant 0 : index
    %165 = vector.load %arg6[%c0_39, %c0_40] : memref<237x128xf32, #tpu.memory_space<vmem>>, vector<237x128xf32>
    %cst_41 = arith.constant dense<0.000000e+00> : vector<16x128xf32>
    %166 = tpu.matmul %164, %165, %cst_41 {dimension_numbers = #tpu.dot_dimension_numbers<[1], [0], [0], [1], [0, 0, 1, 1], [], []>} : vector<16x237xf32>, vector<237x128xf32>, vector<16x128xf32> -> vector<16x128xf32>
    %c32 = arith.constant 32 : index
    %c0_42 = arith.constant 0 : index
    %167 = vector.load %arg20[%c32, %c0_42] : memref<128x128xf32, #tpu.memory_space<vmem>>, vector<16x128xf32>
    tpu.vector_store %arg20[%c32, %c0_42], %166 {strides = array<i32>} : memref<128x128xf32, #tpu.memory_space<vmem>>, vector<16x128xf32>,
    %168 = vector.extract_strided_slice %4 {offsets = [96, 0], sizes = [32, 240], strides = [1, 1]} : vector<256x240xf32> to vector<32x240xf32>
    %169 = vector.extract_strided_slice %168 {offsets = [0, 0], sizes = [28, 238], strides = [1, 1]} : vector<32x240xf32> to vector<28x238xf32>
    %170 = vector.broadcast %6 : vector<1x238xf32> to vector<28x238xf32>
    %171 = arith.mulf %169, %170 : vector<28x238xf32>
    %172 = vector.extract_strided_slice %168 {offsets = [0, 1], sizes = [28, 238], strides = [1, 1]} : vector<32x240xf32> to vector<28x238xf32>
    %173 = vector.broadcast %7 : vector<1x238xf32> to vector<28x238xf32>
    %174 = arith.mulf %172, %173 : vector<28x238xf32>
    %175 = arith.addf %171, %174 : vector<28x238xf32>
    %176 = vector.extract_strided_slice %168 {offsets = [0, 2], sizes = [28, 238], strides = [1, 1]} : vector<32x240xf32> to vector<28x238xf32>
    %177 = vector.broadcast %8 : vector<1x238xf32> to vector<28x238xf32>
    %178 = arith.mulf %176, %177 : vector<28x238xf32>
    %179 = arith.addf %175, %178 : vector<28x238xf32>
    %180 = vector.extract_strided_slice %168 {offsets = [1, 0], sizes = [28, 238], strides = [1, 1]} : vector<32x240xf32> to vector<28x238xf32>
    %181 = vector.broadcast %9 : vector<1x238xf32> to vector<28x238xf32>
    %182 = arith.mulf %180, %181 : vector<28x238xf32>
    %183 = arith.addf %179, %182 : vector<28x238xf32>
    %184 = vector.extract_strided_slice %168 {offsets = [1, 1], sizes = [28, 238], strides = [1, 1]} : vector<32x240xf32> to vector<28x238xf32>
    %185 = vector.broadcast %10 : vector<1x238xf32> to vector<28x238xf32>
    %186 = arith.mulf %184, %185 : vector<28x238xf32>
    %187 = arith.addf %183, %186 : vector<28x238xf32>
    %188 = vector.extract_strided_slice %168 {offsets = [1, 2], sizes = [28, 238], strides = [1, 1]} : vector<32x240xf32> to vector<28x238xf32>
    %189 = vector.broadcast %11 : vector<1x238xf32> to vector<28x238xf32>
    %190 = arith.mulf %188, %189 : vector<28x238xf32>
    %191 = arith.addf %187, %190 : vector<28x238xf32>
    %192 = vector.extract_strided_slice %168 {offsets = [2, 0], sizes = [28, 238], strides = [1, 1]} : vector<32x240xf32> to vector<28x238xf32>
    %193 = vector.broadcast %12 : vector<1x238xf32> to vector<28x238xf32>
    %194 = arith.mulf %192, %193 : vector<28x238xf32>
    %195 = arith.addf %191, %194 : vector<28x238xf32>
    %196 = vector.extract_strided_slice %168 {offsets = [2, 1], sizes = [28, 238], strides = [1, 1]} : vector<32x240xf32> to vector<28x238xf32>
    %197 = vector.broadcast %13 : vector<1x238xf32> to vector<28x238xf32>
    %198 = arith.mulf %196, %197 : vector<28x238xf32>
    %199 = arith.addf %195, %198 : vector<28x238xf32>
    %200 = vector.extract_strided_slice %168 {offsets = [2, 2], sizes = [28, 238], strides = [1, 1]} : vector<32x240xf32> to vector<28x238xf32>
    %201 = vector.broadcast %14 : vector<1x238xf32> to vector<28x238xf32>
    %202 = arith.mulf %200, %201 : vector<28x238xf32>
    %203 = arith.addf %199, %202 : vector<28x238xf32>
    %204 = vector.broadcast %5 : vector<1x238xf32> to vector<28x238xf32>
    %205 = arith.addf %203, %204 : vector<28x238xf32>
    %cst_43 = arith.constant 0.000000e+00 : f32
    %206 = vector.broadcast %cst_43 : f32 to vector<28x238xf32>
    %207 = arith.maximumf %205, %206 : vector<28x238xf32>
    %208 = vector.extract_strided_slice %207 {offsets = [0, 0], sizes = [27, 238], strides = [1, 1]} : vector<28x238xf32> to vector<27x238xf32>
    %209 = vector.extract_strided_slice %207 {offsets = [1, 0], sizes = [27, 238], strides = [1, 1]} : vector<28x238xf32> to vector<27x238xf32>
    %210 = arith.maximumf %208, %209 : vector<27x238xf32>
    %c0_44 = arith.constant 0 : index
    %c0_45 = arith.constant 0 : index
    %211 = vector.load %arg5[%c0_44, %c0_45] : memref<16x27xf32, #tpu.memory_space<vmem>>, vector<16x27xf32>
    %cst_46 = arith.constant dense<0.000000e+00> : vector<16x238xf32>
    %212 = tpu.matmul %211, %210, %cst_46 {dimension_numbers = #tpu.dot_dimension_numbers<[1], [0], [0], [1], [0, 0, 1, 1], [], []>} : vector<16x27xf32>, vector<27x238xf32>, vector<16x238xf32> -> vector<16x238xf32>
    %213 = vector.extract_strided_slice %212 {offsets = [0, 0], sizes = [16, 237], strides = [1, 1]} : vector<16x238xf32> to vector<16x237xf32>
    %214 = vector.extract_strided_slice %212 {offsets = [0, 1], sizes = [16, 237], strides = [1, 1]} : vector<16x238xf32> to vector<16x237xf32>
    %215 = arith.maximumf %213, %214 : vector<16x237xf32>
    %c0_47 = arith.constant 0 : index
    %c0_48 = arith.constant 0 : index
    %216 = vector.load %arg6[%c0_47, %c0_48] : memref<237x128xf32, #tpu.memory_space<vmem>>, vector<237x128xf32>
    %cst_49 = arith.constant dense<0.000000e+00> : vector<16x128xf32>
    %217 = tpu.matmul %215, %216, %cst_49 {dimension_numbers = #tpu.dot_dimension_numbers<[1], [0], [0], [1], [0, 0, 1, 1], [], []>} : vector<16x237xf32>, vector<237x128xf32>, vector<16x128xf32> -> vector<16x128xf32>
    %c48 = arith.constant 48 : index
    %c0_50 = arith.constant 0 : index
    %218 = vector.load %arg20[%c48, %c0_50] : memref<128x128xf32, #tpu.memory_space<vmem>>, vector<16x128xf32>
    tpu.vector_store %arg20[%c48, %c0_50], %217 {strides = array<i32>} : memref<128x128xf32, #tpu.memory_space<vmem>>, vector<16x128xf32>,
    %219 = vector.extract_strided_slice %4 {offsets = [128, 0], sizes = [32, 240], strides = [1, 1]} : vector<256x240xf32> to vector<32x240xf32>
    %220 = vector.extract_strided_slice %219 {offsets = [0, 0], sizes = [28, 238], strides = [1, 1]} : vector<32x240xf32> to vector<28x238xf32>
    %221 = vector.broadcast %6 : vector<1x238xf32> to vector<28x238xf32>
    %222 = arith.mulf %220, %221 : vector<28x238xf32>
    %223 = vector.extract_strided_slice %219 {offsets = [0, 1], sizes = [28, 238], strides = [1, 1]} : vector<32x240xf32> to vector<28x238xf32>
    %224 = vector.broadcast %7 : vector<1x238xf32> to vector<28x238xf32>
    %225 = arith.mulf %223, %224 : vector<28x238xf32>
    %226 = arith.addf %222, %225 : vector<28x238xf32>
    %227 = vector.extract_strided_slice %219 {offsets = [0, 2], sizes = [28, 238], strides = [1, 1]} : vector<32x240xf32> to vector<28x238xf32>
    %228 = vector.broadcast %8 : vector<1x238xf32> to vector<28x238xf32>
    %229 = arith.mulf %227, %228 : vector<28x238xf32>
    %230 = arith.addf %226, %229 : vector<28x238xf32>
    %231 = vector.extract_strided_slice %219 {offsets = [1, 0], sizes = [28, 238], strides = [1, 1]} : vector<32x240xf32> to vector<28x238xf32>
    %232 = vector.broadcast %9 : vector<1x238xf32> to vector<28x238xf32>
    %233 = arith.mulf %231, %232 : vector<28x238xf32>
    %234 = arith.addf %230, %233 : vector<28x238xf32>
    %235 = vector.extract_strided_slice %219 {offsets = [1, 1], sizes = [28, 238], strides = [1, 1]} : vector<32x240xf32> to vector<28x238xf32>
    %236 = vector.broadcast %10 : vector<1x238xf32> to vector<28x238xf32>
    %237 = arith.mulf %235, %236 : vector<28x238xf32>
    %238 = arith.addf %234, %237 : vector<28x238xf32>
    %239 = vector.extract_strided_slice %219 {offsets = [1, 2], sizes = [28, 238], strides = [1, 1]} : vector<32x240xf32> to vector<28x238xf32>
    %240 = vector.broadcast %11 : vector<1x238xf32> to vector<28x238xf32>
    %241 = arith.mulf %239, %240 : vector<28x238xf32>
    %242 = arith.addf %238, %241 : vector<28x238xf32>
    %243 = vector.extract_strided_slice %219 {offsets = [2, 0], sizes = [28, 238], strides = [1, 1]} : vector<32x240xf32> to vector<28x238xf32>
    %244 = vector.broadcast %12 : vector<1x238xf32> to vector<28x238xf32>
    %245 = arith.mulf %243, %244 : vector<28x238xf32>
    %246 = arith.addf %242, %245 : vector<28x238xf32>
    %247 = vector.extract_strided_slice %219 {offsets = [2, 1], sizes = [28, 238], strides = [1, 1]} : vector<32x240xf32> to vector<28x238xf32>
    %248 = vector.broadcast %13 : vector<1x238xf32> to vector<28x238xf32>
    %249 = arith.mulf %247, %248 : vector<28x238xf32>
    %250 = arith.addf %246, %249 : vector<28x238xf32>
    %251 = vector.extract_strided_slice %219 {offsets = [2, 2], sizes = [28, 238], strides = [1, 1]} : vector<32x240xf32> to vector<28x238xf32>
    %252 = vector.broadcast %14 : vector<1x238xf32> to vector<28x238xf32>
    %253 = arith.mulf %251, %252 : vector<28x238xf32>
    %254 = arith.addf %250, %253 : vector<28x238xf32>
    %255 = vector.broadcast %5 : vector<1x238xf32> to vector<28x238xf32>
    %256 = arith.addf %254, %255 : vector<28x238xf32>
    %cst_51 = arith.constant 0.000000e+00 : f32
    %257 = vector.broadcast %cst_51 : f32 to vector<28x238xf32>
    %258 = arith.maximumf %256, %257 : vector<28x238xf32>
    %259 = vector.extract_strided_slice %258 {offsets = [0, 0], sizes = [27, 238], strides = [1, 1]} : vector<28x238xf32> to vector<27x238xf32>
    %260 = vector.extract_strided_slice %258 {offsets = [1, 0], sizes = [27, 238], strides = [1, 1]} : vector<28x238xf32> to vector<27x238xf32>
    %261 = arith.maximumf %259, %260 : vector<27x238xf32>
    %c0_52 = arith.constant 0 : index
    %c0_53 = arith.constant 0 : index
    %262 = vector.load %arg5[%c0_52, %c0_53] : memref<16x27xf32, #tpu.memory_space<vmem>>, vector<16x27xf32>
    %cst_54 = arith.constant dense<0.000000e+00> : vector<16x238xf32>
    %263 = tpu.matmul %262, %261, %cst_54 {dimension_numbers = #tpu.dot_dimension_numbers<[1], [0], [0], [1], [0, 0, 1, 1], [], []>} : vector<16x27xf32>, vector<27x238xf32>, vector<16x238xf32> -> vector<16x238xf32>
    %264 = vector.extract_strided_slice %263 {offsets = [0, 0], sizes = [16, 237], strides = [1, 1]} : vector<16x238xf32> to vector<16x237xf32>
    %265 = vector.extract_strided_slice %263 {offsets = [0, 1], sizes = [16, 237], strides = [1, 1]} : vector<16x238xf32> to vector<16x237xf32>
    %266 = arith.maximumf %264, %265 : vector<16x237xf32>
    %c0_55 = arith.constant 0 : index
    %c0_56 = arith.constant 0 : index
    %267 = vector.load %arg6[%c0_55, %c0_56] : memref<237x128xf32, #tpu.memory_space<vmem>>, vector<237x128xf32>
    %cst_57 = arith.constant dense<0.000000e+00> : vector<16x128xf32>
    %268 = tpu.matmul %266, %267, %cst_57 {dimension_numbers = #tpu.dot_dimension_numbers<[1], [0], [0], [1], [0, 0, 1, 1], [], []>} : vector<16x237xf32>, vector<237x128xf32>, vector<16x128xf32> -> vector<16x128xf32>
    %c64 = arith.constant 64 : index
    %c0_58 = arith.constant 0 : index
    %269 = vector.load %arg20[%c64, %c0_58] : memref<128x128xf32, #tpu.memory_space<vmem>>, vector<16x128xf32>
    tpu.vector_store %arg20[%c64, %c0_58], %268 {strides = array<i32>} : memref<128x128xf32, #tpu.memory_space<vmem>>, vector<16x128xf32>,
    %270 = vector.extract_strided_slice %4 {offsets = [160, 0], sizes = [32, 240], strides = [1, 1]} : vector<256x240xf32> to vector<32x240xf32>
    %271 = vector.extract_strided_slice %270 {offsets = [0, 0], sizes = [28, 238], strides = [1, 1]} : vector<32x240xf32> to vector<28x238xf32>
    %272 = vector.broadcast %6 : vector<1x238xf32> to vector<28x238xf32>
    %273 = arith.mulf %271, %272 : vector<28x238xf32>
    %274 = vector.extract_strided_slice %270 {offsets = [0, 1], sizes = [28, 238], strides = [1, 1]} : vector<32x240xf32> to vector<28x238xf32>
    %275 = vector.broadcast %7 : vector<1x238xf32> to vector<28x238xf32>
    %276 = arith.mulf %274, %275 : vector<28x238xf32>
    %277 = arith.addf %273, %276 : vector<28x238xf32>
    %278 = vector.extract_strided_slice %270 {offsets = [0, 2], sizes = [28, 238], strides = [1, 1]} : vector<32x240xf32> to vector<28x238xf32>
    %279 = vector.broadcast %8 : vector<1x238xf32> to vector<28x238xf32>
    %280 = arith.mulf %278, %279 : vector<28x238xf32>
    %281 = arith.addf %277, %280 : vector<28x238xf32>
    %282 = vector.extract_strided_slice %270 {offsets = [1, 0], sizes = [28, 238], strides = [1, 1]} : vector<32x240xf32> to vector<28x238xf32>
    %283 = vector.broadcast %9 : vector<1x238xf32> to vector<28x238xf32>
    %284 = arith.mulf %282, %283 : vector<28x238xf32>
    %285 = arith.addf %281, %284 : vector<28x238xf32>
    %286 = vector.extract_strided_slice %270 {offsets = [1, 1], sizes = [28, 238], strides = [1, 1]} : vector<32x240xf32> to vector<28x238xf32>
    %287 = vector.broadcast %10 : vector<1x238xf32> to vector<28x238xf32>
    %288 = arith.mulf %286, %287 : vector<28x238xf32>
    %289 = arith.addf %285, %288 : vector<28x238xf32>
    %290 = vector.extract_strided_slice %270 {offsets = [1, 2], sizes = [28, 238], strides = [1, 1]} : vector<32x240xf32> to vector<28x238xf32>
    %291 = vector.broadcast %11 : vector<1x238xf32> to vector<28x238xf32>
    %292 = arith.mulf %290, %291 : vector<28x238xf32>
    %293 = arith.addf %289, %292 : vector<28x238xf32>
    %294 = vector.extract_strided_slice %270 {offsets = [2, 0], sizes = [28, 238], strides = [1, 1]} : vector<32x240xf32> to vector<28x238xf32>
    %295 = vector.broadcast %12 : vector<1x238xf32> to vector<28x238xf32>
    %296 = arith.mulf %294, %295 : vector<28x238xf32>
    %297 = arith.addf %293, %296 : vector<28x238xf32>
    %298 = vector.extract_strided_slice %270 {offsets = [2, 1], sizes = [28, 238], strides = [1, 1]} : vector<32x240xf32> to vector<28x238xf32>
    %299 = vector.broadcast %13 : vector<1x238xf32> to vector<28x238xf32>
    %300 = arith.mulf %298, %299 : vector<28x238xf32>
    %301 = arith.addf %297, %300 : vector<28x238xf32>
    %302 = vector.extract_strided_slice %270 {offsets = [2, 2], sizes = [28, 238], strides = [1, 1]} : vector<32x240xf32> to vector<28x238xf32>
    %303 = vector.broadcast %14 : vector<1x238xf32> to vector<28x238xf32>
    %304 = arith.mulf %302, %303 : vector<28x238xf32>
    %305 = arith.addf %301, %304 : vector<28x238xf32>
    %306 = vector.broadcast %5 : vector<1x238xf32> to vector<28x238xf32>
    %307 = arith.addf %305, %306 : vector<28x238xf32>
    %cst_59 = arith.constant 0.000000e+00 : f32
    %308 = vector.broadcast %cst_59 : f32 to vector<28x238xf32>
    %309 = arith.maximumf %307, %308 : vector<28x238xf32>
    %310 = vector.extract_strided_slice %309 {offsets = [0, 0], sizes = [27, 238], strides = [1, 1]} : vector<28x238xf32> to vector<27x238xf32>
    %311 = vector.extract_strided_slice %309 {offsets = [1, 0], sizes = [27, 238], strides = [1, 1]} : vector<28x238xf32> to vector<27x238xf32>
    %312 = arith.maximumf %310, %311 : vector<27x238xf32>
    %c0_60 = arith.constant 0 : index
    %c0_61 = arith.constant 0 : index
    %313 = vector.load %arg5[%c0_60, %c0_61] : memref<16x27xf32, #tpu.memory_space<vmem>>, vector<16x27xf32>
    %cst_62 = arith.constant dense<0.000000e+00> : vector<16x238xf32>
    %314 = tpu.matmul %313, %312, %cst_62 {dimension_numbers = #tpu.dot_dimension_numbers<[1], [0], [0], [1], [0, 0, 1, 1], [], []>} : vector<16x27xf32>, vector<27x238xf32>, vector<16x238xf32> -> vector<16x238xf32>
    %315 = vector.extract_strided_slice %314 {offsets = [0, 0], sizes = [16, 237], strides = [1, 1]} : vector<16x238xf32> to vector<16x237xf32>
    %316 = vector.extract_strided_slice %314 {offsets = [0, 1], sizes = [16, 237], strides = [1, 1]} : vector<16x238xf32> to vector<16x237xf32>
    %317 = arith.maximumf %315, %316 : vector<16x237xf32>
    %c0_63 = arith.constant 0 : index
    %c0_64 = arith.constant 0 : index
    %318 = vector.load %arg6[%c0_63, %c0_64] : memref<237x128xf32, #tpu.memory_space<vmem>>, vector<237x128xf32>
    %cst_65 = arith.constant dense<0.000000e+00> : vector<16x128xf32>
    %319 = tpu.matmul %317, %318, %cst_65 {dimension_numbers = #tpu.dot_dimension_numbers<[1], [0], [0], [1], [0, 0, 1, 1], [], []>} : vector<16x237xf32>, vector<237x128xf32>, vector<16x128xf32> -> vector<16x128xf32>
    %c80 = arith.constant 80 : index
    %c0_66 = arith.constant 0 : index
    %320 = vector.load %arg20[%c80, %c0_66] : memref<128x128xf32, #tpu.memory_space<vmem>>, vector<16x128xf32>
    tpu.vector_store %arg20[%c80, %c0_66], %319 {strides = array<i32>} : memref<128x128xf32, #tpu.memory_space<vmem>>, vector<16x128xf32>,
    %321 = vector.extract_strided_slice %4 {offsets = [192, 0], sizes = [32, 240], strides = [1, 1]} : vector<256x240xf32> to vector<32x240xf32>
    %322 = vector.extract_strided_slice %321 {offsets = [0, 0], sizes = [28, 238], strides = [1, 1]} : vector<32x240xf32> to vector<28x238xf32>
    %323 = vector.broadcast %6 : vector<1x238xf32> to vector<28x238xf32>
    %324 = arith.mulf %322, %323 : vector<28x238xf32>
    %325 = vector.extract_strided_slice %321 {offsets = [0, 1], sizes = [28, 238], strides = [1, 1]} : vector<32x240xf32> to vector<28x238xf32>
    %326 = vector.broadcast %7 : vector<1x238xf32> to vector<28x238xf32>
    %327 = arith.mulf %325, %326 : vector<28x238xf32>
    %328 = arith.addf %324, %327 : vector<28x238xf32>
    %329 = vector.extract_strided_slice %321 {offsets = [0, 2], sizes = [28, 238], strides = [1, 1]} : vector<32x240xf32> to vector<28x238xf32>
    %330 = vector.broadcast %8 : vector<1x238xf32> to vector<28x238xf32>
    %331 = arith.mulf %329, %330 : vector<28x238xf32>
    %332 = arith.addf %328, %331 : vector<28x238xf32>
    %333 = vector.extract_strided_slice %321 {offsets = [1, 0], sizes = [28, 238], strides = [1, 1]} : vector<32x240xf32> to vector<28x238xf32>
    %334 = vector.broadcast %9 : vector<1x238xf32> to vector<28x238xf32>
    %335 = arith.mulf %333, %334 : vector<28x238xf32>
    %336 = arith.addf %332, %335 : vector<28x238xf32>
    %337 = vector.extract_strided_slice %321 {offsets = [1, 1], sizes = [28, 238], strides = [1, 1]} : vector<32x240xf32> to vector<28x238xf32>
    %338 = vector.broadcast %10 : vector<1x238xf32> to vector<28x238xf32>
    %339 = arith.mulf %337, %338 : vector<28x238xf32>
    %340 = arith.addf %336, %339 : vector<28x238xf32>
    %341 = vector.extract_strided_slice %321 {offsets = [1, 2], sizes = [28, 238], strides = [1, 1]} : vector<32x240xf32> to vector<28x238xf32>
    %342 = vector.broadcast %11 : vector<1x238xf32> to vector<28x238xf32>
    %343 = arith.mulf %341, %342 : vector<28x238xf32>
    %344 = arith.addf %340, %343 : vector<28x238xf32>
    %345 = vector.extract_strided_slice %321 {offsets = [2, 0], sizes = [28, 238], strides = [1, 1]} : vector<32x240xf32> to vector<28x238xf32>
    %346 = vector.broadcast %12 : vector<1x238xf32> to vector<28x238xf32>
    %347 = arith.mulf %345, %346 : vector<28x238xf32>
    %348 = arith.addf %344, %347 : vector<28x238xf32>
    %349 = vector.extract_strided_slice %321 {offsets = [2, 1], sizes = [28, 238], strides = [1, 1]} : vector<32x240xf32> to vector<28x238xf32>
    %350 = vector.broadcast %13 : vector<1x238xf32> to vector<28x238xf32>
    %351 = arith.mulf %349, %350 : vector<28x238xf32>
    %352 = arith.addf %348, %351 : vector<28x238xf32>
    %353 = vector.extract_strided_slice %321 {offsets = [2, 2], sizes = [28, 238], strides = [1, 1]} : vector<32x240xf32> to vector<28x238xf32>
    %354 = vector.broadcast %14 : vector<1x238xf32> to vector<28x238xf32>
    %355 = arith.mulf %353, %354 : vector<28x238xf32>
    %356 = arith.addf %352, %355 : vector<28x238xf32>
    %357 = vector.broadcast %5 : vector<1x238xf32> to vector<28x238xf32>
    %358 = arith.addf %356, %357 : vector<28x238xf32>
    %cst_67 = arith.constant 0.000000e+00 : f32
    %359 = vector.broadcast %cst_67 : f32 to vector<28x238xf32>
    %360 = arith.maximumf %358, %359 : vector<28x238xf32>
    %361 = vector.extract_strided_slice %360 {offsets = [0, 0], sizes = [27, 238], strides = [1, 1]} : vector<28x238xf32> to vector<27x238xf32>
    %362 = vector.extract_strided_slice %360 {offsets = [1, 0], sizes = [27, 238], strides = [1, 1]} : vector<28x238xf32> to vector<27x238xf32>
    %363 = arith.maximumf %361, %362 : vector<27x238xf32>
    %c0_68 = arith.constant 0 : index
    %c0_69 = arith.constant 0 : index
    %364 = vector.load %arg5[%c0_68, %c0_69] : memref<16x27xf32, #tpu.memory_space<vmem>>, vector<16x27xf32>
    %cst_70 = arith.constant dense<0.000000e+00> : vector<16x238xf32>
    %365 = tpu.matmul %364, %363, %cst_70 {dimension_numbers = #tpu.dot_dimension_numbers<[1], [0], [0], [1], [0, 0, 1, 1], [], []>} : vector<16x27xf32>, vector<27x238xf32>, vector<16x238xf32> -> vector<16x238xf32>
    %366 = vector.extract_strided_slice %365 {offsets = [0, 0], sizes = [16, 237], strides = [1, 1]} : vector<16x238xf32> to vector<16x237xf32>
    %367 = vector.extract_strided_slice %365 {offsets = [0, 1], sizes = [16, 237], strides = [1, 1]} : vector<16x238xf32> to vector<16x237xf32>
    %368 = arith.maximumf %366, %367 : vector<16x237xf32>
    %c0_71 = arith.constant 0 : index
    %c0_72 = arith.constant 0 : index
    %369 = vector.load %arg6[%c0_71, %c0_72] : memref<237x128xf32, #tpu.memory_space<vmem>>, vector<237x128xf32>
    %cst_73 = arith.constant dense<0.000000e+00> : vector<16x128xf32>
    %370 = tpu.matmul %368, %369, %cst_73 {dimension_numbers = #tpu.dot_dimension_numbers<[1], [0], [0], [1], [0, 0, 1, 1], [], []>} : vector<16x237xf32>, vector<237x128xf32>, vector<16x128xf32> -> vector<16x128xf32>
    %c96 = arith.constant 96 : index
    %c0_74 = arith.constant 0 : index
    %371 = vector.load %arg20[%c96, %c0_74] : memref<128x128xf32, #tpu.memory_space<vmem>>, vector<16x128xf32>
    tpu.vector_store %arg20[%c96, %c0_74], %370 {strides = array<i32>} : memref<128x128xf32, #tpu.memory_space<vmem>>, vector<16x128xf32>,
    %372 = vector.extract_strided_slice %4 {offsets = [224, 0], sizes = [32, 240], strides = [1, 1]} : vector<256x240xf32> to vector<32x240xf32>
    %373 = vector.extract_strided_slice %372 {offsets = [0, 0], sizes = [28, 238], strides = [1, 1]} : vector<32x240xf32> to vector<28x238xf32>
    %374 = vector.broadcast %6 : vector<1x238xf32> to vector<28x238xf32>
    %375 = arith.mulf %373, %374 : vector<28x238xf32>
    %376 = vector.extract_strided_slice %372 {offsets = [0, 1], sizes = [28, 238], strides = [1, 1]} : vector<32x240xf32> to vector<28x238xf32>
    %377 = vector.broadcast %7 : vector<1x238xf32> to vector<28x238xf32>
    %378 = arith.mulf %376, %377 : vector<28x238xf32>
    %379 = arith.addf %375, %378 : vector<28x238xf32>
    %380 = vector.extract_strided_slice %372 {offsets = [0, 2], sizes = [28, 238], strides = [1, 1]} : vector<32x240xf32> to vector<28x238xf32>
    %381 = vector.broadcast %8 : vector<1x238xf32> to vector<28x238xf32>
    %382 = arith.mulf %380, %381 : vector<28x238xf32>
    %383 = arith.addf %379, %382 : vector<28x238xf32>
    %384 = vector.extract_strided_slice %372 {offsets = [1, 0], sizes = [28, 238], strides = [1, 1]} : vector<32x240xf32> to vector<28x238xf32>
    %385 = vector.broadcast %9 : vector<1x238xf32> to vector<28x238xf32>
    %386 = arith.mulf %384, %385 : vector<28x238xf32>
    %387 = arith.addf %383, %386 : vector<28x238xf32>
    %388 = vector.extract_strided_slice %372 {offsets = [1, 1], sizes = [28, 238], strides = [1, 1]} : vector<32x240xf32> to vector<28x238xf32>
    %389 = vector.broadcast %10 : vector<1x238xf32> to vector<28x238xf32>
    %390 = arith.mulf %388, %389 : vector<28x238xf32>
    %391 = arith.addf %387, %390 : vector<28x238xf32>
    %392 = vector.extract_strided_slice %372 {offsets = [1, 2], sizes = [28, 238], strides = [1, 1]} : vector<32x240xf32> to vector<28x238xf32>
    %393 = vector.broadcast %11 : vector<1x238xf32> to vector<28x238xf32>
    %394 = arith.mulf %392, %393 : vector<28x238xf32>
    %395 = arith.addf %391, %394 : vector<28x238xf32>
    %396 = vector.extract_strided_slice %372 {offsets = [2, 0], sizes = [28, 238], strides = [1, 1]} : vector<32x240xf32> to vector<28x238xf32>
    %397 = vector.broadcast %12 : vector<1x238xf32> to vector<28x238xf32>
    %398 = arith.mulf %396, %397 : vector<28x238xf32>
    %399 = arith.addf %395, %398 : vector<28x238xf32>
    %400 = vector.extract_strided_slice %372 {offsets = [2, 1], sizes = [28, 238], strides = [1, 1]} : vector<32x240xf32> to vector<28x238xf32>
    %401 = vector.broadcast %13 : vector<1x238xf32> to vector<28x238xf32>
    %402 = arith.mulf %400, %401 : vector<28x238xf32>
    %403 = arith.addf %399, %402 : vector<28x238xf32>
    %404 = vector.extract_strided_slice %372 {offsets = [2, 2], sizes = [28, 238], strides = [1, 1]} : vector<32x240xf32> to vector<28x238xf32>
    %405 = vector.broadcast %14 : vector<1x238xf32> to vector<28x238xf32>
    %406 = arith.mulf %404, %405 : vector<28x238xf32>
    %407 = arith.addf %403, %406 : vector<28x238xf32>
    %408 = vector.broadcast %5 : vector<1x238xf32> to vector<28x238xf32>
    %409 = arith.addf %407, %408 : vector<28x238xf32>
    %cst_75 = arith.constant 0.000000e+00 : f32
    %410 = vector.broadcast %cst_75 : f32 to vector<28x238xf32>
    %411 = arith.maximumf %409, %410 : vector<28x238xf32>
    %412 = vector.extract_strided_slice %411 {offsets = [0, 0], sizes = [27, 238], strides = [1, 1]} : vector<28x238xf32> to vector<27x238xf32>
    %413 = vector.extract_strided_slice %411 {offsets = [1, 0], sizes = [27, 238], strides = [1, 1]} : vector<28x238xf32> to vector<27x238xf32>
    %414 = arith.maximumf %412, %413 : vector<27x238xf32>
    %c0_76 = arith.constant 0 : index
    %c0_77 = arith.constant 0 : index
    %415 = vector.load %arg5[%c0_76, %c0_77] : memref<16x27xf32, #tpu.memory_space<vmem>>, vector<16x27xf32>
    %cst_78 = arith.constant dense<0.000000e+00> : vector<16x238xf32>
    %416 = tpu.matmul %415, %414, %cst_78 {dimension_numbers = #tpu.dot_dimension_numbers<[1], [0], [0], [1], [0, 0, 1, 1], [], []>} : vector<16x27xf32>, vector<27x238xf32>, vector<16x238xf32> -> vector<16x238xf32>
    %417 = vector.extract_strided_slice %416 {offsets = [0, 0], sizes = [16, 237], strides = [1, 1]} : vector<16x238xf32> to vector<16x237xf32>
    %418 = vector.extract_strided_slice %416 {offsets = [0, 1], sizes = [16, 237], strides = [1, 1]} : vector<16x238xf32> to vector<16x237xf32>
    %419 = arith.maximumf %417, %418 : vector<16x237xf32>
    %c0_79 = arith.constant 0 : index
    %c0_80 = arith.constant 0 : index
    %420 = vector.load %arg6[%c0_79, %c0_80] : memref<237x128xf32, #tpu.memory_space<vmem>>, vector<237x128xf32>
    %cst_81 = arith.constant dense<0.000000e+00> : vector<16x128xf32>
    %421 = tpu.matmul %419, %420, %cst_81 {dimension_numbers = #tpu.dot_dimension_numbers<[1], [0], [0], [1], [0, 0, 1, 1], [], []>} : vector<16x237xf32>, vector<237x128xf32>, vector<16x128xf32> -> vector<16x128xf32>
    %c112 = arith.constant 112 : index
    %c0_82 = arith.constant 0 : index
    %422 = vector.load %arg20[%c112, %c0_82] : memref<128x128xf32, #tpu.memory_space<vmem>>, vector<16x128xf32>
    tpu.vector_store %arg20[%c112, %c0_82], %421 {strides = array<i32>} : memref<128x128xf32, #tpu.memory_space<vmem>>, vector<16x128xf32>,
    %c0_83 = arith.constant 0 : index
    %c0_84 = arith.constant 0 : index
    %423 = vector.load %arg20[%c0_83, %c0_84] : memref<128x128xf32, #tpu.memory_space<vmem>>, vector<128x128xf32>
    %c0_85 = arith.constant 0 : index
    %c0_86 = arith.constant 0 : index
    %424 = vector.load %arg7[%c0_85, %c0_86] : memref<112x128xf32, #tpu.memory_space<vmem>>, vector<8x128xf32>
    %cst_87 = arith.constant dense<0.000000e+00> : vector<8x128xf32>
    %425 = tpu.matmul %424, %423, %cst_87 {dimension_numbers = #tpu.dot_dimension_numbers<[1], [0], [0], [1], [0, 0, 1, 1], [], []>} : vector<8x128xf32>, vector<128x128xf32>, vector<8x128xf32> -> vector<8x128xf32>
    %c0_88 = arith.constant 0 : index
    %c0_89 = arith.constant 0 : index
    %426 = vector.load %arg21[%c0_88, %c0_89] : memref<8x1792xf32, #tpu.memory_space<vmem>>, vector<8x128xf32>
    tpu.vector_store %arg21[%c0_88, %c0_89], %425 {strides = array<i32>} : memref<8x1792xf32, #tpu.memory_space<vmem>>, vector<8x128xf32>,
    %c8_90 = arith.constant 8 : index
    %c0_91 = arith.constant 0 : index
    %427 = vector.load %arg7[%c8_90, %c0_91] : memref<112x128xf32, #tpu.memory_space<vmem>>, vector<8x128xf32>
    %cst_92 = arith.constant dense<0.000000e+00> : vector<8x128xf32>
    %428 = tpu.matmul %427, %423, %cst_92 {dimension_numbers = #tpu.dot_dimension_numbers<[1], [0], [0], [1], [0, 0, 1, 1], [], []>} : vector<8x128xf32>, vector<128x128xf32>, vector<8x128xf32> -> vector<8x128xf32>
    %c0_93 = arith.constant 0 : index
    %c128 = arith.constant 128 : index
    %429 = vector.load %arg21[%c0_93, %c128] : memref<8x1792xf32, #tpu.memory_space<vmem>>, vector<8x128xf32>
    tpu.vector_store %arg21[%c0_93, %c128], %428 {strides = array<i32>} : memref<8x1792xf32, #tpu.memory_space<vmem>>, vector<8x128xf32>,
    %c16_94 = arith.constant 16 : index
    %c0_95 = arith.constant 0 : index
    %430 = vector.load %arg7[%c16_94, %c0_95] : memref<112x128xf32, #tpu.memory_space<vmem>>, vector<8x128xf32>
    %cst_96 = arith.constant dense<0.000000e+00> : vector<8x128xf32>
    %431 = tpu.matmul %430, %423, %cst_96 {dimension_numbers = #tpu.dot_dimension_numbers<[1], [0], [0], [1], [0, 0, 1, 1], [], []>} : vector<8x128xf32>, vector<128x128xf32>, vector<8x128xf32> -> vector<8x128xf32>
    %c0_97 = arith.constant 0 : index
    %c256 = arith.constant 256 : index
    %432 = vector.load %arg21[%c0_97, %c256] : memref<8x1792xf32, #tpu.memory_space<vmem>>, vector<8x128xf32>
    tpu.vector_store %arg21[%c0_97, %c256], %431 {strides = array<i32>} : memref<8x1792xf32, #tpu.memory_space<vmem>>, vector<8x128xf32>,
    %c24 = arith.constant 24 : index
    %c0_98 = arith.constant 0 : index
    %433 = vector.load %arg7[%c24, %c0_98] : memref<112x128xf32, #tpu.memory_space<vmem>>, vector<8x128xf32>
    %cst_99 = arith.constant dense<0.000000e+00> : vector<8x128xf32>
    %434 = tpu.matmul %433, %423, %cst_99 {dimension_numbers = #tpu.dot_dimension_numbers<[1], [0], [0], [1], [0, 0, 1, 1], [], []>} : vector<8x128xf32>, vector<128x128xf32>, vector<8x128xf32> -> vector<8x128xf32>
    %c0_100 = arith.constant 0 : index
    %c384 = arith.constant 384 : index
    %435 = vector.load %arg21[%c0_100, %c384] : memref<8x1792xf32, #tpu.memory_space<vmem>>, vector<8x128xf32>
    tpu.vector_store %arg21[%c0_100, %c384], %434 {strides = array<i32>} : memref<8x1792xf32, #tpu.memory_space<vmem>>, vector<8x128xf32>,
    %c32_101 = arith.constant 32 : index
    %c0_102 = arith.constant 0 : index
    %436 = vector.load %arg7[%c32_101, %c0_102] : memref<112x128xf32, #tpu.memory_space<vmem>>, vector<8x128xf32>
    %cst_103 = arith.constant dense<0.000000e+00> : vector<8x128xf32>
    %437 = tpu.matmul %436, %423, %cst_103 {dimension_numbers = #tpu.dot_dimension_numbers<[1], [0], [0], [1], [0, 0, 1, 1], [], []>} : vector<8x128xf32>, vector<128x128xf32>, vector<8x128xf32> -> vector<8x128xf32>
    %c0_104 = arith.constant 0 : index
    %c512 = arith.constant 512 : index
    %438 = vector.load %arg21[%c0_104, %c512] : memref<8x1792xf32, #tpu.memory_space<vmem>>, vector<8x128xf32>
    tpu.vector_store %arg21[%c0_104, %c512], %437 {strides = array<i32>} : memref<8x1792xf32, #tpu.memory_space<vmem>>, vector<8x128xf32>,
    %c40 = arith.constant 40 : index
    %c0_105 = arith.constant 0 : index
    %439 = vector.load %arg7[%c40, %c0_105] : memref<112x128xf32, #tpu.memory_space<vmem>>, vector<8x128xf32>
    %cst_106 = arith.constant dense<0.000000e+00> : vector<8x128xf32>
    %440 = tpu.matmul %439, %423, %cst_106 {dimension_numbers = #tpu.dot_dimension_numbers<[1], [0], [0], [1], [0, 0, 1, 1], [], []>} : vector<8x128xf32>, vector<128x128xf32>, vector<8x128xf32> -> vector<8x128xf32>
    %c0_107 = arith.constant 0 : index
    %c640 = arith.constant 640 : index
    %441 = vector.load %arg21[%c0_107, %c640] : memref<8x1792xf32, #tpu.memory_space<vmem>>, vector<8x128xf32>
    tpu.vector_store %arg21[%c0_107, %c640], %440 {strides = array<i32>} : memref<8x1792xf32, #tpu.memory_space<vmem>>, vector<8x128xf32>,
    %c48_108 = arith.constant 48 : index
    %c0_109 = arith.constant 0 : index
    %442 = vector.load %arg7[%c48_108, %c0_109] : memref<112x128xf32, #tpu.memory_space<vmem>>, vector<8x128xf32>
    %cst_110 = arith.constant dense<0.000000e+00> : vector<8x128xf32>
    %443 = tpu.matmul %442, %423, %cst_110 {dimension_numbers = #tpu.dot_dimension_numbers<[1], [0], [0], [1], [0, 0, 1, 1], [], []>} : vector<8x128xf32>, vector<128x128xf32>, vector<8x128xf32> -> vector<8x128xf32>
    %c0_111 = arith.constant 0 : index
    %c768 = arith.constant 768 : index
    %444 = vector.load %arg21[%c0_111, %c768] : memref<8x1792xf32, #tpu.memory_space<vmem>>, vector<8x128xf32>
    tpu.vector_store %arg21[%c0_111, %c768], %443 {strides = array<i32>} : memref<8x1792xf32, #tpu.memory_space<vmem>>, vector<8x128xf32>,
    %c56 = arith.constant 56 : index
    %c0_112 = arith.constant 0 : index
    %445 = vector.load %arg7[%c56, %c0_112] : memref<112x128xf32, #tpu.memory_space<vmem>>, vector<8x128xf32>
    %cst_113 = arith.constant dense<0.000000e+00> : vector<8x128xf32>
    %446 = tpu.matmul %445, %423, %cst_113 {dimension_numbers = #tpu.dot_dimension_numbers<[1], [0], [0], [1], [0, 0, 1, 1], [], []>} : vector<8x128xf32>, vector<128x128xf32>, vector<8x128xf32> -> vector<8x128xf32>
    %c0_114 = arith.constant 0 : index
    %c896 = arith.constant 896 : index
    %447 = vector.load %arg21[%c0_114, %c896] : memref<8x1792xf32, #tpu.memory_space<vmem>>, vector<8x128xf32>
    tpu.vector_store %arg21[%c0_114, %c896], %446 {strides = array<i32>} : memref<8x1792xf32, #tpu.memory_space<vmem>>, vector<8x128xf32>,
    %c64_115 = arith.constant 64 : index
    %c0_116 = arith.constant 0 : index
    %448 = vector.load %arg7[%c64_115, %c0_116] : memref<112x128xf32, #tpu.memory_space<vmem>>, vector<8x128xf32>
    %cst_117 = arith.constant dense<0.000000e+00> : vector<8x128xf32>
    %449 = tpu.matmul %448, %423, %cst_117 {dimension_numbers = #tpu.dot_dimension_numbers<[1], [0], [0], [1], [0, 0, 1, 1], [], []>} : vector<8x128xf32>, vector<128x128xf32>, vector<8x128xf32> -> vector<8x128xf32>
    %c0_118 = arith.constant 0 : index
    %c1024 = arith.constant 1024 : index
    %450 = vector.load %arg21[%c0_118, %c1024] : memref<8x1792xf32, #tpu.memory_space<vmem>>, vector<8x128xf32>
    tpu.vector_store %arg21[%c0_118, %c1024], %449 {strides = array<i32>} : memref<8x1792xf32, #tpu.memory_space<vmem>>, vector<8x128xf32>,
    %c72 = arith.constant 72 : index
    %c0_119 = arith.constant 0 : index
    %451 = vector.load %arg7[%c72, %c0_119] : memref<112x128xf32, #tpu.memory_space<vmem>>, vector<8x128xf32>
    %cst_120 = arith.constant dense<0.000000e+00> : vector<8x128xf32>
    %452 = tpu.matmul %451, %423, %cst_120 {dimension_numbers = #tpu.dot_dimension_numbers<[1], [0], [0], [1], [0, 0, 1, 1], [], []>} : vector<8x128xf32>, vector<128x128xf32>, vector<8x128xf32> -> vector<8x128xf32>
    %c0_121 = arith.constant 0 : index
    %c1152 = arith.constant 1152 : index
    %453 = vector.load %arg21[%c0_121, %c1152] : memref<8x1792xf32, #tpu.memory_space<vmem>>, vector<8x128xf32>
    tpu.vector_store %arg21[%c0_121, %c1152], %452 {strides = array<i32>} : memref<8x1792xf32, #tpu.memory_space<vmem>>, vector<8x128xf32>,
    %c80_122 = arith.constant 80 : index
    %c0_123 = arith.constant 0 : index
    %454 = vector.load %arg7[%c80_122, %c0_123] : memref<112x128xf32, #tpu.memory_space<vmem>>, vector<8x128xf32>
    %cst_124 = arith.constant dense<0.000000e+00> : vector<8x128xf32>
    %455 = tpu.matmul %454, %423, %cst_124 {dimension_numbers = #tpu.dot_dimension_numbers<[1], [0], [0], [1], [0, 0, 1, 1], [], []>} : vector<8x128xf32>, vector<128x128xf32>, vector<8x128xf32> -> vector<8x128xf32>
    %c0_125 = arith.constant 0 : index
    %c1280 = arith.constant 1280 : index
    %456 = vector.load %arg21[%c0_125, %c1280] : memref<8x1792xf32, #tpu.memory_space<vmem>>, vector<8x128xf32>
    tpu.vector_store %arg21[%c0_125, %c1280], %455 {strides = array<i32>} : memref<8x1792xf32, #tpu.memory_space<vmem>>, vector<8x128xf32>,
    %c88 = arith.constant 88 : index
    %c0_126 = arith.constant 0 : index
    %457 = vector.load %arg7[%c88, %c0_126] : memref<112x128xf32, #tpu.memory_space<vmem>>, vector<8x128xf32>
    %cst_127 = arith.constant dense<0.000000e+00> : vector<8x128xf32>
    %458 = tpu.matmul %457, %423, %cst_127 {dimension_numbers = #tpu.dot_dimension_numbers<[1], [0], [0], [1], [0, 0, 1, 1], [], []>} : vector<8x128xf32>, vector<128x128xf32>, vector<8x128xf32> -> vector<8x128xf32>
    %c0_128 = arith.constant 0 : index
    %c1408 = arith.constant 1408 : index
    %459 = vector.load %arg21[%c0_128, %c1408] : memref<8x1792xf32, #tpu.memory_space<vmem>>, vector<8x128xf32>
    tpu.vector_store %arg21[%c0_128, %c1408], %458 {strides = array<i32>} : memref<8x1792xf32, #tpu.memory_space<vmem>>, vector<8x128xf32>,
    %c96_129 = arith.constant 96 : index
    %c0_130 = arith.constant 0 : index
    %460 = vector.load %arg7[%c96_129, %c0_130] : memref<112x128xf32, #tpu.memory_space<vmem>>, vector<8x128xf32>
    %cst_131 = arith.constant dense<0.000000e+00> : vector<8x128xf32>
    %461 = tpu.matmul %460, %423, %cst_131 {dimension_numbers = #tpu.dot_dimension_numbers<[1], [0], [0], [1], [0, 0, 1, 1], [], []>} : vector<8x128xf32>, vector<128x128xf32>, vector<8x128xf32> -> vector<8x128xf32>
    %c0_132 = arith.constant 0 : index
    %c1536 = arith.constant 1536 : index
    %462 = vector.load %arg21[%c0_132, %c1536] : memref<8x1792xf32, #tpu.memory_space<vmem>>, vector<8x128xf32>
    tpu.vector_store %arg21[%c0_132, %c1536], %461 {strides = array<i32>} : memref<8x1792xf32, #tpu.memory_space<vmem>>, vector<8x128xf32>,
    %c104 = arith.constant 104 : index
    %c0_133 = arith.constant 0 : index
    %463 = vector.load %arg7[%c104, %c0_133] : memref<112x128xf32, #tpu.memory_space<vmem>>, vector<8x128xf32>
    %cst_134 = arith.constant dense<0.000000e+00> : vector<8x128xf32>
    %464 = tpu.matmul %463, %423, %cst_134 {dimension_numbers = #tpu.dot_dimension_numbers<[1], [0], [0], [1], [0, 0, 1, 1], [], []>} : vector<8x128xf32>, vector<128x128xf32>, vector<8x128xf32> -> vector<8x128xf32>
    %c0_135 = arith.constant 0 : index
    %c1664 = arith.constant 1664 : index
    %465 = vector.load %arg21[%c0_135, %c1664] : memref<8x1792xf32, #tpu.memory_space<vmem>>, vector<8x128xf32>
    tpu.vector_store %arg21[%c0_135, %c1664], %464 {strides = array<i32>} : memref<8x1792xf32, #tpu.memory_space<vmem>>, vector<8x128xf32>,
    %c0_136 = arith.constant 0 : index
    %c0_137 = arith.constant 0 : index
    %466 = vector.load %arg21[%c0_136, %c0_137] : memref<8x1792xf32, #tpu.memory_space<vmem>>, vector<8x1792xf32>
    %c0_138 = arith.constant 0 : index
    %c0_139 = arith.constant 0 : index
    %467 = vector.load %arg8[%c0_138, %c0_139] : memref<1792x64xf32, #tpu.memory_space<vmem>>, vector<1792x64xf32>
    %cst_140 = arith.constant dense<0.000000e+00> : vector<8x64xf32>
    %468 = tpu.matmul %466, %467, %cst_140 {dimension_numbers = #tpu.dot_dimension_numbers<[1], [0], [0], [1], [0, 0, 1, 1], [], []>} : vector<8x1792xf32>, vector<1792x64xf32>, vector<8x64xf32> -> vector<8x64xf32>
    %c0_141 = arith.constant 0 : index
    %c0_142 = arith.constant 0 : index
    %469 = vector.load %arg9[%c0_141, %c0_142] : memref<1x64xf32, #tpu.memory_space<vmem>>, vector<1x64xf32>
    %470 = vector.broadcast %469 : vector<1x64xf32> to vector<8x64xf32>
    %471 = arith.addf %468, %470 : vector<8x64xf32>
    %cst_143 = arith.constant 0.000000e+00 : f32
    %472 = vector.broadcast %cst_143 : f32 to vector<8x64xf32>
    %473 = arith.maximumf %471, %472 : vector<8x64xf32>
    %c0_144 = arith.constant 0 : index
    %c0_145 = arith.constant 0 : index
    %474 = vector.load %arg10[%c0_144, %c0_145] : memref<64x32xf32, #tpu.memory_space<vmem>>, vector<64x32xf32>
    %cst_146 = arith.constant dense<0.000000e+00> : vector<8x32xf32>
    %475 = tpu.matmul %473, %474, %cst_146 {dimension_numbers = #tpu.dot_dimension_numbers<[1], [0], [0], [1], [0, 0, 1, 1], [], []>} : vector<8x64xf32>, vector<64x32xf32>, vector<8x32xf32> -> vector<8x32xf32>
    %c0_147 = arith.constant 0 : index
    %c0_148 = arith.constant 0 : index
    %476 = vector.load %arg11[%c0_147, %c0_148] : memref<1x32xf32, #tpu.memory_space<vmem>>, vector<1x32xf32>
    %477 = vector.broadcast %476 : vector<1x32xf32> to vector<8x32xf32>
    %478 = arith.addf %475, %477 : vector<8x32xf32>
    %c0_149 = arith.constant 0 : index
    %c0_150 = arith.constant 0 : index
    %479 = vector.load %arg12[%c0_149, %c0_150] : memref<8x8xf32, #tpu.memory_space<vmem>>, vector<8x8xf32>
    %cst_151 = arith.constant dense<0.000000e+00> : vector<8x32xf32>
    %480 = tpu.matmul %479, %478, %cst_151 {dimension_numbers = #tpu.dot_dimension_numbers<[1], [0], [0], [1], [0, 0, 1, 1], [], []>} : vector<8x8xf32>, vector<8x32xf32>, vector<8x32xf32> -> vector<8x32xf32>
    %c0_152 = arith.constant 0 : index
    %c0_153 = arith.constant 0 : index
    %481 = vector.load %arg13[%c0_152, %c0_153] : memref<32x128xf32, #tpu.memory_space<vmem>>, vector<32x128xf32>
    %cst_154 = arith.constant dense<0.000000e+00> : vector<8x128xf32>
    %482 = tpu.matmul %480, %481, %cst_154 {dimension_numbers = #tpu.dot_dimension_numbers<[1], [0], [0], [1], [0, 0, 1, 1], [], []>} : vector<8x32xf32>, vector<32x128xf32>, vector<8x128xf32> -> vector<8x128xf32>
    %c0_155 = arith.constant 0 : index
    %c0_156 = arith.constant 0 : index
    %483 = vector.load %arg15[%c0_155, %c0_156] : memref<1x128xf32, #tpu.memory_space<vmem>>, vector<1x128xf32>
    %484 = vector.broadcast %483 : vector<1x128xf32> to vector<8x128xf32>
    %485 = arith.addf %482, %484 : vector<8x128xf32>
    %c0_157 = arith.constant 0 : index
    %c0_158 = arith.constant 0 : index
    %486 = vector.load %arg14[%c0_157, %c0_158] : memref<32x128xf32, #tpu.memory_space<vmem>>, vector<32x128xf32>
    %cst_159 = arith.constant 0.000000e+00 : f32
    %487 = vector.broadcast %cst_159 : f32 to vector<2x32xf32>
    %cst_160 = arith.constant 0.000000e+00 : f32
    %488 = vector.broadcast %cst_160 : f32 to vector<2x32xf32>
    %489 = vector.extract_strided_slice %485 {offsets = [0, 0], sizes = [2, 128], strides = [1, 1]} : vector<8x128xf32> to vector<2x128xf32>
    %cst_161 = arith.constant dense<0.000000e+00> : vector<2x128xf32>
    %490 = tpu.matmul %487, %486, %cst_161 {dimension_numbers = #tpu.dot_dimension_numbers<[1], [0], [0], [1], [0, 0, 1, 1], [], []>} : vector<2x32xf32>, vector<32x128xf32>, vector<2x128xf32> -> vector<2x128xf32>
    %491 = arith.addf %489, %490 : vector<2x128xf32>
    %cst_162 = arith.constant 5.000000e-01 : f32
    %492 = vector.broadcast %cst_162 : f32 to vector<2x128xf32>
    %493 = arith.mulf %492, %491 : vector<2x128xf32>
    %494 = math.tanh %493 : vector<2x128xf32>
    %cst_163 = arith.constant 1.000000e+00 : f32
    %495 = vector.broadcast %cst_163 : f32 to vector<2x128xf32>
    %496 = arith.addf %494, %495 : vector<2x128xf32>
    %cst_164 = arith.constant 5.000000e-01 : f32
    %497 = vector.broadcast %cst_164 : f32 to vector<2x128xf32>
    %498 = arith.mulf %497, %496 : vector<2x128xf32>
    %499 = math.tanh %491 : vector<2x128xf32>
    %500 = vector.extract_strided_slice %498 {offsets = [0, 32], sizes = [2, 32], strides = [1, 1]} : vector<2x128xf32> to vector<2x32xf32>
    %501 = arith.mulf %500, %488 : vector<2x32xf32>
    %502 = vector.extract_strided_slice %498 {offsets = [0, 0], sizes = [2, 32], strides = [1, 1]} : vector<2x128xf32> to vector<2x32xf32>
    %503 = vector.extract_strided_slice %499 {offsets = [0, 64], sizes = [2, 32], strides = [1, 1]} : vector<2x128xf32> to vector<2x32xf32>
    %504 = arith.mulf %502, %503 : vector<2x32xf32>
    %505 = arith.addf %501, %504 : vector<2x32xf32>
    %506 = vector.extract_strided_slice %498 {offsets = [0, 96], sizes = [2, 32], strides = [1, 1]} : vector<2x128xf32> to vector<2x32xf32>
    %507 = math.tanh %505 : vector<2x32xf32>
    %508 = arith.mulf %506, %507 : vector<2x32xf32>
    %c0_165 = arith.constant 0 : index
    %c0_166 = arith.constant 0 : index
    %509 = vector.load %arg22[%c0_165, %c0_166] : memref<8x32xf32, #tpu.memory_space<vmem>>, vector<2x32xf32>
    tpu.vector_store %arg22[%c0_165, %c0_166], %508 {strides = array<i32>} : memref<8x32xf32, #tpu.memory_space<vmem>>, vector<2x32xf32>,
    %510 = vector.extract_strided_slice %485 {offsets = [2, 0], sizes = [2, 128], strides = [1, 1]} : vector<8x128xf32> to vector<2x128xf32>
    %cst_167 = arith.constant dense<0.000000e+00> : vector<2x128xf32>
    %511 = tpu.matmul %508, %486, %cst_167 {dimension_numbers = #tpu.dot_dimension_numbers<[1], [0], [0], [1], [0, 0, 1, 1], [], []>} : vector<2x32xf32>, vector<32x128xf32>, vector<2x128xf32> -> vector<2x128xf32>
    %512 = arith.addf %510, %511 : vector<2x128xf32>
    %cst_168 = arith.constant 5.000000e-01 : f32
    %513 = vector.broadcast %cst_168 : f32 to vector<2x128xf32>
    %514 = arith.mulf %513, %512 : vector<2x128xf32>
    %515 = math.tanh %514 : vector<2x128xf32>
    %cst_169 = arith.constant 1.000000e+00 : f32
    %516 = vector.broadcast %cst_169 : f32 to vector<2x128xf32>
    %517 = arith.addf %515, %516 : vector<2x128xf32>
    %cst_170 = arith.constant 5.000000e-01 : f32
    %518 = vector.broadcast %cst_170 : f32 to vector<2x128xf32>
    %519 = arith.mulf %518, %517 : vector<2x128xf32>
    %520 = math.tanh %512 : vector<2x128xf32>
    %521 = vector.extract_strided_slice %519 {offsets = [0, 32], sizes = [2, 32], strides = [1, 1]} : vector<2x128xf32> to vector<2x32xf32>
    %522 = arith.mulf %521, %505 : vector<2x32xf32>
    %523 = vector.extract_strided_slice %519 {offsets = [0, 0], sizes = [2, 32], strides = [1, 1]} : vector<2x128xf32> to vector<2x32xf32>
    %524 = vector.extract_strided_slice %520 {offsets = [0, 64], sizes = [2, 32], strides = [1, 1]} : vector<2x128xf32> to vector<2x32xf32>
    %525 = arith.mulf %523, %524 : vector<2x32xf32>
    %526 = arith.addf %522, %525 : vector<2x32xf32>
    %527 = vector.extract_strided_slice %519 {offsets = [0, 96], sizes = [2, 32], strides = [1, 1]} : vector<2x128xf32> to vector<2x32xf32>
    %528 = math.tanh %526 : vector<2x32xf32>
    %529 = arith.mulf %527, %528 : vector<2x32xf32>
    %c2_171 = arith.constant 2 : index
    %c0_172 = arith.constant 0 : index
    %530 = vector.load %arg22[%c2_171, %c0_172] : memref<8x32xf32, #tpu.memory_space<vmem>>, vector<2x32xf32>
    tpu.vector_store %arg22[%c2_171, %c0_172], %529 {strides = array<i32>} : memref<8x32xf32, #tpu.memory_space<vmem>>, vector<2x32xf32>,
    %531 = vector.extract_strided_slice %485 {offsets = [4, 0], sizes = [2, 128], strides = [1, 1]} : vector<8x128xf32> to vector<2x128xf32>
    %cst_173 = arith.constant dense<0.000000e+00> : vector<2x128xf32>
    %532 = tpu.matmul %529, %486, %cst_173 {dimension_numbers = #tpu.dot_dimension_numbers<[1], [0], [0], [1], [0, 0, 1, 1], [], []>} : vector<2x32xf32>, vector<32x128xf32>, vector<2x128xf32> -> vector<2x128xf32>
    %533 = arith.addf %531, %532 : vector<2x128xf32>
    %cst_174 = arith.constant 5.000000e-01 : f32
    %534 = vector.broadcast %cst_174 : f32 to vector<2x128xf32>
    %535 = arith.mulf %534, %533 : vector<2x128xf32>
    %536 = math.tanh %535 : vector<2x128xf32>
    %cst_175 = arith.constant 1.000000e+00 : f32
    %537 = vector.broadcast %cst_175 : f32 to vector<2x128xf32>
    %538 = arith.addf %536, %537 : vector<2x128xf32>
    %cst_176 = arith.constant 5.000000e-01 : f32
    %539 = vector.broadcast %cst_176 : f32 to vector<2x128xf32>
    %540 = arith.mulf %539, %538 : vector<2x128xf32>
    %541 = math.tanh %533 : vector<2x128xf32>
    %542 = vector.extract_strided_slice %540 {offsets = [0, 32], sizes = [2, 32], strides = [1, 1]} : vector<2x128xf32> to vector<2x32xf32>
    %543 = arith.mulf %542, %526 : vector<2x32xf32>
    %544 = vector.extract_strided_slice %540 {offsets = [0, 0], sizes = [2, 32], strides = [1, 1]} : vector<2x128xf32> to vector<2x32xf32>
    %545 = vector.extract_strided_slice %541 {offsets = [0, 64], sizes = [2, 32], strides = [1, 1]} : vector<2x128xf32> to vector<2x32xf32>
    %546 = arith.mulf %544, %545 : vector<2x32xf32>
    %547 = arith.addf %543, %546 : vector<2x32xf32>
    %548 = vector.extract_strided_slice %540 {offsets = [0, 96], sizes = [2, 32], strides = [1, 1]} : vector<2x128xf32> to vector<2x32xf32>
    %549 = math.tanh %547 : vector<2x32xf32>
    %550 = arith.mulf %548, %549 : vector<2x32xf32>
    %c4_177 = arith.constant 4 : index
    %c0_178 = arith.constant 0 : index
    %551 = vector.load %arg22[%c4_177, %c0_178] : memref<8x32xf32, #tpu.memory_space<vmem>>, vector<2x32xf32>
    tpu.vector_store %arg22[%c4_177, %c0_178], %550 {strides = array<i32>} : memref<8x32xf32, #tpu.memory_space<vmem>>, vector<2x32xf32>,
    %552 = vector.extract_strided_slice %485 {offsets = [6, 0], sizes = [2, 128], strides = [1, 1]} : vector<8x128xf32> to vector<2x128xf32>
    %cst_179 = arith.constant dense<0.000000e+00> : vector<2x128xf32>
    %553 = tpu.matmul %550, %486, %cst_179 {dimension_numbers = #tpu.dot_dimension_numbers<[1], [0], [0], [1], [0, 0, 1, 1], [], []>} : vector<2x32xf32>, vector<32x128xf32>, vector<2x128xf32> -> vector<2x128xf32>
    %554 = arith.addf %552, %553 : vector<2x128xf32>
    %cst_180 = arith.constant 5.000000e-01 : f32
    %555 = vector.broadcast %cst_180 : f32 to vector<2x128xf32>
    %556 = arith.mulf %555, %554 : vector<2x128xf32>
    %557 = math.tanh %556 : vector<2x128xf32>
    %cst_181 = arith.constant 1.000000e+00 : f32
    %558 = vector.broadcast %cst_181 : f32 to vector<2x128xf32>
    %559 = arith.addf %557, %558 : vector<2x128xf32>
    %cst_182 = arith.constant 5.000000e-01 : f32
    %560 = vector.broadcast %cst_182 : f32 to vector<2x128xf32>
    %561 = arith.mulf %560, %559 : vector<2x128xf32>
    %562 = math.tanh %554 : vector<2x128xf32>
    %563 = vector.extract_strided_slice %561 {offsets = [0, 32], sizes = [2, 32], strides = [1, 1]} : vector<2x128xf32> to vector<2x32xf32>
    %564 = arith.mulf %563, %547 : vector<2x32xf32>
    %565 = vector.extract_strided_slice %561 {offsets = [0, 0], sizes = [2, 32], strides = [1, 1]} : vector<2x128xf32> to vector<2x32xf32>
    %566 = vector.extract_strided_slice %562 {offsets = [0, 64], sizes = [2, 32], strides = [1, 1]} : vector<2x128xf32> to vector<2x32xf32>
    %567 = arith.mulf %565, %566 : vector<2x32xf32>
    %568 = arith.addf %564, %567 : vector<2x32xf32>
    %569 = vector.extract_strided_slice %561 {offsets = [0, 96], sizes = [2, 32], strides = [1, 1]} : vector<2x128xf32> to vector<2x32xf32>
    %570 = math.tanh %568 : vector<2x32xf32>
    %571 = arith.mulf %569, %570 : vector<2x32xf32>
    %c6_183 = arith.constant 6 : index
    %c0_184 = arith.constant 0 : index
    %572 = vector.load %arg22[%c6_183, %c0_184] : memref<8x32xf32, #tpu.memory_space<vmem>>, vector<2x32xf32>
    tpu.vector_store %arg22[%c6_183, %c0_184], %571 {strides = array<i32>} : memref<8x32xf32, #tpu.memory_space<vmem>>, vector<2x32xf32>,
    %c0_185 = arith.constant 0 : index
    %c0_186 = arith.constant 0 : index
    %573 = vector.load %arg22[%c0_185, %c0_186] : memref<8x32xf32, #tpu.memory_space<vmem>>, vector<8x32xf32>
    %c0_187 = arith.constant 0 : index
    %c0_188 = arith.constant 0 : index
    %574 = vector.load %arg16[%c0_187, %c0_188] : memref<32x26xf32, #tpu.memory_space<vmem>>, vector<32x26xf32>
    %cst_189 = arith.constant dense<0.000000e+00> : vector<8x26xf32>
    %575 = tpu.matmul %573, %574, %cst_189 {dimension_numbers = #tpu.dot_dimension_numbers<[1], [0], [0], [1], [0, 0, 1, 1], [], []>} : vector<8x32xf32>, vector<32x26xf32>, vector<8x26xf32> -> vector<8x26xf32>
    %c0_190 = arith.constant 0 : index
    %c0_191 = arith.constant 0 : index
    %576 = vector.load %arg18[%c0_190, %c0_191] : memref<8x8xf32, #tpu.memory_space<vmem>>, vector<8x8xf32>
    %cst_192 = arith.constant dense<0.000000e+00> : vector<8x26xf32>
    %577 = tpu.matmul %576, %575, %cst_192 {dimension_numbers = #tpu.dot_dimension_numbers<[1], [0], [0], [1], [0, 0, 1, 1], [], []>} : vector<8x8xf32>, vector<8x26xf32>, vector<8x26xf32> -> vector<8x26xf32>
    %c0_193 = arith.constant 0 : index
    %c0_194 = arith.constant 0 : index
    %578 = vector.load %arg17[%c0_193, %c0_194] : memref<1x26xf32, #tpu.memory_space<vmem>>, vector<1x26xf32>
    %579 = vector.broadcast %578 : vector<1x26xf32> to vector<8x26xf32>
    %580 = arith.addf %577, %579 : vector<8x26xf32>
    %c0_195 = arith.constant 0 : index
    %c0_196 = arith.constant 0 : index
    %581 = vector.load %arg19[%c0_195, %c0_196] : memref<8x26xf32, #tpu.memory_space<vmem>>, vector<8x26xf32>
    tpu.vector_store %arg19[%c0_195, %c0_196], %580 {strides = array<i32>} : memref<8x26xf32, #tpu.memory_space<vmem>>, vector<8x26xf32>,
    return
  }
}

</mosaic_0001>

<llo_original>
// kernel: conv_lstm_forward.1
$region0: #{conv_lstm_forward.1}
  #allocation0 [shape = 'u32[]', space=smem, size = 0x4, offset = 0x4, fixed_abs, tag = 'smem constant byte address 0x4 - core index']
  #allocation1 [shape = 'u32[144,128]{1,0:T(1,128)}', space=vmem, size = 0x12000, scoped, tag = 'internal scratch']
  #allocation2 [shape = 'f32[128,128]{1,0:T(8,128)}', space=vmem, size = 0x10000, scoped, tag = 'scratch operand']
  #allocation3 [shape = 'f32[8,1792]{1,0:T(8,128)}', space=vmem, size = 0xe000, scoped, tag = 'scratch operand']
  #allocation4 [shape = 'f32[8,32]{1,0:T(8,128)}', space=vmem, size = 0x1000, scoped, tag = 'scratch operand']
  %s0 = inlined_call_operand.vmem [shape: f32[224,28], index: 0, kind: input, shape index: {}]
  %s1 = inlined_call_operand.vmem [shape: f32[256,224], index: 1, kind: input, shape index: {}]
  %s2 = inlined_call_operand.vmem [shape: f32[28,240], index: 2, kind: input, shape index: {}]
  %s3 = inlined_call_operand.vmem [shape: f32[9,240], index: 3, kind: input, shape index: {}]
  %s4 = inlined_call_operand.vmem [shape: f32[1,240], index: 4, kind: input, shape index: {}]
  %s5 = inlined_call_operand.vmem [shape: f32[16,27], index: 5, kind: input, shape index: {}]
  %s6 = inlined_call_operand.vmem [shape: f32[237,128], index: 6, kind: input, shape index: {}]
  %s7 = inlined_call_operand.vmem [shape: f32[112,128], index: 7, kind: input, shape index: {}]
  %s8 = inlined_call_operand.vmem [shape: f32[1792,64], index: 8, kind: input, shape index: {}]
  %s9 = inlined_call_operand.vmem [shape: f32[1,64], index: 9, kind: input, shape index: {}]
  %s10 = inlined_call_operand.vmem [shape: f32[64,32], index: 10, kind: input, shape index: {}]
  %s11 = inlined_call_operand.vmem [shape: f32[1,32], index: 11, kind: input, shape index: {}]
  %s12 = inlined_call_operand.vmem [shape: f32[8,8], index: 12, kind: input, shape index: {}]
  %s13 = inlined_call_operand.vmem [shape: f32[32,128], index: 13, kind: input, shape index: {}]
  %s14 = inlined_call_operand.vmem [shape: f32[32,128], index: 14, kind: input, shape index: {}]
  %s15 = inlined_call_operand.vmem [shape: f32[1,128], index: 15, kind: input, shape index: {}]
  %s16 = inlined_call_operand.vmem [shape: f32[32,26], index: 16, kind: input, shape index: {}]
  %s17 = inlined_call_operand.vmem [shape: f32[1,26], index: 17, kind: input, shape index: {}]
  %s18 = inlined_call_operand.vmem [shape: f32[8,8], index: 18, kind: input, shape index: {}]
  %s19 = inlined_call_operand.hbm [shape: f32[8,26], index: 19, kind: output, shape index: {}]
  %s20 = sld [smem:[#allocation0]]
  $region86: #{conv_lstm_forward.1} parent=0
    _
  %s22 = ssub.s32 1, %s20
  %s23 = scalar_select 0, %s22, %s20
  $region1: #{conv_lstm_forward.1} parent=0
    #allocation5 [shape = 'u8[4096]{0}', space=vmem, size = 0x1000, scoped, tag = 'output window, operand 0, single buffered']
    #allocation6 [shape = 's32[1]{0}', space=sflag, size = 0x4, scoped, tag = 'scoped memory for conv_lstm_forward.1']
    %24 = vsyncpa [#allocation6], 0
    // Predicated region
    $region2: #{conv_lstm_forward.1} parent=1 // pred_check
      _
    $region3: #{conv_lstm_forward.1} parent=1 // pred_check_branch
      %26 = sbr.rel (0) target = $region5
    $region4: #{conv_lstm_forward.1} parent=1 // pred_region
      _
    $region5: #{conv_lstm_forward.1} parent=1 // pred_fallthru
      _
    // Predicated region
    $region6: #{conv_lstm_forward.1} parent=1 // pred_check
      _
    $region7: #{conv_lstm_forward.1} parent=1 // pred_check_branch
      %28 = sbr.rel (0) target = $region9
    $region8: #{conv_lstm_forward.1} parent=1 // pred_region
      _
    $region9: #{conv_lstm_forward.1} parent=1 // pred_fallthru
      _
    // Predicated region
    $region10: #{conv_lstm_forward.1} parent=1 // pred_check
      _
    $region11: #{conv_lstm_forward.1} parent=1 // pred_check_branch
      %30 = sbr.rel (0) target = $region13
    $region12: #{conv_lstm_forward.1} parent=1 // pred_region
      _
    $region13: #{conv_lstm_forward.1} parent=1 // pred_fallthru
      _
    // Predicated region
    $region14: #{conv_lstm_forward.1} parent=1 // pred_check
      _
    $region15: #{conv_lstm_forward.1} parent=1 // pred_check_branch
      %32 = sbr.rel (0) target = $region17
    $region16: #{conv_lstm_forward.1} parent=1 // pred_region
      _
    $region17: #{conv_lstm_forward.1} parent=1 // pred_fallthru
      _
    // Predicated region
    $region18: #{conv_lstm_forward.1} parent=1 // pred_check
      _
    $region19: #{conv_lstm_forward.1} parent=1 // pred_check_branch
      %34 = sbr.rel (0) target = $region21
    $region20: #{conv_lstm_forward.1} parent=1 // pred_region
      _
    $region21: #{conv_lstm_forward.1} parent=1 // pred_fallthru
      _
    // Predicated region
    $region22: #{conv_lstm_forward.1} parent=1 // pred_check
      _
    $region23: #{conv_lstm_forward.1} parent=1 // pred_check_branch
      %36 = sbr.rel (0) target = $region25
    $region24: #{conv_lstm_forward.1} parent=1 // pred_region
      _
    $region25: #{conv_lstm_forward.1} parent=1 // pred_fallthru
      _
    // Predicated region
    $region26: #{conv_lstm_forward.1} parent=1 // pred_check
      _
    $region27: #{conv_lstm_forward.1} parent=1 // pred_check_branch
      %38 = sbr.rel (0) target = $region29
    $region28: #{conv_lstm_forward.1} parent=1 // pred_region
      _
    $region29: #{conv_lstm_forward.1} parent=1 // pred_fallthru
      _
    // Predicated region
    $region30: #{conv_lstm_forward.1} parent=1 // pred_check
      _
    $region31: #{conv_lstm_forward.1} parent=1 // pred_check_branch
      %40 = sbr.rel (0) target = $region33
    $region32: #{conv_lstm_forward.1} parent=1 // pred_region
      _
    $region33: #{conv_lstm_forward.1} parent=1 // pred_fallthru
      _
    // Predicated region
    $region34: #{conv_lstm_forward.1} parent=1 // pred_check
      _
    $region35: #{conv_lstm_forward.1} parent=1 // pred_check_branch
      %42 = sbr.rel (0) target = $region37
    $region36: #{conv_lstm_forward.1} parent=1 // pred_region
      _
    $region37: #{conv_lstm_forward.1} parent=1 // pred_fallthru
      _
    // Predicated region
    $region38: #{conv_lstm_forward.1} parent=1 // pred_check
      _
    $region39: #{conv_lstm_forward.1} parent=1 // pred_check_branch
      %44 = sbr.rel (0) target = $region41
    $region40: #{conv_lstm_forward.1} parent=1 // pred_region
      _
    $region41: #{conv_lstm_forward.1} parent=1 // pred_fallthru
      _
    // Predicated region
    $region42: #{conv_lstm_forward.1} parent=1 // pred_check
      _
    $region43: #{conv_lstm_forward.1} parent=1 // pred_check_branch
      %46 = sbr.rel (0) target = $region45
    $region44: #{conv_lstm_forward.1} parent=1 // pred_region
      _
    $region45: #{conv_lstm_forward.1} parent=1 // pred_fallthru
      _
    // Predicated region
    $region46: #{conv_lstm_forward.1} parent=1 // pred_check
      _
    $region47: #{conv_lstm_forward.1} parent=1 // pred_check_branch
      %48 = sbr.rel (0) target = $region49
    $region48: #{conv_lstm_forward.1} parent=1 // pred_region
      _
    $region49: #{conv_lstm_forward.1} parent=1 // pred_fallthru
      _
    // Predicated region
    $region50: #{conv_lstm_forward.1} parent=1 // pred_check
      _
    $region51: #{conv_lstm_forward.1} parent=1 // pred_check_branch
      %50 = sbr.rel (0) target = $region53
    $region52: #{conv_lstm_forward.1} parent=1 // pred_region
      _
    $region53: #{conv_lstm_forward.1} parent=1 // pred_fallthru
      _
    // Predicated region
    $region54: #{conv_lstm_forward.1} parent=1 // pred_check
      _
    $region55: #{conv_lstm_forward.1} parent=1 // pred_check_branch
      %52 = sbr.rel (0) target = $region57
    $region56: #{conv_lstm_forward.1} parent=1 // pred_region
      _
    $region57: #{conv_lstm_forward.1} parent=1 // pred_fallthru
      _
    // Predicated region
    $region58: #{conv_lstm_forward.1} parent=1 // pred_check
      _
    $region59: #{conv_lstm_forward.1} parent=1 // pred_check_branch
      %54 = sbr.rel (0) target = $region61
    $region60: #{conv_lstm_forward.1} parent=1 // pred_region
      _
    $region61: #{conv_lstm_forward.1} parent=1 // pred_fallthru
      _
    // Predicated region
    $region62: #{conv_lstm_forward.1} parent=1 // pred_check
      _
    $region63: #{conv_lstm_forward.1} parent=1 // pred_check_branch
      %56 = sbr.rel (0) target = $region65
    $region64: #{conv_lstm_forward.1} parent=1 // pred_region
      _
    $region65: #{conv_lstm_forward.1} parent=1 // pred_fallthru
      _
    // Predicated region
    $region66: #{conv_lstm_forward.1} parent=1 // pred_check
      _
    $region67: #{conv_lstm_forward.1} parent=1 // pred_check_branch
      %58 = sbr.rel (0) target = $region69
    $region68: #{conv_lstm_forward.1} parent=1 // pred_region
      _
    $region69: #{conv_lstm_forward.1} parent=1 // pred_fallthru
      _
    // Predicated region
    $region70: #{conv_lstm_forward.1} parent=1 // pred_check
      _
    $region71: #{conv_lstm_forward.1} parent=1 // pred_check_branch
      %60 = sbr.rel (0) target = $region73
    $region72: #{conv_lstm_forward.1} parent=1 // pred_region
      _
    $region73: #{conv_lstm_forward.1} parent=1 // pred_fallthru
      _
    // Predicated region
    $region74: #{conv_lstm_forward.1} parent=1 // pred_check
      _
    $region75: #{conv_lstm_forward.1} parent=1 // pred_check_branch
      %62 = sbr.rel (0) target = $region77
    $region76: #{conv_lstm_forward.1} parent=1 // pred_region
      _
    $region77: #{conv_lstm_forward.1} parent=1 // pred_fallthru
      _
    %v63 = vld [vmem:[%s1] sm:$0xff]
    %v64 = vld [vmem:[%s1 + $0x8] sm:$0xff]
    %v65 = vld [vmem:[%s1 + $0x10] sm:$0xff]
    %v66 = vld [vmem:[%s1 + $0x18] sm:$0xff]
    %v67 = vld [vmem:[%s1 + $0x20] sm:$0xff]
    %v68 = vld [vmem:[%s1 + $0x28] sm:$0xff]
    %v69 = vld [vmem:[%s1 + $0x30] sm:$0xff]
    %v70 = vld [vmem:[%s1 + $0x38] sm:$0xff]
    %v71 = vld [vmem:[%s1 + $0x40] sm:$0xff]
    %v72 = vld [vmem:[%s1 + $0x48] sm:$0xff]
    %v73 = vld [vmem:[%s1 + $0x50] sm:$0xff]
    %v74 = vld [vmem:[%s1 + $0x58] sm:$0xff]
    %v75 = vld [vmem:[%s1 + $0x60] sm:$0xff]
    %v76 = vld [vmem:[%s1 + $0x68] sm:$0xff]
    %v77 = vld [vmem:[%s1 + $0x70] sm:$0xff]
    %v78 = vld [vmem:[%s1 + $0x78] sm:$0xff]
    %v79 = vld [vmem:[%s1 + $0x80] sm:$0xff]
    %v80 = vld [vmem:[%s1 + $0x88] sm:$0xff]
    %v81 = vld [vmem:[%s1 + $0x90] sm:$0xff]
    %v82 = vld [vmem:[%s1 + $0x98] sm:$0xff]
    %v83 = vld [vmem:[%s1 + $0xa0] sm:$0xff]
    %v84 = vld [vmem:[%s1 + $0xa8] sm:$0xff]
    %v85 = vld [vmem:[%s1 + $0xb0] sm:$0xff]
    %v86 = vld [vmem:[%s1 + $0xb8] sm:$0xff]
    %v87 = vld [vmem:[%s1 + $0xc0] sm:$0xff]
    %v88 = vld [vmem:[%s1 + $0xc8] sm:$0xff]
    %v89 = vld [vmem:[%s1 + $0xd0] sm:$0xff]
    %v90 = vld [vmem:[%s1 + $0xd8] sm:$0xff]
    %v91 = vld [vmem:[%s1 + $0xe0] sm:$0xff]
    %v92 = vld [vmem:[%s1 + $0xe8] sm:$0xff]
    %v93 = vld [vmem:[%s1 + $0xf0] sm:$0xff]
    %v94 = vld [vmem:[%s1 + $0xf8] sm:$0xff]
    %v95 = vld [vmem:[%s1 + $0x100] sm:$0xff]
    %v96 = vld [vmem:[%s1 + $0x108] sm:$0xff]
    %v97 = vld [vmem:[%s1 + $0x110] sm:$0xff]
    %v98 = vld [vmem:[%s1 + $0x118] sm:$0xff]
    %v99 = vld [vmem:[%s1 + $0x120] sm:$0xff]
    %v100 = vld [vmem:[%s1 + $0x128] sm:$0xff]
    %v101 = vld [vmem:[%s1 + $0x130] sm:$0xff]
    %v102 = vld [vmem:[%s1 + $0x138] sm:$0xff]
    %v103 = vld [vmem:[%s1 + $0x140] sm:$0xff]
    %v104 = vld [vmem:[%s1 + $0x148] sm:$0xff]
    %v105 = vld [vmem:[%s1 + $0x150] sm:$0xff]
    %v106 = vld [vmem:[%s1 + $0x158] sm:$0xff]
    %v107 = vld [vmem:[%s1 + $0x160] sm:$0xff]
    %v108 = vld [vmem:[%s1 + $0x168] sm:$0xff]
    %v109 = vld [vmem:[%s1 + $0x170] sm:$0xff]
    %v110 = vld [vmem:[%s1 + $0x178] sm:$0xff]
    %v111 = vld [vmem:[%s1 + $0x180] sm:$0xff]
    %v112 = vld [vmem:[%s1 + $0x188] sm:$0xff]
    %v113 = vld [vmem:[%s1 + $0x190] sm:$0xff]
    %v114 = vld [vmem:[%s1 + $0x198] sm:$0xff]
    %v115 = vld [vmem:[%s1 + $0x1a0] sm:$0xff]
    %v116 = vld [vmem:[%s1 + $0x1a8] sm:$0xff]
    %v117 = vld [vmem:[%s1 + $0x1b0] sm:$0xff]
    %v118 = vld [vmem:[%s1 + $0x1b8] sm:$0xff]
    %v119 = vld [vmem:[%s1 + $0x1c0] sm:$0xff]
    %v120 = vld [vmem:[%s1 + $0x1c8] sm:$0xff]
    %v121 = vld [vmem:[%s1 + $0x1d0] sm:$0xff]
    %v122 = vld [vmem:[%s1 + $0x1d8] sm:$0xff]
    %v123 = vld [vmem:[%s1 + $0x1e0] sm:$0xff]
    %v124 = vld [vmem:[%s1 + $0x1e8] sm:$0xff]
    %v125 = vld [vmem:[%s1 + $0x1f0] sm:$0xff]
    %v126 = vld [vmem:[%s1 + $0x1f8] sm:$0xff]
    %v127 = vld [vmem:[%s0] sm:$0xff]
    %v128 = vld [vmem:[%s0 + $0x8] sm:$0xff]
    %v129 = vld [vmem:[%s0 + $0x10] sm:$0xff]
    %v130 = vld [vmem:[%s0 + $0x18] sm:$0xff]
    %v131 = vld [vmem:[%s0 + $0x20] sm:$0xff]
    %v132 = vld [vmem:[%s0 + $0x28] sm:$0xff]
    %v133 = vld [vmem:[%s0 + $0x30] sm:$0xff]
    %v134 = vld [vmem:[%s0 + $0x38] sm:$0xff]
    %v135 = vld [vmem:[%s0 + $0x40] sm:$0xff]
    %v136 = vld [vmem:[%s0 + $0x48] sm:$0xff]
    %v137 = vld [vmem:[%s0 + $0x50] sm:$0xff]
    %v138 = vld [vmem:[%s0 + $0x58] sm:$0xff]
    %v139 = vld [vmem:[%s0 + $0x60] sm:$0xff]
    %v140 = vld [vmem:[%s0 + $0x68] sm:$0xff]
    %v141 = vld [vmem:[%s0 + $0x70] sm:$0xff]
    %v142 = vld [vmem:[%s0 + $0x78] sm:$0xff]
    %v143 = vld [vmem:[%s0 + $0x80] sm:$0xff]
    %v144 = vld [vmem:[%s0 + $0x88] sm:$0xff]
    %v145 = vld [vmem:[%s0 + $0x90] sm:$0xff]
    %v146 = vld [vmem:[%s0 + $0x98] sm:$0xff]
    %v147 = vld [vmem:[%s0 + $0xa0] sm:$0xff]
    %v148 = vld [vmem:[%s0 + $0xa8] sm:$0xff]
    %v149 = vld [vmem:[%s0 + $0xb0] sm:$0xff]
    %v150 = vld [vmem:[%s0 + $0xb8] sm:$0xff]
    %v151 = vld [vmem:[%s0 + $0xc0] sm:$0xff]
    %v152 = vld [vmem:[%s0 + $0xc8] sm:$0xff]
    %v153 = vld [vmem:[%s0 + $0xd0] sm:$0xff]
    %v154 = vld [vmem:[%s0 + $0xd8] sm:$0xff]
    %vm155 = vcmask 785408
    %v157 = vsel %vm155, %v64, 0
    %v160 = vsel %vm155, %v66, 0
    %v163 = vsel %vm155, %v68, 0
    %v166 = vsel %vm155, %v70, 0
    %v169 = vsel %vm155, %v72, 0
    %v172 = vsel %vm155, %v74, 0
    %v175 = vsel %vm155, %v76, 0
    %v178 = vsel %vm155, %v78, 0
    %v181 = vsel %vm155, %v80, 0
    %v184 = vsel %vm155, %v82, 0
    %v187 = vsel %vm155, %v84, 0
    %v190 = vsel %vm155, %v86, 0
    %v193 = vsel %vm155, %v88, 0
    %v196 = vsel %vm155, %v90, 0
    %v199 = vsel %vm155, %v92, 0
    %v202 = vsel %vm155, %v94, 0
    %v205 = vsel %vm155, %v96, 0
    %v208 = vsel %vm155, %v98, 0
    %v211 = vsel %vm155, %v100, 0
    %v214 = vsel %vm155, %v102, 0
    %v217 = vsel %vm155, %v104, 0
    %v220 = vsel %vm155, %v106, 0
    %v223 = vsel %vm155, %v108, 0
    %v226 = vsel %vm155, %v110, 0
    %v229 = vsel %vm155, %v112, 0
    %v232 = vsel %vm155, %v114, 0
    %v235 = vsel %vm155, %v116, 0
    %v238 = vsel %vm155, %v118, 0
    %v241 = vsel %vm155, %v120, 0
    %v244 = vsel %vm155, %v122, 0
    %v247 = vsel %vm155, %v124, 0
    %v250 = vsel %vm155, %v126, 0
    %252 = vmatprep.subr.mxu0 0.0
    %253 = vmatpush1.msra.mxu0 %v127
    %254 = vmatprep.subr.mxu0 0.0
    %255 = vmatpush1.msra.mxu0 %v128
    %256 = vmatprep.subr.mxu0 0.0
    %257 = vmatpush1.msra.mxu0 %v129
    %258 = vmatprep.subr.mxu0 0.0
    %259 = vmatpush1.msra.mxu0 %v130
    %260 = vmatprep.subr.mxu0 0.0
    %261 = vmatpush1.msra.mxu0 %v131
    %262 = vmatprep.subr.mxu0 0.0
    %263 = vmatpush1.msra.mxu0 %v132
    %264 = vmatprep.subr.mxu0 0.0
    %265 = vmatpush1.msra.mxu0 %v133
    %266 = vmatprep.subr.mxu0 0.0
    %267 = vmatpush1.msra.mxu0 %v134
    %268 = vmatprep.subr.mxu0 0.0
    %269 = vmatpush1.msra.mxu0 %v135
    %270 = vmatprep.subr.mxu0 0.0
    %271 = vmatpush1.msra.mxu0 %v136
    %272 = vmatprep.subr.mxu0 0.0
    %273 = vmatpush1.msra.mxu0 %v137
    %274 = vmatprep.subr.mxu0 0.0
    %275 = vmatpush1.msra.mxu0 %v138
    %276 = vmatprep.subr.mxu0 0.0
    %277 = vmatpush1.msra.mxu0 %v139
    %278 = vmatprep.subr.mxu0 0.0
    %279 = vmatpush1.msra.mxu0 %v140
    %280 = vmatprep.subr.mxu0 0.0
    %281 = vmatpush1.msra.mxu0 %v141
    %282 = vmatprep.subr.mxu0 0.0
    %283 = vmatpush1.msra.mxu0 %v142
    %284 = vmatprep.subr.mxu0 0.0
    %285 = vmatpush1.msra.mxu0 %v143
    %286 = vmatprep.subr.mxu0 0.0
    %287 = vmatpush1.msra.mxu0 %v144
    %288 = vmatprep.subr.mxu0 0.0
    %289 = vmatpush1.msra.mxu0 %v145
    %290 = vmatprep.subr.mxu0 0.0
    %291 = vmatpush1.msra.mxu0 %v146
    %292 = vmatprep.subr.mxu0 0.0
    %293 = vmatpush1.msra.mxu0 %v147
    %294 = vmatprep.subr.mxu0 0.0
    %295 = vmatpush1.msra.mxu0 %v148
    %296 = vmatprep.subr.mxu0 0.0
    %297 = vmatpush1.msra.mxu0 %v149
    %298 = vmatprep.subr.mxu0 0.0
    %299 = vmatpush1.msra.mxu0 %v150
    %300 = vmatprep.subr.mxu0 0.0
    %301 = vmatpush1.msra.mxu0 %v151
    %302 = vmatprep.subr.mxu0 0.0
    %303 = vmatpush1.msra.mxu0 %v152
    %304 = vmatprep.subr.mxu0 0.0
    %305 = vmatpush1.msra.mxu0 %v153
    %306 = vmatprep.subr.mxu0 0.0
    %307 = vmatpush1.msra.mxu0 %v154
    %308 = vmatprep.subr.mxu0 0.0
    %309 = vmatpush1.msra.mxu0 0.0
    %310 = vmatprep.subr.mxu0 0.0
    %311 = vmatpush1.msra.mxu0 0.0
    %312 = vmatprep.subr.mxu0 0.0
    %313 = vmatpush1.msra.mxu0 0.0
    %314 = vmatprep.subr.mxu0 0.0
    %315 = vmatpush1.msra.mxu0 0.0
    %316 = vmatprep.mubr.f32.mxu0 %v157
    %317 = vmatmul.mubr.f32.gmra.mrb[0].mxu0 %v63
    %v318 = vpop.f32.mrb[0].mxu0
    %v319 = vadd.f32 0.0, %v318
    %v320 = vpop.f32.mrb[0].mxu0
    %321 = vmatprep.mubr.f32.mxu0 %v160
    %322 = vmatmul.mubr.f32.gmra.mrb[0].mxu0 %v65
    %v323 = vpop.f32.mrb[0].mxu0
    %v324 = vadd.f32 0.0, %v323
    %v325 = vpop.f32.mrb[0].mxu0
    %326 = vmatprep.mubr.f32.mxu0 %v163
    %327 = vmatmul.mubr.f32.gmra.mrb[0].mxu0 %v67
    %v328 = vpop.f32.mrb[0].mxu0
    %v329 = vadd.f32 0.0, %v328
    %v330 = vpop.f32.mrb[0].mxu0
    %331 = vmatprep.mubr.f32.mxu0 %v166
    %332 = vmatmul.mubr.f32.gmra.mrb[0].mxu0 %v69
    %v333 = vpop.f32.mrb[0].mxu0
    %v334 = vadd.f32 0.0, %v333
    %v335 = vpop.f32.mrb[0].mxu0
    %336 = vmatprep.mubr.f32.mxu0 %v169
    %337 = vmatmul.mubr.f32.gmra.mrb[0].mxu0 %v71
    %v338 = vpop.f32.mrb[0].mxu0
    %v339 = vadd.f32 0.0, %v338
    %v340 = vpop.f32.mrb[0].mxu0
    %341 = vmatprep.mubr.f32.mxu0 %v172
    %342 = vmatmul.mubr.f32.gmra.mrb[0].mxu0 %v73
    %v343 = vpop.f32.mrb[0].mxu0
    %v344 = vadd.f32 0.0, %v343
    %v345 = vpop.f32.mrb[0].mxu0
    %346 = vmatprep.mubr.f32.mxu0 %v175
    %347 = vmatmul.mubr.f32.gmra.mrb[0].mxu0 %v75
    %v348 = vpop.f32.mrb[0].mxu0
    %v349 = vadd.f32 0.0, %v348
    %v350 = vpop.f32.mrb[0].mxu0
    %351 = vmatprep.mubr.f32.mxu0 %v178
    %352 = vmatmul.mubr.f32.gmra.mrb[0].mxu0 %v77
    %v353 = vpop.f32.mrb[0].mxu0
    %v354 = vadd.f32 0.0, %v353
    %v355 = vpop.f32.mrb[0].mxu0
    %356 = vmatprep.mubr.f32.mxu0 %v181
    %357 = vmatmul.mubr.f32.gmra.mrb[0].mxu0 %v79
    %v358 = vpop.f32.mrb[0].mxu0
    %v359 = vadd.f32 0.0, %v358
    %v360 = vpop.f32.mrb[0].mxu0
    %361 = vmatprep.mubr.f32.mxu0 %v184
    %362 = vmatmul.mubr.f32.gmra.mrb[0].mxu0 %v81
    %v363 = vpop.f32.mrb[0].mxu0
    %v364 = vadd.f32 0.0, %v363
    %v365 = vpop.f32.mrb[0].mxu0
    %366 = vmatprep.mubr.f32.mxu0 %v187
    %367 = vmatmul.mubr.f32.gmra.mrb[0].mxu0 %v83
    %v368 = vpop.f32.mrb[0].mxu0
    %v369 = vadd.f32 0.0, %v368
    %v370 = vpop.f32.mrb[0].mxu0
    %371 = vmatprep.mubr.f32.mxu0 %v190
    %372 = vmatmul.mubr.f32.gmra.mrb[0].mxu0 %v85
    %v373 = vpop.f32.mrb[0].mxu0
    %v374 = vadd.f32 0.0, %v373
    %v375 = vpop.f32.mrb[0].mxu0
    %376 = vmatprep.mubr.f32.mxu0 %v193
    %377 = vmatmul.mubr.f32.gmra.mrb[0].mxu0 %v87
    %v378 = vpop.f32.mrb[0].mxu0
    %v379 = vadd.f32 0.0, %v378
    %v380 = vpop.f32.mrb[0].mxu0
    %381 = vmatprep.mubr.f32.mxu0 %v196
    %382 = vmatmul.mubr.f32.gmra.mrb[0].mxu0 %v89
    %v383 = vpop.f32.mrb[0].mxu0
    %v384 = vadd.f32 0.0, %v383
    %v385 = vpop.f32.mrb[0].mxu0
    %386 = vmatprep.mubr.f32.mxu0 %v199
    %387 = vmatmul.mubr.f32.gmra.mrb[0].mxu0 %v91
    %v388 = vpop.f32.mrb[0].mxu0
    %v389 = vadd.f32 0.0, %v388
    %v390 = vpop.f32.mrb[0].mxu0
    %391 = vmatprep.mubr.f32.mxu0 %v202
    %392 = vmatmul.mubr.f32.gmra.mrb[0].mxu0 %v93
    %v393 = vpop.f32.mrb[0].mxu0
    %v394 = vadd.f32 0.0, %v393
    %v395 = vpop.f32.mrb[0].mxu0
    %396 = vmatprep.mubr.f32.mxu0 %v205
    %397 = vmatmul.mubr.f32.gmra.mrb[0].mxu0 %v95
    %v398 = vpop.f32.mrb[0].mxu0
    %v399 = vadd.f32 0.0, %v398
    %v400 = vpop.f32.mrb[0].mxu0
    %401 = vmatprep.mubr.f32.mxu0 %v208
    %402 = vmatmul.mubr.f32.gmra.mrb[0].mxu0 %v97
    %v403 = vpop.f32.mrb[0].mxu0
    %v404 = vadd.f32 0.0, %v403
    %v405 = vpop.f32.mrb[0].mxu0
    %406 = vmatprep.mubr.f32.mxu0 %v211
    %407 = vmatmul.mubr.f32.gmra.mrb[0].mxu0 %v99
    %v408 = vpop.f32.mrb[0].mxu0
    %v409 = vadd.f32 0.0, %v408
    %v410 = vpop.f32.mrb[0].mxu0
    %411 = vmatprep.mubr.f32.mxu0 %v214
    %412 = vmatmul.mubr.f32.gmra.mrb[0].mxu0 %v101
    %v413 = vpop.f32.mrb[0].mxu0
    %v414 = vadd.f32 0.0, %v413
    %v415 = vpop.f32.mrb[0].mxu0
    %416 = vmatprep.mubr.f32.mxu0 %v217
    %417 = vmatmul.mubr.f32.gmra.mrb[0].mxu0 %v103
    %v418 = vpop.f32.mrb[0].mxu0
    %v419 = vadd.f32 0.0, %v418
    %v420 = vpop.f32.mrb[0].mxu0
    %421 = vmatprep.mubr.f32.mxu0 %v220
    %422 = vmatmul.mubr.f32.gmra.mrb[0].mxu0 %v105
    %v423 = vpop.f32.mrb[0].mxu0
    %v424 = vadd.f32 0.0, %v423
    %v425 = vpop.f32.mrb[0].mxu0
    %426 = vmatprep.mubr.f32.mxu0 %v223
    %427 = vmatmul.mubr.f32.gmra.mrb[0].mxu0 %v107
    %v428 = vpop.f32.mrb[0].mxu0
    %v429 = vadd.f32 0.0, %v428
    %v430 = vpop.f32.mrb[0].mxu0
    %431 = vmatprep.mubr.f32.mxu0 %v226
    %432 = vmatmul.mubr.f32.gmra.mrb[0].mxu0 %v109
    %v433 = vpop.f32.mrb[0].mxu0
    %v434 = vadd.f32 0.0, %v433
    %v435 = vpop.f32.mrb[0].mxu0
    %436 = vmatprep.mubr.f32.mxu0 %v229
    %437 = vmatmul.mubr.f32.gmra.mrb[0].mxu0 %v111
    %v438 = vpop.f32.mrb[0].mxu0
    %v439 = vadd.f32 0.0, %v438
    %v440 = vpop.f32.mrb[0].mxu0
    %441 = vmatprep.mubr.f32.mxu0 %v232
    %442 = vmatmul.mubr.f32.gmra.mrb[0].mxu0 %v113
    %v443 = vpop.f32.mrb[0].mxu0
    %v444 = vadd.f32 0.0, %v443
    %v445 = vpop.f32.mrb[0].mxu0
    %446 = vmatprep.mubr.f32.mxu0 %v235
    %447 = vmatmul.mubr.f32.gmra.mrb[0].mxu0 %v115
    %v448 = vpop.f32.mrb[0].mxu0
    %v449 = vadd.f32 0.0, %v448
    %v450 = vpop.f32.mrb[0].mxu0
    %451 = vmatprep.mubr.f32.mxu0 %v238
    %452 = vmatmul.mubr.f32.gmra.mrb[0].mxu0 %v117
    %v453 = vpop.f32.mrb[0].mxu0
    %v454 = vadd.f32 0.0, %v453
    %v455 = vpop.f32.mrb[0].mxu0
    %456 = vmatprep.mubr.f32.mxu0 %v241
    %457 = vmatmul.mubr.f32.gmra.mrb[0].mxu0 %v119
    %v458 = vpop.f32.mrb[0].mxu0
    %v459 = vadd.f32 0.0, %v458
    %v460 = vpop.f32.mrb[0].mxu0
    %461 = vmatprep.mubr.f32.mxu0 %v244
    %462 = vmatmul.mubr.f32.gmra.mrb[0].mxu0 %v121
    %v463 = vpop.f32.mrb[0].mxu0
    %v464 = vadd.f32 0.0, %v463
    %v465 = vpop.f32.mrb[0].mxu0
    %466 = vmatprep.mubr.f32.mxu0 %v247
    %467 = vmatmul.mubr.f32.gmra.mrb[0].mxu0 %v123
    %v468 = vpop.f32.mrb[0].mxu0
    %v469 = vadd.f32 0.0, %v468
    %v470 = vpop.f32.mrb[0].mxu0
    %471 = vmatprep.mubr.f32.mxu0 %v250
    %472 = vmatmul.mubr.f32.gmra.mrb[0].mxu0 %v125
    %v473 = vpop.f32.mrb[0].mxu0
    %v474 = vadd.f32 0.0, %v473
    %v475 = vpop.f32.mrb[0].mxu0
    %476 = vdwg.mxu0
    %v477 = vld [vmem:[%s2] sm:$0xff]
    %v478 = vld [vmem:[%s2 + $0x8] sm:$0xff]
    %v479 = vld [vmem:[%s2 + $0x10] sm:$0xff]
    %v480 = vld [vmem:[%s2 + $0x18] sm:$0xff]
    %v481 = vld [vmem:[%s2 + $0x20] sm:$0xff]
    %v482 = vld [vmem:[%s2 + $0x28] sm:$0xff]
    %v483 = vld [vmem:[%s2 + $0x30] sm:$0xf]
    %v484 = vld [vmem:[%s2 + $0x38] sm:$0xf]
    %vm485 = vcmask 228352
    %v487 = vsel %vm485, %v319, 0
    %v490 = vsel %vm485, %v324, 0
    %v493 = vsel %vm485, %v329, 0
    %v496 = vsel %vm485, %v334, 0
    %v499 = vsel %vm485, %v339, 0
    %v502 = vsel %vm485, %v344, 0
    %v505 = vsel %vm485, %v349, 0
    %v508 = vsel %vm485, %v354, 0
    %v511 = vsel %vm485, %v359, 0
    %v514 = vsel %vm485, %v364, 0
    %v517 = vsel %vm485, %v369, 0
    %v520 = vsel %vm485, %v374, 0
    %v523 = vsel %vm485, %v379, 0
    %v526 = vsel %vm485, %v384, 0
    %v529 = vsel %vm485, %v389, 0
    %v532 = vsel %vm485, %v394, 0
    %v535 = vsel %vm485, %v399, 0
    %v538 = vsel %vm485, %v404, 0
    %v541 = vsel %vm485, %v409, 0
    %v544 = vsel %vm485, %v414, 0
    %v547 = vsel %vm485, %v419, 0
    %v550 = vsel %vm485, %v424, 0
    %v553 = vsel %vm485, %v429, 0
    %v556 = vsel %vm485, %v434, 0
    %v559 = vsel %vm485, %v439, 0
    %v562 = vsel %vm485, %v444, 0
    %v565 = vsel %vm485, %v449, 0
    %v568 = vsel %vm485, %v454, 0
    %v571 = vsel %vm485, %v459, 0
    %v574 = vsel %vm485, %v464, 0
    %v577 = vsel %vm485, %v469, 0
    %v580 = vsel %vm485, %v474, 0
    %vm582 = vcmask 1043456
    %v584 = vsel %vm582, %v483, 0
    %v587 = vsel %vm582, %v484, 0
    %589 = vmatprep.subr.mxu0 %v478
    %590 = vmatpush1.msra.mxu0 %v477
    %591 = vmatprep.subr.mxu0 %v480
    %592 = vmatpush1.msra.mxu0 %v479
    %593 = vmatprep.subr.mxu0 %v482
    %594 = vmatpush1.msra.mxu0 %v481
    %595 = vmatprep.subr.mxu0 %v587
    %596 = vmatpush1.msra.mxu0 %v584
    %597 = vmatprep.subr.mxu0 0.0
    %598 = vmatpush1.msra.mxu0 0.0
    %599 = vmatprep.subr.mxu0 0.0
    %600 = vmatpush1.msra.mxu0 0.0
    %601 = vmatprep.subr.mxu0 0.0
    %602 = vmatpush1.msra.mxu0 0.0
    %603 = vmatprep.subr.mxu0 0.0
    %604 = vmatpush1.msra.mxu0 0.0
    %605 = vmatprep.subr.mxu0 0.0
    %606 = vmatpush1.msra.mxu0 0.0
    %607 = vmatprep.subr.mxu0 0.0
    %608 = vmatpush1.msra.mxu0 0.0
    %609 = vmatprep.subr.mxu0 0.0
    %610 = vmatpush1.msra.mxu0 0.0
    %611 = vmatprep.subr.mxu0 0.0
    %612 = vmatpush1.msra.mxu0 0.0
    %613 = vmatprep.subr.mxu0 0.0
    %614 = vmatpush1.msra.mxu0 0.0
    %615 = vmatprep.subr.mxu0 0.0
    %616 = vmatpush1.msra.mxu0 0.0
    %617 = vmatprep.subr.mxu0 0.0
    %618 = vmatpush1.msra.mxu0 0.0
    %619 = vmatprep.subr.mxu0 0.0
    %620 = vmatpush1.msra.mxu0 0.0
    %621 = vmatprep.subr.mxu0 0.0
    %622 = vmatpush1.msra.mxu0 0.0
    %623 = vmatprep.subr.mxu0 0.0
    %624 = vmatpush1.msra.mxu0 0.0
    %625 = vmatprep.subr.mxu0 0.0
    %626 = vmatpush1.msra.mxu0 0.0
    %627 = vmatprep.subr.mxu0 0.0
    %628 = vmatpush1.msra.mxu0 0.0
    %629 = vmatprep.subr.mxu0 0.0
    %630 = vmatpush1.msra.mxu0 0.0
    %631 = vmatprep.subr.mxu0 0.0
    %632 = vmatpush1.msra.mxu0 0.0
    %633 = vmatprep.subr.mxu0 0.0
    %634 = vmatpush1.msra.mxu0 0.0
    %635 = vmatprep.subr.mxu0 0.0
    %636 = vmatpush1.msra.mxu0 0.0
    %637 = vmatprep.subr.mxu0 0.0
    %638 = vmatpush1.msra.mxu0 0.0
    %639 = vmatprep.subr.mxu0 0.0
    %640 = vmatpush1.msra.mxu0 0.0
    %641 = vmatprep.subr.mxu0 0.0
    %642 = vmatpush1.msra.mxu0 0.0
    %643 = vmatprep.subr.mxu0 0.0
    %644 = vmatpush1.msra.mxu0 0.0
    %645 = vmatprep.subr.mxu0 0.0
    %646 = vmatpush1.msra.mxu0 0.0
    %647 = vmatprep.subr.mxu0 0.0
    %648 = vmatpush1.msra.mxu0 0.0
    %649 = vmatprep.subr.mxu0 0.0
    %650 = vmatpush1.msra.mxu0 0.0
    %651 = vmatprep.subr.mxu0 0.0
    %652 = vmatpush1.msra.mxu0 0.0
    %653 = vmatprep.mubr.f32.mxu0 0.0
    %654 = vmatmul.mubr.f32.gmra.mrb[0].mxu0 %v487
    %v655 = vpop.f32.mrb[0].mxu0
    %v656 = vadd.f32 0.0, %v655
    %v657 = vpop.f32.mrb[0].mxu0
    %v658 = vadd.f32 0.0, %v657
    %659 = vmatprep.mubr.f32.mxu0 0.0
    %660 = vmatmul.mubr.f32.gmra.mrb[0].mxu0 %v490
    %v661 = vpop.f32.mrb[0].mxu0
    %v662 = vadd.f32 0.0, %v661
    %v663 = vpop.f32.mrb[0].mxu0
    %v664 = vadd.f32 0.0, %v663
    %665 = vmatprep.mubr.f32.mxu0 0.0
    %666 = vmatmul.mubr.f32.gmra.mrb[0].mxu0 %v493
    %v667 = vpop.f32.mrb[0].mxu0
    %v668 = vadd.f32 0.0, %v667
    %v669 = vpop.f32.mrb[0].mxu0
    %v670 = vadd.f32 0.0, %v669
    %671 = vmatprep.mubr.f32.mxu0 0.0
    %672 = vmatmul.mubr.f32.gmra.mrb[0].mxu0 %v496
    %v673 = vpop.f32.mrb[0].mxu0
    %v674 = vadd.f32 0.0, %v673
    %v675 = vpop.f32.mrb[0].mxu0
    %v676 = vadd.f32 0.0, %v675
    %677 = vmatprep.mubr.f32.mxu0 0.0
    %678 = vmatmul.mubr.f32.gmra.mrb[0].mxu0 %v499
    %v679 = vpop.f32.mrb[0].mxu0
    %v680 = vadd.f32 0.0, %v679
    %v681 = vpop.f32.mrb[0].mxu0
    %v682 = vadd.f32 0.0, %v681
    %683 = vmatprep.mubr.f32.mxu0 0.0
    %684 = vmatmul.mubr.f32.gmra.mrb[0].mxu0 %v502
    %v685 = vpop.f32.mrb[0].mxu0
    %v686 = vadd.f32 0.0, %v685
    %v687 = vpop.f32.mrb[0].mxu0
    %v688 = vadd.f32 0.0, %v687
    %689 = vmatprep.mubr.f32.mxu0 0.0
    %690 = vmatmul.mubr.f32.gmra.mrb[0].mxu0 %v505
    %v691 = vpop.f32.mrb[0].mxu0
    %v692 = vadd.f32 0.0, %v691
    %v693 = vpop.f32.mrb[0].mxu0
    %v694 = vadd.f32 0.0, %v693
    %695 = vmatprep.mubr.f32.mxu0 0.0
    %696 = vmatmul.mubr.f32.gmra.mrb[0].mxu0 %v508
    %v697 = vpop.f32.mrb[0].mxu0
    %v698 = vadd.f32 0.0, %v697
    %v699 = vpop.f32.mrb[0].mxu0
    %v700 = vadd.f32 0.0, %v699
    %701 = vmatprep.mubr.f32.mxu0 0.0
    %702 = vmatmul.mubr.f32.gmra.mrb[0].mxu0 %v511
    %v703 = vpop.f32.mrb[0].mxu0
    %v704 = vadd.f32 0.0, %v703
    %v705 = vpop.f32.mrb[0].mxu0
    %v706 = vadd.f32 0.0, %v705
    %707 = vmatprep.mubr.f32.mxu0 0.0
    %708 = vmatmul.mubr.f32.gmra.mrb[0].mxu0 %v514
    %v709 = vpop.f32.mrb[0].mxu0
    %v710 = vadd.f32 0.0, %v709
    %v711 = vpop.f32.mrb[0].mxu0
    %v712 = vadd.f32 0.0, %v711
    %713 = vmatprep.mubr.f32.mxu0 0.0
    %714 = vmatmul.mubr.f32.gmra.mrb[0].mxu0 %v517
    %v715 = vpop.f32.mrb[0].mxu0
    %v716 = vadd.f32 0.0, %v715
    %v717 = vpop.f32.mrb[0].mxu0
    %v718 = vadd.f32 0.0, %v717
    %719 = vmatprep.mubr.f32.mxu0 0.0
    %720 = vmatmul.mubr.f32.gmra.mrb[0].mxu0 %v520
    %v721 = vpop.f32.mrb[0].mxu0
    %v722 = vadd.f32 0.0, %v721
    %v723 = vpop.f32.mrb[0].mxu0
    %v724 = vadd.f32 0.0, %v723
    %725 = vmatprep.mubr.f32.mxu0 0.0
    %726 = vmatmul.mubr.f32.gmra.mrb[0].mxu0 %v523
    %v727 = vpop.f32.mrb[0].mxu0
    %v728 = vadd.f32 0.0, %v727
    %v729 = vpop.f32.mrb[0].mxu0
    %v730 = vadd.f32 0.0, %v729
    %731 = vmatprep.mubr.f32.mxu0 0.0
    %732 = vmatmul.mubr.f32.gmra.mrb[0].mxu0 %v526
    %v733 = vpop.f32.mrb[0].mxu0
    %v734 = vadd.f32 0.0, %v733
    %v735 = vpop.f32.mrb[0].mxu0
    %v736 = vadd.f32 0.0, %v735
    %737 = vmatprep.mubr.f32.mxu0 0.0
    %738 = vmatmul.mubr.f32.gmra.mrb[0].mxu0 %v529
    %v739 = vpop.f32.mrb[0].mxu0
    %v740 = vadd.f32 0.0, %v739
    %v741 = vpop.f32.mrb[0].mxu0
    %v742 = vadd.f32 0.0, %v741
    %743 = vmatprep.mubr.f32.mxu0 0.0
    %744 = vmatmul.mubr.f32.gmra.mrb[0].mxu0 %v532
    %v745 = vpop.f32.mrb[0].mxu0
    %v746 = vadd.f32 0.0, %v745
    %v747 = vpop.f32.mrb[0].mxu0
    %v748 = vadd.f32 0.0, %v747
    %749 = vmatprep.mubr.f32.mxu0 0.0
    %750 = vmatmul.mubr.f32.gmra.mrb[0].mxu0 %v535
    %v751 = vpop.f32.mrb[0].mxu0
    %v752 = vadd.f32 0.0, %v751
    %v753 = vpop.f32.mrb[0].mxu0
    %v754 = vadd.f32 0.0, %v753
    %755 = vmatprep.mubr.f32.mxu0 0.0
    %756 = vmatmul.mubr.f32.gmra.mrb[0].mxu0 %v538
    %v757 = vpop.f32.mrb[0].mxu0
    %v758 = vadd.f32 0.0, %v757
    %v759 = vpop.f32.mrb[0].mxu0
    %v760 = vadd.f32 0.0, %v759
    %761 = vmatprep.mubr.f32.mxu0 0.0
    %762 = vmatmul.mubr.f32.gmra.mrb[0].mxu0 %v541
    %v763 = vpop.f32.mrb[0].mxu0
    %v764 = vadd.f32 0.0, %v763
    %v765 = vpop.f32.mrb[0].mxu0
    %v766 = vadd.f32 0.0, %v765
    %767 = vmatprep.mubr.f32.mxu0 0.0
    %768 = vmatmul.mubr.f32.gmra.mrb[0].mxu0 %v544
    %v769 = vpop.f32.mrb[0].mxu0
    %v770 = vadd.f32 0.0, %v769
    %v771 = vpop.f32.mrb[0].mxu0
    %v772 = vadd.f32 0.0, %v771
    %773 = vmatprep.mubr.f32.mxu0 0.0
    %774 = vmatmul.mubr.f32.gmra.mrb[0].mxu0 %v547
    %v775 = vpop.f32.mrb[0].mxu0
    %v776 = vadd.f32 0.0, %v775
    %v777 = vpop.f32.mrb[0].mxu0
    %v778 = vadd.f32 0.0, %v777
    %779 = vmatprep.mubr.f32.mxu0 0.0
    %780 = vmatmul.mubr.f32.gmra.mrb[0].mxu0 %v550
    %v781 = vpop.f32.mrb[0].mxu0
    %v782 = vadd.f32 0.0, %v781
    %v783 = vpop.f32.mrb[0].mxu0
    %v784 = vadd.f32 0.0, %v783
    %785 = vmatprep.mubr.f32.mxu0 0.0
    %786 = vmatmul.mubr.f32.gmra.mrb[0].mxu0 %v553
    %v787 = vpop.f32.mrb[0].mxu0
    %v788 = vadd.f32 0.0, %v787
    %v789 = vpop.f32.mrb[0].mxu0
    %v790 = vadd.f32 0.0, %v789
    %791 = vmatprep.mubr.f32.mxu0 0.0
    %792 = vmatmul.mubr.f32.gmra.mrb[0].mxu0 %v556
    %v793 = vpop.f32.mrb[0].mxu0
    %v794 = vadd.f32 0.0, %v793
    %v795 = vpop.f32.mrb[0].mxu0
    %v796 = vadd.f32 0.0, %v795
    %797 = vmatprep.mubr.f32.mxu0 0.0
    %798 = vmatmul.mubr.f32.gmra.mrb[0].mxu0 %v559
    %v799 = vpop.f32.mrb[0].mxu0
    %v800 = vadd.f32 0.0, %v799
    %v801 = vpop.f32.mrb[0].mxu0
    %v802 = vadd.f32 0.0, %v801
    %803 = vmatprep.mubr.f32.mxu0 0.0
    %804 = vmatmul.mubr.f32.gmra.mrb[0].mxu0 %v562
    %v805 = vpop.f32.mrb[0].mxu0
    %v806 = vadd.f32 0.0, %v805
    %v807 = vpop.f32.mrb[0].mxu0
    %v808 = vadd.f32 0.0, %v807
    %809 = vmatprep.mubr.f32.mxu0 0.0
    %810 = vmatmul.mubr.f32.gmra.mrb[0].mxu0 %v565
    %v811 = vpop.f32.mrb[0].mxu0
    %v812 = vadd.f32 0.0, %v811
    %v813 = vpop.f32.mrb[0].mxu0
    %v814 = vadd.f32 0.0, %v813
    %815 = vmatprep.mubr.f32.mxu0 0.0
    %816 = vmatmul.mubr.f32.gmra.mrb[0].mxu0 %v568
    %v817 = vpop.f32.mrb[0].mxu0
    %v818 = vadd.f32 0.0, %v817
    %v819 = vpop.f32.mrb[0].mxu0
    %v820 = vadd.f32 0.0, %v819
    %821 = vmatprep.mubr.f32.mxu0 0.0
    %822 = vmatmul.mubr.f32.gmra.mrb[0].mxu0 %v571
    %v823 = vpop.f32.mrb[0].mxu0
    %v824 = vadd.f32 0.0, %v823
    %v825 = vpop.f32.mrb[0].mxu0
    %v826 = vadd.f32 0.0, %v825
    %827 = vmatprep.mubr.f32.mxu0 0.0
    %828 = vmatmul.mubr.f32.gmra.mrb[0].mxu0 %v574
    %v829 = vpop.f32.mrb[0].mxu0
    %v830 = vadd.f32 0.0, %v829
    %v831 = vpop.f32.mrb[0].mxu0
    %v832 = vadd.f32 0.0, %v831
    %833 = vmatprep.mubr.f32.mxu0 0.0
    %834 = vmatmul.mubr.f32.gmra.mrb[0].mxu0 %v577
    %v835 = vpop.f32.mrb[0].mxu0
    %v836 = vadd.f32 0.0, %v835
    %v837 = vpop.f32.mrb[0].mxu0
    %v838 = vadd.f32 0.0, %v837
    %839 = vmatprep.mubr.f32.mxu0 0.0
    %840 = vmatmul.mubr.f32.gmra.mrb[0].mxu0 %v580
    %v841 = vpop.f32.mrb[0].mxu0
    %v842 = vadd.f32 0.0, %v841
    %v843 = vpop.f32.mrb[0].mxu0
    %v844 = vadd.f32 0.0, %v843
    %845 = vdwg.mxu0
    %v846 = vld [vmem:[%s4] sm:$0x3]
    %v847 = vld [vmem:[%s3] ss:$8 sm:$0x3]
    %s848 = scalar_lea.vmem %s3, 1
    %v849 = vld [vmem:[%s848] ss:$8 sm:$0x3]
    %s850 = scalar_lea.vmem %s3, 2
    %v851 = vld [vmem:[%s850] ss:$8 sm:$0x3]
    %s852 = scalar_lea.vmem %s3, 3
    %v853 = vld [vmem:[%s852] ss:$8 sm:$0x3]
    %s854 = scalar_lea.vmem %s3, 4
    %v855 = vld [vmem:[%s854] ss:$8 sm:$0x3]
    %s856 = scalar_lea.vmem %s3, 5
    %v857 = vld [vmem:[%s856] ss:$8 sm:$0x3]
    %s858 = scalar_lea.vmem %s3, 6
    %v859 = vld [vmem:[%s858] ss:$8 sm:$0x3]
    %s860 = scalar_lea.vmem %s3, 7
    %v861 = vld [vmem:[%s860] ss:$8 sm:$0x3]
    %s862 = scalar_lea.vmem %s3, 16
    %v863 = vld [vmem:[%s862] ss:$8 sm:$0x3]
    %v865 = vlaneseq
    %v866 = vshrl.u32 %v865, 7
    %v867 = vsub.s32 0, %v866
    %v868 = vrot.slane %v847, %v867
    %v869 = vlaneseq
    %v870 = vshrl.u32 %v869, 7
    %v871 = vsub.s32 1, %v870
    %v872 = vrot.slane %v847, %v871
    %v875 = vmul.f32 %v656, %v868
    %v876 = vmul.f32 %v658, %v872
    %v877 = vmul.f32 %v662, %v868
    %v878 = vmul.f32 %v664, %v872
    %v879 = vmul.f32 %v668, %v868
    %v880 = vmul.f32 %v670, %v872
    %v881 = vmul.f32 %v674, %v868
    %v882 = vmul.f32 %v676, %v872
    %v884 = vlaneseq
    %v885 = vshrl.u32 %v884, 7
    %v886 = vsub.s32 0, %v885
    %v887 = vrot.slane %v849, %v886
    %v888 = vlaneseq
    %v889 = vshrl.u32 %v888, 7
    %v890 = vsub.s32 1, %v889
    %v891 = vrot.slane %v849, %v890
    %892 = vrot.lane.b32.xlu0 %v887, 1
    %v893 = vpop.permute.xlu0 %892
    %894 = vrot.lane.b32.xlu0 %v891, 1
    %v895 = vpop.permute.xlu0 %894
    %vm896 = vcmask 7168
    %v897 = vsel %vm896, %v893, %v895
    %v900 = vmul.f32 %v656, %v893
    %v901 = vmul.f32 %v658, %v897
    %v902 = vmul.f32 %v662, %v893
    %v903 = vmul.f32 %v664, %v897
    %v904 = vmul.f32 %v668, %v893
    %v905 = vmul.f32 %v670, %v897
    %v906 = vmul.f32 %v674, %v893
    %v907 = vmul.f32 %v676, %v897
    %916 = vrot.lane.b32.xlu0 %v900, 127
    %v917 = vpop.permute.xlu0 %916
    %918 = vrot.lane.b32.xlu0 %v901, 127
    %v919 = vpop.permute.xlu0 %918
    %920 = vrot.lane.b32.xlu0 %v902, 127
    %v921 = vpop.permute.xlu0 %920
    %922 = vrot.lane.b32.xlu0 %v903, 127
    %v923 = vpop.permute.xlu0 %922
    %924 = vrot.lane.b32.xlu0 %v904, 127
    %v925 = vpop.permute.xlu0 %924
    %926 = vrot.lane.b32.xlu0 %v905, 127
    %v927 = vpop.permute.xlu0 %926
    %928 = vrot.lane.b32.xlu0 %v906, 127
    %v929 = vpop.permute.xlu0 %928
    %930 = vrot.lane.b32.xlu0 %v907, 127
    %v931 = vpop.permute.xlu0 %930
    %vm932 = vcmask 1039360
    %v933 = vsel %vm932, %v917, %v919
    %v934 = vsel %vm932, %v921, %v923
    %v935 = vsel %vm932, %v925, %v927
    %v936 = vsel %vm932, %v929, %v931
    %v945 = vadd.f32 %v875, %v933
    %v946 = vadd.f32 %v876, %v919
    %v947 = vadd.f32 %v877, %v934
    %v948 = vadd.f32 %v878, %v923
    %v949 = vadd.f32 %v879, %v935
    %v950 = vadd.f32 %v880, %v927
    %v951 = vadd.f32 %v881, %v936
    %v952 = vadd.f32 %v882, %v931
    %v954 = vlaneseq
    %v955 = vshrl.u32 %v954, 7
    %v956 = vsub.s32 0, %v955
    %v957 = vrot.slane %v851, %v956
    %v958 = vlaneseq
    %v959 = vshrl.u32 %v958, 7
    %v960 = vsub.s32 1, %v959
    %v961 = vrot.slane %v851, %v960
    %962 = vrot.lane.b32.xlu0 %v957, 2
    %v963 = vpop.permute.xlu0 %962
    %964 = vrot.lane.b32.xlu0 %v961, 2
    %v965 = vpop.permute.xlu0 %964
    %vm966 = vcmask 15360
    %v967 = vsel %vm966, %v963, %v965
    %v970 = vmul.f32 %v656, %v963
    %v971 = vmul.f32 %v658, %v967
    %v972 = vmul.f32 %v662, %v963
    %v973 = vmul.f32 %v664, %v967
    %v974 = vmul.f32 %v668, %v963
    %v975 = vmul.f32 %v670, %v967
    %v976 = vmul.f32 %v674, %v963
    %v977 = vmul.f32 %v676, %v967
    %986 = vrot.lane.b32.xlu0 %v970, 126
    %v987 = vpop.permute.xlu0 %986
    %988 = vrot.lane.b32.xlu0 %v971, 126
    %v989 = vpop.permute.xlu0 %988
    %990 = vrot.lane.b32.xlu0 %v972, 126
    %v991 = vpop.permute.xlu0 %990
    %992 = vrot.lane.b32.xlu0 %v973, 126
    %v993 = vpop.permute.xlu0 %992
    %994 = vrot.lane.b32.xlu0 %v974, 126
    %v995 = vpop.permute.xlu0 %994
    %996 = vrot.lane.b32.xlu0 %v975, 126
    %v997 = vpop.permute.xlu0 %996
    %998 = vrot.lane.b32.xlu0 %v976, 126
    %v999 = vpop.permute.xlu0 %998
    %1000 = vrot.lane.b32.xlu0 %v977, 126
    %v1001 = vpop.permute.xlu0 %1000
    %vm1002 = vcmask 1031168
    %v1003 = vsel %vm1002, %v987, %v989
    %v1004 = vsel %vm1002, %v991, %v993
    %v1005 = vsel %vm1002, %v995, %v997
    %v1006 = vsel %vm1002, %v999, %v1001
    %v1015 = vadd.f32 %v945, %v1003
    %v1016 = vadd.f32 %v946, %v989
    %v1017 = vadd.f32 %v947, %v1004
    %v1018 = vadd.f32 %v948, %v993
    %v1019 = vadd.f32 %v949, %v1005
    %v1020 = vadd.f32 %v950, %v997
    %v1021 = vadd.f32 %v951, %v1006
    %v1022 = vadd.f32 %v952, %v1001
    %v1024 = vlaneseq
    %v1025 = vshrl.u32 %v1024, 7
    %v1026 = vsub.s32 0, %v1025
    %v1027 = vrot.slane %v853, %v1026
    %v1028 = vlaneseq
    %v1029 = vshrl.u32 %v1028, 7
    %v1030 = vsub.s32 1, %v1029
    %v1031 = vrot.slane %v853, %v1030
    %v1034 = vmul.f32 %v656, %v1027
    %v1035 = vmul.f32 %v658, %v1031
    %v1036 = vmul.f32 %v662, %v1027
    %v1037 = vmul.f32 %v664, %v1031
    %v1038 = vmul.f32 %v668, %v1027
    %v1039 = vmul.f32 %v670, %v1031
    %v1040 = vmul.f32 %v674, %v1027
    %v1041 = vmul.f32 %v676, %v1031
    %vm1050 = vcmask 1046528
    %v1051 = vrot.slane %v1034, 1
    %v1052 = vrot.slane %v1036, 1
    %v1053 = vsel %vm1050, %v1051, %v1052
    %v1054 = vrot.slane %v1035, 1
    %v1055 = vrot.slane %v1037, 1
    %v1056 = vsel %vm1050, %v1054, %v1055
    %v1057 = vrot.slane %v1038, 1
    %v1058 = vsel %vm1050, %v1052, %v1057
    %v1059 = vrot.slane %v1039, 1
    %v1060 = vsel %vm1050, %v1055, %v1059
    %v1061 = vrot.slane %v1040, 1
    %v1062 = vsel %vm1050, %v1057, %v1061
    %v1063 = vrot.slane %v1041, 1
    %v1064 = vsel %vm1050, %v1059, %v1063
    %v1073 = vadd.f32 %v1015, %v1053
    %v1074 = vadd.f32 %v1016, %v1056
    %v1075 = vadd.f32 %v1017, %v1058
    %v1076 = vadd.f32 %v1018, %v1060
    %v1077 = vadd.f32 %v1019, %v1062
    %v1078 = vadd.f32 %v1020, %v1064
    %v1079 = vadd.f32 %v1021, %v1061
    %v1080 = vadd.f32 %v1022, %v1063
    %v1082 = vlaneseq
    %v1083 = vshrl.u32 %v1082, 7
    %v1084 = vsub.s32 0, %v1083
    %v1085 = vrot.slane %v855, %v1084
    %v1086 = vlaneseq
    %v1087 = vshrl.u32 %v1086, 7
    %v1088 = vsub.s32 1, %v1087
    %v1089 = vrot.slane %v855, %v1088
    %1090 = vrot.lane.b32.xlu0 %v1085, 1
    %v1091 = vpop.permute.xlu0 %1090
    %1092 = vrot.lane.b32.xlu0 %v1089, 1
    %v1093 = vpop.permute.xlu0 %1092
    %v1094 = vsel %vm896, %v1091, %v1093
    %v1097 = vmul.f32 %v656, %v1091
    %v1098 = vmul.f32 %v658, %v1094
    %v1099 = vmul.f32 %v662, %v1091
    %v1100 = vmul.f32 %v664, %v1094
    %v1101 = vmul.f32 %v668, %v1091
    %v1102 = vmul.f32 %v670, %v1094
    %v1103 = vmul.f32 %v674, %v1091
    %v1104 = vmul.f32 %v676, %v1094
    %v1113 = vrot.slane %v1097, 1
    %v1114 = vrot.slane %v1099, 1
    %v1115 = vsel %vm1050, %v1113, %v1114
    %v1116 = vrot.slane %v1098, 1
    %v1117 = vrot.slane %v1100, 1
    %v1118 = vsel %vm1050, %v1116, %v1117
    %v1119 = vrot.slane %v1101, 1
    %v1120 = vsel %vm1050, %v1114, %v1119
    %v1121 = vrot.slane %v1102, 1
    %v1122 = vsel %vm1050, %v1117, %v1121
    %v1123 = vrot.slane %v1103, 1
    %v1124 = vsel %vm1050, %v1119, %v1123
    %v1125 = vrot.slane %v1104, 1
    %v1126 = vsel %vm1050, %v1121, %v1125
    %1127 = vrot.lane.b32.xlu0 %v1115, 127
    %v1128 = vpop.permute.xlu0 %1127
    %1129 = vrot.lane.b32.xlu0 %v1118, 127
    %v1130 = vpop.permute.xlu0 %1129
    %1131 = vrot.lane.b32.xlu0 %v1120, 127
    %v1132 = vpop.permute.xlu0 %1131
    %1133 = vrot.lane.b32.xlu0 %v1122, 127
    %v1134 = vpop.permute.xlu0 %1133
    %1135 = vrot.lane.b32.xlu0 %v1124, 127
    %v1136 = vpop.permute.xlu0 %1135
    %1137 = vrot.lane.b32.xlu0 %v1126, 127
    %v1138 = vpop.permute.xlu0 %1137
    %1139 = vrot.lane.b32.xlu0 %v1123, 127
    %v1140 = vpop.permute.xlu0 %1139
    %1141 = vrot.lane.b32.xlu0 %v1125, 127
    %v1142 = vpop.permute.xlu0 %1141
    %v1143 = vsel %vm932, %v1128, %v1130
    %v1144 = vsel %vm932, %v1132, %v1134
    %v1145 = vsel %vm932, %v1136, %v1138
    %v1146 = vsel %vm932, %v1140, %v1142
    %v1155 = vadd.f32 %v1073, %v1143
    %v1156 = vadd.f32 %v1074, %v1130
    %v1157 = vadd.f32 %v1075, %v1144
    %v1158 = vadd.f32 %v1076, %v1134
    %v1159 = vadd.f32 %v1077, %v1145
    %v1160 = vadd.f32 %v1078, %v1138
    %v1161 = vadd.f32 %v1079, %v1146
    %v1162 = vadd.f32 %v1080, %v1142
    %v1164 = vlaneseq
    %v1165 = vshrl.u32 %v1164, 7
    %v1166 = vsub.s32 0, %v1165
    %v1167 = vrot.slane %v857, %v1166
    %v1168 = vlaneseq
    %v1169 = vshrl.u32 %v1168, 7
    %v1170 = vsub.s32 1, %v1169
    %v1171 = vrot.slane %v857, %v1170
    %1172 = vrot.lane.b32.xlu0 %v1167, 2
    %v1173 = vpop.permute.xlu0 %1172
    %1174 = vrot.lane.b32.xlu0 %v1171, 2
    %v1175 = vpop.permute.xlu0 %1174
    %v1176 = vsel %vm966, %v1173, %v1175
    %v1179 = vmul.f32 %v656, %v1173
    %v1180 = vmul.f32 %v658, %v1176
    %v1181 = vmul.f32 %v662, %v1173
    %v1182 = vmul.f32 %v664, %v1176
    %v1183 = vmul.f32 %v668, %v1173
    %v1184 = vmul.f32 %v670, %v1176
    %v1185 = vmul.f32 %v674, %v1173
    %v1186 = vmul.f32 %v676, %v1176
    %v1195 = vrot.slane %v1179, 1
    %v1196 = vrot.slane %v1181, 1
    %v1197 = vsel %vm1050, %v1195, %v1196
    %v1198 = vrot.slane %v1180, 1
    %v1199 = vrot.slane %v1182, 1
    %v1200 = vsel %vm1050, %v1198, %v1199
    %v1201 = vrot.slane %v1183, 1
    %v1202 = vsel %vm1050, %v1196, %v1201
    %v1203 = vrot.slane %v1184, 1
    %v1204 = vsel %vm1050, %v1199, %v1203
    %v1205 = vrot.slane %v1185, 1
    %v1206 = vsel %vm1050, %v1201, %v1205
    %v1207 = vrot.slane %v1186, 1
    %v1208 = vsel %vm1050, %v1203, %v1207
    %1209 = vrot.lane.b32.xlu0 %v1197, 126
    %v1210 = vpop.permute.xlu0 %1209
    %1211 = vrot.lane.b32.xlu0 %v1200, 126
    %v1212 = vpop.permute.xlu0 %1211
    %1213 = vrot.lane.b32.xlu0 %v1202, 126
    %v1214 = vpop.permute.xlu0 %1213
    %1215 = vrot.lane.b32.xlu0 %v1204, 126
    %v1216 = vpop.permute.xlu0 %1215
    %1217 = vrot.lane.b32.xlu0 %v1206, 126
    %v1218 = vpop.permute.xlu0 %1217
    %1219 = vrot.lane.b32.xlu0 %v1208, 126
    %v1220 = vpop.permute.xlu0 %1219
    %1221 = vrot.lane.b32.xlu0 %v1205, 126
    %v1222 = vpop.permute.xlu0 %1221
    %1223 = vrot.lane.b32.xlu0 %v1207, 126
    %v1224 = vpop.permute.xlu0 %1223
    %v1225 = vsel %vm1002, %v1210, %v1212
    %v1226 = vsel %vm1002, %v1214, %v1216
    %v1227 = vsel %vm1002, %v1218, %v1220
    %v1228 = vsel %vm1002, %v1222, %v1224
    %v1237 = vadd.f32 %v1155, %v1225
    %v1238 = vadd.f32 %v1156, %v1212
    %v1239 = vadd.f32 %v1157, %v1226
    %v1240 = vadd.f32 %v1158, %v1216
    %v1241 = vadd.f32 %v1159, %v1227
    %v1242 = vadd.f32 %v1160, %v1220
    %v1243 = vadd.f32 %v1161, %v1228
    %v1244 = vadd.f32 %v1162, %v1224
    %v1246 = vlaneseq
    %v1247 = vshrl.u32 %v1246, 7
    %v1248 = vsub.s32 0, %v1247
    %v1249 = vrot.slane %v859, %v1248
    %v1250 = vlaneseq
    %v1251 = vshrl.u32 %v1250, 7
    %v1252 = vsub.s32 1, %v1251
    %v1253 = vrot.slane %v859, %v1252
    %v1256 = vmul.f32 %v656, %v1249
    %v1257 = vmul.f32 %v658, %v1253
    %v1258 = vmul.f32 %v662, %v1249
    %v1259 = vmul.f32 %v664, %v1253
    %v1260 = vmul.f32 %v668, %v1249
    %v1261 = vmul.f32 %v670, %v1253
    %v1262 = vmul.f32 %v674, %v1249
    %v1263 = vmul.f32 %v676, %v1253
    %vm1272 = vcmask 1045504
    %v1273 = vrot.slane %v1256, 2
    %v1274 = vrot.slane %v1258, 2
    %v1275 = vsel %vm1272, %v1273, %v1274
    %v1276 = vrot.slane %v1257, 2
    %v1277 = vrot.slane %v1259, 2
    %v1278 = vsel %vm1272, %v1276, %v1277
    %v1279 = vrot.slane %v1260, 2
    %v1280 = vsel %vm1272, %v1274, %v1279
    %v1281 = vrot.slane %v1261, 2
    %v1282 = vsel %vm1272, %v1277, %v1281
    %v1283 = vrot.slane %v1262, 2
    %v1284 = vsel %vm1272, %v1279, %v1283
    %v1285 = vrot.slane %v1263, 2
    %v1286 = vsel %vm1272, %v1281, %v1285
    %v1295 = vadd.f32 %v1237, %v1275
    %v1296 = vadd.f32 %v1238, %v1278
    %v1297 = vadd.f32 %v1239, %v1280
    %v1298 = vadd.f32 %v1240, %v1282
    %v1299 = vadd.f32 %v1241, %v1284
    %v1300 = vadd.f32 %v1242, %v1286
    %v1301 = vadd.f32 %v1243, %v1283
    %v1302 = vadd.f32 %v1244, %v1285
    %v1304 = vlaneseq
    %v1305 = vshrl.u32 %v1304, 7
    %v1306 = vsub.s32 0, %v1305
    %v1307 = vrot.slane %v861, %v1306
    %v1308 = vlaneseq
    %v1309 = vshrl.u32 %v1308, 7
    %v1310 = vsub.s32 1, %v1309
    %v1311 = vrot.slane %v861, %v1310
    %1312 = vrot.lane.b32.xlu0 %v1307, 1
    %v1313 = vpop.permute.xlu0 %1312
    %1314 = vrot.lane.b32.xlu0 %v1311, 1
    %v1315 = vpop.permute.xlu0 %1314
    %v1316 = vsel %vm896, %v1313, %v1315
    %v1319 = vmul.f32 %v656, %v1313
    %v1320 = vmul.f32 %v658, %v1316
    %v1321 = vmul.f32 %v662, %v1313
    %v1322 = vmul.f32 %v664, %v1316
    %v1323 = vmul.f32 %v668, %v1313
    %v1324 = vmul.f32 %v670, %v1316
    %v1325 = vmul.f32 %v674, %v1313
    %v1326 = vmul.f32 %v676, %v1316
    %v1335 = vrot.slane %v1319, 2
    %v1336 = vrot.slane %v1321, 2
    %v1337 = vsel %vm1272, %v1335, %v1336
    %v1338 = vrot.slane %v1320, 2
    %v1339 = vrot.slane %v1322, 2
    %v1340 = vsel %vm1272, %v1338, %v1339
    %v1341 = vrot.slane %v1323, 2
    %v1342 = vsel %vm1272, %v1336, %v1341
    %v1343 = vrot.slane %v1324, 2
    %v1344 = vsel %vm1272, %v1339, %v1343
    %v1345 = vrot.slane %v1325, 2
    %v1346 = vsel %vm1272, %v1341, %v1345
    %v1347 = vrot.slane %v1326, 2
    %v1348 = vsel %vm1272, %v1343, %v1347
    %1349 = vrot.lane.b32.xlu0 %v1337, 127
    %v1350 = vpop.permute.xlu0 %1349
    %1351 = vrot.lane.b32.xlu0 %v1340, 127
    %v1352 = vpop.permute.xlu0 %1351
    %1353 = vrot.lane.b32.xlu0 %v1342, 127
    %v1354 = vpop.permute.xlu0 %1353
    %1355 = vrot.lane.b32.xlu0 %v1344, 127
    %v1356 = vpop.permute.xlu0 %1355
    %1357 = vrot.lane.b32.xlu0 %v1346, 127
    %v1358 = vpop.permute.xlu0 %1357
    %1359 = vrot.lane.b32.xlu0 %v1348, 127
    %v1360 = vpop.permute.xlu0 %1359
    %1361 = vrot.lane.b32.xlu0 %v1345, 127
    %v1362 = vpop.permute.xlu0 %1361
    %1363 = vrot.lane.b32.xlu0 %v1347, 127
    %v1364 = vpop.permute.xlu0 %1363
    %v1365 = vsel %vm932, %v1350, %v1352
    %v1366 = vsel %vm932, %v1354, %v1356
    %v1367 = vsel %vm932, %v1358, %v1360
    %v1368 = vsel %vm932, %v1362, %v1364
    %v1377 = vadd.f32 %v1295, %v1365
    %v1378 = vadd.f32 %v1296, %v1352
    %v1379 = vadd.f32 %v1297, %v1366
    %v1380 = vadd.f32 %v1298, %v1356
    %v1381 = vadd.f32 %v1299, %v1367
    %v1382 = vadd.f32 %v1300, %v1360
    %v1383 = vadd.f32 %v1301, %v1368
    %v1384 = vadd.f32 %v1302, %v1364
    %v1386 = vlaneseq
    %v1387 = vshrl.u32 %v1386, 7
    %v1388 = vsub.s32 0, %v1387
    %v1389 = vrot.slane %v863, %v1388
    %v1390 = vlaneseq
    %v1391 = vshrl.u32 %v1390, 7
    %v1392 = vsub.s32 1, %v1391
    %v1393 = vrot.slane %v863, %v1392
    %1394 = vrot.lane.b32.xlu0 %v1389, 2
    %v1395 = vpop.permute.xlu0 %1394
    %1396 = vrot.lane.b32.xlu0 %v1393, 2
    %v1397 = vpop.permute.xlu0 %1396
    %v1398 = vsel %vm966, %v1395, %v1397
    %v1401 = vmul.f32 %v656, %v1395
    %v1402 = vmul.f32 %v658, %v1398
    %v1403 = vmul.f32 %v662, %v1395
    %v1404 = vmul.f32 %v664, %v1398
    %v1405 = vmul.f32 %v668, %v1395
    %v1406 = vmul.f32 %v670, %v1398
    %v1407 = vmul.f32 %v674, %v1395
    %v1408 = vmul.f32 %v676, %v1398
    %v1417 = vrot.slane %v1401, 2
    %v1418 = vrot.slane %v1403, 2
    %v1419 = vsel %vm1272, %v1417, %v1418
    %v1420 = vrot.slane %v1402, 2
    %v1421 = vrot.slane %v1404, 2
    %v1422 = vsel %vm1272, %v1420, %v1421
    %v1423 = vrot.slane %v1405, 2
    %v1424 = vsel %vm1272, %v1418, %v1423
    %v1425 = vrot.slane %v1406, 2
    %v1426 = vsel %vm1272, %v1421, %v1425
    %v1427 = vrot.slane %v1407, 2
    %v1428 = vsel %vm1272, %v1423, %v1427
    %v1429 = vrot.slane %v1408, 2
    %v1430 = vsel %vm1272, %v1425, %v1429
    %1431 = vrot.lane.b32.xlu0 %v1419, 126
    %v1432 = vpop.permute.xlu0 %1431
    %1433 = vrot.lane.b32.xlu0 %v1422, 126
    %v1434 = vpop.permute.xlu0 %1433
    %1435 = vrot.lane.b32.xlu0 %v1424, 126
    %v1436 = vpop.permute.xlu0 %1435
    %1437 = vrot.lane.b32.xlu0 %v1426, 126
    %v1438 = vpop.permute.xlu0 %1437
    %1439 = vrot.lane.b32.xlu0 %v1428, 126
    %v1440 = vpop.permute.xlu0 %1439
    %1441 = vrot.lane.b32.xlu0 %v1430, 126
    %v1442 = vpop.permute.xlu0 %1441
    %1443 = vrot.lane.b32.xlu0 %v1427, 126
    %v1444 = vpop.permute.xlu0 %1443
    %1445 = vrot.lane.b32.xlu0 %v1429, 126
    %v1446 = vpop.permute.xlu0 %1445
    %v1447 = vsel %vm1002, %v1432, %v1434
    %v1448 = vsel %vm1002, %v1436, %v1438
    %v1449 = vsel %vm1002, %v1440, %v1442
    %v1450 = vsel %vm1002, %v1444, %v1446
    %v1459 = vadd.f32 %v1377, %v1447
    %v1460 = vadd.f32 %v1378, %v1434
    %v1461 = vadd.f32 %v1379, %v1448
    %v1462 = vadd.f32 %v1380, %v1438
    %v1463 = vadd.f32 %v1381, %v1449
    %v1464 = vadd.f32 %v1382, %v1442
    %v1465 = vadd.f32 %v1383, %v1450
    %v1466 = vadd.f32 %v1384, %v1446
    %v1468 = vlaneseq
    %v1469 = vshrl.u32 %v1468, 7
    %v1470 = vsub.s32 0, %v1469
    %v1471 = vrot.slane %v846, %v1470
    %v1472 = vlaneseq
    %v1473 = vshrl.u32 %v1472, 7
    %v1474 = vsub.s32 1, %v1473
    %v1475 = vrot.slane %v846, %v1474
    %v1478 = vadd.f32 %v1459, %v1471
    %v1479 = vadd.f32 %v1460, %v1475
    %v1480 = vadd.f32 %v1461, %v1471
    %v1481 = vadd.f32 %v1462, %v1475
    %v1482 = vadd.f32 %v1463, %v1471
    %v1483 = vadd.f32 %v1464, %v1475
    %v1484 = vadd.f32 %v1465, %v1471
    %v1485 = vadd.f32 %v1466, %v1475
    %v1486 = vmax.f32 %v1478, 0.0
    %v1487 = vmax.f32 %v1479, 0.0
    %v1488 = vmax.f32 %v1480, 0.0
    %v1489 = vmax.f32 %v1481, 0.0
    %v1490 = vmax.f32 %v1482, 0.0
    %v1491 = vmax.f32 %v1483, 0.0
    %v1492 = vmax.f32 %v1484, 0.0
    %v1493 = vmax.f32 %v1485, 0.0
    %v1502 = vrot.slane %v1486, 1
    %v1503 = vrot.slane %v1488, 1
    %v1504 = vsel %vm1050, %v1502, %v1503
    %v1505 = vrot.slane %v1487, 1
    %v1506 = vrot.slane %v1489, 1
    %v1507 = vsel %vm1050, %v1505, %v1506
    %v1508 = vrot.slane %v1490, 1
    %v1509 = vsel %vm1050, %v1503, %v1508
    %v1510 = vrot.slane %v1491, 1
    %v1511 = vsel %vm1050, %v1506, %v1510
    %v1512 = vrot.slane %v1492, 1
    %v1513 = vsel %vm1050, %v1508, %v1512
    %v1514 = vrot.slane %v1493, 1
    %v1515 = vsel %vm1050, %v1510, %v1514
    %v1524 = vmax.f32 %v1486, %v1504
    %v1525 = vmax.f32 %v1487, %v1507
    %v1526 = vmax.f32 %v1488, %v1509
    %v1527 = vmax.f32 %v1489, %v1511
    %v1528 = vmax.f32 %v1490, %v1513
    %v1529 = vmax.f32 %v1491, %v1515
    %v1530 = vmax.f32 %v1492, %v1512
    %v1531 = vmax.f32 %v1493, %v1514
    %v1532 = vld [vmem:[%s5] sm:$0xff]
    %v1533 = vld [vmem:[%s5 + $0x8] sm:$0xff]
    %vm1534 = vcmask 220160
    %v1536 = vsel %vm1534, %v1532, 0
    %v1539 = vsel %vm1534, %v1533, 0
    %vm1541 = vcmask 1042432
    %v1543 = vsel %vm1541, %v1530, 0
    %v1546 = vsel %vm1541, %v1531, 0
    %1548 = vmatprep.subr.mxu0 %v1525
    %1549 = vmatpush1.msra.mxu0 %v1524
    %1550 = vmatprep.subr.mxu0 %v1527
    %1551 = vmatpush1.msra.mxu0 %v1526
    %1552 = vmatprep.subr.mxu0 %v1529
    %1553 = vmatpush1.msra.mxu0 %v1528
    %1554 = vmatprep.subr.mxu0 %v1546
    %1555 = vmatpush1.msra.mxu0 %v1543
    %1556 = vmatprep.subr.mxu0 0.0
    %1557 = vmatpush1.msra.mxu0 0.0
    %1558 = vmatprep.subr.mxu0 0.0
    %1559 = vmatpush1.msra.mxu0 0.0
    %1560 = vmatprep.subr.mxu0 0.0
    %1561 = vmatpush1.msra.mxu0 0.0
    %1562 = vmatprep.subr.mxu0 0.0
    %1563 = vmatpush1.msra.mxu0 0.0
    %1564 = vmatprep.subr.mxu0 0.0
    %1565 = vmatpush1.msra.mxu0 0.0
    %1566 = vmatprep.subr.mxu0 0.0
    %1567 = vmatpush1.msra.mxu0 0.0
    %1568 = vmatprep.subr.mxu0 0.0
    %1569 = vmatpush1.msra.mxu0 0.0
    %1570 = vmatprep.subr.mxu0 0.0
    %1571 = vmatpush1.msra.mxu0 0.0
    %1572 = vmatprep.subr.mxu0 0.0
    %1573 = vmatpush1.msra.mxu0 0.0
    %1574 = vmatprep.subr.mxu0 0.0
    %1575 = vmatpush1.msra.mxu0 0.0
    %1576 = vmatprep.subr.mxu0 0.0
    %1577 = vmatpush1.msra.mxu0 0.0
    %1578 = vmatprep.subr.mxu0 0.0
    %1579 = vmatpush1.msra.mxu0 0.0
    %1580 = vmatprep.subr.mxu0 0.0
    %1581 = vmatpush1.msra.mxu0 0.0
    %1582 = vmatprep.subr.mxu0 0.0
    %1583 = vmatpush1.msra.mxu0 0.0
    %1584 = vmatprep.subr.mxu0 0.0
    %1585 = vmatpush1.msra.mxu0 0.0
    %1586 = vmatprep.subr.mxu0 0.0
    %1587 = vmatpush1.msra.mxu0 0.0
    %1588 = vmatprep.subr.mxu0 0.0
    %1589 = vmatpush1.msra.mxu0 0.0
    %1590 = vmatprep.subr.mxu0 0.0
    %1591 = vmatpush1.msra.mxu0 0.0
    %1592 = vmatprep.subr.mxu0 0.0
    %1593 = vmatpush1.msra.mxu0 0.0
    %1594 = vmatprep.subr.mxu0 0.0
    %1595 = vmatpush1.msra.mxu0 0.0
    %1596 = vmatprep.subr.mxu0 0.0
    %1597 = vmatpush1.msra.mxu0 0.0
    %1598 = vmatprep.subr.mxu0 0.0
    %1599 = vmatpush1.msra.mxu0 0.0
    %1600 = vmatprep.subr.mxu0 0.0
    %1601 = vmatpush1.msra.mxu0 0.0
    %1602 = vmatprep.subr.mxu0 0.0
    %1603 = vmatpush1.msra.mxu0 0.0
    %1604 = vmatprep.subr.mxu0 0.0
    %1605 = vmatpush1.msra.mxu0 0.0
    %1606 = vmatprep.subr.mxu0 0.0
    %1607 = vmatpush1.msra.mxu0 0.0
    %1608 = vmatprep.subr.mxu0 0.0
    %1609 = vmatpush1.msra.mxu0 0.0
    %1610 = vmatprep.subr.mxu0 0.0
    %1611 = vmatpush1.msra.mxu0 0.0
    %1612 = vmatprep.mubr.f32.mxu0 0.0
    %1613 = vmatmul.mubr.f32.gmra.mrb[0].mxu0 %v1536
    %v1614 = vpop.f32.mrb[0].mxu0
    %v1615 = vadd.f32 0.0, %v1614
    %v1616 = vpop.f32.mrb[0].mxu0
    %v1617 = vadd.f32 0.0, %v1616
    %1618 = vmatprep.mubr.f32.mxu0 0.0
    %1619 = vmatmul.mubr.f32.gmra.mrb[0].mxu0 %v1539
    %v1620 = vpop.f32.mrb[0].mxu0
    %v1621 = vadd.f32 0.0, %v1620
    %v1622 = vpop.f32.mrb[0].mxu0
    %v1623 = vadd.f32 0.0, %v1622
    %1624 = vdwg.mxu0
    %1629 = vrot.lane.b32.xlu0 %v1615, 127
    %v1630 = vpop.permute.xlu0 %1629
    %1631 = vrot.lane.b32.xlu0 %v1617, 127
    %v1632 = vpop.permute.xlu0 %1631
    %1633 = vrot.lane.b32.xlu0 %v1621, 127
    %v1634 = vpop.permute.xlu0 %1633
    %1635 = vrot.lane.b32.xlu0 %v1623, 127
    %v1636 = vpop.permute.xlu0 %1635
    %v1637 = vsel %vm932, %v1630, %v1632
    %v1638 = vsel %vm932, %v1634, %v1636
    %v1643 = vmax.f32 %v1615, %v1637
    %v1644 = vmax.f32 %v1617, %v1632
    %v1645 = vmax.f32 %v1621, %v1638
    %v1646 = vmax.f32 %v1623, %v1636
    %v1647 = vld [vmem:[%s6] sm:$0xff]
    %v1648 = vld [vmem:[%s6 + $0x8] sm:$0xff]
    %v1649 = vld [vmem:[%s6 + $0x10] sm:$0xff]
    %v1650 = vld [vmem:[%s6 + $0x18] sm:$0xff]
    %v1651 = vld [vmem:[%s6 + $0x20] sm:$0xff]
    %v1652 = vld [vmem:[%s6 + $0x28] sm:$0xff]
    %v1653 = vld [vmem:[%s6 + $0x30] sm:$0xff]
    %v1654 = vld [vmem:[%s6 + $0x38] sm:$0xff]
    %v1655 = vld [vmem:[%s6 + $0x40] sm:$0xff]
    %v1656 = vld [vmem:[%s6 + $0x48] sm:$0xff]
    %v1657 = vld [vmem:[%s6 + $0x50] sm:$0xff]
    %v1658 = vld [vmem:[%s6 + $0x58] sm:$0xff]
    %v1659 = vld [vmem:[%s6 + $0x60] sm:$0xff]
    %v1660 = vld [vmem:[%s6 + $0x68] sm:$0xff]
    %v1661 = vld [vmem:[%s6 + $0x70] sm:$0xff]
    %v1662 = vld [vmem:[%s6 + $0x78] sm:$0xff]
    %v1663 = vld [vmem:[%s6 + $0x80] sm:$0xff]
    %v1664 = vld [vmem:[%s6 + $0x88] sm:$0xff]
    %v1665 = vld [vmem:[%s6 + $0x90] sm:$0xff]
    %v1666 = vld [vmem:[%s6 + $0x98] sm:$0xff]
    %v1667 = vld [vmem:[%s6 + $0xa0] sm:$0xff]
    %v1668 = vld [vmem:[%s6 + $0xa8] sm:$0xff]
    %v1669 = vld [vmem:[%s6 + $0xb0] sm:$0xff]
    %v1670 = vld [vmem:[%s6 + $0xb8] sm:$0xff]
    %v1671 = vld [vmem:[%s6 + $0xc0] sm:$0xff]
    %v1672 = vld [vmem:[%s6 + $0xc8] sm:$0xff]
    %v1673 = vld [vmem:[%s6 + $0xd0] sm:$0xff]
    %v1674 = vld [vmem:[%s6 + $0xd8] sm:$0xff]
    %v1675 = vld [vmem:[%s6 + $0xe0] sm:$0xff]
    %v1676 = vld [vmem:[%s6 + $0xe8] sm:$0x1f]
    %vm1677 = vcmask 891904
    %v1679 = vsel %vm1677, %v1644, 0
    %v1682 = vsel %vm1677, %v1646, 0
    %vm1684 = vcmask 1044480
    %v1686 = vsel %vm1684, %v1676, 0
    %1688 = vmatprep.subr.mxu0 0.0
    %1689 = vmatpush1.msra.mxu0 %v1647
    %1690 = vmatprep.subr.mxu0 0.0
    %1691 = vmatpush1.msra.mxu0 %v1648
    %1692 = vmatprep.subr.mxu0 0.0
    %1693 = vmatpush1.msra.mxu0 %v1649
    %1694 = vmatprep.subr.mxu0 0.0
    %1695 = vmatpush1.msra.mxu0 %v1650
    %1696 = vmatprep.subr.mxu0 0.0
    %1697 = vmatpush1.msra.mxu0 %v1651
    %1698 = vmatprep.subr.mxu0 0.0
    %1699 = vmatpush1.msra.mxu0 %v1652
    %1700 = vmatprep.subr.mxu0 0.0
    %1701 = vmatpush1.msra.mxu0 %v1653
    %1702 = vmatprep.subr.mxu0 0.0
    %1703 = vmatpush1.msra.mxu0 %v1654
    %1704 = vmatprep.subr.mxu0 0.0
    %1705 = vmatpush1.msra.mxu0 %v1655
    %1706 = vmatprep.subr.mxu0 0.0
    %1707 = vmatpush1.msra.mxu0 %v1656
    %1708 = vmatprep.subr.mxu0 0.0
    %1709 = vmatpush1.msra.mxu0 %v1657
    %1710 = vmatprep.subr.mxu0 0.0
    %1711 = vmatpush1.msra.mxu0 %v1658
    %1712 = vmatprep.subr.mxu0 0.0
    %1713 = vmatpush1.msra.mxu0 %v1659
    %1714 = vmatprep.subr.mxu0 0.0
    %1715 = vmatpush1.msra.mxu0 %v1660
    %1716 = vmatprep.subr.mxu0 0.0
    %1717 = vmatpush1.msra.mxu0 %v1661
    %1718 = vmatprep.subr.mxu0 0.0
    %1719 = vmatpush1.msra.mxu0 %v1662
    %1720 = vmatprep.subr.mxu0 0.0
    %1721 = vmatpush1.msra.mxu0 %v1663
    %1722 = vmatprep.subr.mxu0 0.0
    %1723 = vmatpush1.msra.mxu0 %v1664
    %1724 = vmatprep.subr.mxu0 0.0
    %1725 = vmatpush1.msra.mxu0 %v1665
    %1726 = vmatprep.subr.mxu0 0.0
    %1727 = vmatpush1.msra.mxu0 %v1666
    %1728 = vmatprep.subr.mxu0 0.0
    %1729 = vmatpush1.msra.mxu0 %v1667
    %1730 = vmatprep.subr.mxu0 0.0
    %1731 = vmatpush1.msra.mxu0 %v1668
    %1732 = vmatprep.subr.mxu0 0.0
    %1733 = vmatpush1.msra.mxu0 %v1669
    %1734 = vmatprep.subr.mxu0 0.0
    %1735 = vmatpush1.msra.mxu0 %v1670
    %1736 = vmatprep.subr.mxu0 0.0
    %1737 = vmatpush1.msra.mxu0 %v1671
    %1738 = vmatprep.subr.mxu0 0.0
    %1739 = vmatpush1.msra.mxu0 %v1672
    %1740 = vmatprep.subr.mxu0 0.0
    %1741 = vmatpush1.msra.mxu0 %v1673
    %1742 = vmatprep.subr.mxu0 0.0
    %1743 = vmatpush1.msra.mxu0 %v1674
    %1744 = vmatprep.subr.mxu0 0.0
    %1745 = vmatpush1.msra.mxu0 %v1675
    %1746 = vmatprep.subr.mxu0 0.0
    %1747 = vmatpush1.msra.mxu0 %v1686
    %1748 = vmatprep.subr.mxu0 0.0
    %1749 = vmatpush1.msra.mxu0 0.0
    %1750 = vmatprep.subr.mxu0 0.0
    %1751 = vmatpush1.msra.mxu0 0.0
    %1752 = vmatprep.mubr.f32.mxu0 %v1679
    %1753 = vmatmul.mubr.f32.gmra.mrb[0].mxu0 %v1643
    %v1754 = vpop.f32.mrb[0].mxu0
    %v1755 = vadd.f32 0.0, %v1754
    %v1756 = vpop.f32.mrb[0].mxu0
    %1757 = vmatprep.mubr.f32.mxu0 %v1682
    %1758 = vmatmul.mubr.f32.gmra.mrb[0].mxu0 %v1645
    %v1759 = vpop.f32.mrb[0].mxu0
    %v1760 = vadd.f32 0.0, %v1759
    %v1761 = vpop.f32.mrb[0].mxu0
    %1762 = vdwg.mxu0
    %1763 = vst [vmem:[#allocation2] sm:$0xff] %v1755
    %1764 = vst [vmem:[#allocation2 + $0x8] sm:$0xff] %v1760
    %v1765 = vmul.f32 %v680, %v868
    %v1766 = vmul.f32 %v682, %v872
    %v1767 = vmul.f32 %v686, %v868
    %v1768 = vmul.f32 %v688, %v872
    %v1769 = vmul.f32 %v692, %v868
    %v1770 = vmul.f32 %v694, %v872
    %v1771 = vmul.f32 %v698, %v868
    %v1772 = vmul.f32 %v700, %v872
    %v1773 = vmul.f32 %v680, %v893
    %v1774 = vmul.f32 %v682, %v897
    %v1775 = vmul.f32 %v686, %v893
    %v1776 = vmul.f32 %v688, %v897
    %v1777 = vmul.f32 %v692, %v893
    %v1778 = vmul.f32 %v694, %v897
    %v1779 = vmul.f32 %v698, %v893
    %v1780 = vmul.f32 %v700, %v897
    %1789 = vrot.lane.b32.xlu0 %v1773, 127
    %v1790 = vpop.permute.xlu0 %1789
    %1791 = vrot.lane.b32.xlu0 %v1774, 127
    %v1792 = vpop.permute.xlu0 %1791
    %1793 = vrot.lane.b32.xlu0 %v1775, 127
    %v1794 = vpop.permute.xlu0 %1793
    %1795 = vrot.lane.b32.xlu0 %v1776, 127
    %v1796 = vpop.permute.xlu0 %1795
    %1797 = vrot.lane.b32.xlu0 %v1777, 127
    %v1798 = vpop.permute.xlu0 %1797
    %1799 = vrot.lane.b32.xlu0 %v1778, 127
    %v1800 = vpop.permute.xlu0 %1799
    %1801 = vrot.lane.b32.xlu0 %v1779, 127
    %v1802 = vpop.permute.xlu0 %1801
    %1803 = vrot.lane.b32.xlu0 %v1780, 127
    %v1804 = vpop.permute.xlu0 %1803
    %v1805 = vsel %vm932, %v1790, %v1792
    %v1806 = vsel %vm932, %v1794, %v1796
    %v1807 = vsel %vm932, %v1798, %v1800
    %v1808 = vsel %vm932, %v1802, %v1804
    %v1817 = vadd.f32 %v1765, %v1805
    %v1818 = vadd.f32 %v1766, %v1792
    %v1819 = vadd.f32 %v1767, %v1806
    %v1820 = vadd.f32 %v1768, %v1796
    %v1821 = vadd.f32 %v1769, %v1807
    %v1822 = vadd.f32 %v1770, %v1800
    %v1823 = vadd.f32 %v1771, %v1808
    %v1824 = vadd.f32 %v1772, %v1804
    %v1825 = vmul.f32 %v680, %v963
    %v1826 = vmul.f32 %v682, %v967
    %v1827 = vmul.f32 %v686, %v963
    %v1828 = vmul.f32 %v688, %v967
    %v1829 = vmul.f32 %v692, %v963
    %v1830 = vmul.f32 %v694, %v967
    %v1831 = vmul.f32 %v698, %v963
    %v1832 = vmul.f32 %v700, %v967
    %1841 = vrot.lane.b32.xlu0 %v1825, 126
    %v1842 = vpop.permute.xlu0 %1841
    %1843 = vrot.lane.b32.xlu0 %v1826, 126
    %v1844 = vpop.permute.xlu0 %1843
    %1845 = vrot.lane.b32.xlu0 %v1827, 126
    %v1846 = vpop.permute.xlu0 %1845
    %1847 = vrot.lane.b32.xlu0 %v1828, 126
    %v1848 = vpop.permute.xlu0 %1847
    %1849 = vrot.lane.b32.xlu0 %v1829, 126
    %v1850 = vpop.permute.xlu0 %1849
    %1851 = vrot.lane.b32.xlu0 %v1830, 126
    %v1852 = vpop.permute.xlu0 %1851
    %1853 = vrot.lane.b32.xlu0 %v1831, 126
    %v1854 = vpop.permute.xlu0 %1853
    %1855 = vrot.lane.b32.xlu0 %v1832, 126
    %v1856 = vpop.permute.xlu0 %1855
    %v1857 = vsel %vm1002, %v1842, %v1844
    %v1858 = vsel %vm1002, %v1846, %v1848
    %v1859 = vsel %vm1002, %v1850, %v1852
    %v1860 = vsel %vm1002, %v1854, %v1856
    %v1869 = vadd.f32 %v1817, %v1857
    %v1870 = vadd.f32 %v1818, %v1844
    %v1871 = vadd.f32 %v1819, %v1858
    %v1872 = vadd.f32 %v1820, %v1848
    %v1873 = vadd.f32 %v1821, %v1859
    %v1874 = vadd.f32 %v1822, %v1852
    %v1875 = vadd.f32 %v1823, %v1860
    %v1876 = vadd.f32 %v1824, %v1856
    %v1877 = vmul.f32 %v680, %v1027
    %v1878 = vmul.f32 %v682, %v1031
    %v1879 = vmul.f32 %v686, %v1027
    %v1880 = vmul.f32 %v688, %v1031
    %v1881 = vmul.f32 %v692, %v1027
    %v1882 = vmul.f32 %v694, %v1031
    %v1883 = vmul.f32 %v698, %v1027
    %v1884 = vmul.f32 %v700, %v1031
    %v1893 = vrot.slane %v1877, 1
    %v1894 = vrot.slane %v1879, 1
    %v1895 = vsel %vm1050, %v1893, %v1894
    %v1896 = vrot.slane %v1878, 1
    %v1897 = vrot.slane %v1880, 1
    %v1898 = vsel %vm1050, %v1896, %v1897
    %v1899 = vrot.slane %v1881, 1
    %v1900 = vsel %vm1050, %v1894, %v1899
    %v1901 = vrot.slane %v1882, 1
    %v1902 = vsel %vm1050, %v1897, %v1901
    %v1903 = vrot.slane %v1883, 1
    %v1904 = vsel %vm1050, %v1899, %v1903
    %v1905 = vrot.slane %v1884, 1
    %v1906 = vsel %vm1050, %v1901, %v1905
    %v1915 = vadd.f32 %v1869, %v1895
    %v1916 = vadd.f32 %v1870, %v1898
    %v1917 = vadd.f32 %v1871, %v1900
    %v1918 = vadd.f32 %v1872, %v1902
    %v1919 = vadd.f32 %v1873, %v1904
    %v1920 = vadd.f32 %v1874, %v1906
    %v1921 = vadd.f32 %v1875, %v1903
    %v1922 = vadd.f32 %v1876, %v1905
    %v1923 = vmul.f32 %v680, %v1091
    %v1924 = vmul.f32 %v682, %v1094
    %v1925 = vmul.f32 %v686, %v1091
    %v1926 = vmul.f32 %v688, %v1094
    %v1927 = vmul.f32 %v692, %v1091
    %v1928 = vmul.f32 %v694, %v1094
    %v1929 = vmul.f32 %v698, %v1091
    %v1930 = vmul.f32 %v700, %v1094
    %v1939 = vrot.slane %v1923, 1
    %v1940 = vrot.slane %v1925, 1
    %v1941 = vsel %vm1050, %v1939, %v1940
    %v1942 = vrot.slane %v1924, 1
    %v1943 = vrot.slane %v1926, 1
    %v1944 = vsel %vm1050, %v1942, %v1943
    %v1945 = vrot.slane %v1927, 1
    %v1946 = vsel %vm1050, %v1940, %v1945
    %v1947 = vrot.slane %v1928, 1
    %v1948 = vsel %vm1050, %v1943, %v1947
    %v1949 = vrot.slane %v1929, 1
    %v1950 = vsel %vm1050, %v1945, %v1949
    %v1951 = vrot.slane %v1930, 1
    %v1952 = vsel %vm1050, %v1947, %v1951
    %1953 = vrot.lane.b32.xlu0 %v1941, 127
    %v1954 = vpop.permute.xlu0 %1953
    %1955 = vrot.lane.b32.xlu0 %v1944, 127
    %v1956 = vpop.permute.xlu0 %1955
    %1957 = vrot.lane.b32.xlu0 %v1946, 127
    %v1958 = vpop.permute.xlu0 %1957
    %1959 = vrot.lane.b32.xlu0 %v1948, 127
    %v1960 = vpop.permute.xlu0 %1959
    %1961 = vrot.lane.b32.xlu0 %v1950, 127
    %v1962 = vpop.permute.xlu0 %1961
    %1963 = vrot.lane.b32.xlu0 %v1952, 127
    %v1964 = vpop.permute.xlu0 %1963
    %1965 = vrot.lane.b32.xlu0 %v1949, 127
    %v1966 = vpop.permute.xlu0 %1965
    %1967 = vrot.lane.b32.xlu0 %v1951, 127
    %v1968 = vpop.permute.xlu0 %1967
    %v1969 = vsel %vm932, %v1954, %v1956
    %v1970 = vsel %vm932, %v1958, %v1960
    %v1971 = vsel %vm932, %v1962, %v1964
    %v1972 = vsel %vm932, %v1966, %v1968
    %v1981 = vadd.f32 %v1915, %v1969
    %v1982 = vadd.f32 %v1916, %v1956
    %v1983 = vadd.f32 %v1917, %v1970
    %v1984 = vadd.f32 %v1918, %v1960
    %v1985 = vadd.f32 %v1919, %v1971
    %v1986 = vadd.f32 %v1920, %v1964
    %v1987 = vadd.f32 %v1921, %v1972
    %v1988 = vadd.f32 %v1922, %v1968
    %v1989 = vmul.f32 %v680, %v1173
    %v1990 = vmul.f32 %v682, %v1176
    %v1991 = vmul.f32 %v686, %v1173
    %v1992 = vmul.f32 %v688, %v1176
    %v1993 = vmul.f32 %v692, %v1173
    %v1994 = vmul.f32 %v694, %v1176
    %v1995 = vmul.f32 %v698, %v1173
    %v1996 = vmul.f32 %v700, %v1176
    %v2005 = vrot.slane %v1989, 1
    %v2006 = vrot.slane %v1991, 1
    %v2007 = vsel %vm1050, %v2005, %v2006
    %v2008 = vrot.slane %v1990, 1
    %v2009 = vrot.slane %v1992, 1
    %v2010 = vsel %vm1050, %v2008, %v2009
    %v2011 = vrot.slane %v1993, 1
    %v2012 = vsel %vm1050, %v2006, %v2011
    %v2013 = vrot.slane %v1994, 1
    %v2014 = vsel %vm1050, %v2009, %v2013
    %v2015 = vrot.slane %v1995, 1
    %v2016 = vsel %vm1050, %v2011, %v2015
    %v2017 = vrot.slane %v1996, 1
    %v2018 = vsel %vm1050, %v2013, %v2017
    %2019 = vrot.lane.b32.xlu0 %v2007, 126
    %v2020 = vpop.permute.xlu0 %2019
    %2021 = vrot.lane.b32.xlu0 %v2010, 126
    %v2022 = vpop.permute.xlu0 %2021
    %2023 = vrot.lane.b32.xlu0 %v2012, 126
    %v2024 = vpop.permute.xlu0 %2023
    %2025 = vrot.lane.b32.xlu0 %v2014, 126
    %v2026 = vpop.permute.xlu0 %2025
    %2027 = vrot.lane.b32.xlu0 %v2016, 126
    %v2028 = vpop.permute.xlu0 %2027
    %2029 = vrot.lane.b32.xlu0 %v2018, 126
    %v2030 = vpop.permute.xlu0 %2029
    %2031 = vrot.lane.b32.xlu0 %v2015, 126
    %v2032 = vpop.permute.xlu0 %2031
    %2033 = vrot.lane.b32.xlu0 %v2017, 126
    %v2034 = vpop.permute.xlu0 %2033
    %v2035 = vsel %vm1002, %v2020, %v2022
    %v2036 = vsel %vm1002, %v2024, %v2026
    %v2037 = vsel %vm1002, %v2028, %v2030
    %v2038 = vsel %vm1002, %v2032, %v2034
    %v2047 = vadd.f32 %v1981, %v2035
    %v2048 = vadd.f32 %v1982, %v2022
    %v2049 = vadd.f32 %v1983, %v2036
    %v2050 = vadd.f32 %v1984, %v2026
    %v2051 = vadd.f32 %v1985, %v2037
    %v2052 = vadd.f32 %v1986, %v2030
    %v2053 = vadd.f32 %v1987, %v2038
    %v2054 = vadd.f32 %v1988, %v2034
    %v2055 = vmul.f32 %v680, %v1249
    %v2056 = vmul.f32 %v682, %v1253
    %v2057 = vmul.f32 %v686, %v1249
    %v2058 = vmul.f32 %v688, %v1253
    %v2059 = vmul.f32 %v692, %v1249
    %v2060 = vmul.f32 %v694, %v1253
    %v2061 = vmul.f32 %v698, %v1249
    %v2062 = vmul.f32 %v700, %v1253
    %v2071 = vrot.slane %v2055, 2
    %v2072 = vrot.slane %v2057, 2
    %v2073 = vsel %vm1272, %v2071, %v2072
    %v2074 = vrot.slane %v2056, 2
    %v2075 = vrot.slane %v2058, 2
    %v2076 = vsel %vm1272, %v2074, %v2075
    %v2077 = vrot.slane %v2059, 2
    %v2078 = vsel %vm1272, %v2072, %v2077
    %v2079 = vrot.slane %v2060, 2
    %v2080 = vsel %vm1272, %v2075, %v2079
    %v2081 = vrot.slane %v2061, 2
    %v2082 = vsel %vm1272, %v2077, %v2081
    %v2083 = vrot.slane %v2062, 2
    %v2084 = vsel %vm1272, %v2079, %v2083
    %v2093 = vadd.f32 %v2047, %v2073
    %v2094 = vadd.f32 %v2048, %v2076
    %v2095 = vadd.f32 %v2049, %v2078
    %v2096 = vadd.f32 %v2050, %v2080
    %v2097 = vadd.f32 %v2051, %v2082
    %v2098 = vadd.f32 %v2052, %v2084
    %v2099 = vadd.f32 %v2053, %v2081
    %v2100 = vadd.f32 %v2054, %v2083
    %v2101 = vmul.f32 %v680, %v1313
    %v2102 = vmul.f32 %v682, %v1316
    %v2103 = vmul.f32 %v686, %v1313
    %v2104 = vmul.f32 %v688, %v1316
    %v2105 = vmul.f32 %v692, %v1313
    %v2106 = vmul.f32 %v694, %v1316
    %v2107 = vmul.f32 %v698, %v1313
    %v2108 = vmul.f32 %v700, %v1316
    %v2117 = vrot.slane %v2101, 2
    %v2118 = vrot.slane %v2103, 2
    %v2119 = vsel %vm1272, %v2117, %v2118
    %v2120 = vrot.slane %v2102, 2
    %v2121 = vrot.slane %v2104, 2
    %v2122 = vsel %vm1272, %v2120, %v2121
    %v2123 = vrot.slane %v2105, 2
    %v2124 = vsel %vm1272, %v2118, %v2123
    %v2125 = vrot.slane %v2106, 2
    %v2126 = vsel %vm1272, %v2121, %v2125
    %v2127 = vrot.slane %v2107, 2
    %v2128 = vsel %vm1272, %v2123, %v2127
    %v2129 = vrot.slane %v2108, 2
    %v2130 = vsel %vm1272, %v2125, %v2129
    %2131 = vrot.lane.b32.xlu0 %v2119, 127
    %v2132 = vpop.permute.xlu0 %2131
    %2133 = vrot.lane.b32.xlu0 %v2122, 127
    %v2134 = vpop.permute.xlu0 %2133
    %2135 = vrot.lane.b32.xlu0 %v2124, 127
    %v2136 = vpop.permute.xlu0 %2135
    %2137 = vrot.lane.b32.xlu0 %v2126, 127
    %v2138 = vpop.permute.xlu0 %2137
    %2139 = vrot.lane.b32.xlu0 %v2128, 127
    %v2140 = vpop.permute.xlu0 %2139
    %2141 = vrot.lane.b32.xlu0 %v2130, 127
    %v2142 = vpop.permute.xlu0 %2141
    %2143 = vrot.lane.b32.xlu0 %v2127, 127
    %v2144 = vpop.permute.xlu0 %2143
    %2145 = vrot.lane.b32.xlu0 %v2129, 127
    %v2146 = vpop.permute.xlu0 %2145
    %v2147 = vsel %vm932, %v2132, %v2134
    %v2148 = vsel %vm932, %v2136, %v2138
    %v2149 = vsel %vm932, %v2140, %v2142
    %v2150 = vsel %vm932, %v2144, %v2146
    %v2159 = vadd.f32 %v2093, %v2147
    %v2160 = vadd.f32 %v2094, %v2134
    %v2161 = vadd.f32 %v2095, %v2148
    %v2162 = vadd.f32 %v2096, %v2138
    %v2163 = vadd.f32 %v2097, %v2149
    %v2164 = vadd.f32 %v2098, %v2142
    %v2165 = vadd.f32 %v2099, %v2150
    %v2166 = vadd.f32 %v2100, %v2146
    %v2167 = vmul.f32 %v680, %v1395
    %v2168 = vmul.f32 %v682, %v1398
    %v2169 = vmul.f32 %v686, %v1395
    %v2170 = vmul.f32 %v688, %v1398
    %v2171 = vmul.f32 %v692, %v1395
    %v2172 = vmul.f32 %v694, %v1398
    %v2173 = vmul.f32 %v698, %v1395
    %v2174 = vmul.f32 %v700, %v1398
    %v2183 = vrot.slane %v2167, 2
    %v2184 = vrot.slane %v2169, 2
    %v2185 = vsel %vm1272, %v2183, %v2184
    %v2186 = vrot.slane %v2168, 2
    %v2187 = vrot.slane %v2170, 2
    %v2188 = vsel %vm1272, %v2186, %v2187
    %v2189 = vrot.slane %v2171, 2
    %v2190 = vsel %vm1272, %v2184, %v2189
    %v2191 = vrot.slane %v2172, 2
    %v2192 = vsel %vm1272, %v2187, %v2191
    %v2193 = vrot.slane %v2173, 2
    %v2194 = vsel %vm1272, %v2189, %v2193
    %v2195 = vrot.slane %v2174, 2
    %v2196 = vsel %vm1272, %v2191, %v2195
    %2197 = vrot.lane.b32.xlu0 %v2185, 126
    %v2198 = vpop.permute.xlu0 %2197
    %2199 = vrot.lane.b32.xlu0 %v2188, 126
    %v2200 = vpop.permute.xlu0 %2199
    %2201 = vrot.lane.b32.xlu0 %v2190, 126
    %v2202 = vpop.permute.xlu0 %2201
    %2203 = vrot.lane.b32.xlu0 %v2192, 126
    %v2204 = vpop.permute.xlu0 %2203
    %2205 = vrot.lane.b32.xlu0 %v2194, 126
    %v2206 = vpop.permute.xlu0 %2205
    %2207 = vrot.lane.b32.xlu0 %v2196, 126
    %v2208 = vpop.permute.xlu0 %2207
    %2209 = vrot.lane.b32.xlu0 %v2193, 126
    %v2210 = vpop.permute.xlu0 %2209
    %2211 = vrot.lane.b32.xlu0 %v2195, 126
    %v2212 = vpop.permute.xlu0 %2211
    %v2213 = vsel %vm1002, %v2198, %v2200
    %v2214 = vsel %vm1002, %v2202, %v2204
    %v2215 = vsel %vm1002, %v2206, %v2208
    %v2216 = vsel %vm1002, %v2210, %v2212
    %v2225 = vadd.f32 %v2159, %v2213
    %v2226 = vadd.f32 %v2160, %v2200
    %v2227 = vadd.f32 %v2161, %v2214
    %v2228 = vadd.f32 %v2162, %v2204
    %v2229 = vadd.f32 %v2163, %v2215
    %v2230 = vadd.f32 %v2164, %v2208
    %v2231 = vadd.f32 %v2165, %v2216
    %v2232 = vadd.f32 %v2166, %v2212
    %v2233 = vadd.f32 %v2225, %v1471
    %v2234 = vadd.f32 %v2226, %v1475
    %v2235 = vadd.f32 %v2227, %v1471
    %v2236 = vadd.f32 %v2228, %v1475
    %v2237 = vadd.f32 %v2229, %v1471
    %v2238 = vadd.f32 %v2230, %v1475
    %v2239 = vadd.f32 %v2231, %v1471
    %v2240 = vadd.f32 %v2232, %v1475
    %v2241 = vmax.f32 %v2233, 0.0
    %v2242 = vmax.f32 %v2234, 0.0
    %v2243 = vmax.f32 %v2235, 0.0
    %v2244 = vmax.f32 %v2236, 0.0
    %v2245 = vmax.f32 %v2237, 0.0
    %v2246 = vmax.f32 %v2238, 0.0
    %v2247 = vmax.f32 %v2239, 0.0
    %v2248 = vmax.f32 %v2240, 0.0
    %v2257 = vrot.slane %v2241, 1
    %v2258 = vrot.slane %v2243, 1
    %v2259 = vsel %vm1050, %v2257, %v2258
    %v2260 = vrot.slane %v2242, 1
    %v2261 = vrot.slane %v2244, 1
    %v2262 = vsel %vm1050, %v2260, %v2261
    %v2263 = vrot.slane %v2245, 1
    %v2264 = vsel %vm1050, %v2258, %v2263
    %v2265 = vrot.slane %v2246, 1
    %v2266 = vsel %vm1050, %v2261, %v2265
    %v2267 = vrot.slane %v2247, 1
    %v2268 = vsel %vm1050, %v2263, %v2267
    %v2269 = vrot.slane %v2248, 1
    %v2270 = vsel %vm1050, %v2265, %v2269
    %v2279 = vmax.f32 %v2241, %v2259
    %v2280 = vmax.f32 %v2242, %v2262
    %v2281 = vmax.f32 %v2243, %v2264
    %v2282 = vmax.f32 %v2244, %v2266
    %v2283 = vmax.f32 %v2245, %v2268
    %v2284 = vmax.f32 %v2246, %v2270
    %v2285 = vmax.f32 %v2247, %v2267
    %v2286 = vmax.f32 %v2248, %v2269
    %v2287 = vld [vmem:[%s5] sm:$0xff]
    %v2288 = vld [vmem:[%s5 + $0x8] sm:$0xff]
    %v2290 = vsel %vm1534, %v2287, 0
    %v2293 = vsel %vm1534, %v2288, 0
    %v2296 = vsel %vm1541, %v2285, 0
    %v2299 = vsel %vm1541, %v2286, 0
    %2301 = vmatprep.subr.mxu0 %v2280
    %2302 = vmatpush1.msra.mxu0 %v2279
    %2303 = vmatprep.subr.mxu0 %v2282
    %2304 = vmatpush1.msra.mxu0 %v2281
    %2305 = vmatprep.subr.mxu0 %v2284
    %2306 = vmatpush1.msra.mxu0 %v2283
    %2307 = vmatprep.subr.mxu0 %v2299
    %2308 = vmatpush1.msra.mxu0 %v2296
    %2309 = vmatprep.subr.mxu0 0.0
    %2310 = vmatpush1.msra.mxu0 0.0
    %2311 = vmatprep.subr.mxu0 0.0
    %2312 = vmatpush1.msra.mxu0 0.0
    %2313 = vmatprep.subr.mxu0 0.0
    %2314 = vmatpush1.msra.mxu0 0.0
    %2315 = vmatprep.subr.mxu0 0.0
    %2316 = vmatpush1.msra.mxu0 0.0
    %2317 = vmatprep.subr.mxu0 0.0
    %2318 = vmatpush1.msra.mxu0 0.0
    %2319 = vmatprep.subr.mxu0 0.0
    %2320 = vmatpush1.msra.mxu0 0.0
    %2321 = vmatprep.subr.mxu0 0.0
    %2322 = vmatpush1.msra.mxu0 0.0
    %2323 = vmatprep.subr.mxu0 0.0
    %2324 = vmatpush1.msra.mxu0 0.0
    %2325 = vmatprep.subr.mxu0 0.0
    %2326 = vmatpush1.msra.mxu0 0.0
    %2327 = vmatprep.subr.mxu0 0.0
    %2328 = vmatpush1.msra.mxu0 0.0
    %2329 = vmatprep.subr.mxu0 0.0
    %2330 = vmatpush1.msra.mxu0 0.0
    %2331 = vmatprep.subr.mxu0 0.0
    %2332 = vmatpush1.msra.mxu0 0.0
    %2333 = vmatprep.subr.mxu0 0.0
    %2334 = vmatpush1.msra.mxu0 0.0
    %2335 = vmatprep.subr.mxu0 0.0
    %2336 = vmatpush1.msra.mxu0 0.0
    %2337 = vmatprep.subr.mxu0 0.0
    %2338 = vmatpush1.msra.mxu0 0.0
    %2339 = vmatprep.subr.mxu0 0.0
    %2340 = vmatpush1.msra.mxu0 0.0
    %2341 = vmatprep.subr.mxu0 0.0
    %2342 = vmatpush1.msra.mxu0 0.0
    %2343 = vmatprep.subr.mxu0 0.0
    %2344 = vmatpush1.msra.mxu0 0.0
    %2345 = vmatprep.subr.mxu0 0.0
    %2346 = vmatpush1.msra.mxu0 0.0
    %2347 = vmatprep.subr.mxu0 0.0
    %2348 = vmatpush1.msra.mxu0 0.0
    %2349 = vmatprep.subr.mxu0 0.0
    %2350 = vmatpush1.msra.mxu0 0.0
    %2351 = vmatprep.subr.mxu0 0.0
    %2352 = vmatpush1.msra.mxu0 0.0
    %2353 = vmatprep.subr.mxu0 0.0
    %2354 = vmatpush1.msra.mxu0 0.0
    %2355 = vmatprep.subr.mxu0 0.0
    %2356 = vmatpush1.msra.mxu0 0.0
    %2357 = vmatprep.subr.mxu0 0.0
    %2358 = vmatpush1.msra.mxu0 0.0
    %2359 = vmatprep.subr.mxu0 0.0
    %2360 = vmatpush1.msra.mxu0 0.0
    %2361 = vmatprep.subr.mxu0 0.0
    %2362 = vmatpush1.msra.mxu0 0.0
    %2363 = vmatprep.subr.mxu0 0.0
    %2364 = vmatpush1.msra.mxu0 0.0
    %2365 = vmatprep.mubr.f32.mxu0 0.0
    %2366 = vmatmul.mubr.f32.gmra.mrb[0].mxu0 %v2290
    %v2367 = vpop.f32.mrb[0].mxu0
    %v2368 = vadd.f32 0.0, %v2367
    %v2369 = vpop.f32.mrb[0].mxu0
    %v2370 = vadd.f32 0.0, %v2369
    %2371 = vmatprep.mubr.f32.mxu0 0.0
    %2372 = vmatmul.mubr.f32.gmra.mrb[0].mxu0 %v2293
    %v2373 = vpop.f32.mrb[0].mxu0
    %v2374 = vadd.f32 0.0, %v2373
    %v2375 = vpop.f32.mrb[0].mxu0
    %v2376 = vadd.f32 0.0, %v2375
    %2377 = vdwg.mxu0
    %2382 = vrot.lane.b32.xlu0 %v2368, 127
    %v2383 = vpop.permute.xlu0 %2382
    %2384 = vrot.lane.b32.xlu0 %v2370, 127
    %v2385 = vpop.permute.xlu0 %2384
    %2386 = vrot.lane.b32.xlu0 %v2374, 127
    %v2387 = vpop.permute.xlu0 %2386
    %2388 = vrot.lane.b32.xlu0 %v2376, 127
    %v2389 = vpop.permute.xlu0 %2388
    %v2390 = vsel %vm932, %v2383, %v2385
    %v2391 = vsel %vm932, %v2387, %v2389
    %v2396 = vmax.f32 %v2368, %v2390
    %v2397 = vmax.f32 %v2370, %v2385
    %v2398 = vmax.f32 %v2374, %v2391
    %v2399 = vmax.f32 %v2376, %v2389
    %v2400 = vld [vmem:[%s6] sm:$0xff]
    %v2401 = vld [vmem:[%s6 + $0x8] sm:$0xff]
    %v2402 = vld [vmem:[%s6 + $0x10] sm:$0xff]
    %v2403 = vld [vmem:[%s6 + $0x18] sm:$0xff]
    %v2404 = vld [vmem:[%s6 + $0x20] sm:$0xff]
    %v2405 = vld [vmem:[%s6 + $0x28] sm:$0xff]
    %v2406 = vld [vmem:[%s6 + $0x30] sm:$0xff]
    %v2407 = vld [vmem:[%s6 + $0x38] sm:$0xff]
    %v2408 = vld [vmem:[%s6 + $0x40] sm:$0xff]
    %v2409 = vld [vmem:[%s6 + $0x48] sm:$0xff]
    %v2410 = vld [vmem:[%s6 + $0x50] sm:$0xff]
    %v2411 = vld [vmem:[%s6 + $0x58] sm:$0xff]
    %v2412 = vld [vmem:[%s6 + $0x60] sm:$0xff]
    %v2413 = vld [vmem:[%s6 + $0x68] sm:$0xff]
    %v2414 = vld [vmem:[%s6 + $0x70] sm:$0xff]
    %v2415 = vld [vmem:[%s6 + $0x78] sm:$0xff]
    %v2416 = vld [vmem:[%s6 + $0x80] sm:$0xff]
    %v2417 = vld [vmem:[%s6 + $0x88] sm:$0xff]
    %v2418 = vld [vmem:[%s6 + $0x90] sm:$0xff]
    %v2419 = vld [vmem:[%s6 + $0x98] sm:$0xff]
    %v2420 = vld [vmem:[%s6 + $0xa0] sm:$0xff]
    %v2421 = vld [vmem:[%s6 + $0xa8] sm:$0xff]
    %v2422 = vld [vmem:[%s6 + $0xb0] sm:$0xff]
    %v2423 = vld [vmem:[%s6 + $0xb8] sm:$0xff]
    %v2424 = vld [vmem:[%s6 + $0xc0] sm:$0xff]
    %v2425 = vld [vmem:[%s6 + $0xc8] sm:$0xff]
    %v2426 = vld [vmem:[%s6 + $0xd0] sm:$0xff]
    %v2427 = vld [vmem:[%s6 + $0xd8] sm:$0xff]
    %v2428 = vld [vmem:[%s6 + $0xe0] sm:$0xff]
    %v2429 = vld [vmem:[%s6 + $0xe8] sm:$0x1f]
    %v2431 = vsel %vm1677, %v2397, 0
    %v2434 = vsel %vm1677, %v2399, 0
    %v2437 = vsel %vm1684, %v2429, 0
    %2439 = vmatprep.subr.mxu0 0.0
    %2440 = vmatpush1.msra.mxu0 %v2400
    %2441 = vmatprep.subr.mxu0 0.0
    %2442 = vmatpush1.msra.mxu0 %v2401
    %2443 = vmatprep.subr.mxu0 0.0
    %2444 = vmatpush1.msra.mxu0 %v2402
    %2445 = vmatprep.subr.mxu0 0.0
    %2446 = vmatpush1.msra.mxu0 %v2403
    %2447 = vmatprep.subr.mxu0 0.0
    %2448 = vmatpush1.msra.mxu0 %v2404
    %2449 = vmatprep.subr.mxu0 0.0
    %2450 = vmatpush1.msra.mxu0 %v2405
    %2451 = vmatprep.subr.mxu0 0.0
    %2452 = vmatpush1.msra.mxu0 %v2406
    %2453 = vmatprep.subr.mxu0 0.0
    %2454 = vmatpush1.msra.mxu0 %v2407
    %2455 = vmatprep.subr.mxu0 0.0
    %2456 = vmatpush1.msra.mxu0 %v2408
    %2457 = vmatprep.subr.mxu0 0.0
    %2458 = vmatpush1.msra.mxu0 %v2409
    %2459 = vmatprep.subr.mxu0 0.0
    %2460 = vmatpush1.msra.mxu0 %v2410
    %2461 = vmatprep.subr.mxu0 0.0
    %2462 = vmatpush1.msra.mxu0 %v2411
    %2463 = vmatprep.subr.mxu0 0.0
    %2464 = vmatpush1.msra.mxu0 %v2412
    %2465 = vmatprep.subr.mxu0 0.0
    %2466 = vmatpush1.msra.mxu0 %v2413
    %2467 = vmatprep.subr.mxu0 0.0
    %2468 = vmatpush1.msra.mxu0 %v2414
    %2469 = vmatprep.subr.mxu0 0.0
    %2470 = vmatpush1.msra.mxu0 %v2415
    %2471 = vmatprep.subr.mxu0 0.0
    %2472 = vmatpush1.msra.mxu0 %v2416
    %2473 = vmatprep.subr.mxu0 0.0
    %2474 = vmatpush1.msra.mxu0 %v2417
    %2475 = vmatprep.subr.mxu0 0.0
    %2476 = vmatpush1.msra.mxu0 %v2418
    %2477 = vmatprep.subr.mxu0 0.0
    %2478 = vmatpush1.msra.mxu0 %v2419
    %2479 = vmatprep.subr.mxu0 0.0
    %2480 = vmatpush1.msra.mxu0 %v2420
    %2481 = vmatprep.subr.mxu0 0.0
    %2482 = vmatpush1.msra.mxu0 %v2421
    %2483 = vmatprep.subr.mxu0 0.0
    %2484 = vmatpush1.msra.mxu0 %v2422
    %2485 = vmatprep.subr.mxu0 0.0
    %2486 = vmatpush1.msra.mxu0 %v2423
    %2487 = vmatprep.subr.mxu0 0.0
    %2488 = vmatpush1.msra.mxu0 %v2424
    %2489 = vmatprep.subr.mxu0 0.0
    %2490 = vmatpush1.msra.mxu0 %v2425
    %2491 = vmatprep.subr.mxu0 0.0
    %2492 = vmatpush1.msra.mxu0 %v2426
    %2493 = vmatprep.subr.mxu0 0.0
    %2494 = vmatpush1.msra.mxu0 %v2427
    %2495 = vmatprep.subr.mxu0 0.0
    %2496 = vmatpush1.msra.mxu0 %v2428
    %2497 = vmatprep.subr.mxu0 0.0
    %2498 = vmatpush1.msra.mxu0 %v2437
    %2499 = vmatprep.subr.mxu0 0.0
    %2500 = vmatpush1.msra.mxu0 0.0
    %2501 = vmatprep.subr.mxu0 0.0
    %2502 = vmatpush1.msra.mxu0 0.0
    %2503 = vmatprep.mubr.f32.mxu0 %v2431
    %2504 = vmatmul.mubr.f32.gmra.mrb[0].mxu0 %v2396
    %v2505 = vpop.f32.mrb[0].mxu0
    %v2506 = vadd.f32 0.0, %v2505
    %v2507 = vpop.f32.mrb[0].mxu0
    %2508 = vmatprep.mubr.f32.mxu0 %v2434
    %2509 = vmatmul.mubr.f32.gmra.mrb[0].mxu0 %v2398
    %v2510 = vpop.f32.mrb[0].mxu0
    %v2511 = vadd.f32 0.0, %v2510
    %v2512 = vpop.f32.mrb[0].mxu0
    %2513 = vdwg.mxu0
    %2514 = vst [vmem:[#allocation2 + $0x10] sm:$0xff] %v2506
    %2515 = vst [vmem:[#allocation2 + $0x18] sm:$0xff] %v2511
    %v2516 = vmul.f32 %v704, %v868
    %v2517 = vmul.f32 %v706, %v872
    %v2518 = vmul.f32 %v710, %v868
    %v2519 = vmul.f32 %v712, %v872
    %v2520 = vmul.f32 %v716, %v868
    %v2521 = vmul.f32 %v718, %v872
    %v2522 = vmul.f32 %v722, %v868
    %v2523 = vmul.f32 %v724, %v872
    %v2524 = vmul.f32 %v704, %v893
    %v2525 = vmul.f32 %v706, %v897
    %v2526 = vmul.f32 %v710, %v893
    %v2527 = vmul.f32 %v712, %v897
    %v2528 = vmul.f32 %v716, %v893
    %v2529 = vmul.f32 %v718, %v897
    %v2530 = vmul.f32 %v722, %v893
    %v2531 = vmul.f32 %v724, %v897
    %2540 = vrot.lane.b32.xlu0 %v2524, 127
    %v2541 = vpop.permute.xlu0 %2540
    %2542 = vrot.lane.b32.xlu0 %v2525, 127
    %v2543 = vpop.permute.xlu0 %2542
    %2544 = vrot.lane.b32.xlu0 %v2526, 127
    %v2545 = vpop.permute.xlu0 %2544
    %2546 = vrot.lane.b32.xlu0 %v2527, 127
    %v2547 = vpop.permute.xlu0 %2546
    %2548 = vrot.lane.b32.xlu0 %v2528, 127
    %v2549 = vpop.permute.xlu0 %2548
    %2550 = vrot.lane.b32.xlu0 %v2529, 127
    %v2551 = vpop.permute.xlu0 %2550
    %2552 = vrot.lane.b32.xlu0 %v2530, 127
    %v2553 = vpop.permute.xlu0 %2552
    %2554 = vrot.lane.b32.xlu0 %v2531, 127
    %v2555 = vpop.permute.xlu0 %2554
    %v2556 = vsel %vm932, %v2541, %v2543
    %v2557 = vsel %vm932, %v2545, %v2547
    %v2558 = vsel %vm932, %v2549, %v2551
    %v2559 = vsel %vm932, %v2553, %v2555
    %v2568 = vadd.f32 %v2516, %v2556
    %v2569 = vadd.f32 %v2517, %v2543
    %v2570 = vadd.f32 %v2518, %v2557
    %v2571 = vadd.f32 %v2519, %v2547
    %v2572 = vadd.f32 %v2520, %v2558
    %v2573 = vadd.f32 %v2521, %v2551
    %v2574 = vadd.f32 %v2522, %v2559
    %v2575 = vadd.f32 %v2523, %v2555
    %v2576 = vmul.f32 %v704, %v963
    %v2577 = vmul.f32 %v706, %v967
    %v2578 = vmul.f32 %v710, %v963
    %v2579 = vmul.f32 %v712, %v967
    %v2580 = vmul.f32 %v716, %v963
    %v2581 = vmul.f32 %v718, %v967
    %v2582 = vmul.f32 %v722, %v963
    %v2583 = vmul.f32 %v724, %v967
    %2592 = vrot.lane.b32.xlu0 %v2576, 126
    %v2593 = vpop.permute.xlu0 %2592
    %2594 = vrot.lane.b32.xlu0 %v2577, 126
    %v2595 = vpop.permute.xlu0 %2594
    %2596 = vrot.lane.b32.xlu0 %v2578, 126
    %v2597 = vpop.permute.xlu0 %2596
    %2598 = vrot.lane.b32.xlu0 %v2579, 126
    %v2599 = vpop.permute.xlu0 %2598
    %2600 = vrot.lane.b32.xlu0 %v2580, 126
    %v2601 = vpop.permute.xlu0 %2600
    %2602 = vrot.lane.b32.xlu0 %v2581, 126
    %v2603 = vpop.permute.xlu0 %2602
    %2604 = vrot.lane.b32.xlu0 %v2582, 126
    %v2605 = vpop.permute.xlu0 %2604
    %2606 = vrot.lane.b32.xlu0 %v2583, 126
    %v2607 = vpop.permute.xlu0 %2606
    %v2608 = vsel %vm1002, %v2593, %v2595
    %v2609 = vsel %vm1002, %v2597, %v2599
    %v2610 = vsel %vm1002, %v2601, %v2603
    %v2611 = vsel %vm1002, %v2605, %v2607
    %v2620 = vadd.f32 %v2568, %v2608
    %v2621 = vadd.f32 %v2569, %v2595
    %v2622 = vadd.f32 %v2570, %v2609
    %v2623 = vadd.f32 %v2571, %v2599
    %v2624 = vadd.f32 %v2572, %v2610
    %v2625 = vadd.f32 %v2573, %v2603
    %v2626 = vadd.f32 %v2574, %v2611
    %v2627 = vadd.f32 %v2575, %v2607
    %v2628 = vmul.f32 %v704, %v1027
    %v2629 = vmul.f32 %v706, %v1031
    %v2630 = vmul.f32 %v710, %v1027
    %v2631 = vmul.f32 %v712, %v1031
    %v2632 = vmul.f32 %v716, %v1027
    %v2633 = vmul.f32 %v718, %v1031
    %v2634 = vmul.f32 %v722, %v1027
    %v2635 = vmul.f32 %v724, %v1031
    %v2644 = vrot.slane %v2628, 1
    %v2645 = vrot.slane %v2630, 1
    %v2646 = vsel %vm1050, %v2644, %v2645
    %v2647 = vrot.slane %v2629, 1
    %v2648 = vrot.slane %v2631, 1
    %v2649 = vsel %vm1050, %v2647, %v2648
    %v2650 = vrot.slane %v2632, 1
    %v2651 = vsel %vm1050, %v2645, %v2650
    %v2652 = vrot.slane %v2633, 1
    %v2653 = vsel %vm1050, %v2648, %v2652
    %v2654 = vrot.slane %v2634, 1
    %v2655 = vsel %vm1050, %v2650, %v2654
    %v2656 = vrot.slane %v2635, 1
    %v2657 = vsel %vm1050, %v2652, %v2656
    %v2666 = vadd.f32 %v2620, %v2646
    %v2667 = vadd.f32 %v2621, %v2649
    %v2668 = vadd.f32 %v2622, %v2651
    %v2669 = vadd.f32 %v2623, %v2653
    %v2670 = vadd.f32 %v2624, %v2655
    %v2671 = vadd.f32 %v2625, %v2657
    %v2672 = vadd.f32 %v2626, %v2654
    %v2673 = vadd.f32 %v2627, %v2656
    %v2674 = vmul.f32 %v704, %v1091
    %v2675 = vmul.f32 %v706, %v1094
    %v2676 = vmul.f32 %v710, %v1091
    %v2677 = vmul.f32 %v712, %v1094
    %v2678 = vmul.f32 %v716, %v1091
    %v2679 = vmul.f32 %v718, %v1094
    %v2680 = vmul.f32 %v722, %v1091
    %v2681 = vmul.f32 %v724, %v1094
    %v2690 = vrot.slane %v2674, 1
    %v2691 = vrot.slane %v2676, 1
    %v2692 = vsel %vm1050, %v2690, %v2691
    %v2693 = vrot.slane %v2675, 1
    %v2694 = vrot.slane %v2677, 1
    %v2695 = vsel %vm1050, %v2693, %v2694
    %v2696 = vrot.slane %v2678, 1
    %v2697 = vsel %vm1050, %v2691, %v2696
    %v2698 = vrot.slane %v2679, 1
    %v2699 = vsel %vm1050, %v2694, %v2698
    %v2700 = vrot.slane %v2680, 1
    %v2701 = vsel %vm1050, %v2696, %v2700
    %v2702 = vrot.slane %v2681, 1
    %v2703 = vsel %vm1050, %v2698, %v2702
    %2704 = vrot.lane.b32.xlu0 %v2692, 127
    %v2705 = vpop.permute.xlu0 %2704
    %2706 = vrot.lane.b32.xlu0 %v2695, 127
    %v2707 = vpop.permute.xlu0 %2706
    %2708 = vrot.lane.b32.xlu0 %v2697, 127
    %v2709 = vpop.permute.xlu0 %2708
    %2710 = vrot.lane.b32.xlu0 %v2699, 127
    %v2711 = vpop.permute.xlu0 %2710
    %2712 = vrot.lane.b32.xlu0 %v2701, 127
    %v2713 = vpop.permute.xlu0 %2712
    %2714 = vrot.lane.b32.xlu0 %v2703, 127
    %v2715 = vpop.permute.xlu0 %2714
    %2716 = vrot.lane.b32.xlu0 %v2700, 127
    %v2717 = vpop.permute.xlu0 %2716
    %2718 = vrot.lane.b32.xlu0 %v2702, 127
    %v2719 = vpop.permute.xlu0 %2718
    %v2720 = vsel %vm932, %v2705, %v2707
    %v2721 = vsel %vm932, %v2709, %v2711
    %v2722 = vsel %vm932, %v2713, %v2715
    %v2723 = vsel %vm932, %v2717, %v2719
    %v2732 = vadd.f32 %v2666, %v2720
    %v2733 = vadd.f32 %v2667, %v2707
    %v2734 = vadd.f32 %v2668, %v2721
    %v2735 = vadd.f32 %v2669, %v2711
    %v2736 = vadd.f32 %v2670, %v2722
    %v2737 = vadd.f32 %v2671, %v2715
    %v2738 = vadd.f32 %v2672, %v2723
    %v2739 = vadd.f32 %v2673, %v2719
    %v2740 = vmul.f32 %v704, %v1173
    %v2741 = vmul.f32 %v706, %v1176
    %v2742 = vmul.f32 %v710, %v1173
    %v2743 = vmul.f32 %v712, %v1176
    %v2744 = vmul.f32 %v716, %v1173
    %v2745 = vmul.f32 %v718, %v1176
    %v2746 = vmul.f32 %v722, %v1173
    %v2747 = vmul.f32 %v724, %v1176
    %v2756 = vrot.slane %v2740, 1
    %v2757 = vrot.slane %v2742, 1
    %v2758 = vsel %vm1050, %v2756, %v2757
    %v2759 = vrot.slane %v2741, 1
    %v2760 = vrot.slane %v2743, 1
    %v2761 = vsel %vm1050, %v2759, %v2760
    %v2762 = vrot.slane %v2744, 1
    %v2763 = vsel %vm1050, %v2757, %v2762
    %v2764 = vrot.slane %v2745, 1
    %v2765 = vsel %vm1050, %v2760, %v2764
    %v2766 = vrot.slane %v2746, 1
    %v2767 = vsel %vm1050, %v2762, %v2766
    %v2768 = vrot.slane %v2747, 1
    %v2769 = vsel %vm1050, %v2764, %v2768
    %2770 = vrot.lane.b32.xlu0 %v2758, 126
    %v2771 = vpop.permute.xlu0 %2770
    %2772 = vrot.lane.b32.xlu0 %v2761, 126
    %v2773 = vpop.permute.xlu0 %2772
    %2774 = vrot.lane.b32.xlu0 %v2763, 126
    %v2775 = vpop.permute.xlu0 %2774
    %2776 = vrot.lane.b32.xlu0 %v2765, 126
    %v2777 = vpop.permute.xlu0 %2776
    %2778 = vrot.lane.b32.xlu0 %v2767, 126
    %v2779 = vpop.permute.xlu0 %2778
    %2780 = vrot.lane.b32.xlu0 %v2769, 126
    %v2781 = vpop.permute.xlu0 %2780
    %2782 = vrot.lane.b32.xlu0 %v2766, 126
    %v2783 = vpop.permute.xlu0 %2782
    %2784 = vrot.lane.b32.xlu0 %v2768, 126
    %v2785 = vpop.permute.xlu0 %2784
    %v2786 = vsel %vm1002, %v2771, %v2773
    %v2787 = vsel %vm1002, %v2775, %v2777
    %v2788 = vsel %vm1002, %v2779, %v2781
    %v2789 = vsel %vm1002, %v2783, %v2785
    %v2798 = vadd.f32 %v2732, %v2786
    %v2799 = vadd.f32 %v2733, %v2773
    %v2800 = vadd.f32 %v2734, %v2787
    %v2801 = vadd.f32 %v2735, %v2777
    %v2802 = vadd.f32 %v2736, %v2788
    %v2803 = vadd.f32 %v2737, %v2781
    %v2804 = vadd.f32 %v2738, %v2789
    %v2805 = vadd.f32 %v2739, %v2785
    %v2806 = vmul.f32 %v704, %v1249
    %v2807 = vmul.f32 %v706, %v1253
    %v2808 = vmul.f32 %v710, %v1249
    %v2809 = vmul.f32 %v712, %v1253
    %v2810 = vmul.f32 %v716, %v1249
    %v2811 = vmul.f32 %v718, %v1253
    %v2812 = vmul.f32 %v722, %v1249
    %v2813 = vmul.f32 %v724, %v1253
    %v2822 = vrot.slane %v2806, 2
    %v2823 = vrot.slane %v2808, 2
    %v2824 = vsel %vm1272, %v2822, %v2823
    %v2825 = vrot.slane %v2807, 2
    %v2826 = vrot.slane %v2809, 2
    %v2827 = vsel %vm1272, %v2825, %v2826
    %v2828 = vrot.slane %v2810, 2
    %v2829 = vsel %vm1272, %v2823, %v2828
    %v2830 = vrot.slane %v2811, 2
    %v2831 = vsel %vm1272, %v2826, %v2830
    %v2832 = vrot.slane %v2812, 2
    %v2833 = vsel %vm1272, %v2828, %v2832
    %v2834 = vrot.slane %v2813, 2
    %v2835 = vsel %vm1272, %v2830, %v2834
    %v2844 = vadd.f32 %v2798, %v2824
    %v2845 = vadd.f32 %v2799, %v2827
    %v2846 = vadd.f32 %v2800, %v2829
    %v2847 = vadd.f32 %v2801, %v2831
    %v2848 = vadd.f32 %v2802, %v2833
    %v2849 = vadd.f32 %v2803, %v2835
    %v2850 = vadd.f32 %v2804, %v2832
    %v2851 = vadd.f32 %v2805, %v2834
    %v2852 = vmul.f32 %v704, %v1313
    %v2853 = vmul.f32 %v706, %v1316
    %v2854 = vmul.f32 %v710, %v1313
    %v2855 = vmul.f32 %v712, %v1316
    %v2856 = vmul.f32 %v716, %v1313
    %v2857 = vmul.f32 %v718, %v1316
    %v2858 = vmul.f32 %v722, %v1313
    %v2859 = vmul.f32 %v724, %v1316
    %v2868 = vrot.slane %v2852, 2
    %v2869 = vrot.slane %v2854, 2
    %v2870 = vsel %vm1272, %v2868, %v2869
    %v2871 = vrot.slane %v2853, 2
    %v2872 = vrot.slane %v2855, 2
    %v2873 = vsel %vm1272, %v2871, %v2872
    %v2874 = vrot.slane %v2856, 2
    %v2875 = vsel %vm1272, %v2869, %v2874
    %v2876 = vrot.slane %v2857, 2
    %v2877 = vsel %vm1272, %v2872, %v2876
    %v2878 = vrot.slane %v2858, 2
    %v2879 = vsel %vm1272, %v2874, %v2878
    %v2880 = vrot.slane %v2859, 2
    %v2881 = vsel %vm1272, %v2876, %v2880
    %2882 = vrot.lane.b32.xlu0 %v2870, 127
    %v2883 = vpop.permute.xlu0 %2882
    %2884 = vrot.lane.b32.xlu0 %v2873, 127
    %v2885 = vpop.permute.xlu0 %2884
    %2886 = vrot.lane.b32.xlu0 %v2875, 127
    %v2887 = vpop.permute.xlu0 %2886
    %2888 = vrot.lane.b32.xlu0 %v2877, 127
    %v2889 = vpop.permute.xlu0 %2888
    %2890 = vrot.lane.b32.xlu0 %v2879, 127
    %v2891 = vpop.permute.xlu0 %2890
    %2892 = vrot.lane.b32.xlu0 %v2881, 127
    %v2893 = vpop.permute.xlu0 %2892
    %2894 = vrot.lane.b32.xlu0 %v2878, 127
    %v2895 = vpop.permute.xlu0 %2894
    %2896 = vrot.lane.b32.xlu0 %v2880, 127
    %v2897 = vpop.permute.xlu0 %2896
    %v2898 = vsel %vm932, %v2883, %v2885
    %v2899 = vsel %vm932, %v2887, %v2889
    %v2900 = vsel %vm932, %v2891, %v2893
    %v2901 = vsel %vm932, %v2895, %v2897
    %v2910 = vadd.f32 %v2844, %v2898
    %v2911 = vadd.f32 %v2845, %v2885
    %v2912 = vadd.f32 %v2846, %v2899
    %v2913 = vadd.f32 %v2847, %v2889
    %v2914 = vadd.f32 %v2848, %v2900
    %v2915 = vadd.f32 %v2849, %v2893
    %v2916 = vadd.f32 %v2850, %v2901
    %v2917 = vadd.f32 %v2851, %v2897
    %v2918 = vmul.f32 %v704, %v1395
    %v2919 = vmul.f32 %v706, %v1398
    %v2920 = vmul.f32 %v710, %v1395
    %v2921 = vmul.f32 %v712, %v1398
    %v2922 = vmul.f32 %v716, %v1395
    %v2923 = vmul.f32 %v718, %v1398
    %v2924 = vmul.f32 %v722, %v1395
    %v2925 = vmul.f32 %v724, %v1398
    %v2934 = vrot.slane %v2918, 2
    %v2935 = vrot.slane %v2920, 2
    %v2936 = vsel %vm1272, %v2934, %v2935
    %v2937 = vrot.slane %v2919, 2
    %v2938 = vrot.slane %v2921, 2
    %v2939 = vsel %vm1272, %v2937, %v2938
    %v2940 = vrot.slane %v2922, 2
    %v2941 = vsel %vm1272, %v2935, %v2940
    %v2942 = vrot.slane %v2923, 2
    %v2943 = vsel %vm1272, %v2938, %v2942
    %v2944 = vrot.slane %v2924, 2
    %v2945 = vsel %vm1272, %v2940, %v2944
    %v2946 = vrot.slane %v2925, 2
    %v2947 = vsel %vm1272, %v2942, %v2946
    %2948 = vrot.lane.b32.xlu0 %v2936, 126
    %v2949 = vpop.permute.xlu0 %2948
    %2950 = vrot.lane.b32.xlu0 %v2939, 126
    %v2951 = vpop.permute.xlu0 %2950
    %2952 = vrot.lane.b32.xlu0 %v2941, 126
    %v2953 = vpop.permute.xlu0 %2952
    %2954 = vrot.lane.b32.xlu0 %v2943, 126
    %v2955 = vpop.permute.xlu0 %2954
    %2956 = vrot.lane.b32.xlu0 %v2945, 126
    %v2957 = vpop.permute.xlu0 %2956
    %2958 = vrot.lane.b32.xlu0 %v2947, 126
    %v2959 = vpop.permute.xlu0 %2958
    %2960 = vrot.lane.b32.xlu0 %v2944, 126
    %v2961 = vpop.permute.xlu0 %2960
    %2962 = vrot.lane.b32.xlu0 %v2946, 126
    %v2963 = vpop.permute.xlu0 %2962
    %v2964 = vsel %vm1002, %v2949, %v2951
    %v2965 = vsel %vm1002, %v2953, %v2955
    %v2966 = vsel %vm1002, %v2957, %v2959
    %v2967 = vsel %vm1002, %v2961, %v2963
    %v2976 = vadd.f32 %v2910, %v2964
    %v2977 = vadd.f32 %v2911, %v2951
    %v2978 = vadd.f32 %v2912, %v2965
    %v2979 = vadd.f32 %v2913, %v2955
    %v2980 = vadd.f32 %v2914, %v2966
    %v2981 = vadd.f32 %v2915, %v2959
    %v2982 = vadd.f32 %v2916, %v2967
    %v2983 = vadd.f32 %v2917, %v2963
    %v2984 = vadd.f32 %v2976, %v1471
    %v2985 = vadd.f32 %v2977, %v1475
    %v2986 = vadd.f32 %v2978, %v1471
    %v2987 = vadd.f32 %v2979, %v1475
    %v2988 = vadd.f32 %v2980, %v1471
    %v2989 = vadd.f32 %v2981, %v1475
    %v2990 = vadd.f32 %v2982, %v1471
    %v2991 = vadd.f32 %v2983, %v1475
    %v2992 = vmax.f32 %v2984, 0.0
    %v2993 = vmax.f32 %v2985, 0.0
    %v2994 = vmax.f32 %v2986, 0.0
    %v2995 = vmax.f32 %v2987, 0.0
    %v2996 = vmax.f32 %v2988, 0.0
    %v2997 = vmax.f32 %v2989, 0.0
    %v2998 = vmax.f32 %v2990, 0.0
    %v2999 = vmax.f32 %v2991, 0.0
    %v3008 = vrot.slane %v2992, 1
    %v3009 = vrot.slane %v2994, 1
    %v3010 = vsel %vm1050, %v3008, %v3009
    %v3011 = vrot.slane %v2993, 1
    %v3012 = vrot.slane %v2995, 1
    %v3013 = vsel %vm1050, %v3011, %v3012
    %v3014 = vrot.slane %v2996, 1
    %v3015 = vsel %vm1050, %v3009, %v3014
    %v3016 = vrot.slane %v2997, 1
    %v3017 = vsel %vm1050, %v3012, %v3016
    %v3018 = vrot.slane %v2998, 1
    %v3019 = vsel %vm1050, %v3014, %v3018
    %v3020 = vrot.slane %v2999, 1
    %v3021 = vsel %vm1050, %v3016, %v3020
    %v3030 = vmax.f32 %v2992, %v3010
    %v3031 = vmax.f32 %v2993, %v3013
    %v3032 = vmax.f32 %v2994, %v3015
    %v3033 = vmax.f32 %v2995, %v3017
    %v3034 = vmax.f32 %v2996, %v3019
    %v3035 = vmax.f32 %v2997, %v3021
    %v3036 = vmax.f32 %v2998, %v3018
    %v3037 = vmax.f32 %v2999, %v3020
    %v3038 = vld [vmem:[%s5] sm:$0xff]
    %v3039 = vld [vmem:[%s5 + $0x8] sm:$0xff]
    %v3041 = vsel %vm1534, %v3038, 0
    %v3044 = vsel %vm1534, %v3039, 0
    %v3047 = vsel %vm1541, %v3036, 0
    %v3050 = vsel %vm1541, %v3037, 0
    %3052 = vmatprep.subr.mxu0 %v3031
    %3053 = vmatpush1.msra.mxu0 %v3030
    %3054 = vmatprep.subr.mxu0 %v3033
    %3055 = vmatpush1.msra.mxu0 %v3032
    %3056 = vmatprep.subr.mxu0 %v3035
    %3057 = vmatpush1.msra.mxu0 %v3034
    %3058 = vmatprep.subr.mxu0 %v3050
    %3059 = vmatpush1.msra.mxu0 %v3047
    %3060 = vmatprep.subr.mxu0 0.0
    %3061 = vmatpush1.msra.mxu0 0.0
    %3062 = vmatprep.subr.mxu0 0.0
    %3063 = vmatpush1.msra.mxu0 0.0
    %3064 = vmatprep.subr.mxu0 0.0
    %3065 = vmatpush1.msra.mxu0 0.0
    %3066 = vmatprep.subr.mxu0 0.0
    %3067 = vmatpush1.msra.mxu0 0.0
    %3068 = vmatprep.subr.mxu0 0.0
    %3069 = vmatpush1.msra.mxu0 0.0
    %3070 = vmatprep.subr.mxu0 0.0
    %3071 = vmatpush1.msra.mxu0 0.0
    %3072 = vmatprep.subr.mxu0 0.0
    %3073 = vmatpush1.msra.mxu0 0.0
    %3074 = vmatprep.subr.mxu0 0.0
    %3075 = vmatpush1.msra.mxu0 0.0
    %3076 = vmatprep.subr.mxu0 0.0
    %3077 = vmatpush1.msra.mxu0 0.0
    %3078 = vmatprep.subr.mxu0 0.0
    %3079 = vmatpush1.msra.mxu0 0.0
    %3080 = vmatprep.subr.mxu0 0.0
    %3081 = vmatpush1.msra.mxu0 0.0
    %3082 = vmatprep.subr.mxu0 0.0
    %3083 = vmatpush1.msra.mxu0 0.0
    %3084 = vmatprep.subr.mxu0 0.0
    %3085 = vmatpush1.msra.mxu0 0.0
    %3086 = vmatprep.subr.mxu0 0.0
    %3087 = vmatpush1.msra.mxu0 0.0
    %3088 = vmatprep.subr.mxu0 0.0
    %3089 = vmatpush1.msra.mxu0 0.0
    %3090 = vmatprep.subr.mxu0 0.0
    %3091 = vmatpush1.msra.mxu0 0.0
    %3092 = vmatprep.subr.mxu0 0.0
    %3093 = vmatpush1.msra.mxu0 0.0
    %3094 = vmatprep.subr.mxu0 0.0
    %3095 = vmatpush1.msra.mxu0 0.0
    %3096 = vmatprep.subr.mxu0 0.0
    %3097 = vmatpush1.msra.mxu0 0.0
    %3098 = vmatprep.subr.mxu0 0.0
    %3099 = vmatpush1.msra.mxu0 0.0
    %3100 = vmatprep.subr.mxu0 0.0
    %3101 = vmatpush1.msra.mxu0 0.0
    %3102 = vmatprep.subr.mxu0 0.0
    %3103 = vmatpush1.msra.mxu0 0.0
    %3104 = vmatprep.subr.mxu0 0.0
    %3105 = vmatpush1.msra.mxu0 0.0
    %3106 = vmatprep.subr.mxu0 0.0
    %3107 = vmatpush1.msra.mxu0 0.0
    %3108 = vmatprep.subr.mxu0 0.0
    %3109 = vmatpush1.msra.mxu0 0.0
    %3110 = vmatprep.subr.mxu0 0.0
    %3111 = vmatpush1.msra.mxu0 0.0
    %3112 = vmatprep.subr.mxu0 0.0
    %3113 = vmatpush1.msra.mxu0 0.0
    %3114 = vmatprep.subr.mxu0 0.0
    %3115 = vmatpush1.msra.mxu0 0.0
    %3116 = vmatprep.mubr.f32.mxu0 0.0
    %3117 = vmatmul.mubr.f32.gmra.mrb[0].mxu0 %v3041
    %v3118 = vpop.f32.mrb[0].mxu0
    %v3119 = vadd.f32 0.0, %v3118
    %v3120 = vpop.f32.mrb[0].mxu0
    %v3121 = vadd.f32 0.0, %v3120
    %3122 = vmatprep.mubr.f32.mxu0 0.0
    %3123 = vmatmul.mubr.f32.gmra.mrb[0].mxu0 %v3044
    %v3124 = vpop.f32.mrb[0].mxu0
    %v3125 = vadd.f32 0.0, %v3124
    %v3126 = vpop.f32.mrb[0].mxu0
    %v3127 = vadd.f32 0.0, %v3126
    %3128 = vdwg.mxu0
    %3133 = vrot.lane.b32.xlu0 %v3119, 127
    %v3134 = vpop.permute.xlu0 %3133
    %3135 = vrot.lane.b32.xlu0 %v3121, 127
    %v3136 = vpop.permute.xlu0 %3135
    %3137 = vrot.lane.b32.xlu0 %v3125, 127
    %v3138 = vpop.permute.xlu0 %3137
    %3139 = vrot.lane.b32.xlu0 %v3127, 127
    %v3140 = vpop.permute.xlu0 %3139
    %v3141 = vsel %vm932, %v3134, %v3136
    %v3142 = vsel %vm932, %v3138, %v3140
    %v3147 = vmax.f32 %v3119, %v3141
    %v3148 = vmax.f32 %v3121, %v3136
    %v3149 = vmax.f32 %v3125, %v3142
    %v3150 = vmax.f32 %v3127, %v3140
    %v3151 = vld [vmem:[%s6] sm:$0xff]
    %v3152 = vld [vmem:[%s6 + $0x8] sm:$0xff]
    %v3153 = vld [vmem:[%s6 + $0x10] sm:$0xff]
    %v3154 = vld [vmem:[%s6 + $0x18] sm:$0xff]
    %v3155 = vld [vmem:[%s6 + $0x20] sm:$0xff]
    %v3156 = vld [vmem:[%s6 + $0x28] sm:$0xff]
    %v3157 = vld [vmem:[%s6 + $0x30] sm:$0xff]
    %v3158 = vld [vmem:[%s6 + $0x38] sm:$0xff]
    %v3159 = vld [vmem:[%s6 + $0x40] sm:$0xff]
    %v3160 = vld [vmem:[%s6 + $0x48] sm:$0xff]
    %v3161 = vld [vmem:[%s6 + $0x50] sm:$0xff]
    %v3162 = vld [vmem:[%s6 + $0x58] sm:$0xff]
    %v3163 = vld [vmem:[%s6 + $0x60] sm:$0xff]
    %v3164 = vld [vmem:[%s6 + $0x68] sm:$0xff]
    %v3165 = vld [vmem:[%s6 + $0x70] sm:$0xff]
    %v3166 = vld [vmem:[%s6 + $0x78] sm:$0xff]
    %v3167 = vld [vmem:[%s6 + $0x80] sm:$0xff]
    %v3168 = vld [vmem:[%s6 + $0x88] sm:$0xff]
    %v3169 = vld [vmem:[%s6 + $0x90] sm:$0xff]
    %v3170 = vld [vmem:[%s6 + $0x98] sm:$0xff]
    %v3171 = vld [vmem:[%s6 + $0xa0] sm:$0xff]
    %v3172 = vld [vmem:[%s6 + $0xa8] sm:$0xff]
    %v3173 = vld [vmem:[%s6 + $0xb0] sm:$0xff]
    %v3174 = vld [vmem:[%s6 + $0xb8] sm:$0xff]
    %v3175 = vld [vmem:[%s6 + $0xc0] sm:$0xff]
    %v3176 = vld [vmem:[%s6 + $0xc8] sm:$0xff]
    %v3177 = vld [vmem:[%s6 + $0xd0] sm:$0xff]
    %v3178 = vld [vmem:[%s6 + $0xd8] sm:$0xff]
    %v3179 = vld [vmem:[%s6 + $0xe0] sm:$0xff]
    %v3180 = vld [vmem:[%s6 + $0xe8] sm:$0x1f]
    %v3182 = vsel %vm1677, %v3148, 0
    %v3185 = vsel %vm1677, %v3150, 0
    %v3188 = vsel %vm1684, %v3180, 0
    %3190 = vmatprep.subr.mxu0 0.0
    %3191 = vmatpush1.msra.mxu0 %v3151
    %3192 = vmatprep.subr.mxu0 0.0
    %3193 = vmatpush1.msra.mxu0 %v3152
    %3194 = vmatprep.subr.mxu0 0.0
    %3195 = vmatpush1.msra.mxu0 %v3153
    %3196 = vmatprep.subr.mxu0 0.0
    %3197 = vmatpush1.msra.mxu0 %v3154
    %3198 = vmatprep.subr.mxu0 0.0
    %3199 = vmatpush1.msra.mxu0 %v3155
    %3200 = vmatprep.subr.mxu0 0.0
    %3201 = vmatpush1.msra.mxu0 %v3156
    %3202 = vmatprep.subr.mxu0 0.0
    %3203 = vmatpush1.msra.mxu0 %v3157
    %3204 = vmatprep.subr.mxu0 0.0
    %3205 = vmatpush1.msra.mxu0 %v3158
    %3206 = vmatprep.subr.mxu0 0.0
    %3207 = vmatpush1.msra.mxu0 %v3159
    %3208 = vmatprep.subr.mxu0 0.0
    %3209 = vmatpush1.msra.mxu0 %v3160
    %3210 = vmatprep.subr.mxu0 0.0
    %3211 = vmatpush1.msra.mxu0 %v3161
    %3212 = vmatprep.subr.mxu0 0.0
    %3213 = vmatpush1.msra.mxu0 %v3162
    %3214 = vmatprep.subr.mxu0 0.0
    %3215 = vmatpush1.msra.mxu0 %v3163
    %3216 = vmatprep.subr.mxu0 0.0
    %3217 = vmatpush1.msra.mxu0 %v3164
    %3218 = vmatprep.subr.mxu0 0.0
    %3219 = vmatpush1.msra.mxu0 %v3165
    %3220 = vmatprep.subr.mxu0 0.0
    %3221 = vmatpush1.msra.mxu0 %v3166
    %3222 = vmatprep.subr.mxu0 0.0
    %3223 = vmatpush1.msra.mxu0 %v3167
    %3224 = vmatprep.subr.mxu0 0.0
    %3225 = vmatpush1.msra.mxu0 %v3168
    %3226 = vmatprep.subr.mxu0 0.0
    %3227 = vmatpush1.msra.mxu0 %v3169
    %3228 = vmatprep.subr.mxu0 0.0
    %3229 = vmatpush1.msra.mxu0 %v3170
    %3230 = vmatprep.subr.mxu0 0.0
    %3231 = vmatpush1.msra.mxu0 %v3171
    %3232 = vmatprep.subr.mxu0 0.0
    %3233 = vmatpush1.msra.mxu0 %v3172
    %3234 = vmatprep.subr.mxu0 0.0
    %3235 = vmatpush1.msra.mxu0 %v3173
    %3236 = vmatprep.subr.mxu0 0.0
    %3237 = vmatpush1.msra.mxu0 %v3174
    %3238 = vmatprep.subr.mxu0 0.0
    %3239 = vmatpush1.msra.mxu0 %v3175
    %3240 = vmatprep.subr.mxu0 0.0
    %3241 = vmatpush1.msra.mxu0 %v3176
    %3242 = vmatprep.subr.mxu0 0.0
    %3243 = vmatpush1.msra.mxu0 %v3177
    %3244 = vmatprep.subr.mxu0 0.0
    %3245 = vmatpush1.msra.mxu0 %v3178
    %3246 = vmatprep.subr.mxu0 0.0
    %3247 = vmatpush1.msra.mxu0 %v3179
    %3248 = vmatprep.subr.mxu0 0.0
    %3249 = vmatpush1.msra.mxu0 %v3188
    %3250 = vmatprep.subr.mxu0 0.0
    %3251 = vmatpush1.msra.mxu0 0.0
    %3252 = vmatprep.subr.mxu0 0.0
    %3253 = vmatpush1.msra.mxu0 0.0
    %3254 = vmatprep.mubr.f32.mxu0 %v3182
    %3255 = vmatmul.mubr.f32.gmra.mrb[0].mxu0 %v3147
    %v3256 = vpop.f32.mrb[0].mxu0
    %v3257 = vadd.f32 0.0, %v3256
    %v3258 = vpop.f32.mrb[0].mxu0
    %3259 = vmatprep.mubr.f32.mxu0 %v3185
    %3260 = vmatmul.mubr.f32.gmra.mrb[0].mxu0 %v3149
    %v3261 = vpop.f32.mrb[0].mxu0
    %v3262 = vadd.f32 0.0, %v3261
    %v3263 = vpop.f32.mrb[0].mxu0
    %3264 = vdwg.mxu0
    %3265 = vst [vmem:[#allocation2 + $0x20] sm:$0xff] %v3257
    %3266 = vst [vmem:[#allocation2 + $0x28] sm:$0xff] %v3262
    %v3267 = vmul.f32 %v728, %v868
    %v3268 = vmul.f32 %v730, %v872
    %v3269 = vmul.f32 %v734, %v868
    %v3270 = vmul.f32 %v736, %v872
    %v3271 = vmul.f32 %v740, %v868
    %v3272 = vmul.f32 %v742, %v872
    %v3273 = vmul.f32 %v746, %v868
    %v3274 = vmul.f32 %v748, %v872
    %v3275 = vmul.f32 %v728, %v893
    %v3276 = vmul.f32 %v730, %v897
    %v3277 = vmul.f32 %v734, %v893
    %v3278 = vmul.f32 %v736, %v897
    %v3279 = vmul.f32 %v740, %v893
    %v3280 = vmul.f32 %v742, %v897
    %v3281 = vmul.f32 %v746, %v893
    %v3282 = vmul.f32 %v748, %v897
    %3291 = vrot.lane.b32.xlu0 %v3275, 127
    %v3292 = vpop.permute.xlu0 %3291
    %3293 = vrot.lane.b32.xlu0 %v3276, 127
    %v3294 = vpop.permute.xlu0 %3293
    %3295 = vrot.lane.b32.xlu0 %v3277, 127
    %v3296 = vpop.permute.xlu0 %3295
    %3297 = vrot.lane.b32.xlu0 %v3278, 127
    %v3298 = vpop.permute.xlu0 %3297
    %3299 = vrot.lane.b32.xlu0 %v3279, 127
    %v3300 = vpop.permute.xlu0 %3299
    %3301 = vrot.lane.b32.xlu0 %v3280, 127
    %v3302 = vpop.permute.xlu0 %3301
    %3303 = vrot.lane.b32.xlu0 %v3281, 127
    %v3304 = vpop.permute.xlu0 %3303
    %3305 = vrot.lane.b32.xlu0 %v3282, 127
    %v3306 = vpop.permute.xlu0 %3305
    %v3307 = vsel %vm932, %v3292, %v3294
    %v3308 = vsel %vm932, %v3296, %v3298
    %v3309 = vsel %vm932, %v3300, %v3302
    %v3310 = vsel %vm932, %v3304, %v3306
    %v3319 = vadd.f32 %v3267, %v3307
    %v3320 = vadd.f32 %v3268, %v3294
    %v3321 = vadd.f32 %v3269, %v3308
    %v3322 = vadd.f32 %v3270, %v3298
    %v3323 = vadd.f32 %v3271, %v3309
    %v3324 = vadd.f32 %v3272, %v3302
    %v3325 = vadd.f32 %v3273, %v3310
    %v3326 = vadd.f32 %v3274, %v3306
    %v3327 = vmul.f32 %v728, %v963
    %v3328 = vmul.f32 %v730, %v967
    %v3329 = vmul.f32 %v734, %v963
    %v3330 = vmul.f32 %v736, %v967
    %v3331 = vmul.f32 %v740, %v963
    %v3332 = vmul.f32 %v742, %v967
    %v3333 = vmul.f32 %v746, %v963
    %v3334 = vmul.f32 %v748, %v967
    %3343 = vrot.lane.b32.xlu0 %v3327, 126
    %v3344 = vpop.permute.xlu0 %3343
    %3345 = vrot.lane.b32.xlu0 %v3328, 126
    %v3346 = vpop.permute.xlu0 %3345
    %3347 = vrot.lane.b32.xlu0 %v3329, 126
    %v3348 = vpop.permute.xlu0 %3347
    %3349 = vrot.lane.b32.xlu0 %v3330, 126
    %v3350 = vpop.permute.xlu0 %3349
    %3351 = vrot.lane.b32.xlu0 %v3331, 126
    %v3352 = vpop.permute.xlu0 %3351
    %3353 = vrot.lane.b32.xlu0 %v3332, 126
    %v3354 = vpop.permute.xlu0 %3353
    %3355 = vrot.lane.b32.xlu0 %v3333, 126
    %v3356 = vpop.permute.xlu0 %3355
    %3357 = vrot.lane.b32.xlu0 %v3334, 126
    %v3358 = vpop.permute.xlu0 %3357
    %v3359 = vsel %vm1002, %v3344, %v3346
    %v3360 = vsel %vm1002, %v3348, %v3350
    %v3361 = vsel %vm1002, %v3352, %v3354
    %v3362 = vsel %vm1002, %v3356, %v3358
    %v3371 = vadd.f32 %v3319, %v3359
    %v3372 = vadd.f32 %v3320, %v3346
    %v3373 = vadd.f32 %v3321, %v3360
    %v3374 = vadd.f32 %v3322, %v3350
    %v3375 = vadd.f32 %v3323, %v3361
    %v3376 = vadd.f32 %v3324, %v3354
    %v3377 = vadd.f32 %v3325, %v3362
    %v3378 = vadd.f32 %v3326, %v3358
    %v3379 = vmul.f32 %v728, %v1027
    %v3380 = vmul.f32 %v730, %v1031
    %v3381 = vmul.f32 %v734, %v1027
    %v3382 = vmul.f32 %v736, %v1031
    %v3383 = vmul.f32 %v740, %v1027
    %v3384 = vmul.f32 %v742, %v1031
    %v3385 = vmul.f32 %v746, %v1027
    %v3386 = vmul.f32 %v748, %v1031
    %v3395 = vrot.slane %v3379, 1
    %v3396 = vrot.slane %v3381, 1
    %v3397 = vsel %vm1050, %v3395, %v3396
    %v3398 = vrot.slane %v3380, 1
    %v3399 = vrot.slane %v3382, 1
    %v3400 = vsel %vm1050, %v3398, %v3399
    %v3401 = vrot.slane %v3383, 1
    %v3402 = vsel %vm1050, %v3396, %v3401
    %v3403 = vrot.slane %v3384, 1
    %v3404 = vsel %vm1050, %v3399, %v3403
    %v3405 = vrot.slane %v3385, 1
    %v3406 = vsel %vm1050, %v3401, %v3405
    %v3407 = vrot.slane %v3386, 1
    %v3408 = vsel %vm1050, %v3403, %v3407
    %v3417 = vadd.f32 %v3371, %v3397
    %v3418 = vadd.f32 %v3372, %v3400
    %v3419 = vadd.f32 %v3373, %v3402
    %v3420 = vadd.f32 %v3374, %v3404
    %v3421 = vadd.f32 %v3375, %v3406
    %v3422 = vadd.f32 %v3376, %v3408
    %v3423 = vadd.f32 %v3377, %v3405
    %v3424 = vadd.f32 %v3378, %v3407
    %v3425 = vmul.f32 %v728, %v1091
    %v3426 = vmul.f32 %v730, %v1094
    %v3427 = vmul.f32 %v734, %v1091
    %v3428 = vmul.f32 %v736, %v1094
    %v3429 = vmul.f32 %v740, %v1091
    %v3430 = vmul.f32 %v742, %v1094
    %v3431 = vmul.f32 %v746, %v1091
    %v3432 = vmul.f32 %v748, %v1094
    %v3441 = vrot.slane %v3425, 1
    %v3442 = vrot.slane %v3427, 1
    %v3443 = vsel %vm1050, %v3441, %v3442
    %v3444 = vrot.slane %v3426, 1
    %v3445 = vrot.slane %v3428, 1
    %v3446 = vsel %vm1050, %v3444, %v3445
    %v3447 = vrot.slane %v3429, 1
    %v3448 = vsel %vm1050, %v3442, %v3447
    %v3449 = vrot.slane %v3430, 1
    %v3450 = vsel %vm1050, %v3445, %v3449
    %v3451 = vrot.slane %v3431, 1
    %v3452 = vsel %vm1050, %v3447, %v3451
    %v3453 = vrot.slane %v3432, 1
    %v3454 = vsel %vm1050, %v3449, %v3453
    %3455 = vrot.lane.b32.xlu0 %v3443, 127
    %v3456 = vpop.permute.xlu0 %3455
    %3457 = vrot.lane.b32.xlu0 %v3446, 127
    %v3458 = vpop.permute.xlu0 %3457
    %3459 = vrot.lane.b32.xlu0 %v3448, 127
    %v3460 = vpop.permute.xlu0 %3459
    %3461 = vrot.lane.b32.xlu0 %v3450, 127
    %v3462 = vpop.permute.xlu0 %3461
    %3463 = vrot.lane.b32.xlu0 %v3452, 127
    %v3464 = vpop.permute.xlu0 %3463
    %3465 = vrot.lane.b32.xlu0 %v3454, 127
    %v3466 = vpop.permute.xlu0 %3465
    %3467 = vrot.lane.b32.xlu0 %v3451, 127
    %v3468 = vpop.permute.xlu0 %3467
    %3469 = vrot.lane.b32.xlu0 %v3453, 127
    %v3470 = vpop.permute.xlu0 %3469
    %v3471 = vsel %vm932, %v3456, %v3458
    %v3472 = vsel %vm932, %v3460, %v3462
    %v3473 = vsel %vm932, %v3464, %v3466
    %v3474 = vsel %vm932, %v3468, %v3470
    %v3483 = vadd.f32 %v3417, %v3471
    %v3484 = vadd.f32 %v3418, %v3458
    %v3485 = vadd.f32 %v3419, %v3472
    %v3486 = vadd.f32 %v3420, %v3462
    %v3487 = vadd.f32 %v3421, %v3473
    %v3488 = vadd.f32 %v3422, %v3466
    %v3489 = vadd.f32 %v3423, %v3474
    %v3490 = vadd.f32 %v3424, %v3470
    %v3491 = vmul.f32 %v728, %v1173
    %v3492 = vmul.f32 %v730, %v1176
    %v3493 = vmul.f32 %v734, %v1173
    %v3494 = vmul.f32 %v736, %v1176
    %v3495 = vmul.f32 %v740, %v1173
    %v3496 = vmul.f32 %v742, %v1176
    %v3497 = vmul.f32 %v746, %v1173
    %v3498 = vmul.f32 %v748, %v1176
    %v3507 = vrot.slane %v3491, 1
    %v3508 = vrot.slane %v3493, 1
    %v3509 = vsel %vm1050, %v3507, %v3508
    %v3510 = vrot.slane %v3492, 1
    %v3511 = vrot.slane %v3494, 1
    %v3512 = vsel %vm1050, %v3510, %v3511
    %v3513 = vrot.slane %v3495, 1
    %v3514 = vsel %vm1050, %v3508, %v3513
    %v3515 = vrot.slane %v3496, 1
    %v3516 = vsel %vm1050, %v3511, %v3515
    %v3517 = vrot.slane %v3497, 1
    %v3518 = vsel %vm1050, %v3513, %v3517
    %v3519 = vrot.slane %v3498, 1
    %v3520 = vsel %vm1050, %v3515, %v3519
    %3521 = vrot.lane.b32.xlu0 %v3509, 126
    %v3522 = vpop.permute.xlu0 %3521
    %3523 = vrot.lane.b32.xlu0 %v3512, 126
    %v3524 = vpop.permute.xlu0 %3523
    %3525 = vrot.lane.b32.xlu0 %v3514, 126
    %v3526 = vpop.permute.xlu0 %3525
    %3527 = vrot.lane.b32.xlu0 %v3516, 126
    %v3528 = vpop.permute.xlu0 %3527
    %3529 = vrot.lane.b32.xlu0 %v3518, 126
    %v3530 = vpop.permute.xlu0 %3529
    %3531 = vrot.lane.b32.xlu0 %v3520, 126
    %v3532 = vpop.permute.xlu0 %3531
    %3533 = vrot.lane.b32.xlu0 %v3517, 126
    %v3534 = vpop.permute.xlu0 %3533
    %3535 = vrot.lane.b32.xlu0 %v3519, 126
    %v3536 = vpop.permute.xlu0 %3535
    %v3537 = vsel %vm1002, %v3522, %v3524
    %v3538 = vsel %vm1002, %v3526, %v3528
    %v3539 = vsel %vm1002, %v3530, %v3532
    %v3540 = vsel %vm1002, %v3534, %v3536
    %v3549 = vadd.f32 %v3483, %v3537
    %v3550 = vadd.f32 %v3484, %v3524
    %v3551 = vadd.f32 %v3485, %v3538
    %v3552 = vadd.f32 %v3486, %v3528
    %v3553 = vadd.f32 %v3487, %v3539
    %v3554 = vadd.f32 %v3488, %v3532
    %v3555 = vadd.f32 %v3489, %v3540
    %v3556 = vadd.f32 %v3490, %v3536
    %v3557 = vmul.f32 %v728, %v1249
    %v3558 = vmul.f32 %v730, %v1253
    %v3559 = vmul.f32 %v734, %v1249
    %v3560 = vmul.f32 %v736, %v1253
    %v3561 = vmul.f32 %v740, %v1249
    %v3562 = vmul.f32 %v742, %v1253
    %v3563 = vmul.f32 %v746, %v1249
    %v3564 = vmul.f32 %v748, %v1253
    %v3573 = vrot.slane %v3557, 2
    %v3574 = vrot.slane %v3559, 2
    %v3575 = vsel %vm1272, %v3573, %v3574
    %v3576 = vrot.slane %v3558, 2
    %v3577 = vrot.slane %v3560, 2
    %v3578 = vsel %vm1272, %v3576, %v3577
    %v3579 = vrot.slane %v3561, 2
    %v3580 = vsel %vm1272, %v3574, %v3579
    %v3581 = vrot.slane %v3562, 2
    %v3582 = vsel %vm1272, %v3577, %v3581
    %v3583 = vrot.slane %v3563, 2
    %v3584 = vsel %vm1272, %v3579, %v3583
    %v3585 = vrot.slane %v3564, 2
    %v3586 = vsel %vm1272, %v3581, %v3585
    %v3595 = vadd.f32 %v3549, %v3575
    %v3596 = vadd.f32 %v3550, %v3578
    %v3597 = vadd.f32 %v3551, %v3580
    %v3598 = vadd.f32 %v3552, %v3582
    %v3599 = vadd.f32 %v3553, %v3584
    %v3600 = vadd.f32 %v3554, %v3586
    %v3601 = vadd.f32 %v3555, %v3583
    %v3602 = vadd.f32 %v3556, %v3585
    %v3603 = vmul.f32 %v728, %v1313
    %v3604 = vmul.f32 %v730, %v1316
    %v3605 = vmul.f32 %v734, %v1313
    %v3606 = vmul.f32 %v736, %v1316
    %v3607 = vmul.f32 %v740, %v1313
    %v3608 = vmul.f32 %v742, %v1316
    %v3609 = vmul.f32 %v746, %v1313
    %v3610 = vmul.f32 %v748, %v1316
    %v3619 = vrot.slane %v3603, 2
    %v3620 = vrot.slane %v3605, 2
    %v3621 = vsel %vm1272, %v3619, %v3620
    %v3622 = vrot.slane %v3604, 2
    %v3623 = vrot.slane %v3606, 2
    %v3624 = vsel %vm1272, %v3622, %v3623
    %v3625 = vrot.slane %v3607, 2
    %v3626 = vsel %vm1272, %v3620, %v3625
    %v3627 = vrot.slane %v3608, 2
    %v3628 = vsel %vm1272, %v3623, %v3627
    %v3629 = vrot.slane %v3609, 2
    %v3630 = vsel %vm1272, %v3625, %v3629
    %v3631 = vrot.slane %v3610, 2
    %v3632 = vsel %vm1272, %v3627, %v3631
    %3633 = vrot.lane.b32.xlu0 %v3621, 127
    %v3634 = vpop.permute.xlu0 %3633
    %3635 = vrot.lane.b32.xlu0 %v3624, 127
    %v3636 = vpop.permute.xlu0 %3635
    %3637 = vrot.lane.b32.xlu0 %v3626, 127
    %v3638 = vpop.permute.xlu0 %3637
    %3639 = vrot.lane.b32.xlu0 %v3628, 127
    %v3640 = vpop.permute.xlu0 %3639
    %3641 = vrot.lane.b32.xlu0 %v3630, 127
    %v3642 = vpop.permute.xlu0 %3641
    %3643 = vrot.lane.b32.xlu0 %v3632, 127
    %v3644 = vpop.permute.xlu0 %3643
    %3645 = vrot.lane.b32.xlu0 %v3629, 127
    %v3646 = vpop.permute.xlu0 %3645
    %3647 = vrot.lane.b32.xlu0 %v3631, 127
    %v3648 = vpop.permute.xlu0 %3647
    %v3649 = vsel %vm932, %v3634, %v3636
    %v3650 = vsel %vm932, %v3638, %v3640
    %v3651 = vsel %vm932, %v3642, %v3644
    %v3652 = vsel %vm932, %v3646, %v3648
    %v3661 = vadd.f32 %v3595, %v3649
    %v3662 = vadd.f32 %v3596, %v3636
    %v3663 = vadd.f32 %v3597, %v3650
    %v3664 = vadd.f32 %v3598, %v3640
    %v3665 = vadd.f32 %v3599, %v3651
    %v3666 = vadd.f32 %v3600, %v3644
    %v3667 = vadd.f32 %v3601, %v3652
    %v3668 = vadd.f32 %v3602, %v3648
    %v3669 = vmul.f32 %v728, %v1395
    %v3670 = vmul.f32 %v730, %v1398
    %v3671 = vmul.f32 %v734, %v1395
    %v3672 = vmul.f32 %v736, %v1398
    %v3673 = vmul.f32 %v740, %v1395
    %v3674 = vmul.f32 %v742, %v1398
    %v3675 = vmul.f32 %v746, %v1395
    %v3676 = vmul.f32 %v748, %v1398
    %v3685 = vrot.slane %v3669, 2
    %v3686 = vrot.slane %v3671, 2
    %v3687 = vsel %vm1272, %v3685, %v3686
    %v3688 = vrot.slane %v3670, 2
    %v3689 = vrot.slane %v3672, 2
    %v3690 = vsel %vm1272, %v3688, %v3689
    %v3691 = vrot.slane %v3673, 2
    %v3692 = vsel %vm1272, %v3686, %v3691
    %v3693 = vrot.slane %v3674, 2
    %v3694 = vsel %vm1272, %v3689, %v3693
    %v3695 = vrot.slane %v3675, 2
    %v3696 = vsel %vm1272, %v3691, %v3695
    %v3697 = vrot.slane %v3676, 2
    %v3698 = vsel %vm1272, %v3693, %v3697
    %3699 = vrot.lane.b32.xlu0 %v3687, 126
    %v3700 = vpop.permute.xlu0 %3699
    %3701 = vrot.lane.b32.xlu0 %v3690, 126
    %v3702 = vpop.permute.xlu0 %3701
    %3703 = vrot.lane.b32.xlu0 %v3692, 126
    %v3704 = vpop.permute.xlu0 %3703
    %3705 = vrot.lane.b32.xlu0 %v3694, 126
    %v3706 = vpop.permute.xlu0 %3705
    %3707 = vrot.lane.b32.xlu0 %v3696, 126
    %v3708 = vpop.permute.xlu0 %3707
    %3709 = vrot.lane.b32.xlu0 %v3698, 126
    %v3710 = vpop.permute.xlu0 %3709
    %3711 = vrot.lane.b32.xlu0 %v3695, 126
    %v3712 = vpop.permute.xlu0 %3711
    %3713 = vrot.lane.b32.xlu0 %v3697, 126
    %v3714 = vpop.permute.xlu0 %3713
    %v3715 = vsel %vm1002, %v3700, %v3702
    %v3716 = vsel %vm1002, %v3704, %v3706
    %v3717 = vsel %vm1002, %v3708, %v3710
    %v3718 = vsel %vm1002, %v3712, %v3714
    %v3727 = vadd.f32 %v3661, %v3715
    %v3728 = vadd.f32 %v3662, %v3702
    %v3729 = vadd.f32 %v3663, %v3716
    %v3730 = vadd.f32 %v3664, %v3706
    %v3731 = vadd.f32 %v3665, %v3717
    %v3732 = vadd.f32 %v3666, %v3710
    %v3733 = vadd.f32 %v3667, %v3718
    %v3734 = vadd.f32 %v3668, %v3714
    %v3735 = vadd.f32 %v3727, %v1471
    %v3736 = vadd.f32 %v3728, %v1475
    %v3737 = vadd.f32 %v3729, %v1471
    %v3738 = vadd.f32 %v3730, %v1475
    %v3739 = vadd.f32 %v3731, %v1471
    %v3740 = vadd.f32 %v3732, %v1475
    %v3741 = vadd.f32 %v3733, %v1471
    %v3742 = vadd.f32 %v3734, %v1475
    %v3743 = vmax.f32 %v3735, 0.0
    %v3744 = vmax.f32 %v3736, 0.0
    %v3745 = vmax.f32 %v3737, 0.0
    %v3746 = vmax.f32 %v3738, 0.0
    %v3747 = vmax.f32 %v3739, 0.0
    %v3748 = vmax.f32 %v3740, 0.0
    %v3749 = vmax.f32 %v3741, 0.0
    %v3750 = vmax.f32 %v3742, 0.0
    %v3759 = vrot.slane %v3743, 1
    %v3760 = vrot.slane %v3745, 1
    %v3761 = vsel %vm1050, %v3759, %v3760
    %v3762 = vrot.slane %v3744, 1
    %v3763 = vrot.slane %v3746, 1
    %v3764 = vsel %vm1050, %v3762, %v3763
    %v3765 = vrot.slane %v3747, 1
    %v3766 = vsel %vm1050, %v3760, %v3765
    %v3767 = vrot.slane %v3748, 1
    %v3768 = vsel %vm1050, %v3763, %v3767
    %v3769 = vrot.slane %v3749, 1
    %v3770 = vsel %vm1050, %v3765, %v3769
    %v3771 = vrot.slane %v3750, 1
    %v3772 = vsel %vm1050, %v3767, %v3771
    %v3781 = vmax.f32 %v3743, %v3761
    %v3782 = vmax.f32 %v3744, %v3764
    %v3783 = vmax.f32 %v3745, %v3766
    %v3784 = vmax.f32 %v3746, %v3768
    %v3785 = vmax.f32 %v3747, %v3770
    %v3786 = vmax.f32 %v3748, %v3772
    %v3787 = vmax.f32 %v3749, %v3769
    %v3788 = vmax.f32 %v3750, %v3771
    %v3789 = vld [vmem:[%s5] sm:$0xff]
    %v3790 = vld [vmem:[%s5 + $0x8] sm:$0xff]
    %v3792 = vsel %vm1534, %v3789, 0
    %v3795 = vsel %vm1534, %v3790, 0
    %v3798 = vsel %vm1541, %v3787, 0
    %v3801 = vsel %vm1541, %v3788, 0
    %3803 = vmatprep.subr.mxu0 %v3782
    %3804 = vmatpush1.msra.mxu0 %v3781
    %3805 = vmatprep.subr.mxu0 %v3784
    %3806 = vmatpush1.msra.mxu0 %v3783
    %3807 = vmatprep.subr.mxu0 %v3786
    %3808 = vmatpush1.msra.mxu0 %v3785
    %3809 = vmatprep.subr.mxu0 %v3801
    %3810 = vmatpush1.msra.mxu0 %v3798
    %3811 = vmatprep.subr.mxu0 0.0
    %3812 = vmatpush1.msra.mxu0 0.0
    %3813 = vmatprep.subr.mxu0 0.0
    %3814 = vmatpush1.msra.mxu0 0.0
    %3815 = vmatprep.subr.mxu0 0.0
    %3816 = vmatpush1.msra.mxu0 0.0
    %3817 = vmatprep.subr.mxu0 0.0
    %3818 = vmatpush1.msra.mxu0 0.0
    %3819 = vmatprep.subr.mxu0 0.0
    %3820 = vmatpush1.msra.mxu0 0.0
    %3821 = vmatprep.subr.mxu0 0.0
    %3822 = vmatpush1.msra.mxu0 0.0
    %3823 = vmatprep.subr.mxu0 0.0
    %3824 = vmatpush1.msra.mxu0 0.0
    %3825 = vmatprep.subr.mxu0 0.0
    %3826 = vmatpush1.msra.mxu0 0.0
    %3827 = vmatprep.subr.mxu0 0.0
    %3828 = vmatpush1.msra.mxu0 0.0
    %3829 = vmatprep.subr.mxu0 0.0
    %3830 = vmatpush1.msra.mxu0 0.0
    %3831 = vmatprep.subr.mxu0 0.0
    %3832 = vmatpush1.msra.mxu0 0.0
    %3833 = vmatprep.subr.mxu0 0.0
    %3834 = vmatpush1.msra.mxu0 0.0
    %3835 = vmatprep.subr.mxu0 0.0
    %3836 = vmatpush1.msra.mxu0 0.0
    %3837 = vmatprep.subr.mxu0 0.0
    %3838 = vmatpush1.msra.mxu0 0.0
    %3839 = vmatprep.subr.mxu0 0.0
    %3840 = vmatpush1.msra.mxu0 0.0
    %3841 = vmatprep.subr.mxu0 0.0
    %3842 = vmatpush1.msra.mxu0 0.0
    %3843 = vmatprep.subr.mxu0 0.0
    %3844 = vmatpush1.msra.mxu0 0.0
    %3845 = vmatprep.subr.mxu0 0.0
    %3846 = vmatpush1.msra.mxu0 0.0
    %3847 = vmatprep.subr.mxu0 0.0
    %3848 = vmatpush1.msra.mxu0 0.0
    %3849 = vmatprep.subr.mxu0 0.0
    %3850 = vmatpush1.msra.mxu0 0.0
    %3851 = vmatprep.subr.mxu0 0.0
    %3852 = vmatpush1.msra.mxu0 0.0
    %3853 = vmatprep.subr.mxu0 0.0
    %3854 = vmatpush1.msra.mxu0 0.0
    %3855 = vmatprep.subr.mxu0 0.0
    %3856 = vmatpush1.msra.mxu0 0.0
    %3857 = vmatprep.subr.mxu0 0.0
    %3858 = vmatpush1.msra.mxu0 0.0
    %3859 = vmatprep.subr.mxu0 0.0
    %3860 = vmatpush1.msra.mxu0 0.0
    %3861 = vmatprep.subr.mxu0 0.0
    %3862 = vmatpush1.msra.mxu0 0.0
    %3863 = vmatprep.subr.mxu0 0.0
    %3864 = vmatpush1.msra.mxu0 0.0
    %3865 = vmatprep.subr.mxu0 0.0
    %3866 = vmatpush1.msra.mxu0 0.0
    %3867 = vmatprep.mubr.f32.mxu0 0.0
    %3868 = vmatmul.mubr.f32.gmra.mrb[0].mxu0 %v3792
    %v3869 = vpop.f32.mrb[0].mxu0
    %v3870 = vadd.f32 0.0, %v3869
    %v3871 = vpop.f32.mrb[0].mxu0
    %v3872 = vadd.f32 0.0, %v3871
    %3873 = vmatprep.mubr.f32.mxu0 0.0
    %3874 = vmatmul.mubr.f32.gmra.mrb[0].mxu0 %v3795
    %v3875 = vpop.f32.mrb[0].mxu0
    %v3876 = vadd.f32 0.0, %v3875
    %v3877 = vpop.f32.mrb[0].mxu0
    %v3878 = vadd.f32 0.0, %v3877
    %3879 = vdwg.mxu0
    %3884 = vrot.lane.b32.xlu0 %v3870, 127
    %v3885 = vpop.permute.xlu0 %3884
    %3886 = vrot.lane.b32.xlu0 %v3872, 127
    %v3887 = vpop.permute.xlu0 %3886
    %3888 = vrot.lane.b32.xlu0 %v3876, 127
    %v3889 = vpop.permute.xlu0 %3888
    %3890 = vrot.lane.b32.xlu0 %v3878, 127
    %v3891 = vpop.permute.xlu0 %3890
    %v3892 = vsel %vm932, %v3885, %v3887
    %v3893 = vsel %vm932, %v3889, %v3891
    %v3898 = vmax.f32 %v3870, %v3892
    %v3899 = vmax.f32 %v3872, %v3887
    %v3900 = vmax.f32 %v3876, %v3893
    %v3901 = vmax.f32 %v3878, %v3891
    %v3902 = vld [vmem:[%s6] sm:$0xff]
    %v3903 = vld [vmem:[%s6 + $0x8] sm:$0xff]
    %v3904 = vld [vmem:[%s6 + $0x10] sm:$0xff]
    %v3905 = vld [vmem:[%s6 + $0x18] sm:$0xff]
    %v3906 = vld [vmem:[%s6 + $0x20] sm:$0xff]
    %v3907 = vld [vmem:[%s6 + $0x28] sm:$0xff]
    %v3908 = vld [vmem:[%s6 + $0x30] sm:$0xff]
    %v3909 = vld [vmem:[%s6 + $0x38] sm:$0xff]
    %v3910 = vld [vmem:[%s6 + $0x40] sm:$0xff]
    %v3911 = vld [vmem:[%s6 + $0x48] sm:$0xff]
    %v3912 = vld [vmem:[%s6 + $0x50] sm:$0xff]
    %v3913 = vld [vmem:[%s6 + $0x58] sm:$0xff]
    %v3914 = vld [vmem:[%s6 + $0x60] sm:$0xff]
    %v3915 = vld [vmem:[%s6 + $0x68] sm:$0xff]
    %v3916 = vld [vmem:[%s6 + $0x70] sm:$0xff]
    %v3917 = vld [vmem:[%s6 + $0x78] sm:$0xff]
    %v3918 = vld [vmem:[%s6 + $0x80] sm:$0xff]
    %v3919 = vld [vmem:[%s6 + $0x88] sm:$0xff]
    %v3920 = vld [vmem:[%s6 + $0x90] sm:$0xff]
    %v3921 = vld [vmem:[%s6 + $0x98] sm:$0xff]
    %v3922 = vld [vmem:[%s6 + $0xa0] sm:$0xff]
    %v3923 = vld [vmem:[%s6 + $0xa8] sm:$0xff]
    %v3924 = vld [vmem:[%s6 + $0xb0] sm:$0xff]
    %v3925 = vld [vmem:[%s6 + $0xb8] sm:$0xff]
    %v3926 = vld [vmem:[%s6 + $0xc0] sm:$0xff]
    %v3927 = vld [vmem:[%s6 + $0xc8] sm:$0xff]
    %v3928 = vld [vmem:[%s6 + $0xd0] sm:$0xff]
    %v3929 = vld [vmem:[%s6 + $0xd8] sm:$0xff]
    %v3930 = vld [vmem:[%s6 + $0xe0] sm:$0xff]
    %v3931 = vld [vmem:[%s6 + $0xe8] sm:$0x1f]
    %v3933 = vsel %vm1677, %v3899, 0
    %v3936 = vsel %vm1677, %v3901, 0
    %v3939 = vsel %vm1684, %v3931, 0
    %3941 = vmatprep.subr.mxu0 0.0
    %3942 = vmatpush1.msra.mxu0 %v3902
    %3943 = vmatprep.subr.mxu0 0.0
    %3944 = vmatpush1.msra.mxu0 %v3903
    %3945 = vmatprep.subr.mxu0 0.0
    %3946 = vmatpush1.msra.mxu0 %v3904
    %3947 = vmatprep.subr.mxu0 0.0
    %3948 = vmatpush1.msra.mxu0 %v3905
    %3949 = vmatprep.subr.mxu0 0.0
    %3950 = vmatpush1.msra.mxu0 %v3906
    %3951 = vmatprep.subr.mxu0 0.0
    %3952 = vmatpush1.msra.mxu0 %v3907
    %3953 = vmatprep.subr.mxu0 0.0
    %3954 = vmatpush1.msra.mxu0 %v3908
    %3955 = vmatprep.subr.mxu0 0.0
    %3956 = vmatpush1.msra.mxu0 %v3909
    %3957 = vmatprep.subr.mxu0 0.0
    %3958 = vmatpush1.msra.mxu0 %v3910
    %3959 = vmatprep.subr.mxu0 0.0
    %3960 = vmatpush1.msra.mxu0 %v3911
    %3961 = vmatprep.subr.mxu0 0.0
    %3962 = vmatpush1.msra.mxu0 %v3912
    %3963 = vmatprep.subr.mxu0 0.0
    %3964 = vmatpush1.msra.mxu0 %v3913
    %3965 = vmatprep.subr.mxu0 0.0
    %3966 = vmatpush1.msra.mxu0 %v3914
    %3967 = vmatprep.subr.mxu0 0.0
    %3968 = vmatpush1.msra.mxu0 %v3915
    %3969 = vmatprep.subr.mxu0 0.0
    %3970 = vmatpush1.msra.mxu0 %v3916
    %3971 = vmatprep.subr.mxu0 0.0
    %3972 = vmatpush1.msra.mxu0 %v3917
    %3973 = vmatprep.subr.mxu0 0.0
    %3974 = vmatpush1.msra.mxu0 %v3918
    %3975 = vmatprep.subr.mxu0 0.0
    %3976 = vmatpush1.msra.mxu0 %v3919
    %3977 = vmatprep.subr.mxu0 0.0
    %3978 = vmatpush1.msra.mxu0 %v3920
    %3979 = vmatprep.subr.mxu0 0.0
    %3980 = vmatpush1.msra.mxu0 %v3921
    %3981 = vmatprep.subr.mxu0 0.0
    %3982 = vmatpush1.msra.mxu0 %v3922
    %3983 = vmatprep.subr.mxu0 0.0
    %3984 = vmatpush1.msra.mxu0 %v3923
    %3985 = vmatprep.subr.mxu0 0.0
    %3986 = vmatpush1.msra.mxu0 %v3924
    %3987 = vmatprep.subr.mxu0 0.0
    %3988 = vmatpush1.msra.mxu0 %v3925
    %3989 = vmatprep.subr.mxu0 0.0
    %3990 = vmatpush1.msra.mxu0 %v3926
    %3991 = vmatprep.subr.mxu0 0.0
    %3992 = vmatpush1.msra.mxu0 %v3927
    %3993 = vmatprep.subr.mxu0 0.0
    %3994 = vmatpush1.msra.mxu0 %v3928
    %3995 = vmatprep.subr.mxu0 0.0
    %3996 = vmatpush1.msra.mxu0 %v3929
    %3997 = vmatprep.subr.mxu0 0.0
    %3998 = vmatpush1.msra.mxu0 %v3930
    %3999 = vmatprep.subr.mxu0 0.0
    %4000 = vmatpush1.msra.mxu0 %v3939
    %4001 = vmatprep.subr.mxu0 0.0
    %4002 = vmatpush1.msra.mxu0 0.0
    %4003 = vmatprep.subr.mxu0 0.0
    %4004 = vmatpush1.msra.mxu0 0.0
    %4005 = vmatprep.mubr.f32.mxu0 %v3933
    %4006 = vmatmul.mubr.f32.gmra.mrb[0].mxu0 %v3898
    %v4007 = vpop.f32.mrb[0].mxu0
    %v4008 = vadd.f32 0.0, %v4007
    %v4009 = vpop.f32.mrb[0].mxu0
    %4010 = vmatprep.mubr.f32.mxu0 %v3936
    %4011 = vmatmul.mubr.f32.gmra.mrb[0].mxu0 %v3900
    %v4012 = vpop.f32.mrb[0].mxu0
    %v4013 = vadd.f32 0.0, %v4012
    %v4014 = vpop.f32.mrb[0].mxu0
    %4015 = vdwg.mxu0
    %4016 = vst [vmem:[#allocation2 + $0x30] sm:$0xff] %v4008
    %4017 = vst [vmem:[#allocation2 + $0x38] sm:$0xff] %v4013
    %v4018 = vmul.f32 %v752, %v868
    %v4019 = vmul.f32 %v754, %v872
    %v4020 = vmul.f32 %v758, %v868
    %v4021 = vmul.f32 %v760, %v872
    %v4022 = vmul.f32 %v764, %v868
    %v4023 = vmul.f32 %v766, %v872
    %v4024 = vmul.f32 %v770, %v868
    %v4025 = vmul.f32 %v772, %v872
    %v4026 = vmul.f32 %v752, %v893
    %v4027 = vmul.f32 %v754, %v897
    %v4028 = vmul.f32 %v758, %v893
    %v4029 = vmul.f32 %v760, %v897
    %v4030 = vmul.f32 %v764, %v893
    %v4031 = vmul.f32 %v766, %v897
    %v4032 = vmul.f32 %v770, %v893
    %v4033 = vmul.f32 %v772, %v897
    %4042 = vrot.lane.b32.xlu0 %v4026, 127
    %v4043 = vpop.permute.xlu0 %4042
    %4044 = vrot.lane.b32.xlu0 %v4027, 127
    %v4045 = vpop.permute.xlu0 %4044
    %4046 = vrot.lane.b32.xlu0 %v4028, 127
    %v4047 = vpop.permute.xlu0 %4046
    %4048 = vrot.lane.b32.xlu0 %v4029, 127
    %v4049 = vpop.permute.xlu0 %4048
    %4050 = vrot.lane.b32.xlu0 %v4030, 127
    %v4051 = vpop.permute.xlu0 %4050
    %4052 = vrot.lane.b32.xlu0 %v4031, 127
    %v4053 = vpop.permute.xlu0 %4052
    %4054 = vrot.lane.b32.xlu0 %v4032, 127
    %v4055 = vpop.permute.xlu0 %4054
    %4056 = vrot.lane.b32.xlu0 %v4033, 127
    %v4057 = vpop.permute.xlu0 %4056
    %v4058 = vsel %vm932, %v4043, %v4045
    %v4059 = vsel %vm932, %v4047, %v4049
    %v4060 = vsel %vm932, %v4051, %v4053
    %v4061 = vsel %vm932, %v4055, %v4057
    %v4070 = vadd.f32 %v4018, %v4058
    %v4071 = vadd.f32 %v4019, %v4045
    %v4072 = vadd.f32 %v4020, %v4059
    %v4073 = vadd.f32 %v4021, %v4049
    %v4074 = vadd.f32 %v4022, %v4060
    %v4075 = vadd.f32 %v4023, %v4053
    %v4076 = vadd.f32 %v4024, %v4061
    %v4077 = vadd.f32 %v4025, %v4057
    %v4078 = vmul.f32 %v752, %v963
    %v4079 = vmul.f32 %v754, %v967
    %v4080 = vmul.f32 %v758, %v963
    %v4081 = vmul.f32 %v760, %v967
    %v4082 = vmul.f32 %v764, %v963
    %v4083 = vmul.f32 %v766, %v967
    %v4084 = vmul.f32 %v770, %v963
    %v4085 = vmul.f32 %v772, %v967
    %4094 = vrot.lane.b32.xlu0 %v4078, 126
    %v4095 = vpop.permute.xlu0 %4094
    %4096 = vrot.lane.b32.xlu0 %v4079, 126
    %v4097 = vpop.permute.xlu0 %4096
    %4098 = vrot.lane.b32.xlu0 %v4080, 126
    %v4099 = vpop.permute.xlu0 %4098
    %4100 = vrot.lane.b32.xlu0 %v4081, 126
    %v4101 = vpop.permute.xlu0 %4100
    %4102 = vrot.lane.b32.xlu0 %v4082, 126
    %v4103 = vpop.permute.xlu0 %4102
    %4104 = vrot.lane.b32.xlu0 %v4083, 126
    %v4105 = vpop.permute.xlu0 %4104
    %4106 = vrot.lane.b32.xlu0 %v4084, 126
    %v4107 = vpop.permute.xlu0 %4106
    %4108 = vrot.lane.b32.xlu0 %v4085, 126
    %v4109 = vpop.permute.xlu0 %4108
    %v4110 = vsel %vm1002, %v4095, %v4097
    %v4111 = vsel %vm1002, %v4099, %v4101
    %v4112 = vsel %vm1002, %v4103, %v4105
    %v4113 = vsel %vm1002, %v4107, %v4109
    %v4122 = vadd.f32 %v4070, %v4110
    %v4123 = vadd.f32 %v4071, %v4097
    %v4124 = vadd.f32 %v4072, %v4111
    %v4125 = vadd.f32 %v4073, %v4101
    %v4126 = vadd.f32 %v4074, %v4112
    %v4127 = vadd.f32 %v4075, %v4105
    %v4128 = vadd.f32 %v4076, %v4113
    %v4129 = vadd.f32 %v4077, %v4109
    %v4130 = vmul.f32 %v752, %v1027
    %v4131 = vmul.f32 %v754, %v1031
    %v4132 = vmul.f32 %v758, %v1027
    %v4133 = vmul.f32 %v760, %v1031
    %v4134 = vmul.f32 %v764, %v1027
    %v4135 = vmul.f32 %v766, %v1031
    %v4136 = vmul.f32 %v770, %v1027
    %v4137 = vmul.f32 %v772, %v1031
    %v4146 = vrot.slane %v4130, 1
    %v4147 = vrot.slane %v4132, 1
    %v4148 = vsel %vm1050, %v4146, %v4147
    %v4149 = vrot.slane %v4131, 1
    %v4150 = vrot.slane %v4133, 1
    %v4151 = vsel %vm1050, %v4149, %v4150
    %v4152 = vrot.slane %v4134, 1
    %v4153 = vsel %vm1050, %v4147, %v4152
    %v4154 = vrot.slane %v4135, 1
    %v4155 = vsel %vm1050, %v4150, %v4154
    %v4156 = vrot.slane %v4136, 1
    %v4157 = vsel %vm1050, %v4152, %v4156
    %v4158 = vrot.slane %v4137, 1
    %v4159 = vsel %vm1050, %v4154, %v4158
    %v4168 = vadd.f32 %v4122, %v4148
    %v4169 = vadd.f32 %v4123, %v4151
    %v4170 = vadd.f32 %v4124, %v4153
    %v4171 = vadd.f32 %v4125, %v4155
    %v4172 = vadd.f32 %v4126, %v4157
    %v4173 = vadd.f32 %v4127, %v4159
    %v4174 = vadd.f32 %v4128, %v4156
    %v4175 = vadd.f32 %v4129, %v4158
    %v4176 = vmul.f32 %v752, %v1091
    %v4177 = vmul.f32 %v754, %v1094
    %v4178 = vmul.f32 %v758, %v1091
    %v4179 = vmul.f32 %v760, %v1094
    %v4180 = vmul.f32 %v764, %v1091
    %v4181 = vmul.f32 %v766, %v1094
    %v4182 = vmul.f32 %v770, %v1091
    %v4183 = vmul.f32 %v772, %v1094
    %v4192 = vrot.slane %v4176, 1
    %v4193 = vrot.slane %v4178, 1
    %v4194 = vsel %vm1050, %v4192, %v4193
    %v4195 = vrot.slane %v4177, 1
    %v4196 = vrot.slane %v4179, 1
    %v4197 = vsel %vm1050, %v4195, %v4196
    %v4198 = vrot.slane %v4180, 1
    %v4199 = vsel %vm1050, %v4193, %v4198
    %v4200 = vrot.slane %v4181, 1
    %v4201 = vsel %vm1050, %v4196, %v4200
    %v4202 = vrot.slane %v4182, 1
    %v4203 = vsel %vm1050, %v4198, %v4202
    %v4204 = vrot.slane %v4183, 1
    %v4205 = vsel %vm1050, %v4200, %v4204
    %4206 = vrot.lane.b32.xlu0 %v4194, 127
    %v4207 = vpop.permute.xlu0 %4206
    %4208 = vrot.lane.b32.xlu0 %v4197, 127
    %v4209 = vpop.permute.xlu0 %4208
    %4210 = vrot.lane.b32.xlu0 %v4199, 127
    %v4211 = vpop.permute.xlu0 %4210
    %4212 = vrot.lane.b32.xlu0 %v4201, 127
    %v4213 = vpop.permute.xlu0 %4212
    %4214 = vrot.lane.b32.xlu0 %v4203, 127
    %v4215 = vpop.permute.xlu0 %4214
    %4216 = vrot.lane.b32.xlu0 %v4205, 127
    %v4217 = vpop.permute.xlu0 %4216
    %4218 = vrot.lane.b32.xlu0 %v4202, 127
    %v4219 = vpop.permute.xlu0 %4218
    %4220 = vrot.lane.b32.xlu0 %v4204, 127
    %v4221 = vpop.permute.xlu0 %4220
    %v4222 = vsel %vm932, %v4207, %v4209
    %v4223 = vsel %vm932, %v4211, %v4213
    %v4224 = vsel %vm932, %v4215, %v4217
    %v4225 = vsel %vm932, %v4219, %v4221
    %v4234 = vadd.f32 %v4168, %v4222
    %v4235 = vadd.f32 %v4169, %v4209
    %v4236 = vadd.f32 %v4170, %v4223
    %v4237 = vadd.f32 %v4171, %v4213
    %v4238 = vadd.f32 %v4172, %v4224
    %v4239 = vadd.f32 %v4173, %v4217
    %v4240 = vadd.f32 %v4174, %v4225
    %v4241 = vadd.f32 %v4175, %v4221
    %v4242 = vmul.f32 %v752, %v1173
    %v4243 = vmul.f32 %v754, %v1176
    %v4244 = vmul.f32 %v758, %v1173
    %v4245 = vmul.f32 %v760, %v1176
    %v4246 = vmul.f32 %v764, %v1173
    %v4247 = vmul.f32 %v766, %v1176
    %v4248 = vmul.f32 %v770, %v1173
    %v4249 = vmul.f32 %v772, %v1176
    %v4258 = vrot.slane %v4242, 1
    %v4259 = vrot.slane %v4244, 1
    %v4260 = vsel %vm1050, %v4258, %v4259
    %v4261 = vrot.slane %v4243, 1
    %v4262 = vrot.slane %v4245, 1
    %v4263 = vsel %vm1050, %v4261, %v4262
    %v4264 = vrot.slane %v4246, 1
    %v4265 = vsel %vm1050, %v4259, %v4264
    %v4266 = vrot.slane %v4247, 1
    %v4267 = vsel %vm1050, %v4262, %v4266
    %v4268 = vrot.slane %v4248, 1
    %v4269 = vsel %vm1050, %v4264, %v4268
    %v4270 = vrot.slane %v4249, 1
    %v4271 = vsel %vm1050, %v4266, %v4270
    %4272 = vrot.lane.b32.xlu0 %v4260, 126
    %v4273 = vpop.permute.xlu0 %4272
    %4274 = vrot.lane.b32.xlu0 %v4263, 126
    %v4275 = vpop.permute.xlu0 %4274
    %4276 = vrot.lane.b32.xlu0 %v4265, 126
    %v4277 = vpop.permute.xlu0 %4276
    %4278 = vrot.lane.b32.xlu0 %v4267, 126
    %v4279 = vpop.permute.xlu0 %4278
    %4280 = vrot.lane.b32.xlu0 %v4269, 126
    %v4281 = vpop.permute.xlu0 %4280
    %4282 = vrot.lane.b32.xlu0 %v4271, 126
    %v4283 = vpop.permute.xlu0 %4282
    %4284 = vrot.lane.b32.xlu0 %v4268, 126
    %v4285 = vpop.permute.xlu0 %4284
    %4286 = vrot.lane.b32.xlu0 %v4270, 126
    %v4287 = vpop.permute.xlu0 %4286
    %v4288 = vsel %vm1002, %v4273, %v4275
    %v4289 = vsel %vm1002, %v4277, %v4279
    %v4290 = vsel %vm1002, %v4281, %v4283
    %v4291 = vsel %vm1002, %v4285, %v4287
    %v4300 = vadd.f32 %v4234, %v4288
    %v4301 = vadd.f32 %v4235, %v4275
    %v4302 = vadd.f32 %v4236, %v4289
    %v4303 = vadd.f32 %v4237, %v4279
    %v4304 = vadd.f32 %v4238, %v4290
    %v4305 = vadd.f32 %v4239, %v4283
    %v4306 = vadd.f32 %v4240, %v4291
    %v4307 = vadd.f32 %v4241, %v4287
    %v4308 = vmul.f32 %v752, %v1249
    %v4309 = vmul.f32 %v754, %v1253
    %v4310 = vmul.f32 %v758, %v1249
    %v4311 = vmul.f32 %v760, %v1253
    %v4312 = vmul.f32 %v764, %v1249
    %v4313 = vmul.f32 %v766, %v1253
    %v4314 = vmul.f32 %v770, %v1249
    %v4315 = vmul.f32 %v772, %v1253
    %v4324 = vrot.slane %v4308, 2
    %v4325 = vrot.slane %v4310, 2
    %v4326 = vsel %vm1272, %v4324, %v4325
    %v4327 = vrot.slane %v4309, 2
    %v4328 = vrot.slane %v4311, 2
    %v4329 = vsel %vm1272, %v4327, %v4328
    %v4330 = vrot.slane %v4312, 2
    %v4331 = vsel %vm1272, %v4325, %v4330
    %v4332 = vrot.slane %v4313, 2
    %v4333 = vsel %vm1272, %v4328, %v4332
    %v4334 = vrot.slane %v4314, 2
    %v4335 = vsel %vm1272, %v4330, %v4334
    %v4336 = vrot.slane %v4315, 2
    %v4337 = vsel %vm1272, %v4332, %v4336
    %v4346 = vadd.f32 %v4300, %v4326
    %v4347 = vadd.f32 %v4301, %v4329
    %v4348 = vadd.f32 %v4302, %v4331
    %v4349 = vadd.f32 %v4303, %v4333
    %v4350 = vadd.f32 %v4304, %v4335
    %v4351 = vadd.f32 %v4305, %v4337
    %v4352 = vadd.f32 %v4306, %v4334
    %v4353 = vadd.f32 %v4307, %v4336
    %v4354 = vmul.f32 %v752, %v1313
    %v4355 = vmul.f32 %v754, %v1316
    %v4356 = vmul.f32 %v758, %v1313
    %v4357 = vmul.f32 %v760, %v1316
    %v4358 = vmul.f32 %v764, %v1313
    %v4359 = vmul.f32 %v766, %v1316
    %v4360 = vmul.f32 %v770, %v1313
    %v4361 = vmul.f32 %v772, %v1316
    %v4370 = vrot.slane %v4354, 2
    %v4371 = vrot.slane %v4356, 2
    %v4372 = vsel %vm1272, %v4370, %v4371
    %v4373 = vrot.slane %v4355, 2
    %v4374 = vrot.slane %v4357, 2
    %v4375 = vsel %vm1272, %v4373, %v4374
    %v4376 = vrot.slane %v4358, 2
    %v4377 = vsel %vm1272, %v4371, %v4376
    %v4378 = vrot.slane %v4359, 2
    %v4379 = vsel %vm1272, %v4374, %v4378
    %v4380 = vrot.slane %v4360, 2
    %v4381 = vsel %vm1272, %v4376, %v4380
    %v4382 = vrot.slane %v4361, 2
    %v4383 = vsel %vm1272, %v4378, %v4382
    %4384 = vrot.lane.b32.xlu0 %v4372, 127
    %v4385 = vpop.permute.xlu0 %4384
    %4386 = vrot.lane.b32.xlu0 %v4375, 127
    %v4387 = vpop.permute.xlu0 %4386
    %4388 = vrot.lane.b32.xlu0 %v4377, 127
    %v4389 = vpop.permute.xlu0 %4388
    %4390 = vrot.lane.b32.xlu0 %v4379, 127
    %v4391 = vpop.permute.xlu0 %4390
    %4392 = vrot.lane.b32.xlu0 %v4381, 127
    %v4393 = vpop.permute.xlu0 %4392
    %4394 = vrot.lane.b32.xlu0 %v4383, 127
    %v4395 = vpop.permute.xlu0 %4394
    %4396 = vrot.lane.b32.xlu0 %v4380, 127
    %v4397 = vpop.permute.xlu0 %4396
    %4398 = vrot.lane.b32.xlu0 %v4382, 127
    %v4399 = vpop.permute.xlu0 %4398
    %v4400 = vsel %vm932, %v4385, %v4387
    %v4401 = vsel %vm932, %v4389, %v4391
    %v4402 = vsel %vm932, %v4393, %v4395
    %v4403 = vsel %vm932, %v4397, %v4399
    %v4412 = vadd.f32 %v4346, %v4400
    %v4413 = vadd.f32 %v4347, %v4387
    %v4414 = vadd.f32 %v4348, %v4401
    %v4415 = vadd.f32 %v4349, %v4391
    %v4416 = vadd.f32 %v4350, %v4402
    %v4417 = vadd.f32 %v4351, %v4395
    %v4418 = vadd.f32 %v4352, %v4403
    %v4419 = vadd.f32 %v4353, %v4399
    %v4420 = vmul.f32 %v752, %v1395
    %v4421 = vmul.f32 %v754, %v1398
    %v4422 = vmul.f32 %v758, %v1395
    %v4423 = vmul.f32 %v760, %v1398
    %v4424 = vmul.f32 %v764, %v1395
    %v4425 = vmul.f32 %v766, %v1398
    %v4426 = vmul.f32 %v770, %v1395
    %v4427 = vmul.f32 %v772, %v1398
    %v4436 = vrot.slane %v4420, 2
    %v4437 = vrot.slane %v4422, 2
    %v4438 = vsel %vm1272, %v4436, %v4437
    %v4439 = vrot.slane %v4421, 2
    %v4440 = vrot.slane %v4423, 2
    %v4441 = vsel %vm1272, %v4439, %v4440
    %v4442 = vrot.slane %v4424, 2
    %v4443 = vsel %vm1272, %v4437, %v4442
    %v4444 = vrot.slane %v4425, 2
    %v4445 = vsel %vm1272, %v4440, %v4444
    %v4446 = vrot.slane %v4426, 2
    %v4447 = vsel %vm1272, %v4442, %v4446
    %v4448 = vrot.slane %v4427, 2
    %v4449 = vsel %vm1272, %v4444, %v4448
    %4450 = vrot.lane.b32.xlu0 %v4438, 126
    %v4451 = vpop.permute.xlu0 %4450
    %4452 = vrot.lane.b32.xlu0 %v4441, 126
    %v4453 = vpop.permute.xlu0 %4452
    %4454 = vrot.lane.b32.xlu0 %v4443, 126
    %v4455 = vpop.permute.xlu0 %4454
    %4456 = vrot.lane.b32.xlu0 %v4445, 126
    %v4457 = vpop.permute.xlu0 %4456
    %4458 = vrot.lane.b32.xlu0 %v4447, 126
    %v4459 = vpop.permute.xlu0 %4458
    %4460 = vrot.lane.b32.xlu0 %v4449, 126
    %v4461 = vpop.permute.xlu0 %4460
    %4462 = vrot.lane.b32.xlu0 %v4446, 126
    %v4463 = vpop.permute.xlu0 %4462
    %4464 = vrot.lane.b32.xlu0 %v4448, 126
    %v4465 = vpop.permute.xlu0 %4464
    %v4466 = vsel %vm1002, %v4451, %v4453
    %v4467 = vsel %vm1002, %v4455, %v4457
    %v4468 = vsel %vm1002, %v4459, %v4461
    %v4469 = vsel %vm1002, %v4463, %v4465
    %v4478 = vadd.f32 %v4412, %v4466
    %v4479 = vadd.f32 %v4413, %v4453
    %v4480 = vadd.f32 %v4414, %v4467
    %v4481 = vadd.f32 %v4415, %v4457
    %v4482 = vadd.f32 %v4416, %v4468
    %v4483 = vadd.f32 %v4417, %v4461
    %v4484 = vadd.f32 %v4418, %v4469
    %v4485 = vadd.f32 %v4419, %v4465
    %v4486 = vadd.f32 %v4478, %v1471
    %v4487 = vadd.f32 %v4479, %v1475
    %v4488 = vadd.f32 %v4480, %v1471
    %v4489 = vadd.f32 %v4481, %v1475
    %v4490 = vadd.f32 %v4482, %v1471
    %v4491 = vadd.f32 %v4483, %v1475
    %v4492 = vadd.f32 %v4484, %v1471
    %v4493 = vadd.f32 %v4485, %v1475
    %v4494 = vmax.f32 %v4486, 0.0
    %v4495 = vmax.f32 %v4487, 0.0
    %v4496 = vmax.f32 %v4488, 0.0
    %v4497 = vmax.f32 %v4489, 0.0
    %v4498 = vmax.f32 %v4490, 0.0
    %v4499 = vmax.f32 %v4491, 0.0
    %v4500 = vmax.f32 %v4492, 0.0
    %v4501 = vmax.f32 %v4493, 0.0
    %v4510 = vrot.slane %v4494, 1
    %v4511 = vrot.slane %v4496, 1
    %v4512 = vsel %vm1050, %v4510, %v4511
    %v4513 = vrot.slane %v4495, 1
    %v4514 = vrot.slane %v4497, 1
    %v4515 = vsel %vm1050, %v4513, %v4514
    %v4516 = vrot.slane %v4498, 1
    %v4517 = vsel %vm1050, %v4511, %v4516
    %v4518 = vrot.slane %v4499, 1
    %v4519 = vsel %vm1050, %v4514, %v4518
    %v4520 = vrot.slane %v4500, 1
    %v4521 = vsel %vm1050, %v4516, %v4520
    %v4522 = vrot.slane %v4501, 1
    %v4523 = vsel %vm1050, %v4518, %v4522
    %v4532 = vmax.f32 %v4494, %v4512
    %v4533 = vmax.f32 %v4495, %v4515
    %v4534 = vmax.f32 %v4496, %v4517
    %v4535 = vmax.f32 %v4497, %v4519
    %v4536 = vmax.f32 %v4498, %v4521
    %v4537 = vmax.f32 %v4499, %v4523
    %v4538 = vmax.f32 %v4500, %v4520
    %v4539 = vmax.f32 %v4501, %v4522
    %v4540 = vld [vmem:[%s5] sm:$0xff]
    %v4541 = vld [vmem:[%s5 + $0x8] sm:$0xff]
    %v4543 = vsel %vm1534, %v4540, 0
    %v4546 = vsel %vm1534, %v4541, 0
    %v4549 = vsel %vm1541, %v4538, 0
    %v4552 = vsel %vm1541, %v4539, 0
    %4554 = vmatprep.subr.mxu0 %v4533
    %4555 = vmatpush1.msra.mxu0 %v4532
    %4556 = vmatprep.subr.mxu0 %v4535
    %4557 = vmatpush1.msra.mxu0 %v4534
    %4558 = vmatprep.subr.mxu0 %v4537
    %4559 = vmatpush1.msra.mxu0 %v4536
    %4560 = vmatprep.subr.mxu0 %v4552
    %4561 = vmatpush1.msra.mxu0 %v4549
    %4562 = vmatprep.subr.mxu0 0.0
    %4563 = vmatpush1.msra.mxu0 0.0
    %4564 = vmatprep.subr.mxu0 0.0
    %4565 = vmatpush1.msra.mxu0 0.0
    %4566 = vmatprep.subr.mxu0 0.0
    %4567 = vmatpush1.msra.mxu0 0.0
    %4568 = vmatprep.subr.mxu0 0.0
    %4569 = vmatpush1.msra.mxu0 0.0
    %4570 = vmatprep.subr.mxu0 0.0
    %4571 = vmatpush1.msra.mxu0 0.0
    %4572 = vmatprep.subr.mxu0 0.0
    %4573 = vmatpush1.msra.mxu0 0.0
    %4574 = vmatprep.subr.mxu0 0.0
    %4575 = vmatpush1.msra.mxu0 0.0
    %4576 = vmatprep.subr.mxu0 0.0
    %4577 = vmatpush1.msra.mxu0 0.0
    %4578 = vmatprep.subr.mxu0 0.0
    %4579 = vmatpush1.msra.mxu0 0.0
    %4580 = vmatprep.subr.mxu0 0.0
    %4581 = vmatpush1.msra.mxu0 0.0
    %4582 = vmatprep.subr.mxu0 0.0
    %4583 = vmatpush1.msra.mxu0 0.0
    %4584 = vmatprep.subr.mxu0 0.0
    %4585 = vmatpush1.msra.mxu0 0.0
    %4586 = vmatprep.subr.mxu0 0.0
    %4587 = vmatpush1.msra.mxu0 0.0
    %4588 = vmatprep.subr.mxu0 0.0
    %4589 = vmatpush1.msra.mxu0 0.0
    %4590 = vmatprep.subr.mxu0 0.0
    %4591 = vmatpush1.msra.mxu0 0.0
    %4592 = vmatprep.subr.mxu0 0.0
    %4593 = vmatpush1.msra.mxu0 0.0
    %4594 = vmatprep.subr.mxu0 0.0
    %4595 = vmatpush1.msra.mxu0 0.0
    %4596 = vmatprep.subr.mxu0 0.0
    %4597 = vmatpush1.msra.mxu0 0.0
    %4598 = vmatprep.subr.mxu0 0.0
    %4599 = vmatpush1.msra.mxu0 0.0
    %4600 = vmatprep.subr.mxu0 0.0
    %4601 = vmatpush1.msra.mxu0 0.0
    %4602 = vmatprep.subr.mxu0 0.0
    %4603 = vmatpush1.msra.mxu0 0.0
    %4604 = vmatprep.subr.mxu0 0.0
    %4605 = vmatpush1.msra.mxu0 0.0
    %4606 = vmatprep.subr.mxu0 0.0
    %4607 = vmatpush1.msra.mxu0 0.0
    %4608 = vmatprep.subr.mxu0 0.0
    %4609 = vmatpush1.msra.mxu0 0.0
    %4610 = vmatprep.subr.mxu0 0.0
    %4611 = vmatpush1.msra.mxu0 0.0
    %4612 = vmatprep.subr.mxu0 0.0
    %4613 = vmatpush1.msra.mxu0 0.0
    %4614 = vmatprep.subr.mxu0 0.0
    %4615 = vmatpush1.msra.mxu0 0.0
    %4616 = vmatprep.subr.mxu0 0.0
    %4617 = vmatpush1.msra.mxu0 0.0
    %4618 = vmatprep.mubr.f32.mxu0 0.0
    %4619 = vmatmul.mubr.f32.gmra.mrb[0].mxu0 %v4543
    %v4620 = vpop.f32.mrb[0].mxu0
    %v4621 = vadd.f32 0.0, %v4620
    %v4622 = vpop.f32.mrb[0].mxu0
    %v4623 = vadd.f32 0.0, %v4622
    %4624 = vmatprep.mubr.f32.mxu0 0.0
    %4625 = vmatmul.mubr.f32.gmra.mrb[0].mxu0 %v4546
    %v4626 = vpop.f32.mrb[0].mxu0
    %v4627 = vadd.f32 0.0, %v4626
    %v4628 = vpop.f32.mrb[0].mxu0
    %v4629 = vadd.f32 0.0, %v4628
    %4630 = vdwg.mxu0
    %4635 = vrot.lane.b32.xlu0 %v4621, 127
    %v4636 = vpop.permute.xlu0 %4635
    %4637 = vrot.lane.b32.xlu0 %v4623, 127
    %v4638 = vpop.permute.xlu0 %4637
    %4639 = vrot.lane.b32.xlu0 %v4627, 127
    %v4640 = vpop.permute.xlu0 %4639
    %4641 = vrot.lane.b32.xlu0 %v4629, 127
    %v4642 = vpop.permute.xlu0 %4641
    %v4643 = vsel %vm932, %v4636, %v4638
    %v4644 = vsel %vm932, %v4640, %v4642
    %v4649 = vmax.f32 %v4621, %v4643
    %v4650 = vmax.f32 %v4623, %v4638
    %v4651 = vmax.f32 %v4627, %v4644
    %v4652 = vmax.f32 %v4629, %v4642
    %v4653 = vld [vmem:[%s6] sm:$0xff]
    %v4654 = vld [vmem:[%s6 + $0x8] sm:$0xff]
    %v4655 = vld [vmem:[%s6 + $0x10] sm:$0xff]
    %v4656 = vld [vmem:[%s6 + $0x18] sm:$0xff]
    %v4657 = vld [vmem:[%s6 + $0x20] sm:$0xff]
    %v4658 = vld [vmem:[%s6 + $0x28] sm:$0xff]
    %v4659 = vld [vmem:[%s6 + $0x30] sm:$0xff]
    %v4660 = vld [vmem:[%s6 + $0x38] sm:$0xff]
    %v4661 = vld [vmem:[%s6 + $0x40] sm:$0xff]
    %v4662 = vld [vmem:[%s6 + $0x48] sm:$0xff]
    %v4663 = vld [vmem:[%s6 + $0x50] sm:$0xff]
    %v4664 = vld [vmem:[%s6 + $0x58] sm:$0xff]
    %v4665 = vld [vmem:[%s6 + $0x60] sm:$0xff]
    %v4666 = vld [vmem:[%s6 + $0x68] sm:$0xff]
    %v4667 = vld [vmem:[%s6 + $0x70] sm:$0xff]
    %v4668 = vld [vmem:[%s6 + $0x78] sm:$0xff]
    %v4669 = vld [vmem:[%s6 + $0x80] sm:$0xff]
    %v4670 = vld [vmem:[%s6 + $0x88] sm:$0xff]
    %v4671 = vld [vmem:[%s6 + $0x90] sm:$0xff]
    %v4672 = vld [vmem:[%s6 + $0x98] sm:$0xff]
    %v4673 = vld [vmem:[%s6 + $0xa0] sm:$0xff]
    %v4674 = vld [vmem:[%s6 + $0xa8] sm:$0xff]
    %v4675 = vld [vmem:[%s6 + $0xb0] sm:$0xff]
    %v4676 = vld [vmem:[%s6 + $0xb8] sm:$0xff]
    %v4677 = vld [vmem:[%s6 + $0xc0] sm:$0xff]
    %v4678 = vld [vmem:[%s6 + $0xc8] sm:$0xff]
    %v4679 = vld [vmem:[%s6 + $0xd0] sm:$0xff]
    %v4680 = vld [vmem:[%s6 + $0xd8] sm:$0xff]
    %v4681 = vld [vmem:[%s6 + $0xe0] sm:$0xff]
    %v4682 = vld [vmem:[%s6 + $0xe8] sm:$0x1f]
    %v4684 = vsel %vm1677, %v4650, 0
    %v4687 = vsel %vm1677, %v4652, 0
    %v4690 = vsel %vm1684, %v4682, 0
    %4692 = vmatprep.subr.mxu0 0.0
    %4693 = vmatpush1.msra.mxu0 %v4653
    %4694 = vmatprep.subr.mxu0 0.0
    %4695 = vmatpush1.msra.mxu0 %v4654
    %4696 = vmatprep.subr.mxu0 0.0
    %4697 = vmatpush1.msra.mxu0 %v4655
    %4698 = vmatprep.subr.mxu0 0.0
    %4699 = vmatpush1.msra.mxu0 %v4656
    %4700 = vmatprep.subr.mxu0 0.0
    %4701 = vmatpush1.msra.mxu0 %v4657
    %4702 = vmatprep.subr.mxu0 0.0
    %4703 = vmatpush1.msra.mxu0 %v4658
    %4704 = vmatprep.subr.mxu0 0.0
    %4705 = vmatpush1.msra.mxu0 %v4659
    %4706 = vmatprep.subr.mxu0 0.0
    %4707 = vmatpush1.msra.mxu0 %v4660
    %4708 = vmatprep.subr.mxu0 0.0
    %4709 = vmatpush1.msra.mxu0 %v4661
    %4710 = vmatprep.subr.mxu0 0.0
    %4711 = vmatpush1.msra.mxu0 %v4662
    %4712 = vmatprep.subr.mxu0 0.0
    %4713 = vmatpush1.msra.mxu0 %v4663
    %4714 = vmatprep.subr.mxu0 0.0
    %4715 = vmatpush1.msra.mxu0 %v4664
    %4716 = vmatprep.subr.mxu0 0.0
    %4717 = vmatpush1.msra.mxu0 %v4665
    %4718 = vmatprep.subr.mxu0 0.0
    %4719 = vmatpush1.msra.mxu0 %v4666
    %4720 = vmatprep.subr.mxu0 0.0
    %4721 = vmatpush1.msra.mxu0 %v4667
    %4722 = vmatprep.subr.mxu0 0.0
    %4723 = vmatpush1.msra.mxu0 %v4668
    %4724 = vmatprep.subr.mxu0 0.0
    %4725 = vmatpush1.msra.mxu0 %v4669
    %4726 = vmatprep.subr.mxu0 0.0
    %4727 = vmatpush1.msra.mxu0 %v4670
    %4728 = vmatprep.subr.mxu0 0.0
    %4729 = vmatpush1.msra.mxu0 %v4671
    %4730 = vmatprep.subr.mxu0 0.0
    %4731 = vmatpush1.msra.mxu0 %v4672
    %4732 = vmatprep.subr.mxu0 0.0
    %4733 = vmatpush1.msra.mxu0 %v4673
    %4734 = vmatprep.subr.mxu0 0.0
    %4735 = vmatpush1.msra.mxu0 %v4674
    %4736 = vmatprep.subr.mxu0 0.0
    %4737 = vmatpush1.msra.mxu0 %v4675
    %4738 = vmatprep.subr.mxu0 0.0
    %4739 = vmatpush1.msra.mxu0 %v4676
    %4740 = vmatprep.subr.mxu0 0.0
    %4741 = vmatpush1.msra.mxu0 %v4677
    %4742 = vmatprep.subr.mxu0 0.0
    %4743 = vmatpush1.msra.mxu0 %v4678
    %4744 = vmatprep.subr.mxu0 0.0
    %4745 = vmatpush1.msra.mxu0 %v4679
    %4746 = vmatprep.subr.mxu0 0.0
    %4747 = vmatpush1.msra.mxu0 %v4680
    %4748 = vmatprep.subr.mxu0 0.0
    %4749 = vmatpush1.msra.mxu0 %v4681
    %4750 = vmatprep.subr.mxu0 0.0
    %4751 = vmatpush1.msra.mxu0 %v4690
    %4752 = vmatprep.subr.mxu0 0.0
    %4753 = vmatpush1.msra.mxu0 0.0
    %4754 = vmatprep.subr.mxu0 0.0
    %4755 = vmatpush1.msra.mxu0 0.0
    %4756 = vmatprep.mubr.f32.mxu0 %v4684
    %4757 = vmatmul.mubr.f32.gmra.mrb[0].mxu0 %v4649
    %v4758 = vpop.f32.mrb[0].mxu0
    %v4759 = vadd.f32 0.0, %v4758
    %v4760 = vpop.f32.mrb[0].mxu0
    %4761 = vmatprep.mubr.f32.mxu0 %v4687
    %4762 = vmatmul.mubr.f32.gmra.mrb[0].mxu0 %v4651
    %v4763 = vpop.f32.mrb[0].mxu0
    %v4764 = vadd.f32 0.0, %v4763
    %v4765 = vpop.f32.mrb[0].mxu0
    %4766 = vdwg.mxu0
    %4767 = vst [vmem:[#allocation2 + $0x40] sm:$0xff] %v4759
    %4768 = vst [vmem:[#allocation2 + $0x48] sm:$0xff] %v4764
    %v4769 = vmul.f32 %v776, %v868
    %v4770 = vmul.f32 %v778, %v872
    %v4771 = vmul.f32 %v782, %v868
    %v4772 = vmul.f32 %v784, %v872
    %v4773 = vmul.f32 %v788, %v868
    %v4774 = vmul.f32 %v790, %v872
    %v4775 = vmul.f32 %v794, %v868
    %v4776 = vmul.f32 %v796, %v872
    %v4777 = vmul.f32 %v776, %v893
    %v4778 = vmul.f32 %v778, %v897
    %v4779 = vmul.f32 %v782, %v893
    %v4780 = vmul.f32 %v784, %v897
    %v4781 = vmul.f32 %v788, %v893
    %v4782 = vmul.f32 %v790, %v897
    %v4783 = vmul.f32 %v794, %v893
    %v4784 = vmul.f32 %v796, %v897
    %4793 = vrot.lane.b32.xlu0 %v4777, 127
    %v4794 = vpop.permute.xlu0 %4793
    %4795 = vrot.lane.b32.xlu0 %v4778, 127
    %v4796 = vpop.permute.xlu0 %4795
    %4797 = vrot.lane.b32.xlu0 %v4779, 127
    %v4798 = vpop.permute.xlu0 %4797
    %4799 = vrot.lane.b32.xlu0 %v4780, 127
    %v4800 = vpop.permute.xlu0 %4799
    %4801 = vrot.lane.b32.xlu0 %v4781, 127
    %v4802 = vpop.permute.xlu0 %4801
    %4803 = vrot.lane.b32.xlu0 %v4782, 127
    %v4804 = vpop.permute.xlu0 %4803
    %4805 = vrot.lane.b32.xlu0 %v4783, 127
    %v4806 = vpop.permute.xlu0 %4805
    %4807 = vrot.lane.b32.xlu0 %v4784, 127
    %v4808 = vpop.permute.xlu0 %4807
    %v4809 = vsel %vm932, %v4794, %v4796
    %v4810 = vsel %vm932, %v4798, %v4800
    %v4811 = vsel %vm932, %v4802, %v4804
    %v4812 = vsel %vm932, %v4806, %v4808
    %v4821 = vadd.f32 %v4769, %v4809
    %v4822 = vadd.f32 %v4770, %v4796
    %v4823 = vadd.f32 %v4771, %v4810
    %v4824 = vadd.f32 %v4772, %v4800
    %v4825 = vadd.f32 %v4773, %v4811
    %v4826 = vadd.f32 %v4774, %v4804
    %v4827 = vadd.f32 %v4775, %v4812
    %v4828 = vadd.f32 %v4776, %v4808
    %v4829 = vmul.f32 %v776, %v963
    %v4830 = vmul.f32 %v778, %v967
    %v4831 = vmul.f32 %v782, %v963
    %v4832 = vmul.f32 %v784, %v967
    %v4833 = vmul.f32 %v788, %v963
    %v4834 = vmul.f32 %v790, %v967
    %v4835 = vmul.f32 %v794, %v963
    %v4836 = vmul.f32 %v796, %v967
    %4845 = vrot.lane.b32.xlu0 %v4829, 126
    %v4846 = vpop.permute.xlu0 %4845
    %4847 = vrot.lane.b32.xlu0 %v4830, 126
    %v4848 = vpop.permute.xlu0 %4847
    %4849 = vrot.lane.b32.xlu0 %v4831, 126
    %v4850 = vpop.permute.xlu0 %4849
    %4851 = vrot.lane.b32.xlu0 %v4832, 126
    %v4852 = vpop.permute.xlu0 %4851
    %4853 = vrot.lane.b32.xlu0 %v4833, 126
    %v4854 = vpop.permute.xlu0 %4853
    %4855 = vrot.lane.b32.xlu0 %v4834, 126
    %v4856 = vpop.permute.xlu0 %4855
    %4857 = vrot.lane.b32.xlu0 %v4835, 126
    %v4858 = vpop.permute.xlu0 %4857
    %4859 = vrot.lane.b32.xlu0 %v4836, 126
    %v4860 = vpop.permute.xlu0 %4859
    %v4861 = vsel %vm1002, %v4846, %v4848
    %v4862 = vsel %vm1002, %v4850, %v4852
    %v4863 = vsel %vm1002, %v4854, %v4856
    %v4864 = vsel %vm1002, %v4858, %v4860
    %v4873 = vadd.f32 %v4821, %v4861
    %v4874 = vadd.f32 %v4822, %v4848
    %v4875 = vadd.f32 %v4823, %v4862
    %v4876 = vadd.f32 %v4824, %v4852
    %v4877 = vadd.f32 %v4825, %v4863
    %v4878 = vadd.f32 %v4826, %v4856
    %v4879 = vadd.f32 %v4827, %v4864
    %v4880 = vadd.f32 %v4828, %v4860
    %v4881 = vmul.f32 %v776, %v1027
    %v4882 = vmul.f32 %v778, %v1031
    %v4883 = vmul.f32 %v782, %v1027
    %v4884 = vmul.f32 %v784, %v1031
    %v4885 = vmul.f32 %v788, %v1027
    %v4886 = vmul.f32 %v790, %v1031
    %v4887 = vmul.f32 %v794, %v1027
    %v4888 = vmul.f32 %v796, %v1031
    %v4897 = vrot.slane %v4881, 1
    %v4898 = vrot.slane %v4883, 1
    %v4899 = vsel %vm1050, %v4897, %v4898
    %v4900 = vrot.slane %v4882, 1
    %v4901 = vrot.slane %v4884, 1
    %v4902 = vsel %vm1050, %v4900, %v4901
    %v4903 = vrot.slane %v4885, 1
    %v4904 = vsel %vm1050, %v4898, %v4903
    %v4905 = vrot.slane %v4886, 1
    %v4906 = vsel %vm1050, %v4901, %v4905
    %v4907 = vrot.slane %v4887, 1
    %v4908 = vsel %vm1050, %v4903, %v4907
    %v4909 = vrot.slane %v4888, 1
    %v4910 = vsel %vm1050, %v4905, %v4909
    %v4919 = vadd.f32 %v4873, %v4899
    %v4920 = vadd.f32 %v4874, %v4902
    %v4921 = vadd.f32 %v4875, %v4904
    %v4922 = vadd.f32 %v4876, %v4906
    %v4923 = vadd.f32 %v4877, %v4908
    %v4924 = vadd.f32 %v4878, %v4910
    %v4925 = vadd.f32 %v4879, %v4907
    %v4926 = vadd.f32 %v4880, %v4909
    %v4927 = vmul.f32 %v776, %v1091
    %v4928 = vmul.f32 %v778, %v1094
    %v4929 = vmul.f32 %v782, %v1091
    %v4930 = vmul.f32 %v784, %v1094
    %v4931 = vmul.f32 %v788, %v1091
    %v4932 = vmul.f32 %v790, %v1094
    %v4933 = vmul.f32 %v794, %v1091
    %v4934 = vmul.f32 %v796, %v1094
    %v4943 = vrot.slane %v4927, 1
    %v4944 = vrot.slane %v4929, 1
    %v4945 = vsel %vm1050, %v4943, %v4944
    %v4946 = vrot.slane %v4928, 1
    %v4947 = vrot.slane %v4930, 1
    %v4948 = vsel %vm1050, %v4946, %v4947
    %v4949 = vrot.slane %v4931, 1
    %v4950 = vsel %vm1050, %v4944, %v4949
    %v4951 = vrot.slane %v4932, 1
    %v4952 = vsel %vm1050, %v4947, %v4951
    %v4953 = vrot.slane %v4933, 1
    %v4954 = vsel %vm1050, %v4949, %v4953
    %v4955 = vrot.slane %v4934, 1
    %v4956 = vsel %vm1050, %v4951, %v4955
    %4957 = vrot.lane.b32.xlu0 %v4945, 127
    %v4958 = vpop.permute.xlu0 %4957
    %4959 = vrot.lane.b32.xlu0 %v4948, 127
    %v4960 = vpop.permute.xlu0 %4959
    %4961 = vrot.lane.b32.xlu0 %v4950, 127
    %v4962 = vpop.permute.xlu0 %4961
    %4963 = vrot.lane.b32.xlu0 %v4952, 127
    %v4964 = vpop.permute.xlu0 %4963
    %4965 = vrot.lane.b32.xlu0 %v4954, 127
    %v4966 = vpop.permute.xlu0 %4965
    %4967 = vrot.lane.b32.xlu0 %v4956, 127
    %v4968 = vpop.permute.xlu0 %4967
    %4969 = vrot.lane.b32.xlu0 %v4953, 127
    %v4970 = vpop.permute.xlu0 %4969
    %4971 = vrot.lane.b32.xlu0 %v4955, 127
    %v4972 = vpop.permute.xlu0 %4971
    %v4973 = vsel %vm932, %v4958, %v4960
    %v4974 = vsel %vm932, %v4962, %v4964
    %v4975 = vsel %vm932, %v4966, %v4968
    %v4976 = vsel %vm932, %v4970, %v4972
    %v4985 = vadd.f32 %v4919, %v4973
    %v4986 = vadd.f32 %v4920, %v4960
    %v4987 = vadd.f32 %v4921, %v4974
    %v4988 = vadd.f32 %v4922, %v4964
    %v4989 = vadd.f32 %v4923, %v4975
    %v4990 = vadd.f32 %v4924, %v4968
    %v4991 = vadd.f32 %v4925, %v4976
    %v4992 = vadd.f32 %v4926, %v4972
    %v4993 = vmul.f32 %v776, %v1173
    %v4994 = vmul.f32 %v778, %v1176
    %v4995 = vmul.f32 %v782, %v1173
    %v4996 = vmul.f32 %v784, %v1176
    %v4997 = vmul.f32 %v788, %v1173
    %v4998 = vmul.f32 %v790, %v1176
    %v4999 = vmul.f32 %v794, %v1173
    %v5000 = vmul.f32 %v796, %v1176
    %v5009 = vrot.slane %v4993, 1
    %v5010 = vrot.slane %v4995, 1
    %v5011 = vsel %vm1050, %v5009, %v5010
    %v5012 = vrot.slane %v4994, 1
    %v5013 = vrot.slane %v4996, 1
    %v5014 = vsel %vm1050, %v5012, %v5013
    %v5015 = vrot.slane %v4997, 1
    %v5016 = vsel %vm1050, %v5010, %v5015
    %v5017 = vrot.slane %v4998, 1
    %v5018 = vsel %vm1050, %v5013, %v5017
    %v5019 = vrot.slane %v4999, 1
    %v5020 = vsel %vm1050, %v5015, %v5019
    %v5021 = vrot.slane %v5000, 1
    %v5022 = vsel %vm1050, %v5017, %v5021
    %5023 = vrot.lane.b32.xlu0 %v5011, 126
    %v5024 = vpop.permute.xlu0 %5023
    %5025 = vrot.lane.b32.xlu0 %v5014, 126
    %v5026 = vpop.permute.xlu0 %5025
    %5027 = vrot.lane.b32.xlu0 %v5016, 126
    %v5028 = vpop.permute.xlu0 %5027
    %5029 = vrot.lane.b32.xlu0 %v5018, 126
    %v5030 = vpop.permute.xlu0 %5029
    %5031 = vrot.lane.b32.xlu0 %v5020, 126
    %v5032 = vpop.permute.xlu0 %5031
    %5033 = vrot.lane.b32.xlu0 %v5022, 126
    %v5034 = vpop.permute.xlu0 %5033
    %5035 = vrot.lane.b32.xlu0 %v5019, 126
    %v5036 = vpop.permute.xlu0 %5035
    %5037 = vrot.lane.b32.xlu0 %v5021, 126
    %v5038 = vpop.permute.xlu0 %5037
    %v5039 = vsel %vm1002, %v5024, %v5026
    %v5040 = vsel %vm1002, %v5028, %v5030
    %v5041 = vsel %vm1002, %v5032, %v5034
    %v5042 = vsel %vm1002, %v5036, %v5038
    %v5051 = vadd.f32 %v4985, %v5039
    %v5052 = vadd.f32 %v4986, %v5026
    %v5053 = vadd.f32 %v4987, %v5040
    %v5054 = vadd.f32 %v4988, %v5030
    %v5055 = vadd.f32 %v4989, %v5041
    %v5056 = vadd.f32 %v4990, %v5034
    %v5057 = vadd.f32 %v4991, %v5042
    %v5058 = vadd.f32 %v4992, %v5038
    %v5059 = vmul.f32 %v776, %v1249
    %v5060 = vmul.f32 %v778, %v1253
    %v5061 = vmul.f32 %v782, %v1249
    %v5062 = vmul.f32 %v784, %v1253
    %v5063 = vmul.f32 %v788, %v1249
    %v5064 = vmul.f32 %v790, %v1253
    %v5065 = vmul.f32 %v794, %v1249
    %v5066 = vmul.f32 %v796, %v1253
    %v5075 = vrot.slane %v5059, 2
    %v5076 = vrot.slane %v5061, 2
    %v5077 = vsel %vm1272, %v5075, %v5076
    %v5078 = vrot.slane %v5060, 2
    %v5079 = vrot.slane %v5062, 2
    %v5080 = vsel %vm1272, %v5078, %v5079
    %v5081 = vrot.slane %v5063, 2
    %v5082 = vsel %vm1272, %v5076, %v5081
    %v5083 = vrot.slane %v5064, 2
    %v5084 = vsel %vm1272, %v5079, %v5083
    %v5085 = vrot.slane %v5065, 2
    %v5086 = vsel %vm1272, %v5081, %v5085
    %v5087 = vrot.slane %v5066, 2
    %v5088 = vsel %vm1272, %v5083, %v5087
    %v5097 = vadd.f32 %v5051, %v5077
    %v5098 = vadd.f32 %v5052, %v5080
    %v5099 = vadd.f32 %v5053, %v5082
    %v5100 = vadd.f32 %v5054, %v5084
    %v5101 = vadd.f32 %v5055, %v5086
    %v5102 = vadd.f32 %v5056, %v5088
    %v5103 = vadd.f32 %v5057, %v5085
    %v5104 = vadd.f32 %v5058, %v5087
    %v5105 = vmul.f32 %v776, %v1313
    %v5106 = vmul.f32 %v778, %v1316
    %v5107 = vmul.f32 %v782, %v1313
    %v5108 = vmul.f32 %v784, %v1316
    %v5109 = vmul.f32 %v788, %v1313
    %v5110 = vmul.f32 %v790, %v1316
    %v5111 = vmul.f32 %v794, %v1313
    %v5112 = vmul.f32 %v796, %v1316
    %v5121 = vrot.slane %v5105, 2
    %v5122 = vrot.slane %v5107, 2
    %v5123 = vsel %vm1272, %v5121, %v5122
    %v5124 = vrot.slane %v5106, 2
    %v5125 = vrot.slane %v5108, 2
    %v5126 = vsel %vm1272, %v5124, %v5125
    %v5127 = vrot.slane %v5109, 2
    %v5128 = vsel %vm1272, %v5122, %v5127
    %v5129 = vrot.slane %v5110, 2
    %v5130 = vsel %vm1272, %v5125, %v5129
    %v5131 = vrot.slane %v5111, 2
    %v5132 = vsel %vm1272, %v5127, %v5131
    %v5133 = vrot.slane %v5112, 2
    %v5134 = vsel %vm1272, %v5129, %v5133
    %5135 = vrot.lane.b32.xlu0 %v5123, 127
    %v5136 = vpop.permute.xlu0 %5135
    %5137 = vrot.lane.b32.xlu0 %v5126, 127
    %v5138 = vpop.permute.xlu0 %5137
    %5139 = vrot.lane.b32.xlu0 %v5128, 127
    %v5140 = vpop.permute.xlu0 %5139
    %5141 = vrot.lane.b32.xlu0 %v5130, 127
    %v5142 = vpop.permute.xlu0 %5141
    %5143 = vrot.lane.b32.xlu0 %v5132, 127
    %v5144 = vpop.permute.xlu0 %5143
    %5145 = vrot.lane.b32.xlu0 %v5134, 127
    %v5146 = vpop.permute.xlu0 %5145
    %5147 = vrot.lane.b32.xlu0 %v5131, 127
    %v5148 = vpop.permute.xlu0 %5147
    %5149 = vrot.lane.b32.xlu0 %v5133, 127
    %v5150 = vpop.permute.xlu0 %5149
    %v5151 = vsel %vm932, %v5136, %v5138
    %v5152 = vsel %vm932, %v5140, %v5142
    %v5153 = vsel %vm932, %v5144, %v5146
    %v5154 = vsel %vm932, %v5148, %v5150
    %v5163 = vadd.f32 %v5097, %v5151
    %v5164 = vadd.f32 %v5098, %v5138
    %v5165 = vadd.f32 %v5099, %v5152
    %v5166 = vadd.f32 %v5100, %v5142
    %v5167 = vadd.f32 %v5101, %v5153
    %v5168 = vadd.f32 %v5102, %v5146
    %v5169 = vadd.f32 %v5103, %v5154
    %v5170 = vadd.f32 %v5104, %v5150
    %v5171 = vmul.f32 %v776, %v1395
    %v5172 = vmul.f32 %v778, %v1398
    %v5173 = vmul.f32 %v782, %v1395
    %v5174 = vmul.f32 %v784, %v1398
    %v5175 = vmul.f32 %v788, %v1395
    %v5176 = vmul.f32 %v790, %v1398
    %v5177 = vmul.f32 %v794, %v1395
    %v5178 = vmul.f32 %v796, %v1398
    %v5187 = vrot.slane %v5171, 2
    %v5188 = vrot.slane %v5173, 2
    %v5189 = vsel %vm1272, %v5187, %v5188
    %v5190 = vrot.slane %v5172, 2
    %v5191 = vrot.slane %v5174, 2
    %v5192 = vsel %vm1272, %v5190, %v5191
    %v5193 = vrot.slane %v5175, 2
    %v5194 = vsel %vm1272, %v5188, %v5193
    %v5195 = vrot.slane %v5176, 2
    %v5196 = vsel %vm1272, %v5191, %v5195
    %v5197 = vrot.slane %v5177, 2
    %v5198 = vsel %vm1272, %v5193, %v5197
    %v5199 = vrot.slane %v5178, 2
    %v5200 = vsel %vm1272, %v5195, %v5199
    %5201 = vrot.lane.b32.xlu0 %v5189, 126
    %v5202 = vpop.permute.xlu0 %5201
    %5203 = vrot.lane.b32.xlu0 %v5192, 126
    %v5204 = vpop.permute.xlu0 %5203
    %5205 = vrot.lane.b32.xlu0 %v5194, 126
    %v5206 = vpop.permute.xlu0 %5205
    %5207 = vrot.lane.b32.xlu0 %v5196, 126
    %v5208 = vpop.permute.xlu0 %5207
    %5209 = vrot.lane.b32.xlu0 %v5198, 126
    %v5210 = vpop.permute.xlu0 %5209
    %5211 = vrot.lane.b32.xlu0 %v5200, 126
    %v5212 = vpop.permute.xlu0 %5211
    %5213 = vrot.lane.b32.xlu0 %v5197, 126
    %v5214 = vpop.permute.xlu0 %5213
    %5215 = vrot.lane.b32.xlu0 %v5199, 126
    %v5216 = vpop.permute.xlu0 %5215
    %v5217 = vsel %vm1002, %v5202, %v5204
    %v5218 = vsel %vm1002, %v5206, %v5208
    %v5219 = vsel %vm1002, %v5210, %v5212
    %v5220 = vsel %vm1002, %v5214, %v5216
    %v5229 = vadd.f32 %v5163, %v5217
    %v5230 = vadd.f32 %v5164, %v5204
    %v5231 = vadd.f32 %v5165, %v5218
    %v5232 = vadd.f32 %v5166, %v5208
    %v5233 = vadd.f32 %v5167, %v5219
    %v5234 = vadd.f32 %v5168, %v5212
    %v5235 = vadd.f32 %v5169, %v5220
    %v5236 = vadd.f32 %v5170, %v5216
    %v5237 = vadd.f32 %v5229, %v1471
    %v5238 = vadd.f32 %v5230, %v1475
    %v5239 = vadd.f32 %v5231, %v1471
    %v5240 = vadd.f32 %v5232, %v1475
    %v5241 = vadd.f32 %v5233, %v1471
    %v5242 = vadd.f32 %v5234, %v1475
    %v5243 = vadd.f32 %v5235, %v1471
    %v5244 = vadd.f32 %v5236, %v1475
    %v5245 = vmax.f32 %v5237, 0.0
    %v5246 = vmax.f32 %v5238, 0.0
    %v5247 = vmax.f32 %v5239, 0.0
    %v5248 = vmax.f32 %v5240, 0.0
    %v5249 = vmax.f32 %v5241, 0.0
    %v5250 = vmax.f32 %v5242, 0.0
    %v5251 = vmax.f32 %v5243, 0.0
    %v5252 = vmax.f32 %v5244, 0.0
    %v5261 = vrot.slane %v5245, 1
    %v5262 = vrot.slane %v5247, 1
    %v5263 = vsel %vm1050, %v5261, %v5262
    %v5264 = vrot.slane %v5246, 1
    %v5265 = vrot.slane %v5248, 1
    %v5266 = vsel %vm1050, %v5264, %v5265
    %v5267 = vrot.slane %v5249, 1
    %v5268 = vsel %vm1050, %v5262, %v5267
    %v5269 = vrot.slane %v5250, 1
    %v5270 = vsel %vm1050, %v5265, %v5269
    %v5271 = vrot.slane %v5251, 1
    %v5272 = vsel %vm1050, %v5267, %v5271
    %v5273 = vrot.slane %v5252, 1
    %v5274 = vsel %vm1050, %v5269, %v5273
    %v5283 = vmax.f32 %v5245, %v5263
    %v5284 = vmax.f32 %v5246, %v5266
    %v5285 = vmax.f32 %v5247, %v5268
    %v5286 = vmax.f32 %v5248, %v5270
    %v5287 = vmax.f32 %v5249, %v5272
    %v5288 = vmax.f32 %v5250, %v5274
    %v5289 = vmax.f32 %v5251, %v5271
    %v5290 = vmax.f32 %v5252, %v5273
    %v5291 = vld [vmem:[%s5] sm:$0xff]
    %v5292 = vld [vmem:[%s5 + $0x8] sm:$0xff]
    %v5294 = vsel %vm1534, %v5291, 0
    %v5297 = vsel %vm1534, %v5292, 0
    %v5300 = vsel %vm1541, %v5289, 0
    %v5303 = vsel %vm1541, %v5290, 0
    %5305 = vmatprep.subr.mxu0 %v5284
    %5306 = vmatpush1.msra.mxu0 %v5283
    %5307 = vmatprep.subr.mxu0 %v5286
    %5308 = vmatpush1.msra.mxu0 %v5285
    %5309 = vmatprep.subr.mxu0 %v5288
    %5310 = vmatpush1.msra.mxu0 %v5287
    %5311 = vmatprep.subr.mxu0 %v5303
    %5312 = vmatpush1.msra.mxu0 %v5300
    %5313 = vmatprep.subr.mxu0 0.0
    %5314 = vmatpush1.msra.mxu0 0.0
    %5315 = vmatprep.subr.mxu0 0.0
    %5316 = vmatpush1.msra.mxu0 0.0
    %5317 = vmatprep.subr.mxu0 0.0
    %5318 = vmatpush1.msra.mxu0 0.0
    %5319 = vmatprep.subr.mxu0 0.0
    %5320 = vmatpush1.msra.mxu0 0.0
    %5321 = vmatprep.subr.mxu0 0.0
    %5322 = vmatpush1.msra.mxu0 0.0
    %5323 = vmatprep.subr.mxu0 0.0
    %5324 = vmatpush1.msra.mxu0 0.0
    %5325 = vmatprep.subr.mxu0 0.0
    %5326 = vmatpush1.msra.mxu0 0.0
    %5327 = vmatprep.subr.mxu0 0.0
    %5328 = vmatpush1.msra.mxu0 0.0
    %5329 = vmatprep.subr.mxu0 0.0
    %5330 = vmatpush1.msra.mxu0 0.0
    %5331 = vmatprep.subr.mxu0 0.0
    %5332 = vmatpush1.msra.mxu0 0.0
    %5333 = vmatprep.subr.mxu0 0.0
    %5334 = vmatpush1.msra.mxu0 0.0
    %5335 = vmatprep.subr.mxu0 0.0
    %5336 = vmatpush1.msra.mxu0 0.0
    %5337 = vmatprep.subr.mxu0 0.0
    %5338 = vmatpush1.msra.mxu0 0.0
    %5339 = vmatprep.subr.mxu0 0.0
    %5340 = vmatpush1.msra.mxu0 0.0
    %5341 = vmatprep.subr.mxu0 0.0
    %5342 = vmatpush1.msra.mxu0 0.0
    %5343 = vmatprep.subr.mxu0 0.0
    %5344 = vmatpush1.msra.mxu0 0.0
    %5345 = vmatprep.subr.mxu0 0.0
    %5346 = vmatpush1.msra.mxu0 0.0
    %5347 = vmatprep.subr.mxu0 0.0
    %5348 = vmatpush1.msra.mxu0 0.0
    %5349 = vmatprep.subr.mxu0 0.0
    %5350 = vmatpush1.msra.mxu0 0.0
    %5351 = vmatprep.subr.mxu0 0.0
    %5352 = vmatpush1.msra.mxu0 0.0
    %5353 = vmatprep.subr.mxu0 0.0
    %5354 = vmatpush1.msra.mxu0 0.0
    %5355 = vmatprep.subr.mxu0 0.0
    %5356 = vmatpush1.msra.mxu0 0.0
    %5357 = vmatprep.subr.mxu0 0.0
    %5358 = vmatpush1.msra.mxu0 0.0
    %5359 = vmatprep.subr.mxu0 0.0
    %5360 = vmatpush1.msra.mxu0 0.0
    %5361 = vmatprep.subr.mxu0 0.0
    %5362 = vmatpush1.msra.mxu0 0.0
    %5363 = vmatprep.subr.mxu0 0.0
    %5364 = vmatpush1.msra.mxu0 0.0
    %5365 = vmatprep.subr.mxu0 0.0
    %5366 = vmatpush1.msra.mxu0 0.0
    %5367 = vmatprep.subr.mxu0 0.0
    %5368 = vmatpush1.msra.mxu0 0.0
    %5369 = vmatprep.mubr.f32.mxu0 0.0
    %5370 = vmatmul.mubr.f32.gmra.mrb[0].mxu0 %v5294
    %v5371 = vpop.f32.mrb[0].mxu0
    %v5372 = vadd.f32 0.0, %v5371
    %v5373 = vpop.f32.mrb[0].mxu0
    %v5374 = vadd.f32 0.0, %v5373
    %5375 = vmatprep.mubr.f32.mxu0 0.0
    %5376 = vmatmul.mubr.f32.gmra.mrb[0].mxu0 %v5297
    %v5377 = vpop.f32.mrb[0].mxu0
    %v5378 = vadd.f32 0.0, %v5377
    %v5379 = vpop.f32.mrb[0].mxu0
    %v5380 = vadd.f32 0.0, %v5379
    %5381 = vdwg.mxu0
    %5386 = vrot.lane.b32.xlu0 %v5372, 127
    %v5387 = vpop.permute.xlu0 %5386
    %5388 = vrot.lane.b32.xlu0 %v5374, 127
    %v5389 = vpop.permute.xlu0 %5388
    %5390 = vrot.lane.b32.xlu0 %v5378, 127
    %v5391 = vpop.permute.xlu0 %5390
    %5392 = vrot.lane.b32.xlu0 %v5380, 127
    %v5393 = vpop.permute.xlu0 %5392
    %v5394 = vsel %vm932, %v5387, %v5389
    %v5395 = vsel %vm932, %v5391, %v5393
    %v5400 = vmax.f32 %v5372, %v5394
    %v5401 = vmax.f32 %v5374, %v5389
    %v5402 = vmax.f32 %v5378, %v5395
    %v5403 = vmax.f32 %v5380, %v5393
    %v5404 = vld [vmem:[%s6] sm:$0xff]
    %v5405 = vld [vmem:[%s6 + $0x8] sm:$0xff]
    %v5406 = vld [vmem:[%s6 + $0x10] sm:$0xff]
    %v5407 = vld [vmem:[%s6 + $0x18] sm:$0xff]
    %v5408 = vld [vmem:[%s6 + $0x20] sm:$0xff]
    %v5409 = vld [vmem:[%s6 + $0x28] sm:$0xff]
    %v5410 = vld [vmem:[%s6 + $0x30] sm:$0xff]
    %v5411 = vld [vmem:[%s6 + $0x38] sm:$0xff]
    %v5412 = vld [vmem:[%s6 + $0x40] sm:$0xff]
    %v5413 = vld [vmem:[%s6 + $0x48] sm:$0xff]
    %v5414 = vld [vmem:[%s6 + $0x50] sm:$0xff]
    %v5415 = vld [vmem:[%s6 + $0x58] sm:$0xff]
    %v5416 = vld [vmem:[%s6 + $0x60] sm:$0xff]
    %v5417 = vld [vmem:[%s6 + $0x68] sm:$0xff]
    %v5418 = vld [vmem:[%s6 + $0x70] sm:$0xff]
    %v5419 = vld [vmem:[%s6 + $0x78] sm:$0xff]
    %v5420 = vld [vmem:[%s6 + $0x80] sm:$0xff]
    %v5421 = vld [vmem:[%s6 + $0x88] sm:$0xff]
    %v5422 = vld [vmem:[%s6 + $0x90] sm:$0xff]
    %v5423 = vld [vmem:[%s6 + $0x98] sm:$0xff]
    %v5424 = vld [vmem:[%s6 + $0xa0] sm:$0xff]
    %v5425 = vld [vmem:[%s6 + $0xa8] sm:$0xff]
    %v5426 = vld [vmem:[%s6 + $0xb0] sm:$0xff]
    %v5427 = vld [vmem:[%s6 + $0xb8] sm:$0xff]
    %v5428 = vld [vmem:[%s6 + $0xc0] sm:$0xff]
    %v5429 = vld [vmem:[%s6 + $0xc8] sm:$0xff]
    %v5430 = vld [vmem:[%s6 + $0xd0] sm:$0xff]
    %v5431 = vld [vmem:[%s6 + $0xd8] sm:$0xff]
    %v5432 = vld [vmem:[%s6 + $0xe0] sm:$0xff]
    %v5433 = vld [vmem:[%s6 + $0xe8] sm:$0x1f]
    %v5435 = vsel %vm1677, %v5401, 0
    %v5438 = vsel %vm1677, %v5403, 0
    %v5441 = vsel %vm1684, %v5433, 0
    %5443 = vmatprep.subr.mxu0 0.0
    %5444 = vmatpush1.msra.mxu0 %v5404
    %5445 = vmatprep.subr.mxu0 0.0
    %5446 = vmatpush1.msra.mxu0 %v5405
    %5447 = vmatprep.subr.mxu0 0.0
    %5448 = vmatpush1.msra.mxu0 %v5406
    %5449 = vmatprep.subr.mxu0 0.0
    %5450 = vmatpush1.msra.mxu0 %v5407
    %5451 = vmatprep.subr.mxu0 0.0
    %5452 = vmatpush1.msra.mxu0 %v5408
    %5453 = vmatprep.subr.mxu0 0.0
    %5454 = vmatpush1.msra.mxu0 %v5409
    %5455 = vmatprep.subr.mxu0 0.0
    %5456 = vmatpush1.msra.mxu0 %v5410
    %5457 = vmatprep.subr.mxu0 0.0
    %5458 = vmatpush1.msra.mxu0 %v5411
    %5459 = vmatprep.subr.mxu0 0.0
    %5460 = vmatpush1.msra.mxu0 %v5412
    %5461 = vmatprep.subr.mxu0 0.0
    %5462 = vmatpush1.msra.mxu0 %v5413
    %5463 = vmatprep.subr.mxu0 0.0
    %5464 = vmatpush1.msra.mxu0 %v5414
    %5465 = vmatprep.subr.mxu0 0.0
    %5466 = vmatpush1.msra.mxu0 %v5415
    %5467 = vmatprep.subr.mxu0 0.0
    %5468 = vmatpush1.msra.mxu0 %v5416
    %5469 = vmatprep.subr.mxu0 0.0
    %5470 = vmatpush1.msra.mxu0 %v5417
    %5471 = vmatprep.subr.mxu0 0.0
    %5472 = vmatpush1.msra.mxu0 %v5418
    %5473 = vmatprep.subr.mxu0 0.0
    %5474 = vmatpush1.msra.mxu0 %v5419
    %5475 = vmatprep.subr.mxu0 0.0
    %5476 = vmatpush1.msra.mxu0 %v5420
    %5477 = vmatprep.subr.mxu0 0.0
    %5478 = vmatpush1.msra.mxu0 %v5421
    %5479 = vmatprep.subr.mxu0 0.0
    %5480 = vmatpush1.msra.mxu0 %v5422
    %5481 = vmatprep.subr.mxu0 0.0
    %5482 = vmatpush1.msra.mxu0 %v5423
    %5483 = vmatprep.subr.mxu0 0.0
    %5484 = vmatpush1.msra.mxu0 %v5424
    %5485 = vmatprep.subr.mxu0 0.0
    %5486 = vmatpush1.msra.mxu0 %v5425
    %5487 = vmatprep.subr.mxu0 0.0
    %5488 = vmatpush1.msra.mxu0 %v5426
    %5489 = vmatprep.subr.mxu0 0.0
    %5490 = vmatpush1.msra.mxu0 %v5427
    %5491 = vmatprep.subr.mxu0 0.0
    %5492 = vmatpush1.msra.mxu0 %v5428
    %5493 = vmatprep.subr.mxu0 0.0
    %5494 = vmatpush1.msra.mxu0 %v5429
    %5495 = vmatprep.subr.mxu0 0.0
    %5496 = vmatpush1.msra.mxu0 %v5430
    %5497 = vmatprep.subr.mxu0 0.0
    %5498 = vmatpush1.msra.mxu0 %v5431
    %5499 = vmatprep.subr.mxu0 0.0
    %5500 = vmatpush1.msra.mxu0 %v5432
    %5501 = vmatprep.subr.mxu0 0.0
    %5502 = vmatpush1.msra.mxu0 %v5441
    %5503 = vmatprep.subr.mxu0 0.0
    %5504 = vmatpush1.msra.mxu0 0.0
    %5505 = vmatprep.subr.mxu0 0.0
    %5506 = vmatpush1.msra.mxu0 0.0
    %5507 = vmatprep.mubr.f32.mxu0 %v5435
    %5508 = vmatmul.mubr.f32.gmra.mrb[0].mxu0 %v5400
    %v5509 = vpop.f32.mrb[0].mxu0
    %v5510 = vadd.f32 0.0, %v5509
    %v5511 = vpop.f32.mrb[0].mxu0
    %5512 = vmatprep.mubr.f32.mxu0 %v5438
    %5513 = vmatmul.mubr.f32.gmra.mrb[0].mxu0 %v5402
    %v5514 = vpop.f32.mrb[0].mxu0
    %v5515 = vadd.f32 0.0, %v5514
    %v5516 = vpop.f32.mrb[0].mxu0
    %5517 = vdwg.mxu0
    %5518 = vst [vmem:[#allocation2 + $0x50] sm:$0xff] %v5510
    %5519 = vst [vmem:[#allocation2 + $0x58] sm:$0xff] %v5515
    %v5520 = vmul.f32 %v800, %v868
    %v5521 = vmul.f32 %v802, %v872
    %v5522 = vmul.f32 %v806, %v868
    %v5523 = vmul.f32 %v808, %v872
    %v5524 = vmul.f32 %v812, %v868
    %v5525 = vmul.f32 %v814, %v872
    %v5526 = vmul.f32 %v818, %v868
    %v5527 = vmul.f32 %v820, %v872
    %v5528 = vmul.f32 %v800, %v893
    %v5529 = vmul.f32 %v802, %v897
    %v5530 = vmul.f32 %v806, %v893
    %v5531 = vmul.f32 %v808, %v897
    %v5532 = vmul.f32 %v812, %v893
    %v5533 = vmul.f32 %v814, %v897
    %v5534 = vmul.f32 %v818, %v893
    %v5535 = vmul.f32 %v820, %v897
    %5544 = vrot.lane.b32.xlu0 %v5528, 127
    %v5545 = vpop.permute.xlu0 %5544
    %5546 = vrot.lane.b32.xlu0 %v5529, 127
    %v5547 = vpop.permute.xlu0 %5546
    %5548 = vrot.lane.b32.xlu0 %v5530, 127
    %v5549 = vpop.permute.xlu0 %5548
    %5550 = vrot.lane.b32.xlu0 %v5531, 127
    %v5551 = vpop.permute.xlu0 %5550
    %5552 = vrot.lane.b32.xlu0 %v5532, 127
    %v5553 = vpop.permute.xlu0 %5552
    %5554 = vrot.lane.b32.xlu0 %v5533, 127
    %v5555 = vpop.permute.xlu0 %5554
    %5556 = vrot.lane.b32.xlu0 %v5534, 127
    %v5557 = vpop.permute.xlu0 %5556
    %5558 = vrot.lane.b32.xlu0 %v5535, 127
    %v5559 = vpop.permute.xlu0 %5558
    %v5560 = vsel %vm932, %v5545, %v5547
    %v5561 = vsel %vm932, %v5549, %v5551
    %v5562 = vsel %vm932, %v5553, %v5555
    %v5563 = vsel %vm932, %v5557, %v5559
    %v5572 = vadd.f32 %v5520, %v5560
    %v5573 = vadd.f32 %v5521, %v5547
    %v5574 = vadd.f32 %v5522, %v5561
    %v5575 = vadd.f32 %v5523, %v5551
    %v5576 = vadd.f32 %v5524, %v5562
    %v5577 = vadd.f32 %v5525, %v5555
    %v5578 = vadd.f32 %v5526, %v5563
    %v5579 = vadd.f32 %v5527, %v5559
    %v5580 = vmul.f32 %v800, %v963
    %v5581 = vmul.f32 %v802, %v967
    %v5582 = vmul.f32 %v806, %v963
    %v5583 = vmul.f32 %v808, %v967
    %v5584 = vmul.f32 %v812, %v963
    %v5585 = vmul.f32 %v814, %v967
    %v5586 = vmul.f32 %v818, %v963
    %v5587 = vmul.f32 %v820, %v967
    %5596 = vrot.lane.b32.xlu0 %v5580, 126
    %v5597 = vpop.permute.xlu0 %5596
    %5598 = vrot.lane.b32.xlu0 %v5581, 126
    %v5599 = vpop.permute.xlu0 %5598
    %5600 = vrot.lane.b32.xlu0 %v5582, 126
    %v5601 = vpop.permute.xlu0 %5600
    %5602 = vrot.lane.b32.xlu0 %v5583, 126
    %v5603 = vpop.permute.xlu0 %5602
    %5604 = vrot.lane.b32.xlu0 %v5584, 126
    %v5605 = vpop.permute.xlu0 %5604
    %5606 = vrot.lane.b32.xlu0 %v5585, 126
    %v5607 = vpop.permute.xlu0 %5606
    %5608 = vrot.lane.b32.xlu0 %v5586, 126
    %v5609 = vpop.permute.xlu0 %5608
    %5610 = vrot.lane.b32.xlu0 %v5587, 126
    %v5611 = vpop.permute.xlu0 %5610
    %v5612 = vsel %vm1002, %v5597, %v5599
    %v5613 = vsel %vm1002, %v5601, %v5603
    %v5614 = vsel %vm1002, %v5605, %v5607
    %v5615 = vsel %vm1002, %v5609, %v5611
    %v5624 = vadd.f32 %v5572, %v5612
    %v5625 = vadd.f32 %v5573, %v5599
    %v5626 = vadd.f32 %v5574, %v5613
    %v5627 = vadd.f32 %v5575, %v5603
    %v5628 = vadd.f32 %v5576, %v5614
    %v5629 = vadd.f32 %v5577, %v5607
    %v5630 = vadd.f32 %v5578, %v5615
    %v5631 = vadd.f32 %v5579, %v5611
    %v5632 = vmul.f32 %v800, %v1027
    %v5633 = vmul.f32 %v802, %v1031
    %v5634 = vmul.f32 %v806, %v1027
    %v5635 = vmul.f32 %v808, %v1031
    %v5636 = vmul.f32 %v812, %v1027
    %v5637 = vmul.f32 %v814, %v1031
    %v5638 = vmul.f32 %v818, %v1027
    %v5639 = vmul.f32 %v820, %v1031
    %v5648 = vrot.slane %v5632, 1
    %v5649 = vrot.slane %v5634, 1
    %v5650 = vsel %vm1050, %v5648, %v5649
    %v5651 = vrot.slane %v5633, 1
    %v5652 = vrot.slane %v5635, 1
    %v5653 = vsel %vm1050, %v5651, %v5652
    %v5654 = vrot.slane %v5636, 1
    %v5655 = vsel %vm1050, %v5649, %v5654
    %v5656 = vrot.slane %v5637, 1
    %v5657 = vsel %vm1050, %v5652, %v5656
    %v5658 = vrot.slane %v5638, 1
    %v5659 = vsel %vm1050, %v5654, %v5658
    %v5660 = vrot.slane %v5639, 1
    %v5661 = vsel %vm1050, %v5656, %v5660
    %v5670 = vadd.f32 %v5624, %v5650
    %v5671 = vadd.f32 %v5625, %v5653
    %v5672 = vadd.f32 %v5626, %v5655
    %v5673 = vadd.f32 %v5627, %v5657
    %v5674 = vadd.f32 %v5628, %v5659
    %v5675 = vadd.f32 %v5629, %v5661
    %v5676 = vadd.f32 %v5630, %v5658
    %v5677 = vadd.f32 %v5631, %v5660
    %v5678 = vmul.f32 %v800, %v1091
    %v5679 = vmul.f32 %v802, %v1094
    %v5680 = vmul.f32 %v806, %v1091
    %v5681 = vmul.f32 %v808, %v1094
    %v5682 = vmul.f32 %v812, %v1091
    %v5683 = vmul.f32 %v814, %v1094
    %v5684 = vmul.f32 %v818, %v1091
    %v5685 = vmul.f32 %v820, %v1094
    %v5694 = vrot.slane %v5678, 1
    %v5695 = vrot.slane %v5680, 1
    %v5696 = vsel %vm1050, %v5694, %v5695
    %v5697 = vrot.slane %v5679, 1
    %v5698 = vrot.slane %v5681, 1
    %v5699 = vsel %vm1050, %v5697, %v5698
    %v5700 = vrot.slane %v5682, 1
    %v5701 = vsel %vm1050, %v5695, %v5700
    %v5702 = vrot.slane %v5683, 1
    %v5703 = vsel %vm1050, %v5698, %v5702
    %v5704 = vrot.slane %v5684, 1
    %v5705 = vsel %vm1050, %v5700, %v5704
    %v5706 = vrot.slane %v5685, 1
    %v5707 = vsel %vm1050, %v5702, %v5706
    %5708 = vrot.lane.b32.xlu0 %v5696, 127
    %v5709 = vpop.permute.xlu0 %5708
    %5710 = vrot.lane.b32.xlu0 %v5699, 127
    %v5711 = vpop.permute.xlu0 %5710
    %5712 = vrot.lane.b32.xlu0 %v5701, 127
    %v5713 = vpop.permute.xlu0 %5712
    %5714 = vrot.lane.b32.xlu0 %v5703, 127
    %v5715 = vpop.permute.xlu0 %5714
    %5716 = vrot.lane.b32.xlu0 %v5705, 127
    %v5717 = vpop.permute.xlu0 %5716
    %5718 = vrot.lane.b32.xlu0 %v5707, 127
    %v5719 = vpop.permute.xlu0 %5718
    %5720 = vrot.lane.b32.xlu0 %v5704, 127
    %v5721 = vpop.permute.xlu0 %5720
    %5722 = vrot.lane.b32.xlu0 %v5706, 127
    %v5723 = vpop.permute.xlu0 %5722
    %v5724 = vsel %vm932, %v5709, %v5711
    %v5725 = vsel %vm932, %v5713, %v5715
    %v5726 = vsel %vm932, %v5717, %v5719
    %v5727 = vsel %vm932, %v5721, %v5723
    %v5736 = vadd.f32 %v5670, %v5724
    %v5737 = vadd.f32 %v5671, %v5711
    %v5738 = vadd.f32 %v5672, %v5725
    %v5739 = vadd.f32 %v5673, %v5715
    %v5740 = vadd.f32 %v5674, %v5726
    %v5741 = vadd.f32 %v5675, %v5719
    %v5742 = vadd.f32 %v5676, %v5727
    %v5743 = vadd.f32 %v5677, %v5723
    %v5744 = vmul.f32 %v800, %v1173
    %v5745 = vmul.f32 %v802, %v1176
    %v5746 = vmul.f32 %v806, %v1173
    %v5747 = vmul.f32 %v808, %v1176
    %v5748 = vmul.f32 %v812, %v1173
    %v5749 = vmul.f32 %v814, %v1176
    %v5750 = vmul.f32 %v818, %v1173
    %v5751 = vmul.f32 %v820, %v1176
    %v5760 = vrot.slane %v5744, 1
    %v5761 = vrot.slane %v5746, 1
    %v5762 = vsel %vm1050, %v5760, %v5761
    %v5763 = vrot.slane %v5745, 1
    %v5764 = vrot.slane %v5747, 1
    %v5765 = vsel %vm1050, %v5763, %v5764
    %v5766 = vrot.slane %v5748, 1
    %v5767 = vsel %vm1050, %v5761, %v5766
    %v5768 = vrot.slane %v5749, 1
    %v5769 = vsel %vm1050, %v5764, %v5768
    %v5770 = vrot.slane %v5750, 1
    %v5771 = vsel %vm1050, %v5766, %v5770
    %v5772 = vrot.slane %v5751, 1
    %v5773 = vsel %vm1050, %v5768, %v5772
    %5774 = vrot.lane.b32.xlu0 %v5762, 126
    %v5775 = vpop.permute.xlu0 %5774
    %5776 = vrot.lane.b32.xlu0 %v5765, 126
    %v5777 = vpop.permute.xlu0 %5776
    %5778 = vrot.lane.b32.xlu0 %v5767, 126
    %v5779 = vpop.permute.xlu0 %5778
    %5780 = vrot.lane.b32.xlu0 %v5769, 126
    %v5781 = vpop.permute.xlu0 %5780
    %5782 = vrot.lane.b32.xlu0 %v5771, 126
    %v5783 = vpop.permute.xlu0 %5782
    %5784 = vrot.lane.b32.xlu0 %v5773, 126
    %v5785 = vpop.permute.xlu0 %5784
    %5786 = vrot.lane.b32.xlu0 %v5770, 126
    %v5787 = vpop.permute.xlu0 %5786
    %5788 = vrot.lane.b32.xlu0 %v5772, 126
    %v5789 = vpop.permute.xlu0 %5788
    %v5790 = vsel %vm1002, %v5775, %v5777
    %v5791 = vsel %vm1002, %v5779, %v5781
    %v5792 = vsel %vm1002, %v5783, %v5785
    %v5793 = vsel %vm1002, %v5787, %v5789
    %v5802 = vadd.f32 %v5736, %v5790
    %v5803 = vadd.f32 %v5737, %v5777
    %v5804 = vadd.f32 %v5738, %v5791
    %v5805 = vadd.f32 %v5739, %v5781
    %v5806 = vadd.f32 %v5740, %v5792
    %v5807 = vadd.f32 %v5741, %v5785
    %v5808 = vadd.f32 %v5742, %v5793
    %v5809 = vadd.f32 %v5743, %v5789
    %v5810 = vmul.f32 %v800, %v1249
    %v5811 = vmul.f32 %v802, %v1253
    %v5812 = vmul.f32 %v806, %v1249
    %v5813 = vmul.f32 %v808, %v1253
    %v5814 = vmul.f32 %v812, %v1249
    %v5815 = vmul.f32 %v814, %v1253
    %v5816 = vmul.f32 %v818, %v1249
    %v5817 = vmul.f32 %v820, %v1253
    %v5826 = vrot.slane %v5810, 2
    %v5827 = vrot.slane %v5812, 2
    %v5828 = vsel %vm1272, %v5826, %v5827
    %v5829 = vrot.slane %v5811, 2
    %v5830 = vrot.slane %v5813, 2
    %v5831 = vsel %vm1272, %v5829, %v5830
    %v5832 = vrot.slane %v5814, 2
    %v5833 = vsel %vm1272, %v5827, %v5832
    %v5834 = vrot.slane %v5815, 2
    %v5835 = vsel %vm1272, %v5830, %v5834
    %v5836 = vrot.slane %v5816, 2
    %v5837 = vsel %vm1272, %v5832, %v5836
    %v5838 = vrot.slane %v5817, 2
    %v5839 = vsel %vm1272, %v5834, %v5838
    %v5848 = vadd.f32 %v5802, %v5828
    %v5849 = vadd.f32 %v5803, %v5831
    %v5850 = vadd.f32 %v5804, %v5833
    %v5851 = vadd.f32 %v5805, %v5835
    %v5852 = vadd.f32 %v5806, %v5837
    %v5853 = vadd.f32 %v5807, %v5839
    %v5854 = vadd.f32 %v5808, %v5836
    %v5855 = vadd.f32 %v5809, %v5838
    %v5856 = vmul.f32 %v800, %v1313
    %v5857 = vmul.f32 %v802, %v1316
    %v5858 = vmul.f32 %v806, %v1313
    %v5859 = vmul.f32 %v808, %v1316
    %v5860 = vmul.f32 %v812, %v1313
    %v5861 = vmul.f32 %v814, %v1316
    %v5862 = vmul.f32 %v818, %v1313
    %v5863 = vmul.f32 %v820, %v1316
    %v5872 = vrot.slane %v5856, 2
    %v5873 = vrot.slane %v5858, 2
    %v5874 = vsel %vm1272, %v5872, %v5873
    %v5875 = vrot.slane %v5857, 2
    %v5876 = vrot.slane %v5859, 2
    %v5877 = vsel %vm1272, %v5875, %v5876
    %v5878 = vrot.slane %v5860, 2
    %v5879 = vsel %vm1272, %v5873, %v5878
    %v5880 = vrot.slane %v5861, 2
    %v5881 = vsel %vm1272, %v5876, %v5880
    %v5882 = vrot.slane %v5862, 2
    %v5883 = vsel %vm1272, %v5878, %v5882
    %v5884 = vrot.slane %v5863, 2
    %v5885 = vsel %vm1272, %v5880, %v5884
    %5886 = vrot.lane.b32.xlu0 %v5874, 127
    %v5887 = vpop.permute.xlu0 %5886
    %5888 = vrot.lane.b32.xlu0 %v5877, 127
    %v5889 = vpop.permute.xlu0 %5888
    %5890 = vrot.lane.b32.xlu0 %v5879, 127
    %v5891 = vpop.permute.xlu0 %5890
    %5892 = vrot.lane.b32.xlu0 %v5881, 127
    %v5893 = vpop.permute.xlu0 %5892
    %5894 = vrot.lane.b32.xlu0 %v5883, 127
    %v5895 = vpop.permute.xlu0 %5894
    %5896 = vrot.lane.b32.xlu0 %v5885, 127
    %v5897 = vpop.permute.xlu0 %5896
    %5898 = vrot.lane.b32.xlu0 %v5882, 127
    %v5899 = vpop.permute.xlu0 %5898
    %5900 = vrot.lane.b32.xlu0 %v5884, 127
    %v5901 = vpop.permute.xlu0 %5900
    %v5902 = vsel %vm932, %v5887, %v5889
    %v5903 = vsel %vm932, %v5891, %v5893
    %v5904 = vsel %vm932, %v5895, %v5897
    %v5905 = vsel %vm932, %v5899, %v5901
    %v5914 = vadd.f32 %v5848, %v5902
    %v5915 = vadd.f32 %v5849, %v5889
    %v5916 = vadd.f32 %v5850, %v5903
    %v5917 = vadd.f32 %v5851, %v5893
    %v5918 = vadd.f32 %v5852, %v5904
    %v5919 = vadd.f32 %v5853, %v5897
    %v5920 = vadd.f32 %v5854, %v5905
    %v5921 = vadd.f32 %v5855, %v5901
    %v5922 = vmul.f32 %v800, %v1395
    %v5923 = vmul.f32 %v802, %v1398
    %v5924 = vmul.f32 %v806, %v1395
    %v5925 = vmul.f32 %v808, %v1398
    %v5926 = vmul.f32 %v812, %v1395
    %v5927 = vmul.f32 %v814, %v1398
    %v5928 = vmul.f32 %v818, %v1395
    %v5929 = vmul.f32 %v820, %v1398
    %v5938 = vrot.slane %v5922, 2
    %v5939 = vrot.slane %v5924, 2
    %v5940 = vsel %vm1272, %v5938, %v5939
    %v5941 = vrot.slane %v5923, 2
    %v5942 = vrot.slane %v5925, 2
    %v5943 = vsel %vm1272, %v5941, %v5942
    %v5944 = vrot.slane %v5926, 2
    %v5945 = vsel %vm1272, %v5939, %v5944
    %v5946 = vrot.slane %v5927, 2
    %v5947 = vsel %vm1272, %v5942, %v5946
    %v5948 = vrot.slane %v5928, 2
    %v5949 = vsel %vm1272, %v5944, %v5948
    %v5950 = vrot.slane %v5929, 2
    %v5951 = vsel %vm1272, %v5946, %v5950
    %5952 = vrot.lane.b32.xlu0 %v5940, 126
    %v5953 = vpop.permute.xlu0 %5952
    %5954 = vrot.lane.b32.xlu0 %v5943, 126
    %v5955 = vpop.permute.xlu0 %5954
    %5956 = vrot.lane.b32.xlu0 %v5945, 126
    %v5957 = vpop.permute.xlu0 %5956
    %5958 = vrot.lane.b32.xlu0 %v5947, 126
    %v5959 = vpop.permute.xlu0 %5958
    %5960 = vrot.lane.b32.xlu0 %v5949, 126
    %v5961 = vpop.permute.xlu0 %5960
    %5962 = vrot.lane.b32.xlu0 %v5951, 126
    %v5963 = vpop.permute.xlu0 %5962
    %5964 = vrot.lane.b32.xlu0 %v5948, 126
    %v5965 = vpop.permute.xlu0 %5964
    %5966 = vrot.lane.b32.xlu0 %v5950, 126
    %v5967 = vpop.permute.xlu0 %5966
    %v5968 = vsel %vm1002, %v5953, %v5955
    %v5969 = vsel %vm1002, %v5957, %v5959
    %v5970 = vsel %vm1002, %v5961, %v5963
    %v5971 = vsel %vm1002, %v5965, %v5967
    %v5980 = vadd.f32 %v5914, %v5968
    %v5981 = vadd.f32 %v5915, %v5955
    %v5982 = vadd.f32 %v5916, %v5969
    %v5983 = vadd.f32 %v5917, %v5959
    %v5984 = vadd.f32 %v5918, %v5970
    %v5985 = vadd.f32 %v5919, %v5963
    %v5986 = vadd.f32 %v5920, %v5971
    %v5987 = vadd.f32 %v5921, %v5967
    %v5988 = vadd.f32 %v5980, %v1471
    %v5989 = vadd.f32 %v5981, %v1475
    %v5990 = vadd.f32 %v5982, %v1471
    %v5991 = vadd.f32 %v5983, %v1475
    %v5992 = vadd.f32 %v5984, %v1471
    %v5993 = vadd.f32 %v5985, %v1475
    %v5994 = vadd.f32 %v5986, %v1471
    %v5995 = vadd.f32 %v5987, %v1475
    %v5996 = vmax.f32 %v5988, 0.0
    %v5997 = vmax.f32 %v5989, 0.0
    %v5998 = vmax.f32 %v5990, 0.0
    %v5999 = vmax.f32 %v5991, 0.0
    %v6000 = vmax.f32 %v5992, 0.0
    %v6001 = vmax.f32 %v5993, 0.0
    %v6002 = vmax.f32 %v5994, 0.0
    %v6003 = vmax.f32 %v5995, 0.0
    %v6012 = vrot.slane %v5996, 1
    %v6013 = vrot.slane %v5998, 1
    %v6014 = vsel %vm1050, %v6012, %v6013
    %v6015 = vrot.slane %v5997, 1
    %v6016 = vrot.slane %v5999, 1
    %v6017 = vsel %vm1050, %v6015, %v6016
    %v6018 = vrot.slane %v6000, 1
    %v6019 = vsel %vm1050, %v6013, %v6018
    %v6020 = vrot.slane %v6001, 1
    %v6021 = vsel %vm1050, %v6016, %v6020
    %v6022 = vrot.slane %v6002, 1
    %v6023 = vsel %vm1050, %v6018, %v6022
    %v6024 = vrot.slane %v6003, 1
    %v6025 = vsel %vm1050, %v6020, %v6024
    %v6034 = vmax.f32 %v5996, %v6014
    %v6035 = vmax.f32 %v5997, %v6017
    %v6036 = vmax.f32 %v5998, %v6019
    %v6037 = vmax.f32 %v5999, %v6021
    %v6038 = vmax.f32 %v6000, %v6023
    %v6039 = vmax.f32 %v6001, %v6025
    %v6040 = vmax.f32 %v6002, %v6022
    %v6041 = vmax.f32 %v6003, %v6024
    %v6042 = vld [vmem:[%s5] sm:$0xff]
    %v6043 = vld [vmem:[%s5 + $0x8] sm:$0xff]
    %v6045 = vsel %vm1534, %v6042, 0
    %v6048 = vsel %vm1534, %v6043, 0
    %v6051 = vsel %vm1541, %v6040, 0
    %v6054 = vsel %vm1541, %v6041, 0
    %6056 = vmatprep.subr.mxu0 %v6035
    %6057 = vmatpush1.msra.mxu0 %v6034
    %6058 = vmatprep.subr.mxu0 %v6037
    %6059 = vmatpush1.msra.mxu0 %v6036
    %6060 = vmatprep.subr.mxu0 %v6039
    %6061 = vmatpush1.msra.mxu0 %v6038
    %6062 = vmatprep.subr.mxu0 %v6054
    %6063 = vmatpush1.msra.mxu0 %v6051
    %6064 = vmatprep.subr.mxu0 0.0
    %6065 = vmatpush1.msra.mxu0 0.0
    %6066 = vmatprep.subr.mxu0 0.0
    %6067 = vmatpush1.msra.mxu0 0.0
    %6068 = vmatprep.subr.mxu0 0.0
    %6069 = vmatpush1.msra.mxu0 0.0
    %6070 = vmatprep.subr.mxu0 0.0
    %6071 = vmatpush1.msra.mxu0 0.0
    %6072 = vmatprep.subr.mxu0 0.0
    %6073 = vmatpush1.msra.mxu0 0.0
    %6074 = vmatprep.subr.mxu0 0.0
    %6075 = vmatpush1.msra.mxu0 0.0
    %6076 = vmatprep.subr.mxu0 0.0
    %6077 = vmatpush1.msra.mxu0 0.0
    %6078 = vmatprep.subr.mxu0 0.0
    %6079 = vmatpush1.msra.mxu0 0.0
    %6080 = vmatprep.subr.mxu0 0.0
    %6081 = vmatpush1.msra.mxu0 0.0
    %6082 = vmatprep.subr.mxu0 0.0
    %6083 = vmatpush1.msra.mxu0 0.0
    %6084 = vmatprep.subr.mxu0 0.0
    %6085 = vmatpush1.msra.mxu0 0.0
    %6086 = vmatprep.subr.mxu0 0.0
    %6087 = vmatpush1.msra.mxu0 0.0
    %6088 = vmatprep.subr.mxu0 0.0
    %6089 = vmatpush1.msra.mxu0 0.0
    %6090 = vmatprep.subr.mxu0 0.0
    %6091 = vmatpush1.msra.mxu0 0.0
    %6092 = vmatprep.subr.mxu0 0.0
    %6093 = vmatpush1.msra.mxu0 0.0
    %6094 = vmatprep.subr.mxu0 0.0
    %6095 = vmatpush1.msra.mxu0 0.0
    %6096 = vmatprep.subr.mxu0 0.0
    %6097 = vmatpush1.msra.mxu0 0.0
    %6098 = vmatprep.subr.mxu0 0.0
    %6099 = vmatpush1.msra.mxu0 0.0
    %6100 = vmatprep.subr.mxu0 0.0
    %6101 = vmatpush1.msra.mxu0 0.0
    %6102 = vmatprep.subr.mxu0 0.0
    %6103 = vmatpush1.msra.mxu0 0.0
    %6104 = vmatprep.subr.mxu0 0.0
    %6105 = vmatpush1.msra.mxu0 0.0
    %6106 = vmatprep.subr.mxu0 0.0
    %6107 = vmatpush1.msra.mxu0 0.0
    %6108 = vmatprep.subr.mxu0 0.0
    %6109 = vmatpush1.msra.mxu0 0.0
    %6110 = vmatprep.subr.mxu0 0.0
    %6111 = vmatpush1.msra.mxu0 0.0
    %6112 = vmatprep.subr.mxu0 0.0
    %6113 = vmatpush1.msra.mxu0 0.0
    %6114 = vmatprep.subr.mxu0 0.0
    %6115 = vmatpush1.msra.mxu0 0.0
    %6116 = vmatprep.subr.mxu0 0.0
    %6117 = vmatpush1.msra.mxu0 0.0
    %6118 = vmatprep.subr.mxu0 0.0
    %6119 = vmatpush1.msra.mxu0 0.0
    %6120 = vmatprep.mubr.f32.mxu0 0.0
    %6121 = vmatmul.mubr.f32.gmra.mrb[0].mxu0 %v6045
    %v6122 = vpop.f32.mrb[0].mxu0
    %v6123 = vadd.f32 0.0, %v6122
    %v6124 = vpop.f32.mrb[0].mxu0
    %v6125 = vadd.f32 0.0, %v6124
    %6126 = vmatprep.mubr.f32.mxu0 0.0
    %6127 = vmatmul.mubr.f32.gmra.mrb[0].mxu0 %v6048
    %v6128 = vpop.f32.mrb[0].mxu0
    %v6129 = vadd.f32 0.0, %v6128
    %v6130 = vpop.f32.mrb[0].mxu0
    %v6131 = vadd.f32 0.0, %v6130
    %6132 = vdwg.mxu0
    %6137 = vrot.lane.b32.xlu0 %v6123, 127
    %v6138 = vpop.permute.xlu0 %6137
    %6139 = vrot.lane.b32.xlu0 %v6125, 127
    %v6140 = vpop.permute.xlu0 %6139
    %6141 = vrot.lane.b32.xlu0 %v6129, 127
    %v6142 = vpop.permute.xlu0 %6141
    %6143 = vrot.lane.b32.xlu0 %v6131, 127
    %v6144 = vpop.permute.xlu0 %6143
    %v6145 = vsel %vm932, %v6138, %v6140
    %v6146 = vsel %vm932, %v6142, %v6144
    %v6151 = vmax.f32 %v6123, %v6145
    %v6152 = vmax.f32 %v6125, %v6140
    %v6153 = vmax.f32 %v6129, %v6146
    %v6154 = vmax.f32 %v6131, %v6144
    %v6155 = vld [vmem:[%s6] sm:$0xff]
    %v6156 = vld [vmem:[%s6 + $0x8] sm:$0xff]
    %v6157 = vld [vmem:[%s6 + $0x10] sm:$0xff]
    %v6158 = vld [vmem:[%s6 + $0x18] sm:$0xff]
    %v6159 = vld [vmem:[%s6 + $0x20] sm:$0xff]
    %v6160 = vld [vmem:[%s6 + $0x28] sm:$0xff]
    %v6161 = vld [vmem:[%s6 + $0x30] sm:$0xff]
    %v6162 = vld [vmem:[%s6 + $0x38] sm:$0xff]
    %v6163 = vld [vmem:[%s6 + $0x40] sm:$0xff]
    %v6164 = vld [vmem:[%s6 + $0x48] sm:$0xff]
    %v6165 = vld [vmem:[%s6 + $0x50] sm:$0xff]
    %v6166 = vld [vmem:[%s6 + $0x58] sm:$0xff]
    %v6167 = vld [vmem:[%s6 + $0x60] sm:$0xff]
    %v6168 = vld [vmem:[%s6 + $0x68] sm:$0xff]
    %v6169 = vld [vmem:[%s6 + $0x70] sm:$0xff]
    %v6170 = vld [vmem:[%s6 + $0x78] sm:$0xff]
    %v6171 = vld [vmem:[%s6 + $0x80] sm:$0xff]
    %v6172 = vld [vmem:[%s6 + $0x88] sm:$0xff]
    %v6173 = vld [vmem:[%s6 + $0x90] sm:$0xff]
    %v6174 = vld [vmem:[%s6 + $0x98] sm:$0xff]
    %v6175 = vld [vmem:[%s6 + $0xa0] sm:$0xff]
    %v6176 = vld [vmem:[%s6 + $0xa8] sm:$0xff]
    %v6177 = vld [vmem:[%s6 + $0xb0] sm:$0xff]
    %v6178 = vld [vmem:[%s6 + $0xb8] sm:$0xff]
    %v6179 = vld [vmem:[%s6 + $0xc0] sm:$0xff]
    %v6180 = vld [vmem:[%s6 + $0xc8] sm:$0xff]
    %v6181 = vld [vmem:[%s6 + $0xd0] sm:$0xff]
    %v6182 = vld [vmem:[%s6 + $0xd8] sm:$0xff]
    %v6183 = vld [vmem:[%s6 + $0xe0] sm:$0xff]
    %v6184 = vld [vmem:[%s6 + $0xe8] sm:$0x1f]
    %v6186 = vsel %vm1677, %v6152, 0
    %v6189 = vsel %vm1677, %v6154, 0
    %v6192 = vsel %vm1684, %v6184, 0
    %6194 = vmatprep.subr.mxu0 0.0
    %6195 = vmatpush1.msra.mxu0 %v6155
    %6196 = vmatprep.subr.mxu0 0.0
    %6197 = vmatpush1.msra.mxu0 %v6156
    %6198 = vmatprep.subr.mxu0 0.0
    %6199 = vmatpush1.msra.mxu0 %v6157
    %6200 = vmatprep.subr.mxu0 0.0
    %6201 = vmatpush1.msra.mxu0 %v6158
    %6202 = vmatprep.subr.mxu0 0.0
    %6203 = vmatpush1.msra.mxu0 %v6159
    %6204 = vmatprep.subr.mxu0 0.0
    %6205 = vmatpush1.msra.mxu0 %v6160
    %6206 = vmatprep.subr.mxu0 0.0
    %6207 = vmatpush1.msra.mxu0 %v6161
    %6208 = vmatprep.subr.mxu0 0.0
    %6209 = vmatpush1.msra.mxu0 %v6162
    %6210 = vmatprep.subr.mxu0 0.0
    %6211 = vmatpush1.msra.mxu0 %v6163
    %6212 = vmatprep.subr.mxu0 0.0
    %6213 = vmatpush1.msra.mxu0 %v6164
    %6214 = vmatprep.subr.mxu0 0.0
    %6215 = vmatpush1.msra.mxu0 %v6165
    %6216 = vmatprep.subr.mxu0 0.0
    %6217 = vmatpush1.msra.mxu0 %v6166
    %6218 = vmatprep.subr.mxu0 0.0
    %6219 = vmatpush1.msra.mxu0 %v6167
    %6220 = vmatprep.subr.mxu0 0.0
    %6221 = vmatpush1.msra.mxu0 %v6168
    %6222 = vmatprep.subr.mxu0 0.0
    %6223 = vmatpush1.msra.mxu0 %v6169
    %6224 = vmatprep.subr.mxu0 0.0
    %6225 = vmatpush1.msra.mxu0 %v6170
    %6226 = vmatprep.subr.mxu0 0.0
    %6227 = vmatpush1.msra.mxu0 %v6171
    %6228 = vmatprep.subr.mxu0 0.0
    %6229 = vmatpush1.msra.mxu0 %v6172
    %6230 = vmatprep.subr.mxu0 0.0
    %6231 = vmatpush1.msra.mxu0 %v6173
    %6232 = vmatprep.subr.mxu0 0.0
    %6233 = vmatpush1.msra.mxu0 %v6174
    %6234 = vmatprep.subr.mxu0 0.0
    %6235 = vmatpush1.msra.mxu0 %v6175
    %6236 = vmatprep.subr.mxu0 0.0
    %6237 = vmatpush1.msra.mxu0 %v6176
    %6238 = vmatprep.subr.mxu0 0.0
    %6239 = vmatpush1.msra.mxu0 %v6177
    %6240 = vmatprep.subr.mxu0 0.0
    %6241 = vmatpush1.msra.mxu0 %v6178
    %6242 = vmatprep.subr.mxu0 0.0
    %6243 = vmatpush1.msra.mxu0 %v6179
    %6244 = vmatprep.subr.mxu0 0.0
    %6245 = vmatpush1.msra.mxu0 %v6180
    %6246 = vmatprep.subr.mxu0 0.0
    %6247 = vmatpush1.msra.mxu0 %v6181
    %6248 = vmatprep.subr.mxu0 0.0
    %6249 = vmatpush1.msra.mxu0 %v6182
    %6250 = vmatprep.subr.mxu0 0.0
    %6251 = vmatpush1.msra.mxu0 %v6183
    %6252 = vmatprep.subr.mxu0 0.0
    %6253 = vmatpush1.msra.mxu0 %v6192
    %6254 = vmatprep.subr.mxu0 0.0
    %6255 = vmatpush1.msra.mxu0 0.0
    %6256 = vmatprep.subr.mxu0 0.0
    %6257 = vmatpush1.msra.mxu0 0.0
    %6258 = vmatprep.mubr.f32.mxu0 %v6186
    %6259 = vmatmul.mubr.f32.gmra.mrb[0].mxu0 %v6151
    %v6260 = vpop.f32.mrb[0].mxu0
    %v6261 = vadd.f32 0.0, %v6260
    %v6262 = vpop.f32.mrb[0].mxu0
    %6263 = vmatprep.mubr.f32.mxu0 %v6189
    %6264 = vmatmul.mubr.f32.gmra.mrb[0].mxu0 %v6153
    %v6265 = vpop.f32.mrb[0].mxu0
    %v6266 = vadd.f32 0.0, %v6265
    %v6267 = vpop.f32.mrb[0].mxu0
    %6268 = vdwg.mxu0
    %6269 = vst [vmem:[#allocation2 + $0x60] sm:$0xff] %v6261
    %6270 = vst [vmem:[#allocation2 + $0x68] sm:$0xff] %v6266
    %v6271 = vmul.f32 %v824, %v868
    %v6272 = vmul.f32 %v826, %v872
    %v6273 = vmul.f32 %v830, %v868
    %v6274 = vmul.f32 %v832, %v872
    %v6275 = vmul.f32 %v836, %v868
    %v6276 = vmul.f32 %v838, %v872
    %v6277 = vmul.f32 %v842, %v868
    %v6278 = vmul.f32 %v844, %v872
    %v6279 = vmul.f32 %v824, %v893
    %v6280 = vmul.f32 %v826, %v897
    %v6281 = vmul.f32 %v830, %v893
    %v6282 = vmul.f32 %v832, %v897
    %v6283 = vmul.f32 %v836, %v893
    %v6284 = vmul.f32 %v838, %v897
    %v6285 = vmul.f32 %v842, %v893
    %v6286 = vmul.f32 %v844, %v897
    %6295 = vrot.lane.b32.xlu0 %v6279, 127
    %v6296 = vpop.permute.xlu0 %6295
    %6297 = vrot.lane.b32.xlu0 %v6280, 127
    %v6298 = vpop.permute.xlu0 %6297
    %6299 = vrot.lane.b32.xlu0 %v6281, 127
    %v6300 = vpop.permute.xlu0 %6299
    %6301 = vrot.lane.b32.xlu0 %v6282, 127
    %v6302 = vpop.permute.xlu0 %6301
    %6303 = vrot.lane.b32.xlu0 %v6283, 127
    %v6304 = vpop.permute.xlu0 %6303
    %6305 = vrot.lane.b32.xlu0 %v6284, 127
    %v6306 = vpop.permute.xlu0 %6305
    %6307 = vrot.lane.b32.xlu0 %v6285, 127
    %v6308 = vpop.permute.xlu0 %6307
    %6309 = vrot.lane.b32.xlu0 %v6286, 127
    %v6310 = vpop.permute.xlu0 %6309
    %v6311 = vsel %vm932, %v6296, %v6298
    %v6312 = vsel %vm932, %v6300, %v6302
    %v6313 = vsel %vm932, %v6304, %v6306
    %v6314 = vsel %vm932, %v6308, %v6310
    %v6323 = vadd.f32 %v6271, %v6311
    %v6324 = vadd.f32 %v6272, %v6298
    %v6325 = vadd.f32 %v6273, %v6312
    %v6326 = vadd.f32 %v6274, %v6302
    %v6327 = vadd.f32 %v6275, %v6313
    %v6328 = vadd.f32 %v6276, %v6306
    %v6329 = vadd.f32 %v6277, %v6314
    %v6330 = vadd.f32 %v6278, %v6310
    %v6331 = vmul.f32 %v824, %v963
    %v6332 = vmul.f32 %v826, %v967
    %v6333 = vmul.f32 %v830, %v963
    %v6334 = vmul.f32 %v832, %v967
    %v6335 = vmul.f32 %v836, %v963
    %v6336 = vmul.f32 %v838, %v967
    %v6337 = vmul.f32 %v842, %v963
    %v6338 = vmul.f32 %v844, %v967
    %6347 = vrot.lane.b32.xlu0 %v6331, 126
    %v6348 = vpop.permute.xlu0 %6347
    %6349 = vrot.lane.b32.xlu0 %v6332, 126
    %v6350 = vpop.permute.xlu0 %6349
    %6351 = vrot.lane.b32.xlu0 %v6333, 126
    %v6352 = vpop.permute.xlu0 %6351
    %6353 = vrot.lane.b32.xlu0 %v6334, 126
    %v6354 = vpop.permute.xlu0 %6353
    %6355 = vrot.lane.b32.xlu0 %v6335, 126
    %v6356 = vpop.permute.xlu0 %6355
    %6357 = vrot.lane.b32.xlu0 %v6336, 126
    %v6358 = vpop.permute.xlu0 %6357
    %6359 = vrot.lane.b32.xlu0 %v6337, 126
    %v6360 = vpop.permute.xlu0 %6359
    %6361 = vrot.lane.b32.xlu0 %v6338, 126
    %v6362 = vpop.permute.xlu0 %6361
    %v6363 = vsel %vm1002, %v6348, %v6350
    %v6364 = vsel %vm1002, %v6352, %v6354
    %v6365 = vsel %vm1002, %v6356, %v6358
    %v6366 = vsel %vm1002, %v6360, %v6362
    %v6375 = vadd.f32 %v6323, %v6363
    %v6376 = vadd.f32 %v6324, %v6350
    %v6377 = vadd.f32 %v6325, %v6364
    %v6378 = vadd.f32 %v6326, %v6354
    %v6379 = vadd.f32 %v6327, %v6365
    %v6380 = vadd.f32 %v6328, %v6358
    %v6381 = vadd.f32 %v6329, %v6366
    %v6382 = vadd.f32 %v6330, %v6362
    %v6383 = vmul.f32 %v824, %v1027
    %v6384 = vmul.f32 %v826, %v1031
    %v6385 = vmul.f32 %v830, %v1027
    %v6386 = vmul.f32 %v832, %v1031
    %v6387 = vmul.f32 %v836, %v1027
    %v6388 = vmul.f32 %v838, %v1031
    %v6389 = vmul.f32 %v842, %v1027
    %v6390 = vmul.f32 %v844, %v1031
    %v6399 = vrot.slane %v6383, 1
    %v6400 = vrot.slane %v6385, 1
    %v6401 = vsel %vm1050, %v6399, %v6400
    %v6402 = vrot.slane %v6384, 1
    %v6403 = vrot.slane %v6386, 1
    %v6404 = vsel %vm1050, %v6402, %v6403
    %v6405 = vrot.slane %v6387, 1
    %v6406 = vsel %vm1050, %v6400, %v6405
    %v6407 = vrot.slane %v6388, 1
    %v6408 = vsel %vm1050, %v6403, %v6407
    %v6409 = vrot.slane %v6389, 1
    %v6410 = vsel %vm1050, %v6405, %v6409
    %v6411 = vrot.slane %v6390, 1
    %v6412 = vsel %vm1050, %v6407, %v6411
    %v6421 = vadd.f32 %v6375, %v6401
    %v6422 = vadd.f32 %v6376, %v6404
    %v6423 = vadd.f32 %v6377, %v6406
    %v6424 = vadd.f32 %v6378, %v6408
    %v6425 = vadd.f32 %v6379, %v6410
    %v6426 = vadd.f32 %v6380, %v6412
    %v6427 = vadd.f32 %v6381, %v6409
    %v6428 = vadd.f32 %v6382, %v6411
    %v6429 = vmul.f32 %v824, %v1091
    %v6430 = vmul.f32 %v826, %v1094
    %v6431 = vmul.f32 %v830, %v1091
    %v6432 = vmul.f32 %v832, %v1094
    %v6433 = vmul.f32 %v836, %v1091
    %v6434 = vmul.f32 %v838, %v1094
    %v6435 = vmul.f32 %v842, %v1091
    %v6436 = vmul.f32 %v844, %v1094
    %v6445 = vrot.slane %v6429, 1
    %v6446 = vrot.slane %v6431, 1
    %v6447 = vsel %vm1050, %v6445, %v6446
    %v6448 = vrot.slane %v6430, 1
    %v6449 = vrot.slane %v6432, 1
    %v6450 = vsel %vm1050, %v6448, %v6449
    %v6451 = vrot.slane %v6433, 1
    %v6452 = vsel %vm1050, %v6446, %v6451
    %v6453 = vrot.slane %v6434, 1
    %v6454 = vsel %vm1050, %v6449, %v6453
    %v6455 = vrot.slane %v6435, 1
    %v6456 = vsel %vm1050, %v6451, %v6455
    %v6457 = vrot.slane %v6436, 1
    %v6458 = vsel %vm1050, %v6453, %v6457
    %6459 = vrot.lane.b32.xlu0 %v6447, 127
    %v6460 = vpop.permute.xlu0 %6459
    %6461 = vrot.lane.b32.xlu0 %v6450, 127
    %v6462 = vpop.permute.xlu0 %6461
    %6463 = vrot.lane.b32.xlu0 %v6452, 127
    %v6464 = vpop.permute.xlu0 %6463
    %6465 = vrot.lane.b32.xlu0 %v6454, 127
    %v6466 = vpop.permute.xlu0 %6465
    %6467 = vrot.lane.b32.xlu0 %v6456, 127
    %v6468 = vpop.permute.xlu0 %6467
    %6469 = vrot.lane.b32.xlu0 %v6458, 127
    %v6470 = vpop.permute.xlu0 %6469
    %6471 = vrot.lane.b32.xlu0 %v6455, 127
    %v6472 = vpop.permute.xlu0 %6471
    %6473 = vrot.lane.b32.xlu0 %v6457, 127
    %v6474 = vpop.permute.xlu0 %6473
    %v6475 = vsel %vm932, %v6460, %v6462
    %v6476 = vsel %vm932, %v6464, %v6466
    %v6477 = vsel %vm932, %v6468, %v6470
    %v6478 = vsel %vm932, %v6472, %v6474
    %v6487 = vadd.f32 %v6421, %v6475
    %v6488 = vadd.f32 %v6422, %v6462
    %v6489 = vadd.f32 %v6423, %v6476
    %v6490 = vadd.f32 %v6424, %v6466
    %v6491 = vadd.f32 %v6425, %v6477
    %v6492 = vadd.f32 %v6426, %v6470
    %v6493 = vadd.f32 %v6427, %v6478
    %v6494 = vadd.f32 %v6428, %v6474
    %v6495 = vmul.f32 %v824, %v1173
    %v6496 = vmul.f32 %v826, %v1176
    %v6497 = vmul.f32 %v830, %v1173
    %v6498 = vmul.f32 %v832, %v1176
    %v6499 = vmul.f32 %v836, %v1173
    %v6500 = vmul.f32 %v838, %v1176
    %v6501 = vmul.f32 %v842, %v1173
    %v6502 = vmul.f32 %v844, %v1176
    %v6511 = vrot.slane %v6495, 1
    %v6512 = vrot.slane %v6497, 1
    %v6513 = vsel %vm1050, %v6511, %v6512
    %v6514 = vrot.slane %v6496, 1
    %v6515 = vrot.slane %v6498, 1
    %v6516 = vsel %vm1050, %v6514, %v6515
    %v6517 = vrot.slane %v6499, 1
    %v6518 = vsel %vm1050, %v6512, %v6517
    %v6519 = vrot.slane %v6500, 1
    %v6520 = vsel %vm1050, %v6515, %v6519
    %v6521 = vrot.slane %v6501, 1
    %v6522 = vsel %vm1050, %v6517, %v6521
    %v6523 = vrot.slane %v6502, 1
    %v6524 = vsel %vm1050, %v6519, %v6523
    %6525 = vrot.lane.b32.xlu0 %v6513, 126
    %v6526 = vpop.permute.xlu0 %6525
    %6527 = vrot.lane.b32.xlu0 %v6516, 126
    %v6528 = vpop.permute.xlu0 %6527
    %6529 = vrot.lane.b32.xlu0 %v6518, 126
    %v6530 = vpop.permute.xlu0 %6529
    %6531 = vrot.lane.b32.xlu0 %v6520, 126
    %v6532 = vpop.permute.xlu0 %6531
    %6533 = vrot.lane.b32.xlu0 %v6522, 126
    %v6534 = vpop.permute.xlu0 %6533
    %6535 = vrot.lane.b32.xlu0 %v6524, 126
    %v6536 = vpop.permute.xlu0 %6535
    %6537 = vrot.lane.b32.xlu0 %v6521, 126
    %v6538 = vpop.permute.xlu0 %6537
    %6539 = vrot.lane.b32.xlu0 %v6523, 126
    %v6540 = vpop.permute.xlu0 %6539
    %v6541 = vsel %vm1002, %v6526, %v6528
    %v6542 = vsel %vm1002, %v6530, %v6532
    %v6543 = vsel %vm1002, %v6534, %v6536
    %v6544 = vsel %vm1002, %v6538, %v6540
    %v6553 = vadd.f32 %v6487, %v6541
    %v6554 = vadd.f32 %v6488, %v6528
    %v6555 = vadd.f32 %v6489, %v6542
    %v6556 = vadd.f32 %v6490, %v6532
    %v6557 = vadd.f32 %v6491, %v6543
    %v6558 = vadd.f32 %v6492, %v6536
    %v6559 = vadd.f32 %v6493, %v6544
    %v6560 = vadd.f32 %v6494, %v6540
    %v6561 = vmul.f32 %v824, %v1249
    %v6562 = vmul.f32 %v826, %v1253
    %v6563 = vmul.f32 %v830, %v1249
    %v6564 = vmul.f32 %v832, %v1253
    %v6565 = vmul.f32 %v836, %v1249
    %v6566 = vmul.f32 %v838, %v1253
    %v6567 = vmul.f32 %v842, %v1249
    %v6568 = vmul.f32 %v844, %v1253
    %v6577 = vrot.slane %v6561, 2
    %v6578 = vrot.slane %v6563, 2
    %v6579 = vsel %vm1272, %v6577, %v6578
    %v6580 = vrot.slane %v6562, 2
    %v6581 = vrot.slane %v6564, 2
    %v6582 = vsel %vm1272, %v6580, %v6581
    %v6583 = vrot.slane %v6565, 2
    %v6584 = vsel %vm1272, %v6578, %v6583
    %v6585 = vrot.slane %v6566, 2
    %v6586 = vsel %vm1272, %v6581, %v6585
    %v6587 = vrot.slane %v6567, 2
    %v6588 = vsel %vm1272, %v6583, %v6587
    %v6589 = vrot.slane %v6568, 2
    %v6590 = vsel %vm1272, %v6585, %v6589
    %v6599 = vadd.f32 %v6553, %v6579
    %v6600 = vadd.f32 %v6554, %v6582
    %v6601 = vadd.f32 %v6555, %v6584
    %v6602 = vadd.f32 %v6556, %v6586
    %v6603 = vadd.f32 %v6557, %v6588
    %v6604 = vadd.f32 %v6558, %v6590
    %v6605 = vadd.f32 %v6559, %v6587
    %v6606 = vadd.f32 %v6560, %v6589
    %v6607 = vmul.f32 %v824, %v1313
    %v6608 = vmul.f32 %v826, %v1316
    %v6609 = vmul.f32 %v830, %v1313
    %v6610 = vmul.f32 %v832, %v1316
    %v6611 = vmul.f32 %v836, %v1313
    %v6612 = vmul.f32 %v838, %v1316
    %v6613 = vmul.f32 %v842, %v1313
    %v6614 = vmul.f32 %v844, %v1316
    %v6623 = vrot.slane %v6607, 2
    %v6624 = vrot.slane %v6609, 2
    %v6625 = vsel %vm1272, %v6623, %v6624
    %v6626 = vrot.slane %v6608, 2
    %v6627 = vrot.slane %v6610, 2
    %v6628 = vsel %vm1272, %v6626, %v6627
    %v6629 = vrot.slane %v6611, 2
    %v6630 = vsel %vm1272, %v6624, %v6629
    %v6631 = vrot.slane %v6612, 2
    %v6632 = vsel %vm1272, %v6627, %v6631
    %v6633 = vrot.slane %v6613, 2
    %v6634 = vsel %vm1272, %v6629, %v6633
    %v6635 = vrot.slane %v6614, 2
    %v6636 = vsel %vm1272, %v6631, %v6635
    %6637 = vrot.lane.b32.xlu0 %v6625, 127
    %v6638 = vpop.permute.xlu0 %6637
    %6639 = vrot.lane.b32.xlu0 %v6628, 127
    %v6640 = vpop.permute.xlu0 %6639
    %6641 = vrot.lane.b32.xlu0 %v6630, 127
    %v6642 = vpop.permute.xlu0 %6641
    %6643 = vrot.lane.b32.xlu0 %v6632, 127
    %v6644 = vpop.permute.xlu0 %6643
    %6645 = vrot.lane.b32.xlu0 %v6634, 127
    %v6646 = vpop.permute.xlu0 %6645
    %6647 = vrot.lane.b32.xlu0 %v6636, 127
    %v6648 = vpop.permute.xlu0 %6647
    %6649 = vrot.lane.b32.xlu0 %v6633, 127
    %v6650 = vpop.permute.xlu0 %6649
    %6651 = vrot.lane.b32.xlu0 %v6635, 127
    %v6652 = vpop.permute.xlu0 %6651
    %v6653 = vsel %vm932, %v6638, %v6640
    %v6654 = vsel %vm932, %v6642, %v6644
    %v6655 = vsel %vm932, %v6646, %v6648
    %v6656 = vsel %vm932, %v6650, %v6652
    %v6665 = vadd.f32 %v6599, %v6653
    %v6666 = vadd.f32 %v6600, %v6640
    %v6667 = vadd.f32 %v6601, %v6654
    %v6668 = vadd.f32 %v6602, %v6644
    %v6669 = vadd.f32 %v6603, %v6655
    %v6670 = vadd.f32 %v6604, %v6648
    %v6671 = vadd.f32 %v6605, %v6656
    %v6672 = vadd.f32 %v6606, %v6652
    %v6673 = vmul.f32 %v824, %v1395
    %v6674 = vmul.f32 %v826, %v1398
    %v6675 = vmul.f32 %v830, %v1395
    %v6676 = vmul.f32 %v832, %v1398
    %v6677 = vmul.f32 %v836, %v1395
    %v6678 = vmul.f32 %v838, %v1398
    %v6679 = vmul.f32 %v842, %v1395
    %v6680 = vmul.f32 %v844, %v1398
    %v6689 = vrot.slane %v6673, 2
    %v6690 = vrot.slane %v6675, 2
    %v6691 = vsel %vm1272, %v6689, %v6690
    %v6692 = vrot.slane %v6674, 2
    %v6693 = vrot.slane %v6676, 2
    %v6694 = vsel %vm1272, %v6692, %v6693
    %v6695 = vrot.slane %v6677, 2
    %v6696 = vsel %vm1272, %v6690, %v6695
    %v6697 = vrot.slane %v6678, 2
    %v6698 = vsel %vm1272, %v6693, %v6697
    %v6699 = vrot.slane %v6679, 2
    %v6700 = vsel %vm1272, %v6695, %v6699
    %v6701 = vrot.slane %v6680, 2
    %v6702 = vsel %vm1272, %v6697, %v6701
    %6703 = vrot.lane.b32.xlu0 %v6691, 126
    %v6704 = vpop.permute.xlu0 %6703
    %6705 = vrot.lane.b32.xlu0 %v6694, 126
    %v6706 = vpop.permute.xlu0 %6705
    %6707 = vrot.lane.b32.xlu0 %v6696, 126
    %v6708 = vpop.permute.xlu0 %6707
    %6709 = vrot.lane.b32.xlu0 %v6698, 126
    %v6710 = vpop.permute.xlu0 %6709
    %6711 = vrot.lane.b32.xlu0 %v6700, 126
    %v6712 = vpop.permute.xlu0 %6711
    %6713 = vrot.lane.b32.xlu0 %v6702, 126
    %v6714 = vpop.permute.xlu0 %6713
    %6715 = vrot.lane.b32.xlu0 %v6699, 126
    %v6716 = vpop.permute.xlu0 %6715
    %6717 = vrot.lane.b32.xlu0 %v6701, 126
    %v6718 = vpop.permute.xlu0 %6717
    %v6719 = vsel %vm1002, %v6704, %v6706
    %v6720 = vsel %vm1002, %v6708, %v6710
    %v6721 = vsel %vm1002, %v6712, %v6714
    %v6722 = vsel %vm1002, %v6716, %v6718
    %v6731 = vadd.f32 %v6665, %v6719
    %v6732 = vadd.f32 %v6666, %v6706
    %v6733 = vadd.f32 %v6667, %v6720
    %v6734 = vadd.f32 %v6668, %v6710
    %v6735 = vadd.f32 %v6669, %v6721
    %v6736 = vadd.f32 %v6670, %v6714
    %v6737 = vadd.f32 %v6671, %v6722
    %v6738 = vadd.f32 %v6672, %v6718
    %v6739 = vadd.f32 %v6731, %v1471
    %v6740 = vadd.f32 %v6732, %v1475
    %v6741 = vadd.f32 %v6733, %v1471
    %v6742 = vadd.f32 %v6734, %v1475
    %v6743 = vadd.f32 %v6735, %v1471
    %v6744 = vadd.f32 %v6736, %v1475
    %v6745 = vadd.f32 %v6737, %v1471
    %v6746 = vadd.f32 %v6738, %v1475
    %v6747 = vmax.f32 %v6739, 0.0
    %v6748 = vmax.f32 %v6740, 0.0
    %v6749 = vmax.f32 %v6741, 0.0
    %v6750 = vmax.f32 %v6742, 0.0
    %v6751 = vmax.f32 %v6743, 0.0
    %v6752 = vmax.f32 %v6744, 0.0
    %v6753 = vmax.f32 %v6745, 0.0
    %v6754 = vmax.f32 %v6746, 0.0
    %v6763 = vrot.slane %v6747, 1
    %v6764 = vrot.slane %v6749, 1
    %v6765 = vsel %vm1050, %v6763, %v6764
    %v6766 = vrot.slane %v6748, 1
    %v6767 = vrot.slane %v6750, 1
    %v6768 = vsel %vm1050, %v6766, %v6767
    %v6769 = vrot.slane %v6751, 1
    %v6770 = vsel %vm1050, %v6764, %v6769
    %v6771 = vrot.slane %v6752, 1
    %v6772 = vsel %vm1050, %v6767, %v6771
    %v6773 = vrot.slane %v6753, 1
    %v6774 = vsel %vm1050, %v6769, %v6773
    %v6775 = vrot.slane %v6754, 1
    %v6776 = vsel %vm1050, %v6771, %v6775
    %v6785 = vmax.f32 %v6747, %v6765
    %v6786 = vmax.f32 %v6748, %v6768
    %v6787 = vmax.f32 %v6749, %v6770
    %v6788 = vmax.f32 %v6750, %v6772
    %v6789 = vmax.f32 %v6751, %v6774
    %v6790 = vmax.f32 %v6752, %v6776
    %v6791 = vmax.f32 %v6753, %v6773
    %v6792 = vmax.f32 %v6754, %v6775
    %v6793 = vld [vmem:[%s5] sm:$0xff]
    %v6794 = vld [vmem:[%s5 + $0x8] sm:$0xff]
    %v6796 = vsel %vm1534, %v6793, 0
    %v6799 = vsel %vm1534, %v6794, 0
    %v6802 = vsel %vm1541, %v6791, 0
    %v6805 = vsel %vm1541, %v6792, 0
    %6807 = vmatprep.subr.mxu0 %v6786
    %6808 = vmatpush1.msra.mxu0 %v6785
    %6809 = vmatprep.subr.mxu0 %v6788
    %6810 = vmatpush1.msra.mxu0 %v6787
    %6811 = vmatprep.subr.mxu0 %v6790
    %6812 = vmatpush1.msra.mxu0 %v6789
    %6813 = vmatprep.subr.mxu0 %v6805
    %6814 = vmatpush1.msra.mxu0 %v6802
    %6815 = vmatprep.subr.mxu0 0.0
    %6816 = vmatpush1.msra.mxu0 0.0
    %6817 = vmatprep.subr.mxu0 0.0
    %6818 = vmatpush1.msra.mxu0 0.0
    %6819 = vmatprep.subr.mxu0 0.0
    %6820 = vmatpush1.msra.mxu0 0.0
    %6821 = vmatprep.subr.mxu0 0.0
    %6822 = vmatpush1.msra.mxu0 0.0
    %6823 = vmatprep.subr.mxu0 0.0
    %6824 = vmatpush1.msra.mxu0 0.0
    %6825 = vmatprep.subr.mxu0 0.0
    %6826 = vmatpush1.msra.mxu0 0.0
    %6827 = vmatprep.subr.mxu0 0.0
    %6828 = vmatpush1.msra.mxu0 0.0
    %6829 = vmatprep.subr.mxu0 0.0
    %6830 = vmatpush1.msra.mxu0 0.0
    %6831 = vmatprep.subr.mxu0 0.0
    %6832 = vmatpush1.msra.mxu0 0.0
    %6833 = vmatprep.subr.mxu0 0.0
    %6834 = vmatpush1.msra.mxu0 0.0
    %6835 = vmatprep.subr.mxu0 0.0
    %6836 = vmatpush1.msra.mxu0 0.0
    %6837 = vmatprep.subr.mxu0 0.0
    %6838 = vmatpush1.msra.mxu0 0.0
    %6839 = vmatprep.subr.mxu0 0.0
    %6840 = vmatpush1.msra.mxu0 0.0
    %6841 = vmatprep.subr.mxu0 0.0
    %6842 = vmatpush1.msra.mxu0 0.0
    %6843 = vmatprep.subr.mxu0 0.0
    %6844 = vmatpush1.msra.mxu0 0.0
    %6845 = vmatprep.subr.mxu0 0.0
    %6846 = vmatpush1.msra.mxu0 0.0
    %6847 = vmatprep.subr.mxu0 0.0
    %6848 = vmatpush1.msra.mxu0 0.0
    %6849 = vmatprep.subr.mxu0 0.0
    %6850 = vmatpush1.msra.mxu0 0.0
    %6851 = vmatprep.subr.mxu0 0.0
    %6852 = vmatpush1.msra.mxu0 0.0
    %6853 = vmatprep.subr.mxu0 0.0
    %6854 = vmatpush1.msra.mxu0 0.0
    %6855 = vmatprep.subr.mxu0 0.0
    %6856 = vmatpush1.msra.mxu0 0.0
    %6857 = vmatprep.subr.mxu0 0.0
    %6858 = vmatpush1.msra.mxu0 0.0
    %6859 = vmatprep.subr.mxu0 0.0
    %6860 = vmatpush1.msra.mxu0 0.0
    %6861 = vmatprep.subr.mxu0 0.0
    %6862 = vmatpush1.msra.mxu0 0.0
    %6863 = vmatprep.subr.mxu0 0.0
    %6864 = vmatpush1.msra.mxu0 0.0
    %6865 = vmatprep.subr.mxu0 0.0
    %6866 = vmatpush1.msra.mxu0 0.0
    %6867 = vmatprep.subr.mxu0 0.0
    %6868 = vmatpush1.msra.mxu0 0.0
    %6869 = vmatprep.subr.mxu0 0.0
    %6870 = vmatpush1.msra.mxu0 0.0
    %6871 = vmatprep.mubr.f32.mxu0 0.0
    %6872 = vmatmul.mubr.f32.gmra.mrb[0].mxu0 %v6796
    %v6873 = vpop.f32.mrb[0].mxu0
    %v6874 = vadd.f32 0.0, %v6873
    %v6875 = vpop.f32.mrb[0].mxu0
    %v6876 = vadd.f32 0.0, %v6875
    %6877 = vmatprep.mubr.f32.mxu0 0.0
    %6878 = vmatmul.mubr.f32.gmra.mrb[0].mxu0 %v6799
    %v6879 = vpop.f32.mrb[0].mxu0
    %v6880 = vadd.f32 0.0, %v6879
    %v6881 = vpop.f32.mrb[0].mxu0
    %v6882 = vadd.f32 0.0, %v6881
    %6883 = vdwg.mxu0
    %6888 = vrot.lane.b32.xlu0 %v6874, 127
    %v6889 = vpop.permute.xlu0 %6888
    %6890 = vrot.lane.b32.xlu0 %v6876, 127
    %v6891 = vpop.permute.xlu0 %6890
    %6892 = vrot.lane.b32.xlu0 %v6880, 127
    %v6893 = vpop.permute.xlu0 %6892
    %6894 = vrot.lane.b32.xlu0 %v6882, 127
    %v6895 = vpop.permute.xlu0 %6894
    %v6896 = vsel %vm932, %v6889, %v6891
    %v6897 = vsel %vm932, %v6893, %v6895
    %v6902 = vmax.f32 %v6874, %v6896
    %v6903 = vmax.f32 %v6876, %v6891
    %v6904 = vmax.f32 %v6880, %v6897
    %v6905 = vmax.f32 %v6882, %v6895
    %v6906 = vld [vmem:[%s6] sm:$0xff]
    %v6907 = vld [vmem:[%s6 + $0x8] sm:$0xff]
    %v6908 = vld [vmem:[%s6 + $0x10] sm:$0xff]
    %v6909 = vld [vmem:[%s6 + $0x18] sm:$0xff]
    %v6910 = vld [vmem:[%s6 + $0x20] sm:$0xff]
    %v6911 = vld [vmem:[%s6 + $0x28] sm:$0xff]
    %v6912 = vld [vmem:[%s6 + $0x30] sm:$0xff]
    %v6913 = vld [vmem:[%s6 + $0x38] sm:$0xff]
    %v6914 = vld [vmem:[%s6 + $0x40] sm:$0xff]
    %v6915 = vld [vmem:[%s6 + $0x48] sm:$0xff]
    %v6916 = vld [vmem:[%s6 + $0x50] sm:$0xff]
    %v6917 = vld [vmem:[%s6 + $0x58] sm:$0xff]
    %v6918 = vld [vmem:[%s6 + $0x60] sm:$0xff]
    %v6919 = vld [vmem:[%s6 + $0x68] sm:$0xff]
    %v6920 = vld [vmem:[%s6 + $0x70] sm:$0xff]
    %v6921 = vld [vmem:[%s6 + $0x78] sm:$0xff]
    %v6922 = vld [vmem:[%s6 + $0x80] sm:$0xff]
    %v6923 = vld [vmem:[%s6 + $0x88] sm:$0xff]
    %v6924 = vld [vmem:[%s6 + $0x90] sm:$0xff]
    %v6925 = vld [vmem:[%s6 + $0x98] sm:$0xff]
    %v6926 = vld [vmem:[%s6 + $0xa0] sm:$0xff]
    %v6927 = vld [vmem:[%s6 + $0xa8] sm:$0xff]
    %v6928 = vld [vmem:[%s6 + $0xb0] sm:$0xff]
    %v6929 = vld [vmem:[%s6 + $0xb8] sm:$0xff]
    %v6930 = vld [vmem:[%s6 + $0xc0] sm:$0xff]
    %v6931 = vld [vmem:[%s6 + $0xc8] sm:$0xff]
    %v6932 = vld [vmem:[%s6 + $0xd0] sm:$0xff]
    %v6933 = vld [vmem:[%s6 + $0xd8] sm:$0xff]
    %v6934 = vld [vmem:[%s6 + $0xe0] sm:$0xff]
    %v6935 = vld [vmem:[%s6 + $0xe8] sm:$0x1f]
    %v6937 = vsel %vm1677, %v6903, 0
    %v6940 = vsel %vm1677, %v6905, 0
    %v6943 = vsel %vm1684, %v6935, 0
    %6945 = vmatprep.subr.mxu0 0.0
    %6946 = vmatpush1.msra.mxu0 %v6906
    %6947 = vmatprep.subr.mxu0 0.0
    %6948 = vmatpush1.msra.mxu0 %v6907
    %6949 = vmatprep.subr.mxu0 0.0
    %6950 = vmatpush1.msra.mxu0 %v6908
    %6951 = vmatprep.subr.mxu0 0.0
    %6952 = vmatpush1.msra.mxu0 %v6909
    %6953 = vmatprep.subr.mxu0 0.0
    %6954 = vmatpush1.msra.mxu0 %v6910
    %6955 = vmatprep.subr.mxu0 0.0
    %6956 = vmatpush1.msra.mxu0 %v6911
    %6957 = vmatprep.subr.mxu0 0.0
    %6958 = vmatpush1.msra.mxu0 %v6912
    %6959 = vmatprep.subr.mxu0 0.0
    %6960 = vmatpush1.msra.mxu0 %v6913
    %6961 = vmatprep.subr.mxu0 0.0
    %6962 = vmatpush1.msra.mxu0 %v6914
    %6963 = vmatprep.subr.mxu0 0.0
    %6964 = vmatpush1.msra.mxu0 %v6915
    %6965 = vmatprep.subr.mxu0 0.0
    %6966 = vmatpush1.msra.mxu0 %v6916
    %6967 = vmatprep.subr.mxu0 0.0
    %6968 = vmatpush1.msra.mxu0 %v6917
    %6969 = vmatprep.subr.mxu0 0.0
    %6970 = vmatpush1.msra.mxu0 %v6918
    %6971 = vmatprep.subr.mxu0 0.0
    %6972 = vmatpush1.msra.mxu0 %v6919
    %6973 = vmatprep.subr.mxu0 0.0
    %6974 = vmatpush1.msra.mxu0 %v6920
    %6975 = vmatprep.subr.mxu0 0.0
    %6976 = vmatpush1.msra.mxu0 %v6921
    %6977 = vmatprep.subr.mxu0 0.0
    %6978 = vmatpush1.msra.mxu0 %v6922
    %6979 = vmatprep.subr.mxu0 0.0
    %6980 = vmatpush1.msra.mxu0 %v6923
    %6981 = vmatprep.subr.mxu0 0.0
    %6982 = vmatpush1.msra.mxu0 %v6924
    %6983 = vmatprep.subr.mxu0 0.0
    %6984 = vmatpush1.msra.mxu0 %v6925
    %6985 = vmatprep.subr.mxu0 0.0
    %6986 = vmatpush1.msra.mxu0 %v6926
    %6987 = vmatprep.subr.mxu0 0.0
    %6988 = vmatpush1.msra.mxu0 %v6927
    %6989 = vmatprep.subr.mxu0 0.0
    %6990 = vmatpush1.msra.mxu0 %v6928
    %6991 = vmatprep.subr.mxu0 0.0
    %6992 = vmatpush1.msra.mxu0 %v6929
    %6993 = vmatprep.subr.mxu0 0.0
    %6994 = vmatpush1.msra.mxu0 %v6930
    %6995 = vmatprep.subr.mxu0 0.0
    %6996 = vmatpush1.msra.mxu0 %v6931
    %6997 = vmatprep.subr.mxu0 0.0
    %6998 = vmatpush1.msra.mxu0 %v6932
    %6999 = vmatprep.subr.mxu0 0.0
    %7000 = vmatpush1.msra.mxu0 %v6933
    %7001 = vmatprep.subr.mxu0 0.0
    %7002 = vmatpush1.msra.mxu0 %v6934
    %7003 = vmatprep.subr.mxu0 0.0
    %7004 = vmatpush1.msra.mxu0 %v6943
    %7005 = vmatprep.subr.mxu0 0.0
    %7006 = vmatpush1.msra.mxu0 0.0
    %7007 = vmatprep.subr.mxu0 0.0
    %7008 = vmatpush1.msra.mxu0 0.0
    %7009 = vmatprep.mubr.f32.mxu0 %v6937
    %7010 = vmatmul.mubr.f32.gmra.mrb[0].mxu0 %v6902
    %v7011 = vpop.f32.mrb[0].mxu0
    %v7012 = vadd.f32 0.0, %v7011
    %v7013 = vpop.f32.mrb[0].mxu0
    %7014 = vmatprep.mubr.f32.mxu0 %v6940
    %7015 = vmatmul.mubr.f32.gmra.mrb[0].mxu0 %v6904
    %v7016 = vpop.f32.mrb[0].mxu0
    %v7017 = vadd.f32 0.0, %v7016
    %v7018 = vpop.f32.mrb[0].mxu0
    %7019 = vdwg.mxu0
    %7020 = vst [vmem:[#allocation2 + $0x70] sm:$0xff] %v7012
    %7021 = vst [vmem:[#allocation2 + $0x78] sm:$0xff] %v7017
    %v7022 = vld [vmem:[#allocation2] sm:$0xff]
    %v7023 = vld [vmem:[#allocation2 + $0x8] sm:$0xff]
    %v7024 = vld [vmem:[#allocation2 + $0x10] sm:$0xff]
    %v7025 = vld [vmem:[#allocation2 + $0x18] sm:$0xff]
    %v7026 = vld [vmem:[#allocation2 + $0x20] sm:$0xff]
    %v7027 = vld [vmem:[#allocation2 + $0x28] sm:$0xff]
    %v7028 = vld [vmem:[#allocation2 + $0x30] sm:$0xff]
    %v7029 = vld [vmem:[#allocation2 + $0x38] sm:$0xff]
    %v7030 = vld [vmem:[#allocation2 + $0x40] sm:$0xff]
    %v7031 = vld [vmem:[#allocation2 + $0x48] sm:$0xff]
    %v7032 = vld [vmem:[#allocation2 + $0x50] sm:$0xff]
    %v7033 = vld [vmem:[#allocation2 + $0x58] sm:$0xff]
    %v7034 = vld [vmem:[#allocation2 + $0x60] sm:$0xff]
    %v7035 = vld [vmem:[#allocation2 + $0x68] sm:$0xff]
    %v7036 = vld [vmem:[#allocation2 + $0x70] sm:$0xff]
    %v7037 = vld [vmem:[#allocation2 + $0x78] sm:$0xff]
    %v7038 = vld [vmem:[%s7] sm:$0xff]
    %7039 = vmatprep.subr.mxu0 0.0
    %7040 = vmatpush1.msra.mxu0 %v7022
    %7041 = vmatprep.subr.mxu0 0.0
    %7042 = vmatpush1.msra.mxu0 %v7023
    %7043 = vmatprep.subr.mxu0 0.0
    %7044 = vmatpush1.msra.mxu0 %v7024
    %7045 = vmatprep.subr.mxu0 0.0
    %7046 = vmatpush1.msra.mxu0 %v7025
    %7047 = vmatprep.subr.mxu0 0.0
    %7048 = vmatpush1.msra.mxu0 %v7026
    %7049 = vmatprep.subr.mxu0 0.0
    %7050 = vmatpush1.msra.mxu0 %v7027
    %7051 = vmatprep.subr.mxu0 0.0
    %7052 = vmatpush1.msra.mxu0 %v7028
    %7053 = vmatprep.subr.mxu0 0.0
    %7054 = vmatpush1.msra.mxu0 %v7029
    %7055 = vmatprep.subr.mxu0 0.0
    %7056 = vmatpush1.msra.mxu0 %v7030
    %7057 = vmatprep.subr.mxu0 0.0
    %7058 = vmatpush1.msra.mxu0 %v7031
    %7059 = vmatprep.subr.mxu0 0.0
    %7060 = vmatpush1.msra.mxu0 %v7032
    %7061 = vmatprep.subr.mxu0 0.0
    %7062 = vmatpush1.msra.mxu0 %v7033
    %7063 = vmatprep.subr.mxu0 0.0
    %7064 = vmatpush1.msra.mxu0 %v7034
    %7065 = vmatprep.subr.mxu0 0.0
    %7066 = vmatpush1.msra.mxu0 %v7035
    %7067 = vmatprep.subr.mxu0 0.0
    %7068 = vmatpush1.msra.mxu0 %v7036
    %7069 = vmatprep.subr.mxu0 0.0
    %7070 = vmatpush1.msra.mxu0 %v7037
    %7071 = vmatprep.subr.mxu0 0.0
    %7072 = vmatpush1.msra.mxu0 0.0
    %7073 = vmatprep.subr.mxu0 0.0
    %7074 = vmatpush1.msra.mxu0 0.0
    %7075 = vmatprep.subr.mxu0 0.0
    %7076 = vmatpush1.msra.mxu0 0.0
    %7077 = vmatprep.subr.mxu0 0.0
    %7078 = vmatpush1.msra.mxu0 0.0
    %7079 = vmatprep.subr.mxu0 0.0
    %7080 = vmatpush1.msra.mxu0 0.0
    %7081 = vmatprep.subr.mxu0 0.0
    %7082 = vmatpush1.msra.mxu0 0.0
    %7083 = vmatprep.subr.mxu0 0.0
    %7084 = vmatpush1.msra.mxu0 0.0
    %7085 = vmatprep.subr.mxu0 0.0
    %7086 = vmatpush1.msra.mxu0 0.0
    %7087 = vmatprep.subr.mxu0 0.0
    %7088 = vmatpush1.msra.mxu0 0.0
    %7089 = vmatprep.subr.mxu0 0.0
    %7090 = vmatpush1.msra.mxu0 0.0
    %7091 = vmatprep.subr.mxu0 0.0
    %7092 = vmatpush1.msra.mxu0 0.0
    %7093 = vmatprep.subr.mxu0 0.0
    %7094 = vmatpush1.msra.mxu0 0.0
    %7095 = vmatprep.subr.mxu0 0.0
    %7096 = vmatpush1.msra.mxu0 0.0
    %7097 = vmatprep.subr.mxu0 0.0
    %7098 = vmatpush1.msra.mxu0 0.0
    %7099 = vmatprep.subr.mxu0 0.0
    %7100 = vmatpush1.msra.mxu0 0.0
    %7101 = vmatprep.subr.mxu0 0.0
    %7102 = vmatpush1.msra.mxu0 0.0
    %7103 = vmatprep.mubr.f32.mxu0 0.0
    %7104 = vmatmul.mubr.f32.gmra.mrb[0].mxu0 %v7038
    %v7105 = vpop.f32.mrb[0].mxu0
    %v7106 = vadd.f32 0.0, %v7105
    %v7107 = vpop.f32.mrb[0].mxu0
    %7108 = vdwg.mxu0
    %7109 = vst [vmem:[#allocation3] sm:$0xff] %v7106
    %v7110 = vld [vmem:[%s7 + $0x8] sm:$0xff]
    %7111 = vmatprep.subr.mxu0 0.0
    %7112 = vmatpush1.msra.mxu0 %v7022
    %7113 = vmatprep.subr.mxu0 0.0
    %7114 = vmatpush1.msra.mxu0 %v7023
    %7115 = vmatprep.subr.mxu0 0.0
    %7116 = vmatpush1.msra.mxu0 %v7024
    %7117 = vmatprep.subr.mxu0 0.0
    %7118 = vmatpush1.msra.mxu0 %v7025
    %7119 = vmatprep.subr.mxu0 0.0
    %7120 = vmatpush1.msra.mxu0 %v7026
    %7121 = vmatprep.subr.mxu0 0.0
    %7122 = vmatpush1.msra.mxu0 %v7027
    %7123 = vmatprep.subr.mxu0 0.0
    %7124 = vmatpush1.msra.mxu0 %v7028
    %7125 = vmatprep.subr.mxu0 0.0
    %7126 = vmatpush1.msra.mxu0 %v7029
    %7127 = vmatprep.subr.mxu0 0.0
    %7128 = vmatpush1.msra.mxu0 %v7030
    %7129 = vmatprep.subr.mxu0 0.0
    %7130 = vmatpush1.msra.mxu0 %v7031
    %7131 = vmatprep.subr.mxu0 0.0
    %7132 = vmatpush1.msra.mxu0 %v7032
    %7133 = vmatprep.subr.mxu0 0.0
    %7134 = vmatpush1.msra.mxu0 %v7033
    %7135 = vmatprep.subr.mxu0 0.0
    %7136 = vmatpush1.msra.mxu0 %v7034
    %7137 = vmatprep.subr.mxu0 0.0
    %7138 = vmatpush1.msra.mxu0 %v7035
    %7139 = vmatprep.subr.mxu0 0.0
    %7140 = vmatpush1.msra.mxu0 %v7036
    %7141 = vmatprep.subr.mxu0 0.0
    %7142 = vmatpush1.msra.mxu0 %v7037
    %7143 = vmatprep.subr.mxu0 0.0
    %7144 = vmatpush1.msra.mxu0 0.0
    %7145 = vmatprep.subr.mxu0 0.0
    %7146 = vmatpush1.msra.mxu0 0.0
    %7147 = vmatprep.subr.mxu0 0.0
    %7148 = vmatpush1.msra.mxu0 0.0
    %7149 = vmatprep.subr.mxu0 0.0
    %7150 = vmatpush1.msra.mxu0 0.0
    %7151 = vmatprep.subr.mxu0 0.0
    %7152 = vmatpush1.msra.mxu0 0.0
    %7153 = vmatprep.subr.mxu0 0.0
    %7154 = vmatpush1.msra.mxu0 0.0
    %7155 = vmatprep.subr.mxu0 0.0
    %7156 = vmatpush1.msra.mxu0 0.0
    %7157 = vmatprep.subr.mxu0 0.0
    %7158 = vmatpush1.msra.mxu0 0.0
    %7159 = vmatprep.subr.mxu0 0.0
    %7160 = vmatpush1.msra.mxu0 0.0
    %7161 = vmatprep.subr.mxu0 0.0
    %7162 = vmatpush1.msra.mxu0 0.0
    %7163 = vmatprep.subr.mxu0 0.0
    %7164 = vmatpush1.msra.mxu0 0.0
    %7165 = vmatprep.subr.mxu0 0.0
    %7166 = vmatpush1.msra.mxu0 0.0
    %7167 = vmatprep.subr.mxu0 0.0
    %7168 = vmatpush1.msra.mxu0 0.0
    %7169 = vmatprep.subr.mxu0 0.0
    %7170 = vmatpush1.msra.mxu0 0.0
    %7171 = vmatprep.subr.mxu0 0.0
    %7172 = vmatpush1.msra.mxu0 0.0
    %7173 = vmatprep.subr.mxu0 0.0
    %7174 = vmatpush1.msra.mxu0 0.0
    %7175 = vmatprep.mubr.f32.mxu0 0.0
    %7176 = vmatmul.mubr.f32.gmra.mrb[0].mxu0 %v7110
    %v7177 = vpop.f32.mrb[0].mxu0
    %v7178 = vadd.f32 0.0, %v7177
    %v7179 = vpop.f32.mrb[0].mxu0
    %7180 = vdwg.mxu0
    %7181 = vst [vmem:[#allocation3 + $0x8] sm:$0xff] %v7178
    %v7182 = vld [vmem:[%s7 + $0x10] sm:$0xff]
    %7183 = vmatprep.subr.mxu0 0.0
    %7184 = vmatpush1.msra.mxu0 %v7022
    %7185 = vmatprep.subr.mxu0 0.0
    %7186 = vmatpush1.msra.mxu0 %v7023
    %7187 = vmatprep.subr.mxu0 0.0
    %7188 = vmatpush1.msra.mxu0 %v7024
    %7189 = vmatprep.subr.mxu0 0.0
    %7190 = vmatpush1.msra.mxu0 %v7025
    %7191 = vmatprep.subr.mxu0 0.0
    %7192 = vmatpush1.msra.mxu0 %v7026
    %7193 = vmatprep.subr.mxu0 0.0
    %7194 = vmatpush1.msra.mxu0 %v7027
    %7195 = vmatprep.subr.mxu0 0.0
    %7196 = vmatpush1.msra.mxu0 %v7028
    %7197 = vmatprep.subr.mxu0 0.0
    %7198 = vmatpush1.msra.mxu0 %v7029
    %7199 = vmatprep.subr.mxu0 0.0
    %7200 = vmatpush1.msra.mxu0 %v7030
    %7201 = vmatprep.subr.mxu0 0.0
    %7202 = vmatpush1.msra.mxu0 %v7031
    %7203 = vmatprep.subr.mxu0 0.0
    %7204 = vmatpush1.msra.mxu0 %v7032
    %7205 = vmatprep.subr.mxu0 0.0
    %7206 = vmatpush1.msra.mxu0 %v7033
    %7207 = vmatprep.subr.mxu0 0.0
    %7208 = vmatpush1.msra.mxu0 %v7034
    %7209 = vmatprep.subr.mxu0 0.0
    %7210 = vmatpush1.msra.mxu0 %v7035
    %7211 = vmatprep.subr.mxu0 0.0
    %7212 = vmatpush1.msra.mxu0 %v7036
    %7213 = vmatprep.subr.mxu0 0.0
    %7214 = vmatpush1.msra.mxu0 %v7037
    %7215 = vmatprep.subr.mxu0 0.0
    %7216 = vmatpush1.msra.mxu0 0.0
    %7217 = vmatprep.subr.mxu0 0.0
    %7218 = vmatpush1.msra.mxu0 0.0
    %7219 = vmatprep.subr.mxu0 0.0
    %7220 = vmatpush1.msra.mxu0 0.0
    %7221 = vmatprep.subr.mxu0 0.0
    %7222 = vmatpush1.msra.mxu0 0.0
    %7223 = vmatprep.subr.mxu0 0.0
    %7224 = vmatpush1.msra.mxu0 0.0
    %7225 = vmatprep.subr.mxu0 0.0
    %7226 = vmatpush1.msra.mxu0 0.0
    %7227 = vmatprep.subr.mxu0 0.0
    %7228 = vmatpush1.msra.mxu0 0.0
    %7229 = vmatprep.subr.mxu0 0.0
    %7230 = vmatpush1.msra.mxu0 0.0
    %7231 = vmatprep.subr.mxu0 0.0
    %7232 = vmatpush1.msra.mxu0 0.0
    %7233 = vmatprep.subr.mxu0 0.0
    %7234 = vmatpush1.msra.mxu0 0.0
    %7235 = vmatprep.subr.mxu0 0.0
    %7236 = vmatpush1.msra.mxu0 0.0
    %7237 = vmatprep.subr.mxu0 0.0
    %7238 = vmatpush1.msra.mxu0 0.0
    %7239 = vmatprep.subr.mxu0 0.0
    %7240 = vmatpush1.msra.mxu0 0.0
    %7241 = vmatprep.subr.mxu0 0.0
    %7242 = vmatpush1.msra.mxu0 0.0
    %7243 = vmatprep.subr.mxu0 0.0
    %7244 = vmatpush1.msra.mxu0 0.0
    %7245 = vmatprep.subr.mxu0 0.0
    %7246 = vmatpush1.msra.mxu0 0.0
    %7247 = vmatprep.mubr.f32.mxu0 0.0
    %7248 = vmatmul.mubr.f32.gmra.mrb[0].mxu0 %v7182
    %v7249 = vpop.f32.mrb[0].mxu0
    %v7250 = vadd.f32 0.0, %v7249
    %v7251 = vpop.f32.mrb[0].mxu0
    %7252 = vdwg.mxu0
    %7253 = vst [vmem:[#allocation3 + $0x10] sm:$0xff] %v7250
    %v7254 = vld [vmem:[%s7 + $0x18] sm:$0xff]
    %7255 = vmatprep.subr.mxu0 0.0
    %7256 = vmatpush1.msra.mxu0 %v7022
    %7257 = vmatprep.subr.mxu0 0.0
    %7258 = vmatpush1.msra.mxu0 %v7023
    %7259 = vmatprep.subr.mxu0 0.0
    %7260 = vmatpush1.msra.mxu0 %v7024
    %7261 = vmatprep.subr.mxu0 0.0
    %7262 = vmatpush1.msra.mxu0 %v7025
    %7263 = vmatprep.subr.mxu0 0.0
    %7264 = vmatpush1.msra.mxu0 %v7026
    %7265 = vmatprep.subr.mxu0 0.0
    %7266 = vmatpush1.msra.mxu0 %v7027
    %7267 = vmatprep.subr.mxu0 0.0
    %7268 = vmatpush1.msra.mxu0 %v7028
    %7269 = vmatprep.subr.mxu0 0.0
    %7270 = vmatpush1.msra.mxu0 %v7029
    %7271 = vmatprep.subr.mxu0 0.0
    %7272 = vmatpush1.msra.mxu0 %v7030
    %7273 = vmatprep.subr.mxu0 0.0
    %7274 = vmatpush1.msra.mxu0 %v7031
    %7275 = vmatprep.subr.mxu0 0.0
    %7276 = vmatpush1.msra.mxu0 %v7032
    %7277 = vmatprep.subr.mxu0 0.0
    %7278 = vmatpush1.msra.mxu0 %v7033
    %7279 = vmatprep.subr.mxu0 0.0
    %7280 = vmatpush1.msra.mxu0 %v7034
    %7281 = vmatprep.subr.mxu0 0.0
    %7282 = vmatpush1.msra.mxu0 %v7035
    %7283 = vmatprep.subr.mxu0 0.0
    %7284 = vmatpush1.msra.mxu0 %v7036
    %7285 = vmatprep.subr.mxu0 0.0
    %7286 = vmatpush1.msra.mxu0 %v7037
    %7287 = vmatprep.subr.mxu0 0.0
    %7288 = vmatpush1.msra.mxu0 0.0
    %7289 = vmatprep.subr.mxu0 0.0
    %7290 = vmatpush1.msra.mxu0 0.0
    %7291 = vmatprep.subr.mxu0 0.0
    %7292 = vmatpush1.msra.mxu0 0.0
    %7293 = vmatprep.subr.mxu0 0.0
    %7294 = vmatpush1.msra.mxu0 0.0
    %7295 = vmatprep.subr.mxu0 0.0
    %7296 = vmatpush1.msra.mxu0 0.0
    %7297 = vmatprep.subr.mxu0 0.0
    %7298 = vmatpush1.msra.mxu0 0.0
    %7299 = vmatprep.subr.mxu0 0.0
    %7300 = vmatpush1.msra.mxu0 0.0
    %7301 = vmatprep.subr.mxu0 0.0
    %7302 = vmatpush1.msra.mxu0 0.0
    %7303 = vmatprep.subr.mxu0 0.0
    %7304 = vmatpush1.msra.mxu0 0.0
    %7305 = vmatprep.subr.mxu0 0.0
    %7306 = vmatpush1.msra.mxu0 0.0
    %7307 = vmatprep.subr.mxu0 0.0
    %7308 = vmatpush1.msra.mxu0 0.0
    %7309 = vmatprep.subr.mxu0 0.0
    %7310 = vmatpush1.msra.mxu0 0.0
    %7311 = vmatprep.subr.mxu0 0.0
    %7312 = vmatpush1.msra.mxu0 0.0
    %7313 = vmatprep.subr.mxu0 0.0
    %7314 = vmatpush1.msra.mxu0 0.0
    %7315 = vmatprep.subr.mxu0 0.0
    %7316 = vmatpush1.msra.mxu0 0.0
    %7317 = vmatprep.subr.mxu0 0.0
    %7318 = vmatpush1.msra.mxu0 0.0
    %7319 = vmatprep.mubr.f32.mxu0 0.0
    %7320 = vmatmul.mubr.f32.gmra.mrb[0].mxu0 %v7254
    %v7321 = vpop.f32.mrb[0].mxu0
    %v7322 = vadd.f32 0.0, %v7321
    %v7323 = vpop.f32.mrb[0].mxu0
    %7324 = vdwg.mxu0
    %7325 = vst [vmem:[#allocation3 + $0x18] sm:$0xff] %v7322
    %v7326 = vld [vmem:[%s7 + $0x20] sm:$0xff]
    %7327 = vmatprep.subr.mxu0 0.0
    %7328 = vmatpush1.msra.mxu0 %v7022
    %7329 = vmatprep.subr.mxu0 0.0
    %7330 = vmatpush1.msra.mxu0 %v7023
    %7331 = vmatprep.subr.mxu0 0.0
    %7332 = vmatpush1.msra.mxu0 %v7024
    %7333 = vmatprep.subr.mxu0 0.0
    %7334 = vmatpush1.msra.mxu0 %v7025
    %7335 = vmatprep.subr.mxu0 0.0
    %7336 = vmatpush1.msra.mxu0 %v7026
    %7337 = vmatprep.subr.mxu0 0.0
    %7338 = vmatpush1.msra.mxu0 %v7027
    %7339 = vmatprep.subr.mxu0 0.0
    %7340 = vmatpush1.msra.mxu0 %v7028
    %7341 = vmatprep.subr.mxu0 0.0
    %7342 = vmatpush1.msra.mxu0 %v7029
    %7343 = vmatprep.subr.mxu0 0.0
    %7344 = vmatpush1.msra.mxu0 %v7030
    %7345 = vmatprep.subr.mxu0 0.0
    %7346 = vmatpush1.msra.mxu0 %v7031
    %7347 = vmatprep.subr.mxu0 0.0
    %7348 = vmatpush1.msra.mxu0 %v7032
    %7349 = vmatprep.subr.mxu0 0.0
    %7350 = vmatpush1.msra.mxu0 %v7033
    %7351 = vmatprep.subr.mxu0 0.0
    %7352 = vmatpush1.msra.mxu0 %v7034
    %7353 = vmatprep.subr.mxu0 0.0
    %7354 = vmatpush1.msra.mxu0 %v7035
    %7355 = vmatprep.subr.mxu0 0.0
    %7356 = vmatpush1.msra.mxu0 %v7036
    %7357 = vmatprep.subr.mxu0 0.0
    %7358 = vmatpush1.msra.mxu0 %v7037
    %7359 = vmatprep.subr.mxu0 0.0
    %7360 = vmatpush1.msra.mxu0 0.0
    %7361 = vmatprep.subr.mxu0 0.0
    %7362 = vmatpush1.msra.mxu0 0.0
    %7363 = vmatprep.subr.mxu0 0.0
    %7364 = vmatpush1.msra.mxu0 0.0
    %7365 = vmatprep.subr.mxu0 0.0
    %7366 = vmatpush1.msra.mxu0 0.0
    %7367 = vmatprep.subr.mxu0 0.0
    %7368 = vmatpush1.msra.mxu0 0.0
    %7369 = vmatprep.subr.mxu0 0.0
    %7370 = vmatpush1.msra.mxu0 0.0
    %7371 = vmatprep.subr.mxu0 0.0
    %7372 = vmatpush1.msra.mxu0 0.0
    %7373 = vmatprep.subr.mxu0 0.0
    %7374 = vmatpush1.msra.mxu0 0.0
    %7375 = vmatprep.subr.mxu0 0.0
    %7376 = vmatpush1.msra.mxu0 0.0
    %7377 = vmatprep.subr.mxu0 0.0
    %7378 = vmatpush1.msra.mxu0 0.0
    %7379 = vmatprep.subr.mxu0 0.0
    %7380 = vmatpush1.msra.mxu0 0.0
    %7381 = vmatprep.subr.mxu0 0.0
    %7382 = vmatpush1.msra.mxu0 0.0
    %7383 = vmatprep.subr.mxu0 0.0
    %7384 = vmatpush1.msra.mxu0 0.0
    %7385 = vmatprep.subr.mxu0 0.0
    %7386 = vmatpush1.msra.mxu0 0.0
    %7387 = vmatprep.subr.mxu0 0.0
    %7388 = vmatpush1.msra.mxu0 0.0
    %7389 = vmatprep.subr.mxu0 0.0
    %7390 = vmatpush1.msra.mxu0 0.0
    %7391 = vmatprep.mubr.f32.mxu0 0.0
    %7392 = vmatmul.mubr.f32.gmra.mrb[0].mxu0 %v7326
    %v7393 = vpop.f32.mrb[0].mxu0
    %v7394 = vadd.f32 0.0, %v7393
    %v7395 = vpop.f32.mrb[0].mxu0
    %7396 = vdwg.mxu0
    %7397 = vst [vmem:[#allocation3 + $0x20] sm:$0xff] %v7394
    %v7398 = vld [vmem:[%s7 + $0x28] sm:$0xff]
    %7399 = vmatprep.subr.mxu0 0.0
    %7400 = vmatpush1.msra.mxu0 %v7022
    %7401 = vmatprep.subr.mxu0 0.0
    %7402 = vmatpush1.msra.mxu0 %v7023
    %7403 = vmatprep.subr.mxu0 0.0
    %7404 = vmatpush1.msra.mxu0 %v7024
    %7405 = vmatprep.subr.mxu0 0.0
    %7406 = vmatpush1.msra.mxu0 %v7025
    %7407 = vmatprep.subr.mxu0 0.0
    %7408 = vmatpush1.msra.mxu0 %v7026
    %7409 = vmatprep.subr.mxu0 0.0
    %7410 = vmatpush1.msra.mxu0 %v7027
    %7411 = vmatprep.subr.mxu0 0.0
    %7412 = vmatpush1.msra.mxu0 %v7028
    %7413 = vmatprep.subr.mxu0 0.0
    %7414 = vmatpush1.msra.mxu0 %v7029
    %7415 = vmatprep.subr.mxu0 0.0
    %7416 = vmatpush1.msra.mxu0 %v7030
    %7417 = vmatprep.subr.mxu0 0.0
    %7418 = vmatpush1.msra.mxu0 %v7031
    %7419 = vmatprep.subr.mxu0 0.0
    %7420 = vmatpush1.msra.mxu0 %v7032
    %7421 = vmatprep.subr.mxu0 0.0
    %7422 = vmatpush1.msra.mxu0 %v7033
    %7423 = vmatprep.subr.mxu0 0.0
    %7424 = vmatpush1.msra.mxu0 %v7034
    %7425 = vmatprep.subr.mxu0 0.0
    %7426 = vmatpush1.msra.mxu0 %v7035
    %7427 = vmatprep.subr.mxu0 0.0
    %7428 = vmatpush1.msra.mxu0 %v7036
    %7429 = vmatprep.subr.mxu0 0.0
    %7430 = vmatpush1.msra.mxu0 %v7037
    %7431 = vmatprep.subr.mxu0 0.0
    %7432 = vmatpush1.msra.mxu0 0.0
    %7433 = vmatprep.subr.mxu0 0.0
    %7434 = vmatpush1.msra.mxu0 0.0
    %7435 = vmatprep.subr.mxu0 0.0
    %7436 = vmatpush1.msra.mxu0 0.0
    %7437 = vmatprep.subr.mxu0 0.0
    %7438 = vmatpush1.msra.mxu0 0.0
    %7439 = vmatprep.subr.mxu0 0.0
    %7440 = vmatpush1.msra.mxu0 0.0
    %7441 = vmatprep.subr.mxu0 0.0
    %7442 = vmatpush1.msra.mxu0 0.0
    %7443 = vmatprep.subr.mxu0 0.0
    %7444 = vmatpush1.msra.mxu0 0.0
    %7445 = vmatprep.subr.mxu0 0.0
    %7446 = vmatpush1.msra.mxu0 0.0
    %7447 = vmatprep.subr.mxu0 0.0
    %7448 = vmatpush1.msra.mxu0 0.0
    %7449 = vmatprep.subr.mxu0 0.0
    %7450 = vmatpush1.msra.mxu0 0.0
    %7451 = vmatprep.subr.mxu0 0.0
    %7452 = vmatpush1.msra.mxu0 0.0
    %7453 = vmatprep.subr.mxu0 0.0
    %7454 = vmatpush1.msra.mxu0 0.0
    %7455 = vmatprep.subr.mxu0 0.0
    %7456 = vmatpush1.msra.mxu0 0.0
    %7457 = vmatprep.subr.mxu0 0.0
    %7458 = vmatpush1.msra.mxu0 0.0
    %7459 = vmatprep.subr.mxu0 0.0
    %7460 = vmatpush1.msra.mxu0 0.0
    %7461 = vmatprep.subr.mxu0 0.0
    %7462 = vmatpush1.msra.mxu0 0.0
    %7463 = vmatprep.mubr.f32.mxu0 0.0
    %7464 = vmatmul.mubr.f32.gmra.mrb[0].mxu0 %v7398
    %v7465 = vpop.f32.mrb[0].mxu0
    %v7466 = vadd.f32 0.0, %v7465
    %v7467 = vpop.f32.mrb[0].mxu0
    %7468 = vdwg.mxu0
    %7469 = vst [vmem:[#allocation3 + $0x28] sm:$0xff] %v7466
    %v7470 = vld [vmem:[%s7 + $0x30] sm:$0xff]
    %7471 = vmatprep.subr.mxu0 0.0
    %7472 = vmatpush1.msra.mxu0 %v7022
    %7473 = vmatprep.subr.mxu0 0.0
    %7474 = vmatpush1.msra.mxu0 %v7023
    %7475 = vmatprep.subr.mxu0 0.0
    %7476 = vmatpush1.msra.mxu0 %v7024
    %7477 = vmatprep.subr.mxu0 0.0
    %7478 = vmatpush1.msra.mxu0 %v7025
    %7479 = vmatprep.subr.mxu0 0.0
    %7480 = vmatpush1.msra.mxu0 %v7026
    %7481 = vmatprep.subr.mxu0 0.0
    %7482 = vmatpush1.msra.mxu0 %v7027
    %7483 = vmatprep.subr.mxu0 0.0
    %7484 = vmatpush1.msra.mxu0 %v7028
    %7485 = vmatprep.subr.mxu0 0.0
    %7486 = vmatpush1.msra.mxu0 %v7029
    %7487 = vmatprep.subr.mxu0 0.0
    %7488 = vmatpush1.msra.mxu0 %v7030
    %7489 = vmatprep.subr.mxu0 0.0
    %7490 = vmatpush1.msra.mxu0 %v7031
    %7491 = vmatprep.subr.mxu0 0.0
    %7492 = vmatpush1.msra.mxu0 %v7032
    %7493 = vmatprep.subr.mxu0 0.0
    %7494 = vmatpush1.msra.mxu0 %v7033
    %7495 = vmatprep.subr.mxu0 0.0
    %7496 = vmatpush1.msra.mxu0 %v7034
    %7497 = vmatprep.subr.mxu0 0.0
    %7498 = vmatpush1.msra.mxu0 %v7035
    %7499 = vmatprep.subr.mxu0 0.0
    %7500 = vmatpush1.msra.mxu0 %v7036
    %7501 = vmatprep.subr.mxu0 0.0
    %7502 = vmatpush1.msra.mxu0 %v7037
    %7503 = vmatprep.subr.mxu0 0.0
    %7504 = vmatpush1.msra.mxu0 0.0
    %7505 = vmatprep.subr.mxu0 0.0
    %7506 = vmatpush1.msra.mxu0 0.0
    %7507 = vmatprep.subr.mxu0 0.0
    %7508 = vmatpush1.msra.mxu0 0.0
    %7509 = vmatprep.subr.mxu0 0.0
    %7510 = vmatpush1.msra.mxu0 0.0
    %7511 = vmatprep.subr.mxu0 0.0
    %7512 = vmatpush1.msra.mxu0 0.0
    %7513 = vmatprep.subr.mxu0 0.0
    %7514 = vmatpush1.msra.mxu0 0.0
    %7515 = vmatprep.subr.mxu0 0.0
    %7516 = vmatpush1.msra.mxu0 0.0
    %7517 = vmatprep.subr.mxu0 0.0
    %7518 = vmatpush1.msra.mxu0 0.0
    %7519 = vmatprep.subr.mxu0 0.0
    %7520 = vmatpush1.msra.mxu0 0.0
    %7521 = vmatprep.subr.mxu0 0.0
    %7522 = vmatpush1.msra.mxu0 0.0
    %7523 = vmatprep.subr.mxu0 0.0
    %7524 = vmatpush1.msra.mxu0 0.0
    %7525 = vmatprep.subr.mxu0 0.0
    %7526 = vmatpush1.msra.mxu0 0.0
    %7527 = vmatprep.subr.mxu0 0.0
    %7528 = vmatpush1.msra.mxu0 0.0
    %7529 = vmatprep.subr.mxu0 0.0
    %7530 = vmatpush1.msra.mxu0 0.0
    %7531 = vmatprep.subr.mxu0 0.0
    %7532 = vmatpush1.msra.mxu0 0.0
    %7533 = vmatprep.subr.mxu0 0.0
    %7534 = vmatpush1.msra.mxu0 0.0
    %7535 = vmatprep.mubr.f32.mxu0 0.0
    %7536 = vmatmul.mubr.f32.gmra.mrb[0].mxu0 %v7470
    %v7537 = vpop.f32.mrb[0].mxu0
    %v7538 = vadd.f32 0.0, %v7537
    %v7539 = vpop.f32.mrb[0].mxu0
    %7540 = vdwg.mxu0
    %7541 = vst [vmem:[#allocation3 + $0x30] sm:$0xff] %v7538
    %v7542 = vld [vmem:[%s7 + $0x38] sm:$0xff]
    %7543 = vmatprep.subr.mxu0 0.0
    %7544 = vmatpush1.msra.mxu0 %v7022
    %7545 = vmatprep.subr.mxu0 0.0
    %7546 = vmatpush1.msra.mxu0 %v7023
    %7547 = vmatprep.subr.mxu0 0.0
    %7548 = vmatpush1.msra.mxu0 %v7024
    %7549 = vmatprep.subr.mxu0 0.0
    %7550 = vmatpush1.msra.mxu0 %v7025
    %7551 = vmatprep.subr.mxu0 0.0
    %7552 = vmatpush1.msra.mxu0 %v7026
    %7553 = vmatprep.subr.mxu0 0.0
    %7554 = vmatpush1.msra.mxu0 %v7027
    %7555 = vmatprep.subr.mxu0 0.0
    %7556 = vmatpush1.msra.mxu0 %v7028
    %7557 = vmatprep.subr.mxu0 0.0
    %7558 = vmatpush1.msra.mxu0 %v7029
    %7559 = vmatprep.subr.mxu0 0.0
    %7560 = vmatpush1.msra.mxu0 %v7030
    %7561 = vmatprep.subr.mxu0 0.0
    %7562 = vmatpush1.msra.mxu0 %v7031
    %7563 = vmatprep.subr.mxu0 0.0
    %7564 = vmatpush1.msra.mxu0 %v7032
    %7565 = vmatprep.subr.mxu0 0.0
    %7566 = vmatpush1.msra.mxu0 %v7033
    %7567 = vmatprep.subr.mxu0 0.0
    %7568 = vmatpush1.msra.mxu0 %v7034
    %7569 = vmatprep.subr.mxu0 0.0
    %7570 = vmatpush1.msra.mxu0 %v7035
    %7571 = vmatprep.subr.mxu0 0.0
    %7572 = vmatpush1.msra.mxu0 %v7036
    %7573 = vmatprep.subr.mxu0 0.0
    %7574 = vmatpush1.msra.mxu0 %v7037
    %7575 = vmatprep.subr.mxu0 0.0
    %7576 = vmatpush1.msra.mxu0 0.0
    %7577 = vmatprep.subr.mxu0 0.0
    %7578 = vmatpush1.msra.mxu0 0.0
    %7579 = vmatprep.subr.mxu0 0.0
    %7580 = vmatpush1.msra.mxu0 0.0
    %7581 = vmatprep.subr.mxu0 0.0
    %7582 = vmatpush1.msra.mxu0 0.0
    %7583 = vmatprep.subr.mxu0 0.0
    %7584 = vmatpush1.msra.mxu0 0.0
    %7585 = vmatprep.subr.mxu0 0.0
    %7586 = vmatpush1.msra.mxu0 0.0
    %7587 = vmatprep.subr.mxu0 0.0
    %7588 = vmatpush1.msra.mxu0 0.0
    %7589 = vmatprep.subr.mxu0 0.0
    %7590 = vmatpush1.msra.mxu0 0.0
    %7591 = vmatprep.subr.mxu0 0.0
    %7592 = vmatpush1.msra.mxu0 0.0
    %7593 = vmatprep.subr.mxu0 0.0
    %7594 = vmatpush1.msra.mxu0 0.0
    %7595 = vmatprep.subr.mxu0 0.0
    %7596 = vmatpush1.msra.mxu0 0.0
    %7597 = vmatprep.subr.mxu0 0.0
    %7598 = vmatpush1.msra.mxu0 0.0
    %7599 = vmatprep.subr.mxu0 0.0
    %7600 = vmatpush1.msra.mxu0 0.0
    %7601 = vmatprep.subr.mxu0 0.0
    %7602 = vmatpush1.msra.mxu0 0.0
    %7603 = vmatprep.subr.mxu0 0.0
    %7604 = vmatpush1.msra.mxu0 0.0
    %7605 = vmatprep.subr.mxu0 0.0
    %7606 = vmatpush1.msra.mxu0 0.0
    %7607 = vmatprep.mubr.f32.mxu0 0.0
    %7608 = vmatmul.mubr.f32.gmra.mrb[0].mxu0 %v7542
    %v7609 = vpop.f32.mrb[0].mxu0
    %v7610 = vadd.f32 0.0, %v7609
    %v7611 = vpop.f32.mrb[0].mxu0
    %7612 = vdwg.mxu0
    %7613 = vst [vmem:[#allocation3 + $0x38] sm:$0xff] %v7610
    %v7614 = vld [vmem:[%s7 + $0x40] sm:$0xff]
    %7615 = vmatprep.subr.mxu0 0.0
    %7616 = vmatpush1.msra.mxu0 %v7022
    %7617 = vmatprep.subr.mxu0 0.0
    %7618 = vmatpush1.msra.mxu0 %v7023
    %7619 = vmatprep.subr.mxu0 0.0
    %7620 = vmatpush1.msra.mxu0 %v7024
    %7621 = vmatprep.subr.mxu0 0.0
    %7622 = vmatpush1.msra.mxu0 %v7025
    %7623 = vmatprep.subr.mxu0 0.0
    %7624 = vmatpush1.msra.mxu0 %v7026
    %7625 = vmatprep.subr.mxu0 0.0
    %7626 = vmatpush1.msra.mxu0 %v7027
    %7627 = vmatprep.subr.mxu0 0.0
    %7628 = vmatpush1.msra.mxu0 %v7028
    %7629 = vmatprep.subr.mxu0 0.0
    %7630 = vmatpush1.msra.mxu0 %v7029
    %7631 = vmatprep.subr.mxu0 0.0
    %7632 = vmatpush1.msra.mxu0 %v7030
    %7633 = vmatprep.subr.mxu0 0.0
    %7634 = vmatpush1.msra.mxu0 %v7031
    %7635 = vmatprep.subr.mxu0 0.0
    %7636 = vmatpush1.msra.mxu0 %v7032
    %7637 = vmatprep.subr.mxu0 0.0
    %7638 = vmatpush1.msra.mxu0 %v7033
    %7639 = vmatprep.subr.mxu0 0.0
    %7640 = vmatpush1.msra.mxu0 %v7034
    %7641 = vmatprep.subr.mxu0 0.0
    %7642 = vmatpush1.msra.mxu0 %v7035
    %7643 = vmatprep.subr.mxu0 0.0
    %7644 = vmatpush1.msra.mxu0 %v7036
    %7645 = vmatprep.subr.mxu0 0.0
    %7646 = vmatpush1.msra.mxu0 %v7037
    %7647 = vmatprep.subr.mxu0 0.0
    %7648 = vmatpush1.msra.mxu0 0.0
    %7649 = vmatprep.subr.mxu0 0.0
    %7650 = vmatpush1.msra.mxu0 0.0
    %7651 = vmatprep.subr.mxu0 0.0
    %7652 = vmatpush1.msra.mxu0 0.0
    %7653 = vmatprep.subr.mxu0 0.0
    %7654 = vmatpush1.msra.mxu0 0.0
    %7655 = vmatprep.subr.mxu0 0.0
    %7656 = vmatpush1.msra.mxu0 0.0
    %7657 = vmatprep.subr.mxu0 0.0
    %7658 = vmatpush1.msra.mxu0 0.0
    %7659 = vmatprep.subr.mxu0 0.0
    %7660 = vmatpush1.msra.mxu0 0.0
    %7661 = vmatprep.subr.mxu0 0.0
    %7662 = vmatpush1.msra.mxu0 0.0
    %7663 = vmatprep.subr.mxu0 0.0
    %7664 = vmatpush1.msra.mxu0 0.0
    %7665 = vmatprep.subr.mxu0 0.0
    %7666 = vmatpush1.msra.mxu0 0.0
    %7667 = vmatprep.subr.mxu0 0.0
    %7668 = vmatpush1.msra.mxu0 0.0
    %7669 = vmatprep.subr.mxu0 0.0
    %7670 = vmatpush1.msra.mxu0 0.0
    %7671 = vmatprep.subr.mxu0 0.0
    %7672 = vmatpush1.msra.mxu0 0.0
    %7673 = vmatprep.subr.mxu0 0.0
    %7674 = vmatpush1.msra.mxu0 0.0
    %7675 = vmatprep.subr.mxu0 0.0
    %7676 = vmatpush1.msra.mxu0 0.0
    %7677 = vmatprep.subr.mxu0 0.0
    %7678 = vmatpush1.msra.mxu0 0.0
    %7679 = vmatprep.mubr.f32.mxu0 0.0
    %7680 = vmatmul.mubr.f32.gmra.mrb[0].mxu0 %v7614
    %v7681 = vpop.f32.mrb[0].mxu0
    %v7682 = vadd.f32 0.0, %v7681
    %v7683 = vpop.f32.mrb[0].mxu0
    %7684 = vdwg.mxu0
    %7685 = vst [vmem:[#allocation3 + $0x40] sm:$0xff] %v7682
    %v7686 = vld [vmem:[%s7 + $0x48] sm:$0xff]
    %7687 = vmatprep.subr.mxu0 0.0
    %7688 = vmatpush1.msra.mxu0 %v7022
    %7689 = vmatprep.subr.mxu0 0.0
    %7690 = vmatpush1.msra.mxu0 %v7023
    %7691 = vmatprep.subr.mxu0 0.0
    %7692 = vmatpush1.msra.mxu0 %v7024
    %7693 = vmatprep.subr.mxu0 0.0
    %7694 = vmatpush1.msra.mxu0 %v7025
    %7695 = vmatprep.subr.mxu0 0.0
    %7696 = vmatpush1.msra.mxu0 %v7026
    %7697 = vmatprep.subr.mxu0 0.0
    %7698 = vmatpush1.msra.mxu0 %v7027
    %7699 = vmatprep.subr.mxu0 0.0
    %7700 = vmatpush1.msra.mxu0 %v7028
    %7701 = vmatprep.subr.mxu0 0.0
    %7702 = vmatpush1.msra.mxu0 %v7029
    %7703 = vmatprep.subr.mxu0 0.0
    %7704 = vmatpush1.msra.mxu0 %v7030
    %7705 = vmatprep.subr.mxu0 0.0
    %7706 = vmatpush1.msra.mxu0 %v7031
    %7707 = vmatprep.subr.mxu0 0.0
    %7708 = vmatpush1.msra.mxu0 %v7032
    %7709 = vmatprep.subr.mxu0 0.0
    %7710 = vmatpush1.msra.mxu0 %v7033
    %7711 = vmatprep.subr.mxu0 0.0
    %7712 = vmatpush1.msra.mxu0 %v7034
    %7713 = vmatprep.subr.mxu0 0.0
    %7714 = vmatpush1.msra.mxu0 %v7035
    %7715 = vmatprep.subr.mxu0 0.0
    %7716 = vmatpush1.msra.mxu0 %v7036
    %7717 = vmatprep.subr.mxu0 0.0
    %7718 = vmatpush1.msra.mxu0 %v7037
    %7719 = vmatprep.subr.mxu0 0.0
    %7720 = vmatpush1.msra.mxu0 0.0
    %7721 = vmatprep.subr.mxu0 0.0
    %7722 = vmatpush1.msra.mxu0 0.0
    %7723 = vmatprep.subr.mxu0 0.0
    %7724 = vmatpush1.msra.mxu0 0.0
    %7725 = vmatprep.subr.mxu0 0.0
    %7726 = vmatpush1.msra.mxu0 0.0
    %7727 = vmatprep.subr.mxu0 0.0
    %7728 = vmatpush1.msra.mxu0 0.0
    %7729 = vmatprep.subr.mxu0 0.0
    %7730 = vmatpush1.msra.mxu0 0.0
    %7731 = vmatprep.subr.mxu0 0.0
    %7732 = vmatpush1.msra.mxu0 0.0
    %7733 = vmatprep.subr.mxu0 0.0
    %7734 = vmatpush1.msra.mxu0 0.0
    %7735 = vmatprep.subr.mxu0 0.0
    %7736 = vmatpush1.msra.mxu0 0.0
    %7737 = vmatprep.subr.mxu0 0.0
    %7738 = vmatpush1.msra.mxu0 0.0
    %7739 = vmatprep.subr.mxu0 0.0
    %7740 = vmatpush1.msra.mxu0 0.0
    %7741 = vmatprep.subr.mxu0 0.0
    %7742 = vmatpush1.msra.mxu0 0.0
    %7743 = vmatprep.subr.mxu0 0.0
    %7744 = vmatpush1.msra.mxu0 0.0
    %7745 = vmatprep.subr.mxu0 0.0
    %7746 = vmatpush1.msra.mxu0 0.0
    %7747 = vmatprep.subr.mxu0 0.0
    %7748 = vmatpush1.msra.mxu0 0.0
    %7749 = vmatprep.subr.mxu0 0.0
    %7750 = vmatpush1.msra.mxu0 0.0
    %7751 = vmatprep.mubr.f32.mxu0 0.0
    %7752 = vmatmul.mubr.f32.gmra.mrb[0].mxu0 %v7686
    %v7753 = vpop.f32.mrb[0].mxu0
    %v7754 = vadd.f32 0.0, %v7753
    %v7755 = vpop.f32.mrb[0].mxu0
    %7756 = vdwg.mxu0
    %7757 = vst [vmem:[#allocation3 + $0x48] sm:$0xff] %v7754
    %v7758 = vld [vmem:[%s7 + $0x50] sm:$0xff]
    %7759 = vmatprep.subr.mxu0 0.0
    %7760 = vmatpush1.msra.mxu0 %v7022
    %7761 = vmatprep.subr.mxu0 0.0
    %7762 = vmatpush1.msra.mxu0 %v7023
    %7763 = vmatprep.subr.mxu0 0.0
    %7764 = vmatpush1.msra.mxu0 %v7024
    %7765 = vmatprep.subr.mxu0 0.0
    %7766 = vmatpush1.msra.mxu0 %v7025
    %7767 = vmatprep.subr.mxu0 0.0
    %7768 = vmatpush1.msra.mxu0 %v7026
    %7769 = vmatprep.subr.mxu0 0.0
    %7770 = vmatpush1.msra.mxu0 %v7027
    %7771 = vmatprep.subr.mxu0 0.0
    %7772 = vmatpush1.msra.mxu0 %v7028
    %7773 = vmatprep.subr.mxu0 0.0
    %7774 = vmatpush1.msra.mxu0 %v7029
    %7775 = vmatprep.subr.mxu0 0.0
    %7776 = vmatpush1.msra.mxu0 %v7030
    %7777 = vmatprep.subr.mxu0 0.0
    %7778 = vmatpush1.msra.mxu0 %v7031
    %7779 = vmatprep.subr.mxu0 0.0
    %7780 = vmatpush1.msra.mxu0 %v7032
    %7781 = vmatprep.subr.mxu0 0.0
    %7782 = vmatpush1.msra.mxu0 %v7033
    %7783 = vmatprep.subr.mxu0 0.0
    %7784 = vmatpush1.msra.mxu0 %v7034
    %7785 = vmatprep.subr.mxu0 0.0
    %7786 = vmatpush1.msra.mxu0 %v7035
    %7787 = vmatprep.subr.mxu0 0.0
    %7788 = vmatpush1.msra.mxu0 %v7036
    %7789 = vmatprep.subr.mxu0 0.0
    %7790 = vmatpush1.msra.mxu0 %v7037
    %7791 = vmatprep.subr.mxu0 0.0
    %7792 = vmatpush1.msra.mxu0 0.0
    %7793 = vmatprep.subr.mxu0 0.0
    %7794 = vmatpush1.msra.mxu0 0.0
    %7795 = vmatprep.subr.mxu0 0.0
    %7796 = vmatpush1.msra.mxu0 0.0
    %7797 = vmatprep.subr.mxu0 0.0
    %7798 = vmatpush1.msra.mxu0 0.0
    %7799 = vmatprep.subr.mxu0 0.0
    %7800 = vmatpush1.msra.mxu0 0.0
    %7801 = vmatprep.subr.mxu0 0.0
    %7802 = vmatpush1.msra.mxu0 0.0
    %7803 = vmatprep.subr.mxu0 0.0
    %7804 = vmatpush1.msra.mxu0 0.0
    %7805 = vmatprep.subr.mxu0 0.0
    %7806 = vmatpush1.msra.mxu0 0.0
    %7807 = vmatprep.subr.mxu0 0.0
    %7808 = vmatpush1.msra.mxu0 0.0
    %7809 = vmatprep.subr.mxu0 0.0
    %7810 = vmatpush1.msra.mxu0 0.0
    %7811 = vmatprep.subr.mxu0 0.0
    %7812 = vmatpush1.msra.mxu0 0.0
    %7813 = vmatprep.subr.mxu0 0.0
    %7814 = vmatpush1.msra.mxu0 0.0
    %7815 = vmatprep.subr.mxu0 0.0
    %7816 = vmatpush1.msra.mxu0 0.0
    %7817 = vmatprep.subr.mxu0 0.0
    %7818 = vmatpush1.msra.mxu0 0.0
    %7819 = vmatprep.subr.mxu0 0.0
    %7820 = vmatpush1.msra.mxu0 0.0
    %7821 = vmatprep.subr.mxu0 0.0
    %7822 = vmatpush1.msra.mxu0 0.0
    %7823 = vmatprep.mubr.f32.mxu0 0.0
    %7824 = vmatmul.mubr.f32.gmra.mrb[0].mxu0 %v7758
    %v7825 = vpop.f32.mrb[0].mxu0
    %v7826 = vadd.f32 0.0, %v7825
    %v7827 = vpop.f32.mrb[0].mxu0
    %7828 = vdwg.mxu0
    %7829 = vst [vmem:[#allocation3 + $0x50] sm:$0xff] %v7826
    %v7830 = vld [vmem:[%s7 + $0x58] sm:$0xff]
    %7831 = vmatprep.subr.mxu0 0.0
    %7832 = vmatpush1.msra.mxu0 %v7022
    %7833 = vmatprep.subr.mxu0 0.0
    %7834 = vmatpush1.msra.mxu0 %v7023
    %7835 = vmatprep.subr.mxu0 0.0
    %7836 = vmatpush1.msra.mxu0 %v7024
    %7837 = vmatprep.subr.mxu0 0.0
    %7838 = vmatpush1.msra.mxu0 %v7025
    %7839 = vmatprep.subr.mxu0 0.0
    %7840 = vmatpush1.msra.mxu0 %v7026
    %7841 = vmatprep.subr.mxu0 0.0
    %7842 = vmatpush1.msra.mxu0 %v7027
    %7843 = vmatprep.subr.mxu0 0.0
    %7844 = vmatpush1.msra.mxu0 %v7028
    %7845 = vmatprep.subr.mxu0 0.0
    %7846 = vmatpush1.msra.mxu0 %v7029
    %7847 = vmatprep.subr.mxu0 0.0
    %7848 = vmatpush1.msra.mxu0 %v7030
    %7849 = vmatprep.subr.mxu0 0.0
    %7850 = vmatpush1.msra.mxu0 %v7031
    %7851 = vmatprep.subr.mxu0 0.0
    %7852 = vmatpush1.msra.mxu0 %v7032
    %7853 = vmatprep.subr.mxu0 0.0
    %7854 = vmatpush1.msra.mxu0 %v7033
    %7855 = vmatprep.subr.mxu0 0.0
    %7856 = vmatpush1.msra.mxu0 %v7034
    %7857 = vmatprep.subr.mxu0 0.0
    %7858 = vmatpush1.msra.mxu0 %v7035
    %7859 = vmatprep.subr.mxu0 0.0
    %7860 = vmatpush1.msra.mxu0 %v7036
    %7861 = vmatprep.subr.mxu0 0.0
    %7862 = vmatpush1.msra.mxu0 %v7037
    %7863 = vmatprep.subr.mxu0 0.0
    %7864 = vmatpush1.msra.mxu0 0.0
    %7865 = vmatprep.subr.mxu0 0.0
    %7866 = vmatpush1.msra.mxu0 0.0
    %7867 = vmatprep.subr.mxu0 0.0
    %7868 = vmatpush1.msra.mxu0 0.0
    %7869 = vmatprep.subr.mxu0 0.0
    %7870 = vmatpush1.msra.mxu0 0.0
    %7871 = vmatprep.subr.mxu0 0.0
    %7872 = vmatpush1.msra.mxu0 0.0
    %7873 = vmatprep.subr.mxu0 0.0
    %7874 = vmatpush1.msra.mxu0 0.0
    %7875 = vmatprep.subr.mxu0 0.0
    %7876 = vmatpush1.msra.mxu0 0.0
    %7877 = vmatprep.subr.mxu0 0.0
    %7878 = vmatpush1.msra.mxu0 0.0
    %7879 = vmatprep.subr.mxu0 0.0
    %7880 = vmatpush1.msra.mxu0 0.0
    %7881 = vmatprep.subr.mxu0 0.0
    %7882 = vmatpush1.msra.mxu0 0.0
    %7883 = vmatprep.subr.mxu0 0.0
    %7884 = vmatpush1.msra.mxu0 0.0
    %7885 = vmatprep.subr.mxu0 0.0
    %7886 = vmatpush1.msra.mxu0 0.0
    %7887 = vmatprep.subr.mxu0 0.0
    %7888 = vmatpush1.msra.mxu0 0.0
    %7889 = vmatprep.subr.mxu0 0.0
    %7890 = vmatpush1.msra.mxu0 0.0
    %7891 = vmatprep.subr.mxu0 0.0
    %7892 = vmatpush1.msra.mxu0 0.0
    %7893 = vmatprep.subr.mxu0 0.0
    %7894 = vmatpush1.msra.mxu0 0.0
    %7895 = vmatprep.mubr.f32.mxu0 0.0
    %7896 = vmatmul.mubr.f32.gmra.mrb[0].mxu0 %v7830
    %v7897 = vpop.f32.mrb[0].mxu0
    %v7898 = vadd.f32 0.0, %v7897
    %v7899 = vpop.f32.mrb[0].mxu0
    %7900 = vdwg.mxu0
    %7901 = vst [vmem:[#allocation3 + $0x58] sm:$0xff] %v7898
    %v7902 = vld [vmem:[%s7 + $0x60] sm:$0xff]
    %7903 = vmatprep.subr.mxu0 0.0
    %7904 = vmatpush1.msra.mxu0 %v7022
    %7905 = vmatprep.subr.mxu0 0.0
    %7906 = vmatpush1.msra.mxu0 %v7023
    %7907 = vmatprep.subr.mxu0 0.0
    %7908 = vmatpush1.msra.mxu0 %v7024
    %7909 = vmatprep.subr.mxu0 0.0
    %7910 = vmatpush1.msra.mxu0 %v7025
    %7911 = vmatprep.subr.mxu0 0.0
    %7912 = vmatpush1.msra.mxu0 %v7026
    %7913 = vmatprep.subr.mxu0 0.0
    %7914 = vmatpush1.msra.mxu0 %v7027
    %7915 = vmatprep.subr.mxu0 0.0
    %7916 = vmatpush1.msra.mxu0 %v7028
    %7917 = vmatprep.subr.mxu0 0.0
    %7918 = vmatpush1.msra.mxu0 %v7029
    %7919 = vmatprep.subr.mxu0 0.0
    %7920 = vmatpush1.msra.mxu0 %v7030
    %7921 = vmatprep.subr.mxu0 0.0
    %7922 = vmatpush1.msra.mxu0 %v7031
    %7923 = vmatprep.subr.mxu0 0.0
    %7924 = vmatpush1.msra.mxu0 %v7032
    %7925 = vmatprep.subr.mxu0 0.0
    %7926 = vmatpush1.msra.mxu0 %v7033
    %7927 = vmatprep.subr.mxu0 0.0
    %7928 = vmatpush1.msra.mxu0 %v7034
    %7929 = vmatprep.subr.mxu0 0.0
    %7930 = vmatpush1.msra.mxu0 %v7035
    %7931 = vmatprep.subr.mxu0 0.0
    %7932 = vmatpush1.msra.mxu0 %v7036
    %7933 = vmatprep.subr.mxu0 0.0
    %7934 = vmatpush1.msra.mxu0 %v7037
    %7935 = vmatprep.subr.mxu0 0.0
    %7936 = vmatpush1.msra.mxu0 0.0
    %7937 = vmatprep.subr.mxu0 0.0
    %7938 = vmatpush1.msra.mxu0 0.0
    %7939 = vmatprep.subr.mxu0 0.0
    %7940 = vmatpush1.msra.mxu0 0.0
    %7941 = vmatprep.subr.mxu0 0.0
    %7942 = vmatpush1.msra.mxu0 0.0
    %7943 = vmatprep.subr.mxu0 0.0
    %7944 = vmatpush1.msra.mxu0 0.0
    %7945 = vmatprep.subr.mxu0 0.0
    %7946 = vmatpush1.msra.mxu0 0.0
    %7947 = vmatprep.subr.mxu0 0.0
    %7948 = vmatpush1.msra.mxu0 0.0
    %7949 = vmatprep.subr.mxu0 0.0
    %7950 = vmatpush1.msra.mxu0 0.0
    %7951 = vmatprep.subr.mxu0 0.0
    %7952 = vmatpush1.msra.mxu0 0.0
    %7953 = vmatprep.subr.mxu0 0.0
    %7954 = vmatpush1.msra.mxu0 0.0
    %7955 = vmatprep.subr.mxu0 0.0
    %7956 = vmatpush1.msra.mxu0 0.0
    %7957 = vmatprep.subr.mxu0 0.0
    %7958 = vmatpush1.msra.mxu0 0.0
    %7959 = vmatprep.subr.mxu0 0.0
    %7960 = vmatpush1.msra.mxu0 0.0
    %7961 = vmatprep.subr.mxu0 0.0
    %7962 = vmatpush1.msra.mxu0 0.0
    %7963 = vmatprep.subr.mxu0 0.0
    %7964 = vmatpush1.msra.mxu0 0.0
    %7965 = vmatprep.subr.mxu0 0.0
    %7966 = vmatpush1.msra.mxu0 0.0
    %7967 = vmatprep.mubr.f32.mxu0 0.0
    %7968 = vmatmul.mubr.f32.gmra.mrb[0].mxu0 %v7902
    %v7969 = vpop.f32.mrb[0].mxu0
    %v7970 = vadd.f32 0.0, %v7969
    %v7971 = vpop.f32.mrb[0].mxu0
    %7972 = vdwg.mxu0
    %7973 = vst [vmem:[#allocation3 + $0x60] sm:$0xff] %v7970
    %v7974 = vld [vmem:[%s7 + $0x68] sm:$0xff]
    %7975 = vmatprep.subr.mxu0 0.0
    %7976 = vmatpush1.msra.mxu0 %v7022
    %7977 = vmatprep.subr.mxu0 0.0
    %7978 = vmatpush1.msra.mxu0 %v7023
    %7979 = vmatprep.subr.mxu0 0.0
    %7980 = vmatpush1.msra.mxu0 %v7024
    %7981 = vmatprep.subr.mxu0 0.0
    %7982 = vmatpush1.msra.mxu0 %v7025
    %7983 = vmatprep.subr.mxu0 0.0
    %7984 = vmatpush1.msra.mxu0 %v7026
    %7985 = vmatprep.subr.mxu0 0.0
    %7986 = vmatpush1.msra.mxu0 %v7027
    %7987 = vmatprep.subr.mxu0 0.0
    %7988 = vmatpush1.msra.mxu0 %v7028
    %7989 = vmatprep.subr.mxu0 0.0
    %7990 = vmatpush1.msra.mxu0 %v7029
    %7991 = vmatprep.subr.mxu0 0.0
    %7992 = vmatpush1.msra.mxu0 %v7030
    %7993 = vmatprep.subr.mxu0 0.0
    %7994 = vmatpush1.msra.mxu0 %v7031
    %7995 = vmatprep.subr.mxu0 0.0
    %7996 = vmatpush1.msra.mxu0 %v7032
    %7997 = vmatprep.subr.mxu0 0.0
    %7998 = vmatpush1.msra.mxu0 %v7033
    %7999 = vmatprep.subr.mxu0 0.0
    %8000 = vmatpush1.msra.mxu0 %v7034
    %8001 = vmatprep.subr.mxu0 0.0
    %8002 = vmatpush1.msra.mxu0 %v7035
    %8003 = vmatprep.subr.mxu0 0.0
    %8004 = vmatpush1.msra.mxu0 %v7036
    %8005 = vmatprep.subr.mxu0 0.0
    %8006 = vmatpush1.msra.mxu0 %v7037
    %8007 = vmatprep.subr.mxu0 0.0
    %8008 = vmatpush1.msra.mxu0 0.0
    %8009 = vmatprep.subr.mxu0 0.0
    %8010 = vmatpush1.msra.mxu0 0.0
    %8011 = vmatprep.subr.mxu0 0.0
    %8012 = vmatpush1.msra.mxu0 0.0
    %8013 = vmatprep.subr.mxu0 0.0
    %8014 = vmatpush1.msra.mxu0 0.0
    %8015 = vmatprep.subr.mxu0 0.0
    %8016 = vmatpush1.msra.mxu0 0.0
    %8017 = vmatprep.subr.mxu0 0.0
    %8018 = vmatpush1.msra.mxu0 0.0
    %8019 = vmatprep.subr.mxu0 0.0
    %8020 = vmatpush1.msra.mxu0 0.0
    %8021 = vmatprep.subr.mxu0 0.0
    %8022 = vmatpush1.msra.mxu0 0.0
    %8023 = vmatprep.subr.mxu0 0.0
    %8024 = vmatpush1.msra.mxu0 0.0
    %8025 = vmatprep.subr.mxu0 0.0
    %8026 = vmatpush1.msra.mxu0 0.0
    %8027 = vmatprep.subr.mxu0 0.0
    %8028 = vmatpush1.msra.mxu0 0.0
    %8029 = vmatprep.subr.mxu0 0.0
    %8030 = vmatpush1.msra.mxu0 0.0
    %8031 = vmatprep.subr.mxu0 0.0
    %8032 = vmatpush1.msra.mxu0 0.0
    %8033 = vmatprep.subr.mxu0 0.0
    %8034 = vmatpush1.msra.mxu0 0.0
    %8035 = vmatprep.subr.mxu0 0.0
    %8036 = vmatpush1.msra.mxu0 0.0
    %8037 = vmatprep.subr.mxu0 0.0
    %8038 = vmatpush1.msra.mxu0 0.0
    %8039 = vmatprep.mubr.f32.mxu0 0.0
    %8040 = vmatmul.mubr.f32.gmra.mrb[0].mxu0 %v7974
    %v8041 = vpop.f32.mrb[0].mxu0
    %v8042 = vadd.f32 0.0, %v8041
    %v8043 = vpop.f32.mrb[0].mxu0
    %8044 = vdwg.mxu0
    %8045 = vst [vmem:[#allocation3 + $0x68] sm:$0xff] %v8042
    %v8046 = vld [vmem:[#allocation3] sm:$0xff]
    %v8047 = vld [vmem:[#allocation3 + $0x8] sm:$0xff]
    %v8048 = vld [vmem:[#allocation3 + $0x10] sm:$0xff]
    %v8049 = vld [vmem:[#allocation3 + $0x18] sm:$0xff]
    %v8050 = vld [vmem:[#allocation3 + $0x20] sm:$0xff]
    %v8051 = vld [vmem:[#allocation3 + $0x28] sm:$0xff]
    %v8052 = vld [vmem:[#allocation3 + $0x30] sm:$0xff]
    %v8053 = vld [vmem:[#allocation3 + $0x38] sm:$0xff]
    %v8054 = vld [vmem:[#allocation3 + $0x40] sm:$0xff]
    %v8055 = vld [vmem:[#allocation3 + $0x48] sm:$0xff]
    %v8056 = vld [vmem:[#allocation3 + $0x50] sm:$0xff]
    %v8057 = vld [vmem:[#allocation3 + $0x58] sm:$0xff]
    %v8058 = vld [vmem:[#allocation3 + $0x60] sm:$0xff]
    %v8059 = vld [vmem:[#allocation3 + $0x68] sm:$0xff]
    %v8060 = vld [vmem:[%s8] sm:$0xff]
    %v8061 = vld [vmem:[%s8 + $0x8] sm:$0xff]
    %v8062 = vld [vmem:[%s8 + $0x10] sm:$0xff]
    %v8063 = vld [vmem:[%s8 + $0x18] sm:$0xff]
    %v8064 = vld [vmem:[%s8 + $0x20] sm:$0xff]
    %v8065 = vld [vmem:[%s8 + $0x28] sm:$0xff]
    %v8066 = vld [vmem:[%s8 + $0x30] sm:$0xff]
    %v8067 = vld [vmem:[%s8 + $0x38] sm:$0xff]
    %v8068 = vld [vmem:[%s8 + $0x40] sm:$0xff]
    %v8069 = vld [vmem:[%s8 + $0x48] sm:$0xff]
    %v8070 = vld [vmem:[%s8 + $0x50] sm:$0xff]
    %v8071 = vld [vmem:[%s8 + $0x58] sm:$0xff]
    %v8072 = vld [vmem:[%s8 + $0x60] sm:$0xff]
    %v8073 = vld [vmem:[%s8 + $0x68] sm:$0xff]
    %v8074 = vld [vmem:[%s8 + $0x70] sm:$0xff]
    %v8075 = vld [vmem:[%s8 + $0x78] sm:$0xff]
    %v8076 = vld [vmem:[%s8 + $0x80] sm:$0xff]
    %v8077 = vld [vmem:[%s8 + $0x88] sm:$0xff]
    %v8078 = vld [vmem:[%s8 + $0x90] sm:$0xff]
    %v8079 = vld [vmem:[%s8 + $0x98] sm:$0xff]
    %v8080 = vld [vmem:[%s8 + $0xa0] sm:$0xff]
    %v8081 = vld [vmem:[%s8 + $0xa8] sm:$0xff]
    %v8082 = vld [vmem:[%s8 + $0xb0] sm:$0xff]
    %v8083 = vld [vmem:[%s8 + $0xb8] sm:$0xff]
    %v8084 = vld [vmem:[%s8 + $0xc0] sm:$0xff]
    %v8085 = vld [vmem:[%s8 + $0xc8] sm:$0xff]
    %v8086 = vld [vmem:[%s8 + $0xd0] sm:$0xff]
    %v8087 = vld [vmem:[%s8 + $0xd8] sm:$0xff]
    %v8088 = vld [vmem:[%s8 + $0xe0] sm:$0xff]
    %v8089 = vld [vmem:[%s8 + $0xe8] sm:$0xff]
    %v8090 = vld [vmem:[%s8 + $0xf0] sm:$0xff]
    %v8091 = vld [vmem:[%s8 + $0xf8] sm:$0xff]
    %v8092 = vld [vmem:[%s8 + $0x100] sm:$0xff]
    %v8093 = vld [vmem:[%s8 + $0x108] sm:$0xff]
    %v8094 = vld [vmem:[%s8 + $0x110] sm:$0xff]
    %v8095 = vld [vmem:[%s8 + $0x118] sm:$0xff]
    %v8096 = vld [vmem:[%s8 + $0x120] sm:$0xff]
    %v8097 = vld [vmem:[%s8 + $0x128] sm:$0xff]
    %v8098 = vld [vmem:[%s8 + $0x130] sm:$0xff]
    %v8099 = vld [vmem:[%s8 + $0x138] sm:$0xff]
    %v8100 = vld [vmem:[%s8 + $0x140] sm:$0xff]
    %v8101 = vld [vmem:[%s8 + $0x148] sm:$0xff]
    %v8102 = vld [vmem:[%s8 + $0x150] sm:$0xff]
    %v8103 = vld [vmem:[%s8 + $0x158] sm:$0xff]
    %v8104 = vld [vmem:[%s8 + $0x160] sm:$0xff]
    %v8105 = vld [vmem:[%s8 + $0x168] sm:$0xff]
    %v8106 = vld [vmem:[%s8 + $0x170] sm:$0xff]
    %v8107 = vld [vmem:[%s8 + $0x178] sm:$0xff]
    %v8108 = vld [vmem:[%s8 + $0x180] sm:$0xff]
    %v8109 = vld [vmem:[%s8 + $0x188] sm:$0xff]
    %v8110 = vld [vmem:[%s8 + $0x190] sm:$0xff]
    %v8111 = vld [vmem:[%s8 + $0x198] sm:$0xff]
    %v8112 = vld [vmem:[%s8 + $0x1a0] sm:$0xff]
    %v8113 = vld [vmem:[%s8 + $0x1a8] sm:$0xff]
    %v8114 = vld [vmem:[%s8 + $0x1b0] sm:$0xff]
    %v8115 = vld [vmem:[%s8 + $0x1b8] sm:$0xff]
    %v8116 = vld [vmem:[%s8 + $0x1c0] sm:$0xff]
    %v8117 = vld [vmem:[%s8 + $0x1c8] sm:$0xff]
    %v8118 = vld [vmem:[%s8 + $0x1d0] sm:$0xff]
    %v8119 = vld [vmem:[%s8 + $0x1d8] sm:$0xff]
    %v8120 = vld [vmem:[%s8 + $0x1e0] sm:$0xff]
    %v8121 = vld [vmem:[%s8 + $0x1e8] sm:$0xff]
    %v8122 = vld [vmem:[%s8 + $0x1f0] sm:$0xff]
    %v8123 = vld [vmem:[%s8 + $0x1f8] sm:$0xff]
    %v8124 = vld [vmem:[%s8 + $0x200] sm:$0xff]
    %v8125 = vld [vmem:[%s8 + $0x208] sm:$0xff]
    %v8126 = vld [vmem:[%s8 + $0x210] sm:$0xff]
    %v8127 = vld [vmem:[%s8 + $0x218] sm:$0xff]
    %v8128 = vld [vmem:[%s8 + $0x220] sm:$0xff]
    %v8129 = vld [vmem:[%s8 + $0x228] sm:$0xff]
    %v8130 = vld [vmem:[%s8 + $0x230] sm:$0xff]
    %v8131 = vld [vmem:[%s8 + $0x238] sm:$0xff]
    %v8132 = vld [vmem:[%s8 + $0x240] sm:$0xff]
    %v8133 = vld [vmem:[%s8 + $0x248] sm:$0xff]
    %v8134 = vld [vmem:[%s8 + $0x250] sm:$0xff]
    %v8135 = vld [vmem:[%s8 + $0x258] sm:$0xff]
    %v8136 = vld [vmem:[%s8 + $0x260] sm:$0xff]
    %v8137 = vld [vmem:[%s8 + $0x268] sm:$0xff]
    %v8138 = vld [vmem:[%s8 + $0x270] sm:$0xff]
    %v8139 = vld [vmem:[%s8 + $0x278] sm:$0xff]
    %v8140 = vld [vmem:[%s8 + $0x280] sm:$0xff]
    %v8141 = vld [vmem:[%s8 + $0x288] sm:$0xff]
    %v8142 = vld [vmem:[%s8 + $0x290] sm:$0xff]
    %v8143 = vld [vmem:[%s8 + $0x298] sm:$0xff]
    %v8144 = vld [vmem:[%s8 + $0x2a0] sm:$0xff]
    %v8145 = vld [vmem:[%s8 + $0x2a8] sm:$0xff]
    %v8146 = vld [vmem:[%s8 + $0x2b0] sm:$0xff]
    %v8147 = vld [vmem:[%s8 + $0x2b8] sm:$0xff]
    %v8148 = vld [vmem:[%s8 + $0x2c0] sm:$0xff]
    %v8149 = vld [vmem:[%s8 + $0x2c8] sm:$0xff]
    %v8150 = vld [vmem:[%s8 + $0x2d0] sm:$0xff]
    %v8151 = vld [vmem:[%s8 + $0x2d8] sm:$0xff]
    %v8152 = vld [vmem:[%s8 + $0x2e0] sm:$0xff]
    %v8153 = vld [vmem:[%s8 + $0x2e8] sm:$0xff]
    %v8154 = vld [vmem:[%s8 + $0x2f0] sm:$0xff]
    %v8155 = vld [vmem:[%s8 + $0x2f8] sm:$0xff]
    %v8156 = vld [vmem:[%s8 + $0x300] sm:$0xff]
    %v8157 = vld [vmem:[%s8 + $0x308] sm:$0xff]
    %v8158 = vld [vmem:[%s8 + $0x310] sm:$0xff]
    %v8159 = vld [vmem:[%s8 + $0x318] sm:$0xff]
    %v8160 = vld [vmem:[%s8 + $0x320] sm:$0xff]
    %v8161 = vld [vmem:[%s8 + $0x328] sm:$0xff]
    %v8162 = vld [vmem:[%s8 + $0x330] sm:$0xff]
    %v8163 = vld [vmem:[%s8 + $0x338] sm:$0xff]
    %v8164 = vld [vmem:[%s8 + $0x340] sm:$0xff]
    %v8165 = vld [vmem:[%s8 + $0x348] sm:$0xff]
    %v8166 = vld [vmem:[%s8 + $0x350] sm:$0xff]
    %v8167 = vld [vmem:[%s8 + $0x358] sm:$0xff]
    %v8168 = vld [vmem:[%s8 + $0x360] sm:$0xff]
    %v8169 = vld [vmem:[%s8 + $0x368] sm:$0xff]
    %v8170 = vld [vmem:[%s8 + $0x370] sm:$0xff]
    %v8171 = vld [vmem:[%s8 + $0x378] sm:$0xff]
    %v8172 = vld [vmem:[%s8 + $0x380] sm:$0xff]
    %v8173 = vld [vmem:[%s8 + $0x388] sm:$0xff]
    %v8174 = vld [vmem:[%s8 + $0x390] sm:$0xff]
    %v8175 = vld [vmem:[%s8 + $0x398] sm:$0xff]
    %v8176 = vld [vmem:[%s8 + $0x3a0] sm:$0xff]
    %v8177 = vld [vmem:[%s8 + $0x3a8] sm:$0xff]
    %v8178 = vld [vmem:[%s8 + $0x3b0] sm:$0xff]
    %v8179 = vld [vmem:[%s8 + $0x3b8] sm:$0xff]
    %v8180 = vld [vmem:[%s8 + $0x3c0] sm:$0xff]
    %v8181 = vld [vmem:[%s8 + $0x3c8] sm:$0xff]
    %v8182 = vld [vmem:[%s8 + $0x3d0] sm:$0xff]
    %v8183 = vld [vmem:[%s8 + $0x3d8] sm:$0xff]
    %v8184 = vld [vmem:[%s8 + $0x3e0] sm:$0xff]
    %v8185 = vld [vmem:[%s8 + $0x3e8] sm:$0xff]
    %v8186 = vld [vmem:[%s8 + $0x3f0] sm:$0xff]
    %v8187 = vld [vmem:[%s8 + $0x3f8] sm:$0xff]
    %v8188 = vld [vmem:[%s8 + $0x400] sm:$0xff]
    %v8189 = vld [vmem:[%s8 + $0x408] sm:$0xff]
    %v8190 = vld [vmem:[%s8 + $0x410] sm:$0xff]
    %v8191 = vld [vmem:[%s8 + $0x418] sm:$0xff]
    %v8192 = vld [vmem:[%s8 + $0x420] sm:$0xff]
    %v8193 = vld [vmem:[%s8 + $0x428] sm:$0xff]
    %v8194 = vld [vmem:[%s8 + $0x430] sm:$0xff]
    %v8195 = vld [vmem:[%s8 + $0x438] sm:$0xff]
    %v8196 = vld [vmem:[%s8 + $0x440] sm:$0xff]
    %v8197 = vld [vmem:[%s8 + $0x448] sm:$0xff]
    %v8198 = vld [vmem:[%s8 + $0x450] sm:$0xff]
    %v8199 = vld [vmem:[%s8 + $0x458] sm:$0xff]
    %v8200 = vld [vmem:[%s8 + $0x460] sm:$0xff]
    %v8201 = vld [vmem:[%s8 + $0x468] sm:$0xff]
    %v8202 = vld [vmem:[%s8 + $0x470] sm:$0xff]
    %v8203 = vld [vmem:[%s8 + $0x478] sm:$0xff]
    %v8204 = vld [vmem:[%s8 + $0x480] sm:$0xff]
    %v8205 = vld [vmem:[%s8 + $0x488] sm:$0xff]
    %v8206 = vld [vmem:[%s8 + $0x490] sm:$0xff]
    %v8207 = vld [vmem:[%s8 + $0x498] sm:$0xff]
    %v8208 = vld [vmem:[%s8 + $0x4a0] sm:$0xff]
    %v8209 = vld [vmem:[%s8 + $0x4a8] sm:$0xff]
    %v8210 = vld [vmem:[%s8 + $0x4b0] sm:$0xff]
    %v8211 = vld [vmem:[%s8 + $0x4b8] sm:$0xff]
    %v8212 = vld [vmem:[%s8 + $0x4c0] sm:$0xff]
    %v8213 = vld [vmem:[%s8 + $0x4c8] sm:$0xff]
    %v8214 = vld [vmem:[%s8 + $0x4d0] sm:$0xff]
    %v8215 = vld [vmem:[%s8 + $0x4d8] sm:$0xff]
    %v8216 = vld [vmem:[%s8 + $0x4e0] sm:$0xff]
    %v8217 = vld [vmem:[%s8 + $0x4e8] sm:$0xff]
    %v8218 = vld [vmem:[%s8 + $0x4f0] sm:$0xff]
    %v8219 = vld [vmem:[%s8 + $0x4f8] sm:$0xff]
    %v8220 = vld [vmem:[%s8 + $0x500] sm:$0xff]
    %v8221 = vld [vmem:[%s8 + $0x508] sm:$0xff]
    %v8222 = vld [vmem:[%s8 + $0x510] sm:$0xff]
    %v8223 = vld [vmem:[%s8 + $0x518] sm:$0xff]
    %v8224 = vld [vmem:[%s8 + $0x520] sm:$0xff]
    %v8225 = vld [vmem:[%s8 + $0x528] sm:$0xff]
    %v8226 = vld [vmem:[%s8 + $0x530] sm:$0xff]
    %v8227 = vld [vmem:[%s8 + $0x538] sm:$0xff]
    %v8228 = vld [vmem:[%s8 + $0x540] sm:$0xff]
    %v8229 = vld [vmem:[%s8 + $0x548] sm:$0xff]
    %v8230 = vld [vmem:[%s8 + $0x550] sm:$0xff]
    %v8231 = vld [vmem:[%s8 + $0x558] sm:$0xff]
    %v8232 = vld [vmem:[%s8 + $0x560] sm:$0xff]
    %v8233 = vld [vmem:[%s8 + $0x568] sm:$0xff]
    %v8234 = vld [vmem:[%s8 + $0x570] sm:$0xff]
    %v8235 = vld [vmem:[%s8 + $0x578] sm:$0xff]
    %v8236 = vld [vmem:[%s8 + $0x580] sm:$0xff]
    %v8237 = vld [vmem:[%s8 + $0x588] sm:$0xff]
    %v8238 = vld [vmem:[%s8 + $0x590] sm:$0xff]
    %v8239 = vld [vmem:[%s8 + $0x598] sm:$0xff]
    %v8240 = vld [vmem:[%s8 + $0x5a0] sm:$0xff]
    %v8241 = vld [vmem:[%s8 + $0x5a8] sm:$0xff]
    %v8242 = vld [vmem:[%s8 + $0x5b0] sm:$0xff]
    %v8243 = vld [vmem:[%s8 + $0x5b8] sm:$0xff]
    %v8244 = vld [vmem:[%s8 + $0x5c0] sm:$0xff]
    %v8245 = vld [vmem:[%s8 + $0x5c8] sm:$0xff]
    %v8246 = vld [vmem:[%s8 + $0x5d0] sm:$0xff]
    %v8247 = vld [vmem:[%s8 + $0x5d8] sm:$0xff]
    %v8248 = vld [vmem:[%s8 + $0x5e0] sm:$0xff]
    %v8249 = vld [vmem:[%s8 + $0x5e8] sm:$0xff]
    %v8250 = vld [vmem:[%s8 + $0x5f0] sm:$0xff]
    %v8251 = vld [vmem:[%s8 + $0x5f8] sm:$0xff]
    %v8252 = vld [vmem:[%s8 + $0x600] sm:$0xff]
    %v8253 = vld [vmem:[%s8 + $0x608] sm:$0xff]
    %v8254 = vld [vmem:[%s8 + $0x610] sm:$0xff]
    %v8255 = vld [vmem:[%s8 + $0x618] sm:$0xff]
    %v8256 = vld [vmem:[%s8 + $0x620] sm:$0xff]
    %v8257 = vld [vmem:[%s8 + $0x628] sm:$0xff]
    %v8258 = vld [vmem:[%s8 + $0x630] sm:$0xff]
    %v8259 = vld [vmem:[%s8 + $0x638] sm:$0xff]
    %v8260 = vld [vmem:[%s8 + $0x640] sm:$0xff]
    %v8261 = vld [vmem:[%s8 + $0x648] sm:$0xff]
    %v8262 = vld [vmem:[%s8 + $0x650] sm:$0xff]
    %v8263 = vld [vmem:[%s8 + $0x658] sm:$0xff]
    %v8264 = vld [vmem:[%s8 + $0x660] sm:$0xff]
    %v8265 = vld [vmem:[%s8 + $0x668] sm:$0xff]
    %v8266 = vld [vmem:[%s8 + $0x670] sm:$0xff]
    %v8267 = vld [vmem:[%s8 + $0x678] sm:$0xff]
    %v8268 = vld [vmem:[%s8 + $0x680] sm:$0xff]
    %v8269 = vld [vmem:[%s8 + $0x688] sm:$0xff]
    %v8270 = vld [vmem:[%s8 + $0x690] sm:$0xff]
    %v8271 = vld [vmem:[%s8 + $0x698] sm:$0xff]
    %v8272 = vld [vmem:[%s8 + $0x6a0] sm:$0xff]
    %v8273 = vld [vmem:[%s8 + $0x6a8] sm:$0xff]
    %v8274 = vld [vmem:[%s8 + $0x6b0] sm:$0xff]
    %v8275 = vld [vmem:[%s8 + $0x6b8] sm:$0xff]
    %v8276 = vld [vmem:[%s8 + $0x6c0] sm:$0xff]
    %v8277 = vld [vmem:[%s8 + $0x6c8] sm:$0xff]
    %v8278 = vld [vmem:[%s8 + $0x6d0] sm:$0xff]
    %v8279 = vld [vmem:[%s8 + $0x6d8] sm:$0xff]
    %v8280 = vld [vmem:[%s8 + $0x6e0] sm:$0xff]
    %v8281 = vld [vmem:[%s8 + $0x6e8] sm:$0xff]
    %v8282 = vld [vmem:[%s8 + $0x6f0] sm:$0xff]
    %v8283 = vld [vmem:[%s8 + $0x6f8] sm:$0xff]
    %v8284 = vld [vmem:[%s9] sm:$0x1]
    %v8286 = vlaneseq
    %v8287 = vshrl.u32 %v8286, 7
    %v8288 = vsub.s32 0, %v8287
    %v8289 = vrot.slane %v8284, %v8288
    %8291 = vmatprep.subr.mxu0 0.0
    %8292 = vmatpush1.msra.mxu0 %v8060
    %8293 = vmatprep.subr.mxu0 0.0
    %8294 = vmatpush1.msra.mxu0 %v8061
    %8295 = vmatprep.subr.mxu0 0.0
    %8296 = vmatpush1.msra.mxu0 %v8062
    %8297 = vmatprep.subr.mxu0 0.0
    %8298 = vmatpush1.msra.mxu0 %v8063
    %8299 = vmatprep.subr.mxu0 0.0
    %8300 = vmatpush1.msra.mxu0 %v8064
    %8301 = vmatprep.subr.mxu0 0.0
    %8302 = vmatpush1.msra.mxu0 %v8065
    %8303 = vmatprep.subr.mxu0 0.0
    %8304 = vmatpush1.msra.mxu0 %v8066
    %8305 = vmatprep.subr.mxu0 0.0
    %8306 = vmatpush1.msra.mxu0 %v8067
    %8307 = vmatprep.subr.mxu0 0.0
    %8308 = vmatpush1.msra.mxu0 %v8068
    %8309 = vmatprep.subr.mxu0 0.0
    %8310 = vmatpush1.msra.mxu0 %v8069
    %8311 = vmatprep.subr.mxu0 0.0
    %8312 = vmatpush1.msra.mxu0 %v8070
    %8313 = vmatprep.subr.mxu0 0.0
    %8314 = vmatpush1.msra.mxu0 %v8071
    %8315 = vmatprep.subr.mxu0 0.0
    %8316 = vmatpush1.msra.mxu0 %v8072
    %8317 = vmatprep.subr.mxu0 0.0
    %8318 = vmatpush1.msra.mxu0 %v8073
    %8319 = vmatprep.subr.mxu0 0.0
    %8320 = vmatpush1.msra.mxu0 %v8074
    %8321 = vmatprep.subr.mxu0 0.0
    %8322 = vmatpush1.msra.mxu0 %v8075
    %8323 = vmatprep.subr.mxu0 0.0
    %8324 = vmatpush1.msra.mxu0 %v8076
    %8325 = vmatprep.subr.mxu0 0.0
    %8326 = vmatpush1.msra.mxu0 %v8077
    %8327 = vmatprep.subr.mxu0 0.0
    %8328 = vmatpush1.msra.mxu0 %v8078
    %8329 = vmatprep.subr.mxu0 0.0
    %8330 = vmatpush1.msra.mxu0 %v8079
    %8331 = vmatprep.subr.mxu0 0.0
    %8332 = vmatpush1.msra.mxu0 %v8080
    %8333 = vmatprep.subr.mxu0 0.0
    %8334 = vmatpush1.msra.mxu0 %v8081
    %8335 = vmatprep.subr.mxu0 0.0
    %8336 = vmatpush1.msra.mxu0 %v8082
    %8337 = vmatprep.subr.mxu0 0.0
    %8338 = vmatpush1.msra.mxu0 %v8083
    %8339 = vmatprep.subr.mxu0 0.0
    %8340 = vmatpush1.msra.mxu0 %v8084
    %8341 = vmatprep.subr.mxu0 0.0
    %8342 = vmatpush1.msra.mxu0 %v8085
    %8343 = vmatprep.subr.mxu0 0.0
    %8344 = vmatpush1.msra.mxu0 %v8086
    %8345 = vmatprep.subr.mxu0 0.0
    %8346 = vmatpush1.msra.mxu0 %v8087
    %8347 = vmatprep.subr.mxu0 0.0
    %8348 = vmatpush1.msra.mxu0 %v8088
    %8349 = vmatprep.subr.mxu0 0.0
    %8350 = vmatpush1.msra.mxu0 %v8089
    %8351 = vmatprep.subr.mxu0 0.0
    %8352 = vmatpush1.msra.mxu0 %v8090
    %8353 = vmatprep.subr.mxu0 0.0
    %8354 = vmatpush1.msra.mxu0 %v8091
    %8355 = vmatprep.mubr.f32.mxu0 %v8047
    %8356 = vmatmul.mubr.f32.gmra.mrb[0].mxu0 %v8046
    %v8357 = vpop.f32.mrb[0].mxu0
    %v8358 = vadd.f32 %v8289, %v8357
    %v8359 = vpop.f32.mrb[0].mxu0
    %8360 = vdwg.mxu0
    %8361 = vmatprep.subr.mxu0 0.0
    %8362 = vmatpush1.msra.mxu0 %v8092
    %8363 = vmatprep.subr.mxu0 0.0
    %8364 = vmatpush1.msra.mxu0 %v8093
    %8365 = vmatprep.subr.mxu0 0.0
    %8366 = vmatpush1.msra.mxu0 %v8094
    %8367 = vmatprep.subr.mxu0 0.0
    %8368 = vmatpush1.msra.mxu0 %v8095
    %8369 = vmatprep.subr.mxu0 0.0
    %8370 = vmatpush1.msra.mxu0 %v8096
    %8371 = vmatprep.subr.mxu0 0.0
    %8372 = vmatpush1.msra.mxu0 %v8097
    %8373 = vmatprep.subr.mxu0 0.0
    %8374 = vmatpush1.msra.mxu0 %v8098
    %8375 = vmatprep.subr.mxu0 0.0
    %8376 = vmatpush1.msra.mxu0 %v8099
    %8377 = vmatprep.subr.mxu0 0.0
    %8378 = vmatpush1.msra.mxu0 %v8100
    %8379 = vmatprep.subr.mxu0 0.0
    %8380 = vmatpush1.msra.mxu0 %v8101
    %8381 = vmatprep.subr.mxu0 0.0
    %8382 = vmatpush1.msra.mxu0 %v8102
    %8383 = vmatprep.subr.mxu0 0.0
    %8384 = vmatpush1.msra.mxu0 %v8103
    %8385 = vmatprep.subr.mxu0 0.0
    %8386 = vmatpush1.msra.mxu0 %v8104
    %8387 = vmatprep.subr.mxu0 0.0
    %8388 = vmatpush1.msra.mxu0 %v8105
    %8389 = vmatprep.subr.mxu0 0.0
    %8390 = vmatpush1.msra.mxu0 %v8106
    %8391 = vmatprep.subr.mxu0 0.0
    %8392 = vmatpush1.msra.mxu0 %v8107
    %8393 = vmatprep.subr.mxu0 0.0
    %8394 = vmatpush1.msra.mxu0 %v8108
    %8395 = vmatprep.subr.mxu0 0.0
    %8396 = vmatpush1.msra.mxu0 %v8109
    %8397 = vmatprep.subr.mxu0 0.0
    %8398 = vmatpush1.msra.mxu0 %v8110
    %8399 = vmatprep.subr.mxu0 0.0
    %8400 = vmatpush1.msra.mxu0 %v8111
    %8401 = vmatprep.subr.mxu0 0.0
    %8402 = vmatpush1.msra.mxu0 %v8112
    %8403 = vmatprep.subr.mxu0 0.0
    %8404 = vmatpush1.msra.mxu0 %v8113
    %8405 = vmatprep.subr.mxu0 0.0
    %8406 = vmatpush1.msra.mxu0 %v8114
    %8407 = vmatprep.subr.mxu0 0.0
    %8408 = vmatpush1.msra.mxu0 %v8115
    %8409 = vmatprep.subr.mxu0 0.0
    %8410 = vmatpush1.msra.mxu0 %v8116
    %8411 = vmatprep.subr.mxu0 0.0
    %8412 = vmatpush1.msra.mxu0 %v8117
    %8413 = vmatprep.subr.mxu0 0.0
    %8414 = vmatpush1.msra.mxu0 %v8118
    %8415 = vmatprep.subr.mxu0 0.0
    %8416 = vmatpush1.msra.mxu0 %v8119
    %8417 = vmatprep.subr.mxu0 0.0
    %8418 = vmatpush1.msra.mxu0 %v8120
    %8419 = vmatprep.subr.mxu0 0.0
    %8420 = vmatpush1.msra.mxu0 %v8121
    %8421 = vmatprep.subr.mxu0 0.0
    %8422 = vmatpush1.msra.mxu0 %v8122
    %8423 = vmatprep.subr.mxu0 0.0
    %8424 = vmatpush1.msra.mxu0 %v8123
    %8425 = vmatprep.mubr.f32.mxu0 %v8049
    %8426 = vmatmul.mubr.f32.gmra.mrb[0].mxu0 %v8048
    %v8427 = vpop.f32.mrb[0].mxu0
    %v8428 = vadd.f32 %v8358, %v8427
    %v8429 = vpop.f32.mrb[0].mxu0
    %8430 = vdwg.mxu0
    %8431 = vmatprep.subr.mxu0 0.0
    %8432 = vmatpush1.msra.mxu0 %v8124
    %8433 = vmatprep.subr.mxu0 0.0
    %8434 = vmatpush1.msra.mxu0 %v8125
    %8435 = vmatprep.subr.mxu0 0.0
    %8436 = vmatpush1.msra.mxu0 %v8126
    %8437 = vmatprep.subr.mxu0 0.0
    %8438 = vmatpush1.msra.mxu0 %v8127
    %8439 = vmatprep.subr.mxu0 0.0
    %8440 = vmatpush1.msra.mxu0 %v8128
    %8441 = vmatprep.subr.mxu0 0.0
    %8442 = vmatpush1.msra.mxu0 %v8129
    %8443 = vmatprep.subr.mxu0 0.0
    %8444 = vmatpush1.msra.mxu0 %v8130
    %8445 = vmatprep.subr.mxu0 0.0
    %8446 = vmatpush1.msra.mxu0 %v8131
    %8447 = vmatprep.subr.mxu0 0.0
    %8448 = vmatpush1.msra.mxu0 %v8132
    %8449 = vmatprep.subr.mxu0 0.0
    %8450 = vmatpush1.msra.mxu0 %v8133
    %8451 = vmatprep.subr.mxu0 0.0
    %8452 = vmatpush1.msra.mxu0 %v8134
    %8453 = vmatprep.subr.mxu0 0.0
    %8454 = vmatpush1.msra.mxu0 %v8135
    %8455 = vmatprep.subr.mxu0 0.0
    %8456 = vmatpush1.msra.mxu0 %v8136
    %8457 = vmatprep.subr.mxu0 0.0
    %8458 = vmatpush1.msra.mxu0 %v8137
    %8459 = vmatprep.subr.mxu0 0.0
    %8460 = vmatpush1.msra.mxu0 %v8138
    %8461 = vmatprep.subr.mxu0 0.0
    %8462 = vmatpush1.msra.mxu0 %v8139
    %8463 = vmatprep.subr.mxu0 0.0
    %8464 = vmatpush1.msra.mxu0 %v8140
    %8465 = vmatprep.subr.mxu0 0.0
    %8466 = vmatpush1.msra.mxu0 %v8141
    %8467 = vmatprep.subr.mxu0 0.0
    %8468 = vmatpush1.msra.mxu0 %v8142
    %8469 = vmatprep.subr.mxu0 0.0
    %8470 = vmatpush1.msra.mxu0 %v8143
    %8471 = vmatprep.subr.mxu0 0.0
    %8472 = vmatpush1.msra.mxu0 %v8144
    %8473 = vmatprep.subr.mxu0 0.0
    %8474 = vmatpush1.msra.mxu0 %v8145
    %8475 = vmatprep.subr.mxu0 0.0
    %8476 = vmatpush1.msra.mxu0 %v8146
    %8477 = vmatprep.subr.mxu0 0.0
    %8478 = vmatpush1.msra.mxu0 %v8147
    %8479 = vmatprep.subr.mxu0 0.0
    %8480 = vmatpush1.msra.mxu0 %v8148
    %8481 = vmatprep.subr.mxu0 0.0
    %8482 = vmatpush1.msra.mxu0 %v8149
    %8483 = vmatprep.subr.mxu0 0.0
    %8484 = vmatpush1.msra.mxu0 %v8150
    %8485 = vmatprep.subr.mxu0 0.0
    %8486 = vmatpush1.msra.mxu0 %v8151
    %8487 = vmatprep.subr.mxu0 0.0
    %8488 = vmatpush1.msra.mxu0 %v8152
    %8489 = vmatprep.subr.mxu0 0.0
    %8490 = vmatpush1.msra.mxu0 %v8153
    %8491 = vmatprep.subr.mxu0 0.0
    %8492 = vmatpush1.msra.mxu0 %v8154
    %8493 = vmatprep.subr.mxu0 0.0
    %8494 = vmatpush1.msra.mxu0 %v8155
    %8495 = vmatprep.mubr.f32.mxu0 %v8051
    %8496 = vmatmul.mubr.f32.gmra.mrb[0].mxu0 %v8050
    %v8497 = vpop.f32.mrb[0].mxu0
    %v8498 = vadd.f32 %v8428, %v8497
    %v8499 = vpop.f32.mrb[0].mxu0
    %8500 = vdwg.mxu0
    %8501 = vmatprep.subr.mxu0 0.0
    %8502 = vmatpush1.msra.mxu0 %v8156
    %8503 = vmatprep.subr.mxu0 0.0
    %8504 = vmatpush1.msra.mxu0 %v8157
    %8505 = vmatprep.subr.mxu0 0.0
    %8506 = vmatpush1.msra.mxu0 %v8158
    %8507 = vmatprep.subr.mxu0 0.0
    %8508 = vmatpush1.msra.mxu0 %v8159
    %8509 = vmatprep.subr.mxu0 0.0
    %8510 = vmatpush1.msra.mxu0 %v8160
    %8511 = vmatprep.subr.mxu0 0.0
    %8512 = vmatpush1.msra.mxu0 %v8161
    %8513 = vmatprep.subr.mxu0 0.0
    %8514 = vmatpush1.msra.mxu0 %v8162
    %8515 = vmatprep.subr.mxu0 0.0
    %8516 = vmatpush1.msra.mxu0 %v8163
    %8517 = vmatprep.subr.mxu0 0.0
    %8518 = vmatpush1.msra.mxu0 %v8164
    %8519 = vmatprep.subr.mxu0 0.0
    %8520 = vmatpush1.msra.mxu0 %v8165
    %8521 = vmatprep.subr.mxu0 0.0
    %8522 = vmatpush1.msra.mxu0 %v8166
    %8523 = vmatprep.subr.mxu0 0.0
    %8524 = vmatpush1.msra.mxu0 %v8167
    %8525 = vmatprep.subr.mxu0 0.0
    %8526 = vmatpush1.msra.mxu0 %v8168
    %8527 = vmatprep.subr.mxu0 0.0
    %8528 = vmatpush1.msra.mxu0 %v8169
    %8529 = vmatprep.subr.mxu0 0.0
    %8530 = vmatpush1.msra.mxu0 %v8170
    %8531 = vmatprep.subr.mxu0 0.0
    %8532 = vmatpush1.msra.mxu0 %v8171
    %8533 = vmatprep.subr.mxu0 0.0
    %8534 = vmatpush1.msra.mxu0 %v8172
    %8535 = vmatprep.subr.mxu0 0.0
    %8536 = vmatpush1.msra.mxu0 %v8173
    %8537 = vmatprep.subr.mxu0 0.0
    %8538 = vmatpush1.msra.mxu0 %v8174
    %8539 = vmatprep.subr.mxu0 0.0
    %8540 = vmatpush1.msra.mxu0 %v8175
    %8541 = vmatprep.subr.mxu0 0.0
    %8542 = vmatpush1.msra.mxu0 %v8176
    %8543 = vmatprep.subr.mxu0 0.0
    %8544 = vmatpush1.msra.mxu0 %v8177
    %8545 = vmatprep.subr.mxu0 0.0
    %8546 = vmatpush1.msra.mxu0 %v8178
    %8547 = vmatprep.subr.mxu0 0.0
    %8548 = vmatpush1.msra.mxu0 %v8179
    %8549 = vmatprep.subr.mxu0 0.0
    %8550 = vmatpush1.msra.mxu0 %v8180
    %8551 = vmatprep.subr.mxu0 0.0
    %8552 = vmatpush1.msra.mxu0 %v8181
    %8553 = vmatprep.subr.mxu0 0.0
    %8554 = vmatpush1.msra.mxu0 %v8182
    %8555 = vmatprep.subr.mxu0 0.0
    %8556 = vmatpush1.msra.mxu0 %v8183
    %8557 = vmatprep.subr.mxu0 0.0
    %8558 = vmatpush1.msra.mxu0 %v8184
    %8559 = vmatprep.subr.mxu0 0.0
    %8560 = vmatpush1.msra.mxu0 %v8185
    %8561 = vmatprep.subr.mxu0 0.0
    %8562 = vmatpush1.msra.mxu0 %v8186
    %8563 = vmatprep.subr.mxu0 0.0
    %8564 = vmatpush1.msra.mxu0 %v8187
    %8565 = vmatprep.mubr.f32.mxu0 %v8053
    %8566 = vmatmul.mubr.f32.gmra.mrb[0].mxu0 %v8052
    %v8567 = vpop.f32.mrb[0].mxu0
    %v8568 = vadd.f32 %v8498, %v8567
    %v8569 = vpop.f32.mrb[0].mxu0
    %8570 = vdwg.mxu0
    %8571 = vmatprep.subr.mxu0 0.0
    %8572 = vmatpush1.msra.mxu0 %v8188
    %8573 = vmatprep.subr.mxu0 0.0
    %8574 = vmatpush1.msra.mxu0 %v8189
    %8575 = vmatprep.subr.mxu0 0.0
    %8576 = vmatpush1.msra.mxu0 %v8190
    %8577 = vmatprep.subr.mxu0 0.0
    %8578 = vmatpush1.msra.mxu0 %v8191
    %8579 = vmatprep.subr.mxu0 0.0
    %8580 = vmatpush1.msra.mxu0 %v8192
    %8581 = vmatprep.subr.mxu0 0.0
    %8582 = vmatpush1.msra.mxu0 %v8193
    %8583 = vmatprep.subr.mxu0 0.0
    %8584 = vmatpush1.msra.mxu0 %v8194
    %8585 = vmatprep.subr.mxu0 0.0
    %8586 = vmatpush1.msra.mxu0 %v8195
    %8587 = vmatprep.subr.mxu0 0.0
    %8588 = vmatpush1.msra.mxu0 %v8196
    %8589 = vmatprep.subr.mxu0 0.0
    %8590 = vmatpush1.msra.mxu0 %v8197
    %8591 = vmatprep.subr.mxu0 0.0
    %8592 = vmatpush1.msra.mxu0 %v8198
    %8593 = vmatprep.subr.mxu0 0.0
    %8594 = vmatpush1.msra.mxu0 %v8199
    %8595 = vmatprep.subr.mxu0 0.0
    %8596 = vmatpush1.msra.mxu0 %v8200
    %8597 = vmatprep.subr.mxu0 0.0
    %8598 = vmatpush1.msra.mxu0 %v8201
    %8599 = vmatprep.subr.mxu0 0.0
    %8600 = vmatpush1.msra.mxu0 %v8202
    %8601 = vmatprep.subr.mxu0 0.0
    %8602 = vmatpush1.msra.mxu0 %v8203
    %8603 = vmatprep.subr.mxu0 0.0
    %8604 = vmatpush1.msra.mxu0 %v8204
    %8605 = vmatprep.subr.mxu0 0.0
    %8606 = vmatpush1.msra.mxu0 %v8205
    %8607 = vmatprep.subr.mxu0 0.0
    %8608 = vmatpush1.msra.mxu0 %v8206
    %8609 = vmatprep.subr.mxu0 0.0
    %8610 = vmatpush1.msra.mxu0 %v8207
    %8611 = vmatprep.subr.mxu0 0.0
    %8612 = vmatpush1.msra.mxu0 %v8208
    %8613 = vmatprep.subr.mxu0 0.0
    %8614 = vmatpush1.msra.mxu0 %v8209
    %8615 = vmatprep.subr.mxu0 0.0
    %8616 = vmatpush1.msra.mxu0 %v8210
    %8617 = vmatprep.subr.mxu0 0.0
    %8618 = vmatpush1.msra.mxu0 %v8211
    %8619 = vmatprep.subr.mxu0 0.0
    %8620 = vmatpush1.msra.mxu0 %v8212
    %8621 = vmatprep.subr.mxu0 0.0
    %8622 = vmatpush1.msra.mxu0 %v8213
    %8623 = vmatprep.subr.mxu0 0.0
    %8624 = vmatpush1.msra.mxu0 %v8214
    %8625 = vmatprep.subr.mxu0 0.0
    %8626 = vmatpush1.msra.mxu0 %v8215
    %8627 = vmatprep.subr.mxu0 0.0
    %8628 = vmatpush1.msra.mxu0 %v8216
    %8629 = vmatprep.subr.mxu0 0.0
    %8630 = vmatpush1.msra.mxu0 %v8217
    %8631 = vmatprep.subr.mxu0 0.0
    %8632 = vmatpush1.msra.mxu0 %v8218
    %8633 = vmatprep.subr.mxu0 0.0
    %8634 = vmatpush1.msra.mxu0 %v8219
    %8635 = vmatprep.mubr.f32.mxu0 %v8055
    %8636 = vmatmul.mubr.f32.gmra.mrb[0].mxu0 %v8054
    %v8637 = vpop.f32.mrb[0].mxu0
    %v8638 = vadd.f32 %v8568, %v8637
    %v8639 = vpop.f32.mrb[0].mxu0
    %8640 = vdwg.mxu0
    %8641 = vmatprep.subr.mxu0 0.0
    %8642 = vmatpush1.msra.mxu0 %v8220
    %8643 = vmatprep.subr.mxu0 0.0
    %8644 = vmatpush1.msra.mxu0 %v8221
    %8645 = vmatprep.subr.mxu0 0.0
    %8646 = vmatpush1.msra.mxu0 %v8222
    %8647 = vmatprep.subr.mxu0 0.0
    %8648 = vmatpush1.msra.mxu0 %v8223
    %8649 = vmatprep.subr.mxu0 0.0
    %8650 = vmatpush1.msra.mxu0 %v8224
    %8651 = vmatprep.subr.mxu0 0.0
    %8652 = vmatpush1.msra.mxu0 %v8225
    %8653 = vmatprep.subr.mxu0 0.0
    %8654 = vmatpush1.msra.mxu0 %v8226
    %8655 = vmatprep.subr.mxu0 0.0
    %8656 = vmatpush1.msra.mxu0 %v8227
    %8657 = vmatprep.subr.mxu0 0.0
    %8658 = vmatpush1.msra.mxu0 %v8228
    %8659 = vmatprep.subr.mxu0 0.0
    %8660 = vmatpush1.msra.mxu0 %v8229
    %8661 = vmatprep.subr.mxu0 0.0
    %8662 = vmatpush1.msra.mxu0 %v8230
    %8663 = vmatprep.subr.mxu0 0.0
    %8664 = vmatpush1.msra.mxu0 %v8231
    %8665 = vmatprep.subr.mxu0 0.0
    %8666 = vmatpush1.msra.mxu0 %v8232
    %8667 = vmatprep.subr.mxu0 0.0
    %8668 = vmatpush1.msra.mxu0 %v8233
    %8669 = vmatprep.subr.mxu0 0.0
    %8670 = vmatpush1.msra.mxu0 %v8234
    %8671 = vmatprep.subr.mxu0 0.0
    %8672 = vmatpush1.msra.mxu0 %v8235
    %8673 = vmatprep.subr.mxu0 0.0
    %8674 = vmatpush1.msra.mxu0 %v8236
    %8675 = vmatprep.subr.mxu0 0.0
    %8676 = vmatpush1.msra.mxu0 %v8237
    %8677 = vmatprep.subr.mxu0 0.0
    %8678 = vmatpush1.msra.mxu0 %v8238
    %8679 = vmatprep.subr.mxu0 0.0
    %8680 = vmatpush1.msra.mxu0 %v8239
    %8681 = vmatprep.subr.mxu0 0.0
    %8682 = vmatpush1.msra.mxu0 %v8240
    %8683 = vmatprep.subr.mxu0 0.0
    %8684 = vmatpush1.msra.mxu0 %v8241
    %8685 = vmatprep.subr.mxu0 0.0
    %8686 = vmatpush1.msra.mxu0 %v8242
    %8687 = vmatprep.subr.mxu0 0.0
    %8688 = vmatpush1.msra.mxu0 %v8243
    %8689 = vmatprep.subr.mxu0 0.0
    %8690 = vmatpush1.msra.mxu0 %v8244
    %8691 = vmatprep.subr.mxu0 0.0
    %8692 = vmatpush1.msra.mxu0 %v8245
    %8693 = vmatprep.subr.mxu0 0.0
    %8694 = vmatpush1.msra.mxu0 %v8246
    %8695 = vmatprep.subr.mxu0 0.0
    %8696 = vmatpush1.msra.mxu0 %v8247
    %8697 = vmatprep.subr.mxu0 0.0
    %8698 = vmatpush1.msra.mxu0 %v8248
    %8699 = vmatprep.subr.mxu0 0.0
    %8700 = vmatpush1.msra.mxu0 %v8249
    %8701 = vmatprep.subr.mxu0 0.0
    %8702 = vmatpush1.msra.mxu0 %v8250
    %8703 = vmatprep.subr.mxu0 0.0
    %8704 = vmatpush1.msra.mxu0 %v8251
    %8705 = vmatprep.mubr.f32.mxu0 %v8057
    %8706 = vmatmul.mubr.f32.gmra.mrb[0].mxu0 %v8056
    %v8707 = vpop.f32.mrb[0].mxu0
    %v8708 = vadd.f32 %v8638, %v8707
    %v8709 = vpop.f32.mrb[0].mxu0
    %8710 = vdwg.mxu0
    %8711 = vmatprep.subr.mxu0 0.0
    %8712 = vmatpush1.msra.mxu0 %v8252
    %8713 = vmatprep.subr.mxu0 0.0
    %8714 = vmatpush1.msra.mxu0 %v8253
    %8715 = vmatprep.subr.mxu0 0.0
    %8716 = vmatpush1.msra.mxu0 %v8254
    %8717 = vmatprep.subr.mxu0 0.0
    %8718 = vmatpush1.msra.mxu0 %v8255
    %8719 = vmatprep.subr.mxu0 0.0
    %8720 = vmatpush1.msra.mxu0 %v8256
    %8721 = vmatprep.subr.mxu0 0.0
    %8722 = vmatpush1.msra.mxu0 %v8257
    %8723 = vmatprep.subr.mxu0 0.0
    %8724 = vmatpush1.msra.mxu0 %v8258
    %8725 = vmatprep.subr.mxu0 0.0
    %8726 = vmatpush1.msra.mxu0 %v8259
    %8727 = vmatprep.subr.mxu0 0.0
    %8728 = vmatpush1.msra.mxu0 %v8260
    %8729 = vmatprep.subr.mxu0 0.0
    %8730 = vmatpush1.msra.mxu0 %v8261
    %8731 = vmatprep.subr.mxu0 0.0
    %8732 = vmatpush1.msra.mxu0 %v8262
    %8733 = vmatprep.subr.mxu0 0.0
    %8734 = vmatpush1.msra.mxu0 %v8263
    %8735 = vmatprep.subr.mxu0 0.0
    %8736 = vmatpush1.msra.mxu0 %v8264
    %8737 = vmatprep.subr.mxu0 0.0
    %8738 = vmatpush1.msra.mxu0 %v8265
    %8739 = vmatprep.subr.mxu0 0.0
    %8740 = vmatpush1.msra.mxu0 %v8266
    %8741 = vmatprep.subr.mxu0 0.0
    %8742 = vmatpush1.msra.mxu0 %v8267
    %8743 = vmatprep.subr.mxu0 0.0
    %8744 = vmatpush1.msra.mxu0 %v8268
    %8745 = vmatprep.subr.mxu0 0.0
    %8746 = vmatpush1.msra.mxu0 %v8269
    %8747 = vmatprep.subr.mxu0 0.0
    %8748 = vmatpush1.msra.mxu0 %v8270
    %8749 = vmatprep.subr.mxu0 0.0
    %8750 = vmatpush1.msra.mxu0 %v8271
    %8751 = vmatprep.subr.mxu0 0.0
    %8752 = vmatpush1.msra.mxu0 %v8272
    %8753 = vmatprep.subr.mxu0 0.0
    %8754 = vmatpush1.msra.mxu0 %v8273
    %8755 = vmatprep.subr.mxu0 0.0
    %8756 = vmatpush1.msra.mxu0 %v8274
    %8757 = vmatprep.subr.mxu0 0.0
    %8758 = vmatpush1.msra.mxu0 %v8275
    %8759 = vmatprep.subr.mxu0 0.0
    %8760 = vmatpush1.msra.mxu0 %v8276
    %8761 = vmatprep.subr.mxu0 0.0
    %8762 = vmatpush1.msra.mxu0 %v8277
    %8763 = vmatprep.subr.mxu0 0.0
    %8764 = vmatpush1.msra.mxu0 %v8278
    %8765 = vmatprep.subr.mxu0 0.0
    %8766 = vmatpush1.msra.mxu0 %v8279
    %8767 = vmatprep.subr.mxu0 0.0
    %8768 = vmatpush1.msra.mxu0 %v8280
    %8769 = vmatprep.subr.mxu0 0.0
    %8770 = vmatpush1.msra.mxu0 %v8281
    %8771 = vmatprep.subr.mxu0 0.0
    %8772 = vmatpush1.msra.mxu0 %v8282
    %8773 = vmatprep.subr.mxu0 0.0
    %8774 = vmatpush1.msra.mxu0 %v8283
    %8775 = vmatprep.mubr.f32.mxu0 %v8059
    %8776 = vmatmul.mubr.f32.gmra.mrb[0].mxu0 %v8058
    %v8777 = vpop.f32.mrb[0].mxu0
    %v8778 = vadd.f32 %v8708, %v8777
    %v8779 = vpop.f32.mrb[0].mxu0
    %8780 = vdwg.mxu0
    %v8781 = vmax.f32 %v8778, 0.0
    %v8782 = vld [vmem:[%s10] sm:$0xff]
    %v8783 = vld [vmem:[%s10 + $0x8] sm:$0xff]
    %v8784 = vld [vmem:[%s10 + $0x10] sm:$0xff]
    %v8785 = vld [vmem:[%s10 + $0x18] sm:$0xff]
    %v8786 = vld [vmem:[%s10 + $0x20] sm:$0xff]
    %v8787 = vld [vmem:[%s10 + $0x28] sm:$0xff]
    %v8788 = vld [vmem:[%s10 + $0x30] sm:$0xff]
    %v8789 = vld [vmem:[%s10 + $0x38] sm:$0xff]
    %v8790 = vld [vmem:[%s11] sm:$0x1]
    %v8792 = vlaneseq
    %v8793 = vshrl.u32 %v8792, 7
    %v8794 = vsub.s32 0, %v8793
    %v8795 = vrot.slane %v8790, %v8794
    %vm8797 = vcmask 523264
    %v8799 = vsel %vm8797, %v8781, 0
    %8801 = vmatprep.subr.mxu0 0.0
    %8802 = vmatpush1.msra.mxu0 %v8782
    %8803 = vmatprep.subr.mxu0 0.0
    %8804 = vmatpush1.msra.mxu0 %v8783
    %8805 = vmatprep.subr.mxu0 0.0
    %8806 = vmatpush1.msra.mxu0 %v8784
    %8807 = vmatprep.subr.mxu0 0.0
    %8808 = vmatpush1.msra.mxu0 %v8785
    %8809 = vmatprep.subr.mxu0 0.0
    %8810 = vmatpush1.msra.mxu0 %v8786
    %8811 = vmatprep.subr.mxu0 0.0
    %8812 = vmatpush1.msra.mxu0 %v8787
    %8813 = vmatprep.subr.mxu0 0.0
    %8814 = vmatpush1.msra.mxu0 %v8788
    %8815 = vmatprep.subr.mxu0 0.0
    %8816 = vmatpush1.msra.mxu0 %v8789
    %8817 = vmatprep.subr.mxu0 0.0
    %8818 = vmatpush1.msra.mxu0 0.0
    %8819 = vmatprep.subr.mxu0 0.0
    %8820 = vmatpush1.msra.mxu0 0.0
    %8821 = vmatprep.subr.mxu0 0.0
    %8822 = vmatpush1.msra.mxu0 0.0
    %8823 = vmatprep.subr.mxu0 0.0
    %8824 = vmatpush1.msra.mxu0 0.0
    %8825 = vmatprep.subr.mxu0 0.0
    %8826 = vmatpush1.msra.mxu0 0.0
    %8827 = vmatprep.subr.mxu0 0.0
    %8828 = vmatpush1.msra.mxu0 0.0
    %8829 = vmatprep.subr.mxu0 0.0
    %8830 = vmatpush1.msra.mxu0 0.0
    %8831 = vmatprep.subr.mxu0 0.0
    %8832 = vmatpush1.msra.mxu0 0.0
    %8833 = vmatprep.subr.mxu0 0.0
    %8834 = vmatpush1.msra.mxu0 0.0
    %8835 = vmatprep.subr.mxu0 0.0
    %8836 = vmatpush1.msra.mxu0 0.0
    %8837 = vmatprep.subr.mxu0 0.0
    %8838 = vmatpush1.msra.mxu0 0.0
    %8839 = vmatprep.subr.mxu0 0.0
    %8840 = vmatpush1.msra.mxu0 0.0
    %8841 = vmatprep.subr.mxu0 0.0
    %8842 = vmatpush1.msra.mxu0 0.0
    %8843 = vmatprep.subr.mxu0 0.0
    %8844 = vmatpush1.msra.mxu0 0.0
    %8845 = vmatprep.subr.mxu0 0.0
    %8846 = vmatpush1.msra.mxu0 0.0
    %8847 = vmatprep.subr.mxu0 0.0
    %8848 = vmatpush1.msra.mxu0 0.0
    %8849 = vmatprep.subr.mxu0 0.0
    %8850 = vmatpush1.msra.mxu0 0.0
    %8851 = vmatprep.subr.mxu0 0.0
    %8852 = vmatpush1.msra.mxu0 0.0
    %8853 = vmatprep.subr.mxu0 0.0
    %8854 = vmatpush1.msra.mxu0 0.0
    %8855 = vmatprep.subr.mxu0 0.0
    %8856 = vmatpush1.msra.mxu0 0.0
    %8857 = vmatprep.subr.mxu0 0.0
    %8858 = vmatpush1.msra.mxu0 0.0
    %8859 = vmatprep.subr.mxu0 0.0
    %8860 = vmatpush1.msra.mxu0 0.0
    %8861 = vmatprep.subr.mxu0 0.0
    %8862 = vmatpush1.msra.mxu0 0.0
    %8863 = vmatprep.subr.mxu0 0.0
    %8864 = vmatpush1.msra.mxu0 0.0
    %8865 = vmatprep.mubr.f32.mxu0 0.0
    %8866 = vmatmul.mubr.f32.gmra.mrb[0].mxu0 %v8799
    %v8867 = vpop.f32.mrb[0].mxu0
    %v8868 = vadd.f32 %v8795, %v8867
    %v8869 = vpop.f32.mrb[0].mxu0
    %8870 = vdwg.mxu0
    %v8871 = vld [vmem:[%s12] sm:$0xff]
    %vm8872 = vcmask 64512
    %v8874 = vsel %vm8872, %v8871, 0
    %8876 = vmatprep.subr.mxu0 0.0
    %8877 = vmatpush1.msra.mxu0 %v8868
    %8878 = vmatprep.subr.mxu0 0.0
    %8879 = vmatpush1.msra.mxu0 0.0
    %8880 = vmatprep.subr.mxu0 0.0
    %8881 = vmatpush1.msra.mxu0 0.0
    %8882 = vmatprep.subr.mxu0 0.0
    %8883 = vmatpush1.msra.mxu0 0.0
    %8884 = vmatprep.subr.mxu0 0.0
    %8885 = vmatpush1.msra.mxu0 0.0
    %8886 = vmatprep.subr.mxu0 0.0
    %8887 = vmatpush1.msra.mxu0 0.0
    %8888 = vmatprep.subr.mxu0 0.0
    %8889 = vmatpush1.msra.mxu0 0.0
    %8890 = vmatprep.subr.mxu0 0.0
    %8891 = vmatpush1.msra.mxu0 0.0
    %8892 = vmatprep.subr.mxu0 0.0
    %8893 = vmatpush1.msra.mxu0 0.0
    %8894 = vmatprep.subr.mxu0 0.0
    %8895 = vmatpush1.msra.mxu0 0.0
    %8896 = vmatprep.subr.mxu0 0.0
    %8897 = vmatpush1.msra.mxu0 0.0
    %8898 = vmatprep.subr.mxu0 0.0
    %8899 = vmatpush1.msra.mxu0 0.0
    %8900 = vmatprep.subr.mxu0 0.0
    %8901 = vmatpush1.msra.mxu0 0.0
    %8902 = vmatprep.subr.mxu0 0.0
    %8903 = vmatpush1.msra.mxu0 0.0
    %8904 = vmatprep.subr.mxu0 0.0
    %8905 = vmatpush1.msra.mxu0 0.0
    %8906 = vmatprep.subr.mxu0 0.0
    %8907 = vmatpush1.msra.mxu0 0.0
    %8908 = vmatprep.subr.mxu0 0.0
    %8909 = vmatpush1.msra.mxu0 0.0
    %8910 = vmatprep.subr.mxu0 0.0
    %8911 = vmatpush1.msra.mxu0 0.0
    %8912 = vmatprep.subr.mxu0 0.0
    %8913 = vmatpush1.msra.mxu0 0.0
    %8914 = vmatprep.subr.mxu0 0.0
    %8915 = vmatpush1.msra.mxu0 0.0
    %8916 = vmatprep.subr.mxu0 0.0
    %8917 = vmatpush1.msra.mxu0 0.0
    %8918 = vmatprep.subr.mxu0 0.0
    %8919 = vmatpush1.msra.mxu0 0.0
    %8920 = vmatprep.subr.mxu0 0.0
    %8921 = vmatpush1.msra.mxu0 0.0
    %8922 = vmatprep.subr.mxu0 0.0
    %8923 = vmatpush1.msra.mxu0 0.0
    %8924 = vmatprep.subr.mxu0 0.0
    %8925 = vmatpush1.msra.mxu0 0.0
    %8926 = vmatprep.subr.mxu0 0.0
    %8927 = vmatpush1.msra.mxu0 0.0
    %8928 = vmatprep.subr.mxu0 0.0
    %8929 = vmatpush1.msra.mxu0 0.0
    %8930 = vmatprep.subr.mxu0 0.0
    %8931 = vmatpush1.msra.mxu0 0.0
    %8932 = vmatprep.subr.mxu0 0.0
    %8933 = vmatpush1.msra.mxu0 0.0
    %8934 = vmatprep.subr.mxu0 0.0
    %8935 = vmatpush1.msra.mxu0 0.0
    %8936 = vmatprep.subr.mxu0 0.0
    %8937 = vmatpush1.msra.mxu0 0.0
    %8938 = vmatprep.subr.mxu0 0.0
    %8939 = vmatpush1.msra.mxu0 0.0
    %8940 = vmatprep.mubr.f32.mxu0 0.0
    %8941 = vmatmul.mubr.f32.gmra.mrb[0].mxu0 %v8874
    %v8942 = vpop.f32.mrb[0].mxu0
    %v8943 = vadd.f32 0.0, %v8942
    %v8944 = vpop.f32.mrb[0].mxu0
    %8945 = vdwg.mxu0
    %v8946 = vld [vmem:[%s13] sm:$0xff]
    %v8947 = vld [vmem:[%s13 + $0x8] sm:$0xff]
    %v8948 = vld [vmem:[%s13 + $0x10] sm:$0xff]
    %v8949 = vld [vmem:[%s13 + $0x18] sm:$0xff]
    %v8950 = vld [vmem:[%s15] sm:$0x1]
    %v8952 = vlaneseq
    %v8953 = vshrl.u32 %v8952, 7
    %v8954 = vsub.s32 0, %v8953
    %v8955 = vrot.slane %v8950, %v8954
    %vm8957 = vcmask 261120
    %v8959 = vsel %vm8957, %v8943, 0
    %8961 = vmatprep.subr.mxu0 0.0
    %8962 = vmatpush1.msra.mxu0 %v8946
    %8963 = vmatprep.subr.mxu0 0.0
    %8964 = vmatpush1.msra.mxu0 %v8947
    %8965 = vmatprep.subr.mxu0 0.0
    %8966 = vmatpush1.msra.mxu0 %v8948
    %8967 = vmatprep.subr.mxu0 0.0
    %8968 = vmatpush1.msra.mxu0 %v8949
    %8969 = vmatprep.subr.mxu0 0.0
    %8970 = vmatpush1.msra.mxu0 0.0
    %8971 = vmatprep.subr.mxu0 0.0
    %8972 = vmatpush1.msra.mxu0 0.0
    %8973 = vmatprep.subr.mxu0 0.0
    %8974 = vmatpush1.msra.mxu0 0.0
    %8975 = vmatprep.subr.mxu0 0.0
    %8976 = vmatpush1.msra.mxu0 0.0
    %8977 = vmatprep.subr.mxu0 0.0
    %8978 = vmatpush1.msra.mxu0 0.0
    %8979 = vmatprep.subr.mxu0 0.0
    %8980 = vmatpush1.msra.mxu0 0.0
    %8981 = vmatprep.subr.mxu0 0.0
    %8982 = vmatpush1.msra.mxu0 0.0
    %8983 = vmatprep.subr.mxu0 0.0
    %8984 = vmatpush1.msra.mxu0 0.0
    %8985 = vmatprep.subr.mxu0 0.0
    %8986 = vmatpush1.msra.mxu0 0.0
    %8987 = vmatprep.subr.mxu0 0.0
    %8988 = vmatpush1.msra.mxu0 0.0
    %8989 = vmatprep.subr.mxu0 0.0
    %8990 = vmatpush1.msra.mxu0 0.0
    %8991 = vmatprep.subr.mxu0 0.0
    %8992 = vmatpush1.msra.mxu0 0.0
    %8993 = vmatprep.subr.mxu0 0.0
    %8994 = vmatpush1.msra.mxu0 0.0
    %8995 = vmatprep.subr.mxu0 0.0
    %8996 = vmatpush1.msra.mxu0 0.0
    %8997 = vmatprep.subr.mxu0 0.0
    %8998 = vmatpush1.msra.mxu0 0.0
    %8999 = vmatprep.subr.mxu0 0.0
    %9000 = vmatpush1.msra.mxu0 0.0
    %9001 = vmatprep.subr.mxu0 0.0
    %9002 = vmatpush1.msra.mxu0 0.0
    %9003 = vmatprep.subr.mxu0 0.0
    %9004 = vmatpush1.msra.mxu0 0.0
    %9005 = vmatprep.subr.mxu0 0.0
    %9006 = vmatpush1.msra.mxu0 0.0
    %9007 = vmatprep.subr.mxu0 0.0
    %9008 = vmatpush1.msra.mxu0 0.0
    %9009 = vmatprep.subr.mxu0 0.0
    %9010 = vmatpush1.msra.mxu0 0.0
    %9011 = vmatprep.subr.mxu0 0.0
    %9012 = vmatpush1.msra.mxu0 0.0
    %9013 = vmatprep.subr.mxu0 0.0
    %9014 = vmatpush1.msra.mxu0 0.0
    %9015 = vmatprep.subr.mxu0 0.0
    %9016 = vmatpush1.msra.mxu0 0.0
    %9017 = vmatprep.subr.mxu0 0.0
    %9018 = vmatpush1.msra.mxu0 0.0
    %9019 = vmatprep.subr.mxu0 0.0
    %9020 = vmatpush1.msra.mxu0 0.0
    %9021 = vmatprep.subr.mxu0 0.0
    %9022 = vmatpush1.msra.mxu0 0.0
    %9023 = vmatprep.subr.mxu0 0.0
    %9024 = vmatpush1.msra.mxu0 0.0
    %9025 = vmatprep.mubr.f32.mxu0 0.0
    %9026 = vmatmul.mubr.f32.gmra.mrb[0].mxu0 %v8959
    %v9027 = vpop.f32.mrb[0].mxu0
    %v9028 = vadd.f32 %v8955, %v9027
    %v9029 = vpop.f32.mrb[0].mxu0
    %9030 = vdwg.mxu0
    %v9031 = vld [vmem:[%s14] sm:$0xff]
    %v9032 = vld [vmem:[%s14 + $0x8] sm:$0xff]
    %v9033 = vld [vmem:[%s14 + $0x10] sm:$0xff]
    %v9034 = vld [vmem:[%s14 + $0x18] sm:$0xff]
    %v9036 = vsel %vm8957, 0.0, 0
    %9038 = vmatprep.subr.mxu0 0.0
    %9039 = vmatpush1.msra.mxu0 %v9031
    %9040 = vmatprep.subr.mxu0 0.0
    %9041 = vmatpush1.msra.mxu0 %v9032
    %9042 = vmatprep.subr.mxu0 0.0
    %9043 = vmatpush1.msra.mxu0 %v9033
    %9044 = vmatprep.subr.mxu0 0.0
    %9045 = vmatpush1.msra.mxu0 %v9034
    %9046 = vmatprep.subr.mxu0 0.0
    %9047 = vmatpush1.msra.mxu0 0.0
    %9048 = vmatprep.subr.mxu0 0.0
    %9049 = vmatpush1.msra.mxu0 0.0
    %9050 = vmatprep.subr.mxu0 0.0
    %9051 = vmatpush1.msra.mxu0 0.0
    %9052 = vmatprep.subr.mxu0 0.0
    %9053 = vmatpush1.msra.mxu0 0.0
    %9054 = vmatprep.subr.mxu0 0.0
    %9055 = vmatpush1.msra.mxu0 0.0
    %9056 = vmatprep.subr.mxu0 0.0
    %9057 = vmatpush1.msra.mxu0 0.0
    %9058 = vmatprep.subr.mxu0 0.0
    %9059 = vmatpush1.msra.mxu0 0.0
    %9060 = vmatprep.subr.mxu0 0.0
    %9061 = vmatpush1.msra.mxu0 0.0
    %9062 = vmatprep.subr.mxu0 0.0
    %9063 = vmatpush1.msra.mxu0 0.0
    %9064 = vmatprep.subr.mxu0 0.0
    %9065 = vmatpush1.msra.mxu0 0.0
    %9066 = vmatprep.subr.mxu0 0.0
    %9067 = vmatpush1.msra.mxu0 0.0
    %9068 = vmatprep.subr.mxu0 0.0
    %9069 = vmatpush1.msra.mxu0 0.0
    %9070 = vmatprep.subr.mxu0 0.0
    %9071 = vmatpush1.msra.mxu0 0.0
    %9072 = vmatprep.subr.mxu0 0.0
    %9073 = vmatpush1.msra.mxu0 0.0
    %9074 = vmatprep.subr.mxu0 0.0
    %9075 = vmatpush1.msra.mxu0 0.0
    %9076 = vmatprep.subr.mxu0 0.0
    %9077 = vmatpush1.msra.mxu0 0.0
    %9078 = vmatprep.subr.mxu0 0.0
    %9079 = vmatpush1.msra.mxu0 0.0
    %9080 = vmatprep.subr.mxu0 0.0
    %9081 = vmatpush1.msra.mxu0 0.0
    %9082 = vmatprep.subr.mxu0 0.0
    %9083 = vmatpush1.msra.mxu0 0.0
    %9084 = vmatprep.subr.mxu0 0.0
    %9085 = vmatpush1.msra.mxu0 0.0
    %9086 = vmatprep.subr.mxu0 0.0
    %9087 = vmatpush1.msra.mxu0 0.0
    %9088 = vmatprep.subr.mxu0 0.0
    %9089 = vmatpush1.msra.mxu0 0.0
    %9090 = vmatprep.subr.mxu0 0.0
    %9091 = vmatpush1.msra.mxu0 0.0
    %9092 = vmatprep.subr.mxu0 0.0
    %9093 = vmatpush1.msra.mxu0 0.0
    %9094 = vmatprep.subr.mxu0 0.0
    %9095 = vmatpush1.msra.mxu0 0.0
    %9096 = vmatprep.subr.mxu0 0.0
    %9097 = vmatpush1.msra.mxu0 0.0
    %9098 = vmatprep.subr.mxu0 0.0
    %9099 = vmatpush1.msra.mxu0 0.0
    %9100 = vmatprep.subr.mxu0 0.0
    %9101 = vmatpush1.msra.mxu0 0.0
    %9102 = vmatprep.mubr.f32.mxu0 0.0
    %9103 = vmatmul.mubr.f32.gmra.mrb[0].mxu0 %v9036
    %v9104 = vpop.f32.mrb[0].mxu0
    %v9105 = vadd.f32 0.0, %v9104
    %v9106 = vpop.f32.mrb[0].mxu0
    %9107 = vdwg.mxu0
    %v9108 = vadd.f32 %v9028, %v9105
    %v9109 = vmul.f32 %v9108, 0.5
    %v9110 = vtanh.pop %v9109
    %v9111 = vadd.f32 %v9110, 1.0
    %v9112 = vmul.f32 %v9111, 0.5
    %v9113 = vtanh.pop %v9108
    %v9114 = vmul.f32 %v9112, 0.0
    %9116 = vrot.lane.b32.xlu0 %v9113, 64
    %v9117 = vpop.permute.xlu0 %9116
    %v9119 = vmul.f32 %v9112, %v9117
    %9121 = vrot.lane.b32.xlu0 %v9119, 32
    %v9122 = vpop.permute.xlu0 %9121
    %v9124 = vadd.f32 %v9114, %v9122
    %v9125 = vtanh.pop %v9124
    %9127 = vrot.lane.b32.xlu0 %v9125, 64
    %v9128 = vpop.permute.xlu0 %9127
    %v9130 = vmul.f32 %v9112, %v9128
    %9132 = vrot.lane.b32.xlu0 %v9130, 32
    %v9133 = vpop.permute.xlu0 %9132
    %vm9135 = vcmask 254976
    %9136 = vst.msk [vmem:[#allocation4] sm:$0x3] %vm9135, %v9133
    %v9137 = vsel %vm8957, %v9133, 0
    %9139 = vmatprep.subr.mxu0 0.0
    %9140 = vmatpush1.msra.mxu0 %v9031
    %9141 = vmatprep.subr.mxu0 0.0
    %9142 = vmatpush1.msra.mxu0 %v9032
    %9143 = vmatprep.subr.mxu0 0.0
    %9144 = vmatpush1.msra.mxu0 %v9033
    %9145 = vmatprep.subr.mxu0 0.0
    %9146 = vmatpush1.msra.mxu0 %v9034
    %9147 = vmatprep.subr.mxu0 0.0
    %9148 = vmatpush1.msra.mxu0 0.0
    %9149 = vmatprep.subr.mxu0 0.0
    %9150 = vmatpush1.msra.mxu0 0.0
    %9151 = vmatprep.subr.mxu0 0.0
    %9152 = vmatpush1.msra.mxu0 0.0
    %9153 = vmatprep.subr.mxu0 0.0
    %9154 = vmatpush1.msra.mxu0 0.0
    %9155 = vmatprep.subr.mxu0 0.0
    %9156 = vmatpush1.msra.mxu0 0.0
    %9157 = vmatprep.subr.mxu0 0.0
    %9158 = vmatpush1.msra.mxu0 0.0
    %9159 = vmatprep.subr.mxu0 0.0
    %9160 = vmatpush1.msra.mxu0 0.0
    %9161 = vmatprep.subr.mxu0 0.0
    %9162 = vmatpush1.msra.mxu0 0.0
    %9163 = vmatprep.subr.mxu0 0.0
    %9164 = vmatpush1.msra.mxu0 0.0
    %9165 = vmatprep.subr.mxu0 0.0
    %9166 = vmatpush1.msra.mxu0 0.0
    %9167 = vmatprep.subr.mxu0 0.0
    %9168 = vmatpush1.msra.mxu0 0.0
    %9169 = vmatprep.subr.mxu0 0.0
    %9170 = vmatpush1.msra.mxu0 0.0
    %9171 = vmatprep.subr.mxu0 0.0
    %9172 = vmatpush1.msra.mxu0 0.0
    %9173 = vmatprep.subr.mxu0 0.0
    %9174 = vmatpush1.msra.mxu0 0.0
    %9175 = vmatprep.subr.mxu0 0.0
    %9176 = vmatpush1.msra.mxu0 0.0
    %9177 = vmatprep.subr.mxu0 0.0
    %9178 = vmatpush1.msra.mxu0 0.0
    %9179 = vmatprep.subr.mxu0 0.0
    %9180 = vmatpush1.msra.mxu0 0.0
    %9181 = vmatprep.subr.mxu0 0.0
    %9182 = vmatpush1.msra.mxu0 0.0
    %9183 = vmatprep.subr.mxu0 0.0
    %9184 = vmatpush1.msra.mxu0 0.0
    %9185 = vmatprep.subr.mxu0 0.0
    %9186 = vmatpush1.msra.mxu0 0.0
    %9187 = vmatprep.subr.mxu0 0.0
    %9188 = vmatpush1.msra.mxu0 0.0
    %9189 = vmatprep.subr.mxu0 0.0
    %9190 = vmatpush1.msra.mxu0 0.0
    %9191 = vmatprep.subr.mxu0 0.0
    %9192 = vmatpush1.msra.mxu0 0.0
    %9193 = vmatprep.subr.mxu0 0.0
    %9194 = vmatpush1.msra.mxu0 0.0
    %9195 = vmatprep.subr.mxu0 0.0
    %9196 = vmatpush1.msra.mxu0 0.0
    %9197 = vmatprep.subr.mxu0 0.0
    %9198 = vmatpush1.msra.mxu0 0.0
    %9199 = vmatprep.subr.mxu0 0.0
    %9200 = vmatpush1.msra.mxu0 0.0
    %9201 = vmatprep.subr.mxu0 0.0
    %9202 = vmatpush1.msra.mxu0 0.0
    %9203 = vmatprep.mubr.f32.mxu0 0.0
    %9204 = vmatmul.mubr.f32.gmra.mrb[0].mxu0 %v9137
    %v9205 = vpop.f32.mrb[0].mxu0
    %v9206 = vadd.f32 0.0, %v9205
    %v9207 = vpop.f32.mrb[0].mxu0
    %9208 = vdwg.mxu0
    %v9210 = vrot.slane %v9206, 6
    %v9212 = vadd.f32 %v9028, %v9210
    %v9213 = vmul.f32 %v9212, 0.5
    %v9214 = vtanh.pop %v9213
    %v9215 = vadd.f32 %v9214, 1.0
    %v9216 = vmul.f32 %v9215, 0.5
    %v9217 = vtanh.pop %v9212
    %v9219 = vrot.slane %v9124, 6
    %v9221 = vmul.f32 %v9216, %v9219
    %9223 = vrot.lane.b32.xlu0 %v9217, 64
    %v9224 = vpop.permute.xlu0 %9223
    %v9226 = vmul.f32 %v9216, %v9224
    %9228 = vrot.lane.b32.xlu0 %v9226, 32
    %v9229 = vpop.permute.xlu0 %9228
    %v9231 = vadd.f32 %v9221, %v9229
    %v9232 = vtanh.pop %v9231
    %9234 = vrot.lane.b32.xlu0 %v9232, 64
    %v9235 = vpop.permute.xlu0 %9234
    %v9237 = vmul.f32 %v9216, %v9235
    %9239 = vrot.lane.b32.xlu0 %v9237, 32
    %v9240 = vpop.permute.xlu0 %9239
    %vm9242 = vcmask 257026
    %9243 = vst.msk [vmem:[#allocation4] sm:$0xc] %vm9242, %v9240
    %v9244 = vrot.slane %v9237, 2
    %9245 = vrot.lane.b32.xlu0 %v9244, 32
    %v9246 = vpop.permute.xlu0 %9245
    %v9247 = vsel %vm8957, %v9246, 0
    %9249 = vmatprep.subr.mxu0 0.0
    %9250 = vmatpush1.msra.mxu0 %v9031
    %9251 = vmatprep.subr.mxu0 0.0
    %9252 = vmatpush1.msra.mxu0 %v9032
    %9253 = vmatprep.subr.mxu0 0.0
    %9254 = vmatpush1.msra.mxu0 %v9033
    %9255 = vmatprep.subr.mxu0 0.0
    %9256 = vmatpush1.msra.mxu0 %v9034
    %9257 = vmatprep.subr.mxu0 0.0
    %9258 = vmatpush1.msra.mxu0 0.0
    %9259 = vmatprep.subr.mxu0 0.0
    %9260 = vmatpush1.msra.mxu0 0.0
    %9261 = vmatprep.subr.mxu0 0.0
    %9262 = vmatpush1.msra.mxu0 0.0
    %9263 = vmatprep.subr.mxu0 0.0
    %9264 = vmatpush1.msra.mxu0 0.0
    %9265 = vmatprep.subr.mxu0 0.0
    %9266 = vmatpush1.msra.mxu0 0.0
    %9267 = vmatprep.subr.mxu0 0.0
    %9268 = vmatpush1.msra.mxu0 0.0
    %9269 = vmatprep.subr.mxu0 0.0
    %9270 = vmatpush1.msra.mxu0 0.0
    %9271 = vmatprep.subr.mxu0 0.0
    %9272 = vmatpush1.msra.mxu0 0.0
    %9273 = vmatprep.subr.mxu0 0.0
    %9274 = vmatpush1.msra.mxu0 0.0
    %9275 = vmatprep.subr.mxu0 0.0
    %9276 = vmatpush1.msra.mxu0 0.0
    %9277 = vmatprep.subr.mxu0 0.0
    %9278 = vmatpush1.msra.mxu0 0.0
    %9279 = vmatprep.subr.mxu0 0.0
    %9280 = vmatpush1.msra.mxu0 0.0
    %9281 = vmatprep.subr.mxu0 0.0
    %9282 = vmatpush1.msra.mxu0 0.0
    %9283 = vmatprep.subr.mxu0 0.0
    %9284 = vmatpush1.msra.mxu0 0.0
    %9285 = vmatprep.subr.mxu0 0.0
    %9286 = vmatpush1.msra.mxu0 0.0
    %9287 = vmatprep.subr.mxu0 0.0
    %9288 = vmatpush1.msra.mxu0 0.0
    %9289 = vmatprep.subr.mxu0 0.0
    %9290 = vmatpush1.msra.mxu0 0.0
    %9291 = vmatprep.subr.mxu0 0.0
    %9292 = vmatpush1.msra.mxu0 0.0
    %9293 = vmatprep.subr.mxu0 0.0
    %9294 = vmatpush1.msra.mxu0 0.0
    %9295 = vmatprep.subr.mxu0 0.0
    %9296 = vmatpush1.msra.mxu0 0.0
    %9297 = vmatprep.subr.mxu0 0.0
    %9298 = vmatpush1.msra.mxu0 0.0
    %9299 = vmatprep.subr.mxu0 0.0
    %9300 = vmatpush1.msra.mxu0 0.0
    %9301 = vmatprep.subr.mxu0 0.0
    %9302 = vmatpush1.msra.mxu0 0.0
    %9303 = vmatprep.subr.mxu0 0.0
    %9304 = vmatpush1.msra.mxu0 0.0
    %9305 = vmatprep.subr.mxu0 0.0
    %9306 = vmatpush1.msra.mxu0 0.0
    %9307 = vmatprep.subr.mxu0 0.0
    %9308 = vmatpush1.msra.mxu0 0.0
    %9309 = vmatprep.subr.mxu0 0.0
    %9310 = vmatpush1.msra.mxu0 0.0
    %9311 = vmatprep.subr.mxu0 0.0
    %9312 = vmatpush1.msra.mxu0 0.0
    %9313 = vmatprep.mubr.f32.mxu0 0.0
    %9314 = vmatmul.mubr.f32.gmra.mrb[0].mxu0 %v9247
    %v9315 = vpop.f32.mrb[0].mxu0
    %v9316 = vadd.f32 0.0, %v9315
    %v9317 = vpop.f32.mrb[0].mxu0
    %9318 = vdwg.mxu0
    %v9320 = vrot.slane %v9316, 4
    %v9322 = vadd.f32 %v9028, %v9320
    %v9323 = vmul.f32 %v9322, 0.5
    %v9324 = vtanh.pop %v9323
    %v9325 = vadd.f32 %v9324, 1.0
    %v9326 = vmul.f32 %v9325, 0.5
    %v9327 = vtanh.pop %v9322
    %v9329 = vrot.slane %v9231, 6
    %v9331 = vmul.f32 %v9326, %v9329
    %9333 = vrot.lane.b32.xlu0 %v9327, 64
    %v9334 = vpop.permute.xlu0 %9333
    %v9336 = vmul.f32 %v9326, %v9334
    %9338 = vrot.lane.b32.xlu0 %v9336, 32
    %v9339 = vpop.permute.xlu0 %9338
    %v9341 = vadd.f32 %v9331, %v9339
    %v9342 = vtanh.pop %v9341
    %9344 = vrot.lane.b32.xlu0 %v9342, 64
    %v9345 = vpop.permute.xlu0 %9344
    %v9347 = vmul.f32 %v9326, %v9345
    %9349 = vrot.lane.b32.xlu0 %v9347, 32
    %v9350 = vpop.permute.xlu0 %9349
    %vm9352 = vcmask 259076
    %9353 = vst.msk [vmem:[#allocation4] sm:$0x30] %vm9352, %v9350
    %v9354 = vrot.slane %v9347, 4
    %9355 = vrot.lane.b32.xlu0 %v9354, 32
    %v9356 = vpop.permute.xlu0 %9355
    %v9357 = vsel %vm8957, %v9356, 0
    %9359 = vmatprep.subr.mxu0 0.0
    %9360 = vmatpush1.msra.mxu0 %v9031
    %9361 = vmatprep.subr.mxu0 0.0
    %9362 = vmatpush1.msra.mxu0 %v9032
    %9363 = vmatprep.subr.mxu0 0.0
    %9364 = vmatpush1.msra.mxu0 %v9033
    %9365 = vmatprep.subr.mxu0 0.0
    %9366 = vmatpush1.msra.mxu0 %v9034
    %9367 = vmatprep.subr.mxu0 0.0
    %9368 = vmatpush1.msra.mxu0 0.0
    %9369 = vmatprep.subr.mxu0 0.0
    %9370 = vmatpush1.msra.mxu0 0.0
    %9371 = vmatprep.subr.mxu0 0.0
    %9372 = vmatpush1.msra.mxu0 0.0
    %9373 = vmatprep.subr.mxu0 0.0
    %9374 = vmatpush1.msra.mxu0 0.0
    %9375 = vmatprep.subr.mxu0 0.0
    %9376 = vmatpush1.msra.mxu0 0.0
    %9377 = vmatprep.subr.mxu0 0.0
    %9378 = vmatpush1.msra.mxu0 0.0
    %9379 = vmatprep.subr.mxu0 0.0
    %9380 = vmatpush1.msra.mxu0 0.0
    %9381 = vmatprep.subr.mxu0 0.0
    %9382 = vmatpush1.msra.mxu0 0.0
    %9383 = vmatprep.subr.mxu0 0.0
    %9384 = vmatpush1.msra.mxu0 0.0
    %9385 = vmatprep.subr.mxu0 0.0
    %9386 = vmatpush1.msra.mxu0 0.0
    %9387 = vmatprep.subr.mxu0 0.0
    %9388 = vmatpush1.msra.mxu0 0.0
    %9389 = vmatprep.subr.mxu0 0.0
    %9390 = vmatpush1.msra.mxu0 0.0
    %9391 = vmatprep.subr.mxu0 0.0
    %9392 = vmatpush1.msra.mxu0 0.0
    %9393 = vmatprep.subr.mxu0 0.0
    %9394 = vmatpush1.msra.mxu0 0.0
    %9395 = vmatprep.subr.mxu0 0.0
    %9396 = vmatpush1.msra.mxu0 0.0
    %9397 = vmatprep.subr.mxu0 0.0
    %9398 = vmatpush1.msra.mxu0 0.0
    %9399 = vmatprep.subr.mxu0 0.0
    %9400 = vmatpush1.msra.mxu0 0.0
    %9401 = vmatprep.subr.mxu0 0.0
    %9402 = vmatpush1.msra.mxu0 0.0
    %9403 = vmatprep.subr.mxu0 0.0
    %9404 = vmatpush1.msra.mxu0 0.0
    %9405 = vmatprep.subr.mxu0 0.0
    %9406 = vmatpush1.msra.mxu0 0.0
    %9407 = vmatprep.subr.mxu0 0.0
    %9408 = vmatpush1.msra.mxu0 0.0
    %9409 = vmatprep.subr.mxu0 0.0
    %9410 = vmatpush1.msra.mxu0 0.0
    %9411 = vmatprep.subr.mxu0 0.0
    %9412 = vmatpush1.msra.mxu0 0.0
    %9413 = vmatprep.subr.mxu0 0.0
    %9414 = vmatpush1.msra.mxu0 0.0
    %9415 = vmatprep.subr.mxu0 0.0
    %9416 = vmatpush1.msra.mxu0 0.0
    %9417 = vmatprep.subr.mxu0 0.0
    %9418 = vmatpush1.msra.mxu0 0.0
    %9419 = vmatprep.subr.mxu0 0.0
    %9420 = vmatpush1.msra.mxu0 0.0
    %9421 = vmatprep.subr.mxu0 0.0
    %9422 = vmatpush1.msra.mxu0 0.0
    %9423 = vmatprep.mubr.f32.mxu0 0.0
    %9424 = vmatmul.mubr.f32.gmra.mrb[0].mxu0 %v9357
    %v9425 = vpop.f32.mrb[0].mxu0
    %v9426 = vadd.f32 0.0, %v9425
    %v9427 = vpop.f32.mrb[0].mxu0
    %9428 = vdwg.mxu0
    %v9430 = vrot.slane %v9426, 2
    %v9432 = vadd.f32 %v9028, %v9430
    %v9433 = vmul.f32 %v9432, 0.5
    %v9434 = vtanh.pop %v9433
    %v9435 = vadd.f32 %v9434, 1.0
    %v9436 = vmul.f32 %v9435, 0.5
    %v9437 = vtanh.pop %v9432
    %v9439 = vrot.slane %v9341, 6
    %v9441 = vmul.f32 %v9436, %v9439
    %9443 = vrot.lane.b32.xlu0 %v9437, 64
    %v9444 = vpop.permute.xlu0 %9443
    %v9446 = vmul.f32 %v9436, %v9444
    %9448 = vrot.lane.b32.xlu0 %v9446, 32
    %v9449 = vpop.permute.xlu0 %9448
    %v9451 = vadd.f32 %v9441, %v9449
    %v9452 = vtanh.pop %v9451
    %9454 = vrot.lane.b32.xlu0 %v9452, 64
    %v9455 = vpop.permute.xlu0 %9454
    %v9457 = vmul.f32 %v9436, %v9455
    %9459 = vrot.lane.b32.xlu0 %v9457, 32
    %v9460 = vpop.permute.xlu0 %9459
    %vm9462 = vcmask 261126
    %9463 = vst.msk [vmem:[#allocation4] sm:$0xc0] %vm9462, %v9460
    %v9464 = vld [vmem:[#allocation4] sm:$0xff]
    %v9465 = vld [vmem:[%s16] sm:$0xff]
    %v9466 = vld [vmem:[%s16 + $0x8] sm:$0xff]
    %v9467 = vld [vmem:[%s16 + $0x10] sm:$0xff]
    %v9468 = vld [vmem:[%s16 + $0x18] sm:$0xff]
    %v9470 = vsel %vm8957, %v9464, 0
    %9472 = vmatprep.subr.mxu0 0.0
    %9473 = vmatpush1.msra.mxu0 %v9465
    %9474 = vmatprep.subr.mxu0 0.0
    %9475 = vmatpush1.msra.mxu0 %v9466
    %9476 = vmatprep.subr.mxu0 0.0
    %9477 = vmatpush1.msra.mxu0 %v9467
    %9478 = vmatprep.subr.mxu0 0.0
    %9479 = vmatpush1.msra.mxu0 %v9468
    %9480 = vmatprep.subr.mxu0 0.0
    %9481 = vmatpush1.msra.mxu0 0.0
    %9482 = vmatprep.subr.mxu0 0.0
    %9483 = vmatpush1.msra.mxu0 0.0
    %9484 = vmatprep.subr.mxu0 0.0
    %9485 = vmatpush1.msra.mxu0 0.0
    %9486 = vmatprep.subr.mxu0 0.0
    %9487 = vmatpush1.msra.mxu0 0.0
    %9488 = vmatprep.subr.mxu0 0.0
    %9489 = vmatpush1.msra.mxu0 0.0
    %9490 = vmatprep.subr.mxu0 0.0
    %9491 = vmatpush1.msra.mxu0 0.0
    %9492 = vmatprep.subr.mxu0 0.0
    %9493 = vmatpush1.msra.mxu0 0.0
    %9494 = vmatprep.subr.mxu0 0.0
    %9495 = vmatpush1.msra.mxu0 0.0
    %9496 = vmatprep.subr.mxu0 0.0
    %9497 = vmatpush1.msra.mxu0 0.0
    %9498 = vmatprep.subr.mxu0 0.0
    %9499 = vmatpush1.msra.mxu0 0.0
    %9500 = vmatprep.subr.mxu0 0.0
    %9501 = vmatpush1.msra.mxu0 0.0
    %9502 = vmatprep.subr.mxu0 0.0
    %9503 = vmatpush1.msra.mxu0 0.0
    %9504 = vmatprep.subr.mxu0 0.0
    %9505 = vmatpush1.msra.mxu0 0.0
    %9506 = vmatprep.subr.mxu0 0.0
    %9507 = vmatpush1.msra.mxu0 0.0
    %9508 = vmatprep.subr.mxu0 0.0
    %9509 = vmatpush1.msra.mxu0 0.0
    %9510 = vmatprep.subr.mxu0 0.0
    %9511 = vmatpush1.msra.mxu0 0.0
    %9512 = vmatprep.subr.mxu0 0.0
    %9513 = vmatpush1.msra.mxu0 0.0
    %9514 = vmatprep.subr.mxu0 0.0
    %9515 = vmatpush1.msra.mxu0 0.0
    %9516 = vmatprep.subr.mxu0 0.0
    %9517 = vmatpush1.msra.mxu0 0.0
    %9518 = vmatprep.subr.mxu0 0.0
    %9519 = vmatpush1.msra.mxu0 0.0
    %9520 = vmatprep.subr.mxu0 0.0
    %9521 = vmatpush1.msra.mxu0 0.0
    %9522 = vmatprep.subr.mxu0 0.0
    %9523 = vmatpush1.msra.mxu0 0.0
    %9524 = vmatprep.subr.mxu0 0.0
    %9525 = vmatpush1.msra.mxu0 0.0
    %9526 = vmatprep.subr.mxu0 0.0
    %9527 = vmatpush1.msra.mxu0 0.0
    %9528 = vmatprep.subr.mxu0 0.0
    %9529 = vmatpush1.msra.mxu0 0.0
    %9530 = vmatprep.subr.mxu0 0.0
    %9531 = vmatpush1.msra.mxu0 0.0
    %9532 = vmatprep.subr.mxu0 0.0
    %9533 = vmatpush1.msra.mxu0 0.0
    %9534 = vmatprep.subr.mxu0 0.0
    %9535 = vmatpush1.msra.mxu0 0.0
    %9536 = vmatprep.mubr.f32.mxu0 0.0
    %9537 = vmatmul.mubr.f32.gmra.mrb[0].mxu0 %v9470
    %v9538 = vpop.f32.mrb[0].mxu0
    %v9539 = vadd.f32 0.0, %v9538
    %v9540 = vpop.f32.mrb[0].mxu0
    %9541 = vdwg.mxu0
    %v9542 = vld [vmem:[%s18] sm:$0xff]
    %v9543 = vld [vmem:[%s17] sm:$0x1]
    %v9545 = vlaneseq
    %v9546 = vshrl.u32 %v9545, 7
    %v9547 = vsub.s32 0, %v9546
    %v9548 = vrot.slane %v9543, %v9547
    %v9551 = vsel %vm8872, %v9542, 0
    %9553 = vmatprep.subr.mxu0 0.0
    %9554 = vmatpush1.msra.mxu0 %v9539
    %9555 = vmatprep.subr.mxu0 0.0
    %9556 = vmatpush1.msra.mxu0 0.0
    %9557 = vmatprep.subr.mxu0 0.0
    %9558 = vmatpush1.msra.mxu0 0.0
    %9559 = vmatprep.subr.mxu0 0.0
    %9560 = vmatpush1.msra.mxu0 0.0
    %9561 = vmatprep.subr.mxu0 0.0
    %9562 = vmatpush1.msra.mxu0 0.0
    %9563 = vmatprep.subr.mxu0 0.0
    %9564 = vmatpush1.msra.mxu0 0.0
    %9565 = vmatprep.subr.mxu0 0.0
    %9566 = vmatpush1.msra.mxu0 0.0
    %9567 = vmatprep.subr.mxu0 0.0
    %9568 = vmatpush1.msra.mxu0 0.0
    %9569 = vmatprep.subr.mxu0 0.0
    %9570 = vmatpush1.msra.mxu0 0.0
    %9571 = vmatprep.subr.mxu0 0.0
    %9572 = vmatpush1.msra.mxu0 0.0
    %9573 = vmatprep.subr.mxu0 0.0
    %9574 = vmatpush1.msra.mxu0 0.0
    %9575 = vmatprep.subr.mxu0 0.0
    %9576 = vmatpush1.msra.mxu0 0.0
    %9577 = vmatprep.subr.mxu0 0.0
    %9578 = vmatpush1.msra.mxu0 0.0
    %9579 = vmatprep.subr.mxu0 0.0
    %9580 = vmatpush1.msra.mxu0 0.0
    %9581 = vmatprep.subr.mxu0 0.0
    %9582 = vmatpush1.msra.mxu0 0.0
    %9583 = vmatprep.subr.mxu0 0.0
    %9584 = vmatpush1.msra.mxu0 0.0
    %9585 = vmatprep.subr.mxu0 0.0
    %9586 = vmatpush1.msra.mxu0 0.0
    %9587 = vmatprep.subr.mxu0 0.0
    %9588 = vmatpush1.msra.mxu0 0.0
    %9589 = vmatprep.subr.mxu0 0.0
    %9590 = vmatpush1.msra.mxu0 0.0
    %9591 = vmatprep.subr.mxu0 0.0
    %9592 = vmatpush1.msra.mxu0 0.0
    %9593 = vmatprep.subr.mxu0 0.0
    %9594 = vmatpush1.msra.mxu0 0.0
    %9595 = vmatprep.subr.mxu0 0.0
    %9596 = vmatpush1.msra.mxu0 0.0
    %9597 = vmatprep.subr.mxu0 0.0
    %9598 = vmatpush1.msra.mxu0 0.0
    %9599 = vmatprep.subr.mxu0 0.0
    %9600 = vmatpush1.msra.mxu0 0.0
    %9601 = vmatprep.subr.mxu0 0.0
    %9602 = vmatpush1.msra.mxu0 0.0
    %9603 = vmatprep.subr.mxu0 0.0
    %9604 = vmatpush1.msra.mxu0 0.0
    %9605 = vmatprep.subr.mxu0 0.0
    %9606 = vmatpush1.msra.mxu0 0.0
    %9607 = vmatprep.subr.mxu0 0.0
    %9608 = vmatpush1.msra.mxu0 0.0
    %9609 = vmatprep.subr.mxu0 0.0
    %9610 = vmatpush1.msra.mxu0 0.0
    %9611 = vmatprep.subr.mxu0 0.0
    %9612 = vmatpush1.msra.mxu0 0.0
    %9613 = vmatprep.subr.mxu0 0.0
    %9614 = vmatpush1.msra.mxu0 0.0
    %9615 = vmatprep.subr.mxu0 0.0
    %9616 = vmatpush1.msra.mxu0 0.0
    %9617 = vmatprep.mubr.f32.mxu0 0.0
    %9618 = vmatmul.mubr.f32.gmra.mrb[0].mxu0 %v9551
    %v9619 = vpop.f32.mrb[0].mxu0
    %v9620 = vadd.f32 %v9548, %v9619
    %v9621 = vpop.f32.mrb[0].mxu0
    %9622 = vdwg.mxu0
    %vm9623 = vcmask 211968
    %9624 = vst.msk [vmem:[#allocation5] sm:$0xff] %vm9623, %v9620
    // Predicated region
    $region78: #{conv_lstm_forward.1} parent=1 // pred_check
      _
    $region79: #{conv_lstm_forward.1} parent=1 // pred_check_branch
      %9626 = sbr.rel (0) target = $region81
    $region80: #{conv_lstm_forward.1} parent=1 // pred_region
      %s9628 = ssub.s32 128, 128
      %9629 = vsyncadd [#allocation6], %s9628
      %s9631 = sshll.u32 [#allocation5], 4
      %s9632 = int_to_ptr.vmem [resolvable:$true] %s9631
      %9634 = dma.vmem_to_hbm [thread:$0]  %s9632, 128, %s19, [#allocation6]
    $region81: #{conv_lstm_forward.1} parent=1 // pred_fallthru
      _
    // Predicated region
    $region82: #{conv_lstm_forward.1} parent=1 // pred_check
      _
    $region83: #{conv_lstm_forward.1} parent=1 // pred_check_branch
      %9636 = sbr.rel (0) target = $region85
    $region84: #{conv_lstm_forward.1} parent=1 // pred_region
      %9637 = dma.done [#allocation6], 128
    $region85: #{conv_lstm_forward.1} parent=1 // pred_fallthru
      _
    %9638 = vsyncpa [#allocation6], 1

</llo_original>
